<compile_context>
chip_gen: v7x
topology: tpu7x:2x2x1
jax: 0.10.0
libtpu: 0.0.40
codegen_flags: <defaults>
</compile_context>

<pallas_src>
import functools

import jax
import jax.numpy as jnp
from jax.experimental import pallas as pl
from jax.experimental.pallas import tpu as pltpu


def _fused_kernel(x_ref, colb_ref, rph_ref, bih_ref, rpw_ref, biw_ref,
                  whT_ref, wwT_ref, wcT_ref,
                  w1T_ref, b1_ref, w2T_ref, b2_ref,
                  woT_ref, bo_ref,
                  out_ref, *, H, W, nh, hd, Bblk):
    C = nh * hd
    HW = H * W
    R = Bblk * HW
    f32, bf16 = jnp.float32, jnp.bfloat16

    x_bf = x_ref[...].reshape(R, C)        # (R, C) bf16 activations straight from HBM
    xb = x_bf.astype(f32)                  # f32 working copy for the permutes
    colb = colb_ref[...]                   # (1, C) int32: column head index
    rph, bih = rph_ref[...], bih_ref[...]  # (R, 1) int32: h row-component / batch id
    rpw, biw = rpw_ref[...], biw_ref[...]  # (R, 1) int32: w row-component / (b,h) id

    def block_perm(val, rowpos, blockid, G, step):
        """Swap the row component `rowpos` (range G, row-stride `step`, restricted to
        blocks identified by `blockid`) with the column head-block index (block width
        hd).  Pure roll-and-mask in VMEM: per diagonal k the columns are rolled by k*hd
        (XLU), the rows by +/- k*step with a wrap fix-up, and the (single-compare)
        masks / wrap-selects are built by rolling the index vectors with the SAME
        pltpu.roll calls, so the result is independent of the roll direction
        convention.  This permutation is its own inverse."""
        Rv, Cv = val.shape
        zero = jnp.zeros((), val.dtype)
        terms = []
        for k in range(G):
            if k == 0:
                src = val
                mask = rowpos == colb                    # diagonal 0: value stays put
            else:
                sc = (k * hd) % Cv                       # column roll (lane, XLU)
                sr = (Rv - k * step) % Rv                # main row roll (sublane, XLU)
                srw = ((G - k) * step) % Rv              # wrap row roll
                vc = pltpu.roll(val, sc, axis=1)
                src_cb = pltpu.roll(colb, sc, axis=1)    # head of the source column
                v_main = pltpu.roll(vc, sr, axis=0)
                v_wrap = pltpu.roll(vc, srw, axis=0)
                bid_main = pltpu.roll(blockid, sr, axis=0)
                # main roll is valid only where its source row stayed in the same block
                src = jnp.where(bid_main == blockid, v_main, v_wrap)
                mask = rowpos == src_cb                  # single compare per diagonal
            terms.append(jnp.where(mask, src, zero))
        # Balanced tree sum (masks are disjoint & exhaustive) -> no G-deep serial chain.
        while len(terms) > 1:
            nxt = [terms[i] + terms[i + 1] for i in range(0, len(terms) - 1, 2)]
            if len(terms) % 2:
                nxt.append(terms[-1])
            terms = nxt
        return terms[0]

    # ---- forward permutes (token-mixing views), f32 in VMEM -----------------------
    xh = block_perm(xb, rph, bih, H, W)    # rows (b, head, w), cols (h, d)
    xw = block_perm(xb, rpw, biw, W, 1)    # rows (b, h, head), cols (w, d)

    # ---- three branch matmuls (bf16 operands, f32 MXU accumulation) ---------------
    hh = jnp.dot(xh.astype(bf16), whT_ref[...], preferred_element_type=f32)
    ww = jnp.dot(xw.astype(bf16), wwT_ref[...], preferred_element_type=f32)
    cb = jnp.dot(x_bf, wcT_ref[...], preferred_element_type=f32)

    # ---- back-permutes into the original (b, h, w) x (head, d) layout -------------
    hb = block_perm(hh, rph, bih, H, W)
    wb = block_perm(ww, rpw, biw, W, 1)

    # ---- per-element spatial mean -> fused reweight MLP ---------------------------
    means = []
    for bb in range(Bblk):
        r0 = bb * HW
        s = hb[r0:r0 + HW] + wb[r0:r0 + HW] + cb[r0:r0 + HW]
        means.append(jnp.mean(s, axis=0, keepdims=True))
    a_mean = means[0] if Bblk == 1 else jnp.concatenate(means, axis=0)   # (Bblk, C)

    z = jnp.dot(a_mean.astype(bf16), w1T_ref[...], preferred_element_type=f32) + b1_ref[...]
    z = jnp.maximum(z, 0.0)
    # single (Bblk, C//4) x (C//4, 3C) dot; W2 regrouped branch-major in the wrapper
    logits = jnp.dot(z.astype(bf16), w2T_ref[...], preferred_element_type=f32) + b2_ref[...]
    l0, l1, l2 = logits[:, 0:C], logits[:, C:2 * C], logits[:, 2 * C:3 * C]

    # ---- softmax over the 3 branch logits (per channel) ---------------------------
    m = jnp.maximum(jnp.maximum(l0, l1), l2)
    e0, e1, e2 = jnp.exp(l0 - m), jnp.exp(l1 - m), jnp.exp(l2 - m)
    inv = pl.reciprocal(e0 + e1 + e2, approx=True)     # EUP slot (approx: sums to ~1)
    a0, a1, a2 = e0 * inv, e1 * inv, e2 * inv          # (Bblk, C)

    # ---- weighted combine + out_proj (with bias) -----------------------------------
    mixes = []
    for bb in range(Bblk):
        r0 = bb * HW
        mixes.append(hb[r0:r0 + HW] * a0[bb:bb + 1, :]
                     + wb[r0:r0 + HW] * a1[bb:bb + 1, :]
                     + cb[r0:r0 + HW] * a2[bb:bb + 1, :])
    mix = mixes[0] if Bblk == 1 else jnp.concatenate(mixes, axis=0)

    out = jnp.dot(mix.astype(bf16), woT_ref[...], preferred_element_type=f32) + bo_ref[...]
    out_ref[...] = out.reshape(Bblk, HW, C).astype(out_ref.dtype)


def _vmem_limit_bytes(requested=64 * 1024 * 1024):
    # Derive the cap from the chip's physical VMEM (64 MiB/TC on v7x, 128 MiB on
    # v5e/v6e) and keep ~25% headroom instead of hard-coding 32 MiB.
    try:
        cap = int(pltpu.get_tpu_info().vmem_capacity_bytes)
    except Exception:
        cap = 64 * 1024 * 1024
    return max(16 * 1024 * 1024, min(requested, cap * 3 // 4))


def weighted_mlp_forward(x, params, *, act_dtype=jnp.bfloat16, rows_per_step=512):
    B, H, W, C = x.shape
    nh = H
    hd = C // nh
    assert C % nh == 0 and W * hd == C, "WeightedMLP requires C % H == 0 and W*head_dim == C"
    HW = H * W
    C4 = C // 4
    f32, bf16 = jnp.float32, jnp.bfloat16

    # Batch several elements per grid step so the MXU sees M = Bblk*HW rows and the
    # ~0.35us per-grid-step overhead is amortized.
    Bblk = 1
    for d in range(1, B + 1):
        if B % d == 0 and d * HW <= max(HW, rows_per_step):
            Bblk = d
    R = Bblk * HW

    # Weights cast to bf16 once; the MXU accumulates in f32 inside the kernel.
    whT = params["mlp_h_w"].T.astype(bf16)
    wwT = params["mlp_w_w"].T.astype(bf16)
    wcT = params["mlp_c_w"].T.astype(bf16)
    w1T = params["rw1_w"].T.astype(bf16)                                # (C, C//4)
    b1 = params["rw1_b"].reshape(1, C4).astype(f32)
    # reweight 2nd Linear: PyTorch output ordering is c*3 + branch.  Regroup it
    # branch-major so one dot yields (Bblk, 3C) logits laid out [br0 | br1 | br2].
    w2T = (params["rw2_w"].reshape(C, 3, C4).transpose(1, 0, 2)
           .reshape(3 * C, C4).T.astype(bf16))                          # (C//4, 3C)
    b2 = params["rw2_b"].reshape(C, 3).T.reshape(1, 3 * C).astype(f32)
    woT = params["out_w"].T.astype(bf16)
    bo = params["out_b"].reshape(1, C).astype(f32)

    # Tiny int32 index factors (no (HW, C) index maps shipped through HBM).
    r = jnp.arange(R, dtype=jnp.int32)[:, None]                         # (R, 1)
    colb = (jnp.arange(C, dtype=jnp.int32) // hd)[None, :]              # (1, C)
    rowpos_h = (r // W) % H                                             # h component
    blockid_h = r // HW                                                 # batch element
    rowpos_w = r % W                                                    # w component
    blockid_w = r // W                                                  # (batch, h) block

    kernel = functools.partial(_fused_kernel, H=H, W=W, nh=nh, hd=hd, Bblk=Bblk)
    c2 = lambda i: (0, 0)
    b3 = lambda i: (i, 0, 0)

    out = pl.pallas_call(
        kernel,
        out_shape=jax.ShapeDtypeStruct((B, HW, C), act_dtype),
        grid=(B // Bblk,),
        in_specs=[
            pl.BlockSpec((Bblk, HW, C), b3),      # x slab (bf16)
            pl.BlockSpec((1, C), c2),             # colb
            pl.BlockSpec((R, 1), c2),             # rowpos_h
            pl.BlockSpec((R, 1), c2),             # blockid_h
            pl.BlockSpec((R, 1), c2),             # rowpos_w
            pl.BlockSpec((R, 1), c2),             # blockid_w
            pl.BlockSpec((C, C), c2),             # Wh^T
            pl.BlockSpec((C, C), c2),             # Ww^T
            pl.BlockSpec((C, C), c2),             # Wc^T
            pl.BlockSpec((C, C4), c2),            # W1^T
            pl.BlockSpec((1, C4), c2),            # b1
            pl.BlockSpec((C4, 3 * C), c2),        # W2^T (branch-major)
            pl.BlockSpec((1, 3 * C), c2),         # b2 (branch-major)
            pl.BlockSpec((C, C), c2),             # Wo^T
            pl.BlockSpec((1, C), c2),             # bo
        ],
        out_specs=pl.BlockSpec((Bblk, HW, C), b3),
        compiler_params=pltpu.CompilerParams(
            dimension_semantics=("parallel",),
            vmem_limit_bytes=_vmem_limit_bytes(),
        ),
    )(x.reshape(B, HW, C).astype(act_dtype), colb, rowpos_h, blockid_h,
      rowpos_w, blockid_w, whT, wwT, wcT, w1T, b1, w2T, b2, woT, bo)

    return out.reshape(B, H, W, C)


# ----------------------------------------------------------------------------
# Pure-JAX reference (mirrors the PyTorch forward).  bf16_dots=True reproduces the
# kernel's bf16-operand / f32-accumulate matmuls for a tight apples-to-apples check.
# ----------------------------------------------------------------------------
def weighted_mlp_reference(x, p, bf16_dots=False):
    def mm(a, w):  # a @ w.T
        if bf16_dots:
            a, w = a.astype(jnp.bfloat16), w.astype(jnp.bfloat16)
        return jnp.matmul(a, w.T, preferred_element_type=jnp.float32)

    B, H, W, C = x.shape
    nh, hd = H, C // H
    h = x.reshape(B, H, W, nh, hd).transpose(0, 3, 2, 1, 4).reshape(B, nh, W, C)
    h = mm(h, p["mlp_h_w"])
    h = h.reshape(B, nh, W, H, hd).transpose(0, 3, 2, 1, 4).reshape(B, H, W, C)
    w = x.reshape(B, H, W, nh, hd).transpose(0, 1, 3, 2, 4).reshape(B, H, nh, C)
    w = mm(w, p["mlp_w_w"])
    w = w.reshape(B, H, nh, W, hd).transpose(0, 1, 3, 2, 4).reshape(B, H, W, C)
    c = mm(x, p["mlp_c_w"])
    a = (h + w + c).transpose(0, 3, 1, 2).reshape(B, C, -1).mean(-1)
    a = mm(jnp.maximum(mm(a, p["rw1_w"]) + p["rw1_b"], 0.0), p["rw2_w"]) + p["rw2_b"]
    a = a.reshape(B, C, 3).transpose(2, 0, 1)
    a = jax.nn.softmax(a, axis=0)[:, :, None, None, :]   # (3, B, 1, 1, C)
    out = h * a[0] + w * a[1] + c * a[2]
    return mm(out, p["out_w"]) + p["out_b"]


def init_params(key, dim):
    def uniform(k, shape, fan_in):
        bound = 1.0 / jnp.sqrt(jnp.float32(fan_in))
        return jax.random.uniform(k, shape, jnp.float32, -bound, bound)

    ks = jax.random.split(key, 9)
    hidden = dim // 4
    return {
        "mlp_c_w": uniform(ks[0], (dim, dim), dim),
        "mlp_h_w": uniform(ks[1], (dim, dim), dim),
        "mlp_w_w": uniform(ks[2], (dim, dim), dim),
        "rw1_w": uniform(ks[3], (hidden, dim), dim),
        "rw1_b": uniform(ks[4], (hidden,), dim),
        "rw2_w": uniform(ks[5], (dim * 3, hidden), hidden),
        "rw2_b": uniform(ks[6], (dim * 3,), hidden),
        "out_w": uniform(ks[7], (dim, dim), dim),
        "out_b": uniform(ks[8], (dim,), dim),
    }


if __name__ == "__main__":
    # num_heads = H = 8, head_dim = 16; C = 128 keeps lanes dense and the MXU fed.
    B, H, W, C = 2, 8, 8, 128
    key = jax.random.PRNGKey(0)
    kx, kp = jax.random.split(key)
    x = jax.random.normal(kx, (B, H, W, C), jnp.float32)
    params = init_params(kp, C)

    out = jax.block_until_ready(weighted_mlp_forward(x, params))
    assert out.shape == (B, H, W, C)
    out_f32 = out.astype(jnp.float32)

    # Tight check vs. a reference using the same bf16-operand / f32-accumulate matmuls
    # (remaining slack covers the approximate EUP reciprocal and the bf16 output cast).
    ref_bf16 = weighted_mlp_reference(x, params, bf16_dots=True)
    assert jnp.allclose(out_f32, ref_bf16, rtol=2e-2, atol=2e-2), "mismatch vs bf16-matched reference"

    # Looser check vs. the full-f32 reference; the slack is the deliberate bf16
    # activation/operand policy recommended by the performance review.
    with jax.default_matmul_precision("highest"):
        ref_f32 = weighted_mlp_reference(x, params, bf16_dots=False)
    assert jnp.allclose(out_f32, ref_f32, rtol=5e-2, atol=5e-2), "mismatch vs f32 reference"

    print("KERNEL_OK")
</pallas_src>

<mosaic_0001>
module attributes {stable_mosaic.version = 11 : i64} {
  func.func @_fused_kernel(%arg0: i32, %arg1: memref<2x64x128xbf16, #tpu.memory_space<vmem>>, %arg2: memref<1x128xi32, #tpu.memory_space<vmem>>, %arg3: memref<128x1xi32, #tpu.memory_space<vmem>>, %arg4: memref<128x1xi32, #tpu.memory_space<vmem>>, %arg5: memref<128x1xi32, #tpu.memory_space<vmem>>, %arg6: memref<128x1xi32, #tpu.memory_space<vmem>>, %arg7: memref<128x128xbf16, #tpu.memory_space<vmem>>, %arg8: memref<128x128xbf16, #tpu.memory_space<vmem>>, %arg9: memref<128x128xbf16, #tpu.memory_space<vmem>>, %arg10: memref<128x32xbf16, #tpu.memory_space<vmem>>, %arg11: memref<1x32xf32, #tpu.memory_space<vmem>>, %arg12: memref<32x384xbf16, #tpu.memory_space<vmem>>, %arg13: memref<1x384xf32, #tpu.memory_space<vmem>>, %arg14: memref<128x128xbf16, #tpu.memory_space<vmem>>, %arg15: memref<1x128xf32, #tpu.memory_space<vmem>>, %arg16: memref<2x64x128xbf16, #tpu.memory_space<vmem>>) attributes {dimension_semantics = [#tpu.dimension_semantics<parallel>], iteration_bounds = array<i64: 1>, scalar_prefetch = 0 : i64, scratch_operands = 0 : i64, tpu.core_type = #tpu.core_type<tc>, window_params = [{transform_indices = @transform_0, window_bounds = array<i64: 2, 64, 128>}, {pipeline_mode = #tpu.pipeline_mode<synchronous>, transform_indices = @transform_1, window_bounds = array<i64: 1, 128>}, {pipeline_mode = #tpu.pipeline_mode<synchronous>, transform_indices = @transform_2, window_bounds = array<i64: 128, 1>}, {pipeline_mode = #tpu.pipeline_mode<synchronous>, transform_indices = @transform_3, window_bounds = array<i64: 128, 1>}, {pipeline_mode = #tpu.pipeline_mode<synchronous>, transform_indices = @transform_4, window_bounds = array<i64: 128, 1>}, {pipeline_mode = #tpu.pipeline_mode<synchronous>, transform_indices = @transform_5, window_bounds = array<i64: 128, 1>}, {pipeline_mode = #tpu.pipeline_mode<synchronous>, transform_indices = @transform_6, window_bounds = array<i64: 128, 128>}, {pipeline_mode = #tpu.pipeline_mode<synchronous>, transform_indices = @transform_7, window_bounds = array<i64: 128, 128>}, {pipeline_mode = #tpu.pipeline_mode<synchronous>, transform_indices = @transform_8, window_bounds = array<i64: 128, 128>}, {pipeline_mode = #tpu.pipeline_mode<synchronous>, transform_indices = @transform_9, window_bounds = array<i64: 128, 32>}, {pipeline_mode = #tpu.pipeline_mode<synchronous>, transform_indices = @transform_10, window_bounds = array<i64: 1, 32>}, {pipeline_mode = #tpu.pipeline_mode<synchronous>, transform_indices = @transform_11, window_bounds = array<i64: 32, 384>}, {pipeline_mode = #tpu.pipeline_mode<synchronous>, transform_indices = @transform_12, window_bounds = array<i64: 1, 384>}, {pipeline_mode = #tpu.pipeline_mode<synchronous>, transform_indices = @transform_13, window_bounds = array<i64: 128, 128>}, {pipeline_mode = #tpu.pipeline_mode<synchronous>, transform_indices = @transform_14, window_bounds = array<i64: 1, 128>}, {transform_indices = @transform_15, window_bounds = array<i64: 2, 64, 128>}]} {
    %c0 = arith.constant 0 : index
    %c0_0 = arith.constant 0 : index
    %c0_1 = arith.constant 0 : index
    %0 = vector.load %arg1[%c0, %c0_0, %c0_1] : memref<2x64x128xbf16, #tpu.memory_space<vmem>>, vector<2x64x128xbf16>
    %1 = vector.shape_cast %0 : vector<2x64x128xbf16> to vector<128x128xbf16>
    %2 = arith.extf %1 : vector<128x128xbf16> to vector<128x128xf32>
    %c0_2 = arith.constant 0 : index
    %c0_3 = arith.constant 0 : index
    %3 = vector.load %arg2[%c0_2, %c0_3] : memref<1x128xi32, #tpu.memory_space<vmem>>, vector<1x128xi32>
    %c0_4 = arith.constant 0 : index
    %c0_5 = arith.constant 0 : index
    %4 = vector.load %arg3[%c0_4, %c0_5] : memref<128x1xi32, #tpu.memory_space<vmem>>, vector<128x1xi32>
    %c0_6 = arith.constant 0 : index
    %c0_7 = arith.constant 0 : index
    %5 = vector.load %arg4[%c0_6, %c0_7] : memref<128x1xi32, #tpu.memory_space<vmem>>, vector<128x1xi32>
    %c0_8 = arith.constant 0 : index
    %c0_9 = arith.constant 0 : index
    %6 = vector.load %arg5[%c0_8, %c0_9] : memref<128x1xi32, #tpu.memory_space<vmem>>, vector<128x1xi32>
    %c0_10 = arith.constant 0 : index
    %c0_11 = arith.constant 0 : index
    %7 = vector.load %arg6[%c0_10, %c0_11] : memref<128x1xi32, #tpu.memory_space<vmem>>, vector<128x1xi32>
    %8 = vector.broadcast %4 : vector<128x1xi32> to vector<128x128xi32>
    %9 = vector.broadcast %3 : vector<1x128xi32> to vector<128x128xi32>
    %10 = arith.cmpi eq, %8, %9 : vector<128x128xi32>
    %cst = arith.constant 0.000000e+00 : f32
    %11 = vector.broadcast %cst : f32 to vector<128x128xf32>
    %12 = arith.select %10, %2, %11 : vector<128x128xi1>, vector<128x128xf32>
    %c16_i32 = arith.constant 16 : i32
    %13 = tpu.dynamic_rotate %2 by %c16_i32 dim 1 : vector<128x128xf32>, i32 -> vector<128x128xf32>
    %c16_i32_12 = arith.constant 16 : i32
    %14 = tpu.dynamic_rotate %3 by %c16_i32_12 dim 1 : vector<1x128xi32>, i32 -> vector<1x128xi32>
    %c120_i32 = arith.constant 120 : i32
    %15 = tpu.dynamic_rotate %13 by %c120_i32 dim 0 : vector<128x128xf32>, i32 -> vector<128x128xf32>
    %c56_i32 = arith.constant 56 : i32
    %16 = tpu.dynamic_rotate %13 by %c56_i32 dim 0 : vector<128x128xf32>, i32 -> vector<128x128xf32>
    %c120_i32_13 = arith.constant 120 : i32
    %17 = tpu.dynamic_rotate %5 by %c120_i32_13 dim 0 : vector<128x1xi32>, i32 -> vector<128x1xi32>
    %18 = arith.cmpi eq, %17, %5 : vector<128x1xi32>
    %19 = vector.shape_cast %18 : vector<128x1xi1> to vector<128x1xi1>
    %20 = vector.broadcast %19 : vector<128x1xi1> to vector<128x128xi1>
    %21 = arith.select %20, %15, %16 : vector<128x128xi1>, vector<128x128xf32>
    %22 = vector.broadcast %4 : vector<128x1xi32> to vector<128x128xi32>
    %23 = vector.broadcast %14 : vector<1x128xi32> to vector<128x128xi32>
    %24 = arith.cmpi eq, %22, %23 : vector<128x128xi32>
    %cst_14 = arith.constant 0.000000e+00 : f32
    %25 = vector.broadcast %cst_14 : f32 to vector<128x128xf32>
    %26 = arith.select %24, %21, %25 : vector<128x128xi1>, vector<128x128xf32>
    %c32_i32 = arith.constant 32 : i32
    %27 = tpu.dynamic_rotate %2 by %c32_i32 dim 1 : vector<128x128xf32>, i32 -> vector<128x128xf32>
    %c32_i32_15 = arith.constant 32 : i32
    %28 = tpu.dynamic_rotate %3 by %c32_i32_15 dim 1 : vector<1x128xi32>, i32 -> vector<1x128xi32>
    %c112_i32 = arith.constant 112 : i32
    %29 = tpu.dynamic_rotate %27 by %c112_i32 dim 0 : vector<128x128xf32>, i32 -> vector<128x128xf32>
    %c48_i32 = arith.constant 48 : i32
    %30 = tpu.dynamic_rotate %27 by %c48_i32 dim 0 : vector<128x128xf32>, i32 -> vector<128x128xf32>
    %c112_i32_16 = arith.constant 112 : i32
    %31 = tpu.dynamic_rotate %5 by %c112_i32_16 dim 0 : vector<128x1xi32>, i32 -> vector<128x1xi32>
    %32 = arith.cmpi eq, %31, %5 : vector<128x1xi32>
    %33 = vector.shape_cast %32 : vector<128x1xi1> to vector<128x1xi1>
    %34 = vector.broadcast %33 : vector<128x1xi1> to vector<128x128xi1>
    %35 = arith.select %34, %29, %30 : vector<128x128xi1>, vector<128x128xf32>
    %36 = vector.broadcast %4 : vector<128x1xi32> to vector<128x128xi32>
    %37 = vector.broadcast %28 : vector<1x128xi32> to vector<128x128xi32>
    %38 = arith.cmpi eq, %36, %37 : vector<128x128xi32>
    %cst_17 = arith.constant 0.000000e+00 : f32
    %39 = vector.broadcast %cst_17 : f32 to vector<128x128xf32>
    %40 = arith.select %38, %35, %39 : vector<128x128xi1>, vector<128x128xf32>
    %c48_i32_18 = arith.constant 48 : i32
    %41 = tpu.dynamic_rotate %2 by %c48_i32_18 dim 1 : vector<128x128xf32>, i32 -> vector<128x128xf32>
    %c48_i32_19 = arith.constant 48 : i32
    %42 = tpu.dynamic_rotate %3 by %c48_i32_19 dim 1 : vector<1x128xi32>, i32 -> vector<1x128xi32>
    %c104_i32 = arith.constant 104 : i32
    %43 = tpu.dynamic_rotate %41 by %c104_i32 dim 0 : vector<128x128xf32>, i32 -> vector<128x128xf32>
    %c40_i32 = arith.constant 40 : i32
    %44 = tpu.dynamic_rotate %41 by %c40_i32 dim 0 : vector<128x128xf32>, i32 -> vector<128x128xf32>
    %c104_i32_20 = arith.constant 104 : i32
    %45 = tpu.dynamic_rotate %5 by %c104_i32_20 dim 0 : vector<128x1xi32>, i32 -> vector<128x1xi32>
    %46 = arith.cmpi eq, %45, %5 : vector<128x1xi32>
    %47 = vector.shape_cast %46 : vector<128x1xi1> to vector<128x1xi1>
    %48 = vector.broadcast %47 : vector<128x1xi1> to vector<128x128xi1>
    %49 = arith.select %48, %43, %44 : vector<128x128xi1>, vector<128x128xf32>
    %50 = vector.broadcast %4 : vector<128x1xi32> to vector<128x128xi32>
    %51 = vector.broadcast %42 : vector<1x128xi32> to vector<128x128xi32>
    %52 = arith.cmpi eq, %50, %51 : vector<128x128xi32>
    %cst_21 = arith.constant 0.000000e+00 : f32
    %53 = vector.broadcast %cst_21 : f32 to vector<128x128xf32>
    %54 = arith.select %52, %49, %53 : vector<128x128xi1>, vector<128x128xf32>
    %c64_i32 = arith.constant 64 : i32
    %55 = tpu.dynamic_rotate %2 by %c64_i32 dim 1 : vector<128x128xf32>, i32 -> vector<128x128xf32>
    %c64_i32_22 = arith.constant 64 : i32
    %56 = tpu.dynamic_rotate %3 by %c64_i32_22 dim 1 : vector<1x128xi32>, i32 -> vector<1x128xi32>
    %c96_i32 = arith.constant 96 : i32
    %57 = tpu.dynamic_rotate %55 by %c96_i32 dim 0 : vector<128x128xf32>, i32 -> vector<128x128xf32>
    %c32_i32_23 = arith.constant 32 : i32
    %58 = tpu.dynamic_rotate %55 by %c32_i32_23 dim 0 : vector<128x128xf32>, i32 -> vector<128x128xf32>
    %c96_i32_24 = arith.constant 96 : i32
    %59 = tpu.dynamic_rotate %5 by %c96_i32_24 dim 0 : vector<128x1xi32>, i32 -> vector<128x1xi32>
    %60 = arith.cmpi eq, %59, %5 : vector<128x1xi32>
    %61 = vector.shape_cast %60 : vector<128x1xi1> to vector<128x1xi1>
    %62 = vector.broadcast %61 : vector<128x1xi1> to vector<128x128xi1>
    %63 = arith.select %62, %57, %58 : vector<128x128xi1>, vector<128x128xf32>
    %64 = vector.broadcast %4 : vector<128x1xi32> to vector<128x128xi32>
    %65 = vector.broadcast %56 : vector<1x128xi32> to vector<128x128xi32>
    %66 = arith.cmpi eq, %64, %65 : vector<128x128xi32>
    %cst_25 = arith.constant 0.000000e+00 : f32
    %67 = vector.broadcast %cst_25 : f32 to vector<128x128xf32>
    %68 = arith.select %66, %63, %67 : vector<128x128xi1>, vector<128x128xf32>
    %c80_i32 = arith.constant 80 : i32
    %69 = tpu.dynamic_rotate %2 by %c80_i32 dim 1 : vector<128x128xf32>, i32 -> vector<128x128xf32>
    %c80_i32_26 = arith.constant 80 : i32
    %70 = tpu.dynamic_rotate %3 by %c80_i32_26 dim 1 : vector<1x128xi32>, i32 -> vector<1x128xi32>
    %c88_i32 = arith.constant 88 : i32
    %71 = tpu.dynamic_rotate %69 by %c88_i32 dim 0 : vector<128x128xf32>, i32 -> vector<128x128xf32>
    %c24_i32 = arith.constant 24 : i32
    %72 = tpu.dynamic_rotate %69 by %c24_i32 dim 0 : vector<128x128xf32>, i32 -> vector<128x128xf32>
    %c88_i32_27 = arith.constant 88 : i32
    %73 = tpu.dynamic_rotate %5 by %c88_i32_27 dim 0 : vector<128x1xi32>, i32 -> vector<128x1xi32>
    %74 = arith.cmpi eq, %73, %5 : vector<128x1xi32>
    %75 = vector.shape_cast %74 : vector<128x1xi1> to vector<128x1xi1>
    %76 = vector.broadcast %75 : vector<128x1xi1> to vector<128x128xi1>
    %77 = arith.select %76, %71, %72 : vector<128x128xi1>, vector<128x128xf32>
    %78 = vector.broadcast %4 : vector<128x1xi32> to vector<128x128xi32>
    %79 = vector.broadcast %70 : vector<1x128xi32> to vector<128x128xi32>
    %80 = arith.cmpi eq, %78, %79 : vector<128x128xi32>
    %cst_28 = arith.constant 0.000000e+00 : f32
    %81 = vector.broadcast %cst_28 : f32 to vector<128x128xf32>
    %82 = arith.select %80, %77, %81 : vector<128x128xi1>, vector<128x128xf32>
    %c96_i32_29 = arith.constant 96 : i32
    %83 = tpu.dynamic_rotate %2 by %c96_i32_29 dim 1 : vector<128x128xf32>, i32 -> vector<128x128xf32>
    %c96_i32_30 = arith.constant 96 : i32
    %84 = tpu.dynamic_rotate %3 by %c96_i32_30 dim 1 : vector<1x128xi32>, i32 -> vector<1x128xi32>
    %c80_i32_31 = arith.constant 80 : i32
    %85 = tpu.dynamic_rotate %83 by %c80_i32_31 dim 0 : vector<128x128xf32>, i32 -> vector<128x128xf32>
    %c16_i32_32 = arith.constant 16 : i32
    %86 = tpu.dynamic_rotate %83 by %c16_i32_32 dim 0 : vector<128x128xf32>, i32 -> vector<128x128xf32>
    %c80_i32_33 = arith.constant 80 : i32
    %87 = tpu.dynamic_rotate %5 by %c80_i32_33 dim 0 : vector<128x1xi32>, i32 -> vector<128x1xi32>
    %88 = arith.cmpi eq, %87, %5 : vector<128x1xi32>
    %89 = vector.shape_cast %88 : vector<128x1xi1> to vector<128x1xi1>
    %90 = vector.broadcast %89 : vector<128x1xi1> to vector<128x128xi1>
    %91 = arith.select %90, %85, %86 : vector<128x128xi1>, vector<128x128xf32>
    %92 = vector.broadcast %4 : vector<128x1xi32> to vector<128x128xi32>
    %93 = vector.broadcast %84 : vector<1x128xi32> to vector<128x128xi32>
    %94 = arith.cmpi eq, %92, %93 : vector<128x128xi32>
    %cst_34 = arith.constant 0.000000e+00 : f32
    %95 = vector.broadcast %cst_34 : f32 to vector<128x128xf32>
    %96 = arith.select %94, %91, %95 : vector<128x128xi1>, vector<128x128xf32>
    %c112_i32_35 = arith.constant 112 : i32
    %97 = tpu.dynamic_rotate %2 by %c112_i32_35 dim 1 : vector<128x128xf32>, i32 -> vector<128x128xf32>
    %c112_i32_36 = arith.constant 112 : i32
    %98 = tpu.dynamic_rotate %3 by %c112_i32_36 dim 1 : vector<1x128xi32>, i32 -> vector<1x128xi32>
    %c72_i32 = arith.constant 72 : i32
    %99 = tpu.dynamic_rotate %97 by %c72_i32 dim 0 : vector<128x128xf32>, i32 -> vector<128x128xf32>
    %c8_i32 = arith.constant 8 : i32
    %100 = tpu.dynamic_rotate %97 by %c8_i32 dim 0 : vector<128x128xf32>, i32 -> vector<128x128xf32>
    %c72_i32_37 = arith.constant 72 : i32
    %101 = tpu.dynamic_rotate %5 by %c72_i32_37 dim 0 : vector<128x1xi32>, i32 -> vector<128x1xi32>
    %102 = arith.cmpi eq, %101, %5 : vector<128x1xi32>
    %103 = vector.shape_cast %102 : vector<128x1xi1> to vector<128x1xi1>
    %104 = vector.broadcast %103 : vector<128x1xi1> to vector<128x128xi1>
    %105 = arith.select %104, %99, %100 : vector<128x128xi1>, vector<128x128xf32>
    %106 = vector.broadcast %4 : vector<128x1xi32> to vector<128x128xi32>
    %107 = vector.broadcast %98 : vector<1x128xi32> to vector<128x128xi32>
    %108 = arith.cmpi eq, %106, %107 : vector<128x128xi32>
    %cst_38 = arith.constant 0.000000e+00 : f32
    %109 = vector.broadcast %cst_38 : f32 to vector<128x128xf32>
    %110 = arith.select %108, %105, %109 : vector<128x128xi1>, vector<128x128xf32>
    %111 = arith.addf %12, %26 : vector<128x128xf32>
    %112 = arith.addf %40, %54 : vector<128x128xf32>
    %113 = arith.addf %68, %82 : vector<128x128xf32>
    %114 = arith.addf %96, %110 : vector<128x128xf32>
    %115 = arith.addf %111, %112 : vector<128x128xf32>
    %116 = arith.addf %113, %114 : vector<128x128xf32>
    %117 = arith.addf %115, %116 : vector<128x128xf32>
    %118 = vector.broadcast %6 : vector<128x1xi32> to vector<128x128xi32>
    %119 = vector.broadcast %3 : vector<1x128xi32> to vector<128x128xi32>
    %120 = arith.cmpi eq, %118, %119 : vector<128x128xi32>
    %cst_39 = arith.constant 0.000000e+00 : f32
    %121 = vector.broadcast %cst_39 : f32 to vector<128x128xf32>
    %122 = arith.select %120, %2, %121 : vector<128x128xi1>, vector<128x128xf32>
    %c16_i32_40 = arith.constant 16 : i32
    %123 = tpu.dynamic_rotate %2 by %c16_i32_40 dim 1 : vector<128x128xf32>, i32 -> vector<128x128xf32>
    %c16_i32_41 = arith.constant 16 : i32
    %124 = tpu.dynamic_rotate %3 by %c16_i32_41 dim 1 : vector<1x128xi32>, i32 -> vector<1x128xi32>
    %c127_i32 = arith.constant 127 : i32
    %125 = tpu.dynamic_rotate %123 by %c127_i32 dim 0 : vector<128x128xf32>, i32 -> vector<128x128xf32>
    %c7_i32 = arith.constant 7 : i32
    %126 = tpu.dynamic_rotate %123 by %c7_i32 dim 0 : vector<128x128xf32>, i32 -> vector<128x128xf32>
    %c127_i32_42 = arith.constant 127 : i32
    %127 = tpu.dynamic_rotate %7 by %c127_i32_42 dim 0 : vector<128x1xi32>, i32 -> vector<128x1xi32>
    %128 = arith.cmpi eq, %127, %7 : vector<128x1xi32>
    %129 = vector.shape_cast %128 : vector<128x1xi1> to vector<128x1xi1>
    %130 = vector.broadcast %129 : vector<128x1xi1> to vector<128x128xi1>
    %131 = arith.select %130, %125, %126 : vector<128x128xi1>, vector<128x128xf32>
    %132 = vector.broadcast %6 : vector<128x1xi32> to vector<128x128xi32>
    %133 = vector.broadcast %124 : vector<1x128xi32> to vector<128x128xi32>
    %134 = arith.cmpi eq, %132, %133 : vector<128x128xi32>
    %cst_43 = arith.constant 0.000000e+00 : f32
    %135 = vector.broadcast %cst_43 : f32 to vector<128x128xf32>
    %136 = arith.select %134, %131, %135 : vector<128x128xi1>, vector<128x128xf32>
    %c32_i32_44 = arith.constant 32 : i32
    %137 = tpu.dynamic_rotate %2 by %c32_i32_44 dim 1 : vector<128x128xf32>, i32 -> vector<128x128xf32>
    %c32_i32_45 = arith.constant 32 : i32
    %138 = tpu.dynamic_rotate %3 by %c32_i32_45 dim 1 : vector<1x128xi32>, i32 -> vector<1x128xi32>
    %c126_i32 = arith.constant 126 : i32
    %139 = tpu.dynamic_rotate %137 by %c126_i32 dim 0 : vector<128x128xf32>, i32 -> vector<128x128xf32>
    %c6_i32 = arith.constant 6 : i32
    %140 = tpu.dynamic_rotate %137 by %c6_i32 dim 0 : vector<128x128xf32>, i32 -> vector<128x128xf32>
    %c126_i32_46 = arith.constant 126 : i32
    %141 = tpu.dynamic_rotate %7 by %c126_i32_46 dim 0 : vector<128x1xi32>, i32 -> vector<128x1xi32>
    %142 = arith.cmpi eq, %141, %7 : vector<128x1xi32>
    %143 = vector.shape_cast %142 : vector<128x1xi1> to vector<128x1xi1>
    %144 = vector.broadcast %143 : vector<128x1xi1> to vector<128x128xi1>
    %145 = arith.select %144, %139, %140 : vector<128x128xi1>, vector<128x128xf32>
    %146 = vector.broadcast %6 : vector<128x1xi32> to vector<128x128xi32>
    %147 = vector.broadcast %138 : vector<1x128xi32> to vector<128x128xi32>
    %148 = arith.cmpi eq, %146, %147 : vector<128x128xi32>
    %cst_47 = arith.constant 0.000000e+00 : f32
    %149 = vector.broadcast %cst_47 : f32 to vector<128x128xf32>
    %150 = arith.select %148, %145, %149 : vector<128x128xi1>, vector<128x128xf32>
    %c48_i32_48 = arith.constant 48 : i32
    %151 = tpu.dynamic_rotate %2 by %c48_i32_48 dim 1 : vector<128x128xf32>, i32 -> vector<128x128xf32>
    %c48_i32_49 = arith.constant 48 : i32
    %152 = tpu.dynamic_rotate %3 by %c48_i32_49 dim 1 : vector<1x128xi32>, i32 -> vector<1x128xi32>
    %c125_i32 = arith.constant 125 : i32
    %153 = tpu.dynamic_rotate %151 by %c125_i32 dim 0 : vector<128x128xf32>, i32 -> vector<128x128xf32>
    %c5_i32 = arith.constant 5 : i32
    %154 = tpu.dynamic_rotate %151 by %c5_i32 dim 0 : vector<128x128xf32>, i32 -> vector<128x128xf32>
    %c125_i32_50 = arith.constant 125 : i32
    %155 = tpu.dynamic_rotate %7 by %c125_i32_50 dim 0 : vector<128x1xi32>, i32 -> vector<128x1xi32>
    %156 = arith.cmpi eq, %155, %7 : vector<128x1xi32>
    %157 = vector.shape_cast %156 : vector<128x1xi1> to vector<128x1xi1>
    %158 = vector.broadcast %157 : vector<128x1xi1> to vector<128x128xi1>
    %159 = arith.select %158, %153, %154 : vector<128x128xi1>, vector<128x128xf32>
    %160 = vector.broadcast %6 : vector<128x1xi32> to vector<128x128xi32>
    %161 = vector.broadcast %152 : vector<1x128xi32> to vector<128x128xi32>
    %162 = arith.cmpi eq, %160, %161 : vector<128x128xi32>
    %cst_51 = arith.constant 0.000000e+00 : f32
    %163 = vector.broadcast %cst_51 : f32 to vector<128x128xf32>
    %164 = arith.select %162, %159, %163 : vector<128x128xi1>, vector<128x128xf32>
    %c64_i32_52 = arith.constant 64 : i32
    %165 = tpu.dynamic_rotate %2 by %c64_i32_52 dim 1 : vector<128x128xf32>, i32 -> vector<128x128xf32>
    %c64_i32_53 = arith.constant 64 : i32
    %166 = tpu.dynamic_rotate %3 by %c64_i32_53 dim 1 : vector<1x128xi32>, i32 -> vector<1x128xi32>
    %c124_i32 = arith.constant 124 : i32
    %167 = tpu.dynamic_rotate %165 by %c124_i32 dim 0 : vector<128x128xf32>, i32 -> vector<128x128xf32>
    %c4_i32 = arith.constant 4 : i32
    %168 = tpu.dynamic_rotate %165 by %c4_i32 dim 0 : vector<128x128xf32>, i32 -> vector<128x128xf32>
    %c124_i32_54 = arith.constant 124 : i32
    %169 = tpu.dynamic_rotate %7 by %c124_i32_54 dim 0 : vector<128x1xi32>, i32 -> vector<128x1xi32>
    %170 = arith.cmpi eq, %169, %7 : vector<128x1xi32>
    %171 = vector.shape_cast %170 : vector<128x1xi1> to vector<128x1xi1>
    %172 = vector.broadcast %171 : vector<128x1xi1> to vector<128x128xi1>
    %173 = arith.select %172, %167, %168 : vector<128x128xi1>, vector<128x128xf32>
    %174 = vector.broadcast %6 : vector<128x1xi32> to vector<128x128xi32>
    %175 = vector.broadcast %166 : vector<1x128xi32> to vector<128x128xi32>
    %176 = arith.cmpi eq, %174, %175 : vector<128x128xi32>
    %cst_55 = arith.constant 0.000000e+00 : f32
    %177 = vector.broadcast %cst_55 : f32 to vector<128x128xf32>
    %178 = arith.select %176, %173, %177 : vector<128x128xi1>, vector<128x128xf32>
    %c80_i32_56 = arith.constant 80 : i32
    %179 = tpu.dynamic_rotate %2 by %c80_i32_56 dim 1 : vector<128x128xf32>, i32 -> vector<128x128xf32>
    %c80_i32_57 = arith.constant 80 : i32
    %180 = tpu.dynamic_rotate %3 by %c80_i32_57 dim 1 : vector<1x128xi32>, i32 -> vector<1x128xi32>
    %c123_i32 = arith.constant 123 : i32
    %181 = tpu.dynamic_rotate %179 by %c123_i32 dim 0 : vector<128x128xf32>, i32 -> vector<128x128xf32>
    %c3_i32 = arith.constant 3 : i32
    %182 = tpu.dynamic_rotate %179 by %c3_i32 dim 0 : vector<128x128xf32>, i32 -> vector<128x128xf32>
    %c123_i32_58 = arith.constant 123 : i32
    %183 = tpu.dynamic_rotate %7 by %c123_i32_58 dim 0 : vector<128x1xi32>, i32 -> vector<128x1xi32>
    %184 = arith.cmpi eq, %183, %7 : vector<128x1xi32>
    %185 = vector.shape_cast %184 : vector<128x1xi1> to vector<128x1xi1>
    %186 = vector.broadcast %185 : vector<128x1xi1> to vector<128x128xi1>
    %187 = arith.select %186, %181, %182 : vector<128x128xi1>, vector<128x128xf32>
    %188 = vector.broadcast %6 : vector<128x1xi32> to vector<128x128xi32>
    %189 = vector.broadcast %180 : vector<1x128xi32> to vector<128x128xi32>
    %190 = arith.cmpi eq, %188, %189 : vector<128x128xi32>
    %cst_59 = arith.constant 0.000000e+00 : f32
    %191 = vector.broadcast %cst_59 : f32 to vector<128x128xf32>
    %192 = arith.select %190, %187, %191 : vector<128x128xi1>, vector<128x128xf32>
    %c96_i32_60 = arith.constant 96 : i32
    %193 = tpu.dynamic_rotate %2 by %c96_i32_60 dim 1 : vector<128x128xf32>, i32 -> vector<128x128xf32>
    %c96_i32_61 = arith.constant 96 : i32
    %194 = tpu.dynamic_rotate %3 by %c96_i32_61 dim 1 : vector<1x128xi32>, i32 -> vector<1x128xi32>
    %c122_i32 = arith.constant 122 : i32
    %195 = tpu.dynamic_rotate %193 by %c122_i32 dim 0 : vector<128x128xf32>, i32 -> vector<128x128xf32>
    %c2_i32 = arith.constant 2 : i32
    %196 = tpu.dynamic_rotate %193 by %c2_i32 dim 0 : vector<128x128xf32>, i32 -> vector<128x128xf32>
    %c122_i32_62 = arith.constant 122 : i32
    %197 = tpu.dynamic_rotate %7 by %c122_i32_62 dim 0 : vector<128x1xi32>, i32 -> vector<128x1xi32>
    %198 = arith.cmpi eq, %197, %7 : vector<128x1xi32>
    %199 = vector.shape_cast %198 : vector<128x1xi1> to vector<128x1xi1>
    %200 = vector.broadcast %199 : vector<128x1xi1> to vector<128x128xi1>
    %201 = arith.select %200, %195, %196 : vector<128x128xi1>, vector<128x128xf32>
    %202 = vector.broadcast %6 : vector<128x1xi32> to vector<128x128xi32>
    %203 = vector.broadcast %194 : vector<1x128xi32> to vector<128x128xi32>
    %204 = arith.cmpi eq, %202, %203 : vector<128x128xi32>
    %cst_63 = arith.constant 0.000000e+00 : f32
    %205 = vector.broadcast %cst_63 : f32 to vector<128x128xf32>
    %206 = arith.select %204, %201, %205 : vector<128x128xi1>, vector<128x128xf32>
    %c112_i32_64 = arith.constant 112 : i32
    %207 = tpu.dynamic_rotate %2 by %c112_i32_64 dim 1 : vector<128x128xf32>, i32 -> vector<128x128xf32>
    %c112_i32_65 = arith.constant 112 : i32
    %208 = tpu.dynamic_rotate %3 by %c112_i32_65 dim 1 : vector<1x128xi32>, i32 -> vector<1x128xi32>
    %c121_i32 = arith.constant 121 : i32
    %209 = tpu.dynamic_rotate %207 by %c121_i32 dim 0 : vector<128x128xf32>, i32 -> vector<128x128xf32>
    %c1_i32 = arith.constant 1 : i32
    %210 = tpu.dynamic_rotate %207 by %c1_i32 dim 0 : vector<128x128xf32>, i32 -> vector<128x128xf32>
    %c121_i32_66 = arith.constant 121 : i32
    %211 = tpu.dynamic_rotate %7 by %c121_i32_66 dim 0 : vector<128x1xi32>, i32 -> vector<128x1xi32>
    %212 = arith.cmpi eq, %211, %7 : vector<128x1xi32>
    %213 = vector.shape_cast %212 : vector<128x1xi1> to vector<128x1xi1>
    %214 = vector.broadcast %213 : vector<128x1xi1> to vector<128x128xi1>
    %215 = arith.select %214, %209, %210 : vector<128x128xi1>, vector<128x128xf32>
    %216 = vector.broadcast %6 : vector<128x1xi32> to vector<128x128xi32>
    %217 = vector.broadcast %208 : vector<1x128xi32> to vector<128x128xi32>
    %218 = arith.cmpi eq, %216, %217 : vector<128x128xi32>
    %cst_67 = arith.constant 0.000000e+00 : f32
    %219 = vector.broadcast %cst_67 : f32 to vector<128x128xf32>
    %220 = arith.select %218, %215, %219 : vector<128x128xi1>, vector<128x128xf32>
    %221 = arith.addf %122, %136 : vector<128x128xf32>
    %222 = arith.addf %150, %164 : vector<128x128xf32>
    %223 = arith.addf %178, %192 : vector<128x128xf32>
    %224 = arith.addf %206, %220 : vector<128x128xf32>
    %225 = arith.addf %221, %222 : vector<128x128xf32>
    %226 = arith.addf %223, %224 : vector<128x128xf32>
    %227 = arith.addf %225, %226 : vector<128x128xf32>
    %228 = arith.truncf %117 : vector<128x128xf32> to vector<128x128xbf16>
    %c0_68 = arith.constant 0 : index
    %c0_69 = arith.constant 0 : index
    %229 = vector.load %arg7[%c0_68, %c0_69] : memref<128x128xbf16, #tpu.memory_space<vmem>>, vector<128x128xbf16>
    %cst_70 = arith.constant dense<0.000000e+00> : vector<128x128xf32>
    %230 = tpu.matmul %228, %229, %cst_70 {dimension_numbers = #tpu.dot_dimension_numbers<[1], [0], [0], [1], [0, 0, 1, 1], [], []>} : vector<128x128xbf16>, vector<128x128xbf16>, vector<128x128xf32> -> vector<128x128xf32>
    %231 = arith.truncf %227 : vector<128x128xf32> to vector<128x128xbf16>
    %c0_71 = arith.constant 0 : index
    %c0_72 = arith.constant 0 : index
    %232 = vector.load %arg8[%c0_71, %c0_72] : memref<128x128xbf16, #tpu.memory_space<vmem>>, vector<128x128xbf16>
    %cst_73 = arith.constant dense<0.000000e+00> : vector<128x128xf32>
    %233 = tpu.matmul %231, %232, %cst_73 {dimension_numbers = #tpu.dot_dimension_numbers<[1], [0], [0], [1], [0, 0, 1, 1], [], []>} : vector<128x128xbf16>, vector<128x128xbf16>, vector<128x128xf32> -> vector<128x128xf32>
    %c0_74 = arith.constant 0 : index
    %c0_75 = arith.constant 0 : index
    %234 = vector.load %arg9[%c0_74, %c0_75] : memref<128x128xbf16, #tpu.memory_space<vmem>>, vector<128x128xbf16>
    %cst_76 = arith.constant dense<0.000000e+00> : vector<128x128xf32>
    %235 = tpu.matmul %1, %234, %cst_76 {dimension_numbers = #tpu.dot_dimension_numbers<[1], [0], [0], [1], [0, 0, 1, 1], [], []>} : vector<128x128xbf16>, vector<128x128xbf16>, vector<128x128xf32> -> vector<128x128xf32>
    %236 = vector.broadcast %4 : vector<128x1xi32> to vector<128x128xi32>
    %237 = vector.broadcast %3 : vector<1x128xi32> to vector<128x128xi32>
    %238 = arith.cmpi eq, %236, %237 : vector<128x128xi32>
    %cst_77 = arith.constant 0.000000e+00 : f32
    %239 = vector.broadcast %cst_77 : f32 to vector<128x128xf32>
    %240 = arith.select %238, %230, %239 : vector<128x128xi1>, vector<128x128xf32>
    %c16_i32_78 = arith.constant 16 : i32
    %241 = tpu.dynamic_rotate %230 by %c16_i32_78 dim 1 : vector<128x128xf32>, i32 -> vector<128x128xf32>
    %c16_i32_79 = arith.constant 16 : i32
    %242 = tpu.dynamic_rotate %3 by %c16_i32_79 dim 1 : vector<1x128xi32>, i32 -> vector<1x128xi32>
    %c120_i32_80 = arith.constant 120 : i32
    %243 = tpu.dynamic_rotate %241 by %c120_i32_80 dim 0 : vector<128x128xf32>, i32 -> vector<128x128xf32>
    %c56_i32_81 = arith.constant 56 : i32
    %244 = tpu.dynamic_rotate %241 by %c56_i32_81 dim 0 : vector<128x128xf32>, i32 -> vector<128x128xf32>
    %c120_i32_82 = arith.constant 120 : i32
    %245 = tpu.dynamic_rotate %5 by %c120_i32_82 dim 0 : vector<128x1xi32>, i32 -> vector<128x1xi32>
    %246 = arith.cmpi eq, %245, %5 : vector<128x1xi32>
    %247 = vector.shape_cast %246 : vector<128x1xi1> to vector<128x1xi1>
    %248 = vector.broadcast %247 : vector<128x1xi1> to vector<128x128xi1>
    %249 = arith.select %248, %243, %244 : vector<128x128xi1>, vector<128x128xf32>
    %250 = vector.broadcast %4 : vector<128x1xi32> to vector<128x128xi32>
    %251 = vector.broadcast %242 : vector<1x128xi32> to vector<128x128xi32>
    %252 = arith.cmpi eq, %250, %251 : vector<128x128xi32>
    %cst_83 = arith.constant 0.000000e+00 : f32
    %253 = vector.broadcast %cst_83 : f32 to vector<128x128xf32>
    %254 = arith.select %252, %249, %253 : vector<128x128xi1>, vector<128x128xf32>
    %c32_i32_84 = arith.constant 32 : i32
    %255 = tpu.dynamic_rotate %230 by %c32_i32_84 dim 1 : vector<128x128xf32>, i32 -> vector<128x128xf32>
    %c32_i32_85 = arith.constant 32 : i32
    %256 = tpu.dynamic_rotate %3 by %c32_i32_85 dim 1 : vector<1x128xi32>, i32 -> vector<1x128xi32>
    %c112_i32_86 = arith.constant 112 : i32
    %257 = tpu.dynamic_rotate %255 by %c112_i32_86 dim 0 : vector<128x128xf32>, i32 -> vector<128x128xf32>
    %c48_i32_87 = arith.constant 48 : i32
    %258 = tpu.dynamic_rotate %255 by %c48_i32_87 dim 0 : vector<128x128xf32>, i32 -> vector<128x128xf32>
    %c112_i32_88 = arith.constant 112 : i32
    %259 = tpu.dynamic_rotate %5 by %c112_i32_88 dim 0 : vector<128x1xi32>, i32 -> vector<128x1xi32>
    %260 = arith.cmpi eq, %259, %5 : vector<128x1xi32>
    %261 = vector.shape_cast %260 : vector<128x1xi1> to vector<128x1xi1>
    %262 = vector.broadcast %261 : vector<128x1xi1> to vector<128x128xi1>
    %263 = arith.select %262, %257, %258 : vector<128x128xi1>, vector<128x128xf32>
    %264 = vector.broadcast %4 : vector<128x1xi32> to vector<128x128xi32>
    %265 = vector.broadcast %256 : vector<1x128xi32> to vector<128x128xi32>
    %266 = arith.cmpi eq, %264, %265 : vector<128x128xi32>
    %cst_89 = arith.constant 0.000000e+00 : f32
    %267 = vector.broadcast %cst_89 : f32 to vector<128x128xf32>
    %268 = arith.select %266, %263, %267 : vector<128x128xi1>, vector<128x128xf32>
    %c48_i32_90 = arith.constant 48 : i32
    %269 = tpu.dynamic_rotate %230 by %c48_i32_90 dim 1 : vector<128x128xf32>, i32 -> vector<128x128xf32>
    %c48_i32_91 = arith.constant 48 : i32
    %270 = tpu.dynamic_rotate %3 by %c48_i32_91 dim 1 : vector<1x128xi32>, i32 -> vector<1x128xi32>
    %c104_i32_92 = arith.constant 104 : i32
    %271 = tpu.dynamic_rotate %269 by %c104_i32_92 dim 0 : vector<128x128xf32>, i32 -> vector<128x128xf32>
    %c40_i32_93 = arith.constant 40 : i32
    %272 = tpu.dynamic_rotate %269 by %c40_i32_93 dim 0 : vector<128x128xf32>, i32 -> vector<128x128xf32>
    %c104_i32_94 = arith.constant 104 : i32
    %273 = tpu.dynamic_rotate %5 by %c104_i32_94 dim 0 : vector<128x1xi32>, i32 -> vector<128x1xi32>
    %274 = arith.cmpi eq, %273, %5 : vector<128x1xi32>
    %275 = vector.shape_cast %274 : vector<128x1xi1> to vector<128x1xi1>
    %276 = vector.broadcast %275 : vector<128x1xi1> to vector<128x128xi1>
    %277 = arith.select %276, %271, %272 : vector<128x128xi1>, vector<128x128xf32>
    %278 = vector.broadcast %4 : vector<128x1xi32> to vector<128x128xi32>
    %279 = vector.broadcast %270 : vector<1x128xi32> to vector<128x128xi32>
    %280 = arith.cmpi eq, %278, %279 : vector<128x128xi32>
    %cst_95 = arith.constant 0.000000e+00 : f32
    %281 = vector.broadcast %cst_95 : f32 to vector<128x128xf32>
    %282 = arith.select %280, %277, %281 : vector<128x128xi1>, vector<128x128xf32>
    %c64_i32_96 = arith.constant 64 : i32
    %283 = tpu.dynamic_rotate %230 by %c64_i32_96 dim 1 : vector<128x128xf32>, i32 -> vector<128x128xf32>
    %c64_i32_97 = arith.constant 64 : i32
    %284 = tpu.dynamic_rotate %3 by %c64_i32_97 dim 1 : vector<1x128xi32>, i32 -> vector<1x128xi32>
    %c96_i32_98 = arith.constant 96 : i32
    %285 = tpu.dynamic_rotate %283 by %c96_i32_98 dim 0 : vector<128x128xf32>, i32 -> vector<128x128xf32>
    %c32_i32_99 = arith.constant 32 : i32
    %286 = tpu.dynamic_rotate %283 by %c32_i32_99 dim 0 : vector<128x128xf32>, i32 -> vector<128x128xf32>
    %c96_i32_100 = arith.constant 96 : i32
    %287 = tpu.dynamic_rotate %5 by %c96_i32_100 dim 0 : vector<128x1xi32>, i32 -> vector<128x1xi32>
    %288 = arith.cmpi eq, %287, %5 : vector<128x1xi32>
    %289 = vector.shape_cast %288 : vector<128x1xi1> to vector<128x1xi1>
    %290 = vector.broadcast %289 : vector<128x1xi1> to vector<128x128xi1>
    %291 = arith.select %290, %285, %286 : vector<128x128xi1>, vector<128x128xf32>
    %292 = vector.broadcast %4 : vector<128x1xi32> to vector<128x128xi32>
    %293 = vector.broadcast %284 : vector<1x128xi32> to vector<128x128xi32>
    %294 = arith.cmpi eq, %292, %293 : vector<128x128xi32>
    %cst_101 = arith.constant 0.000000e+00 : f32
    %295 = vector.broadcast %cst_101 : f32 to vector<128x128xf32>
    %296 = arith.select %294, %291, %295 : vector<128x128xi1>, vector<128x128xf32>
    %c80_i32_102 = arith.constant 80 : i32
    %297 = tpu.dynamic_rotate %230 by %c80_i32_102 dim 1 : vector<128x128xf32>, i32 -> vector<128x128xf32>
    %c80_i32_103 = arith.constant 80 : i32
    %298 = tpu.dynamic_rotate %3 by %c80_i32_103 dim 1 : vector<1x128xi32>, i32 -> vector<1x128xi32>
    %c88_i32_104 = arith.constant 88 : i32
    %299 = tpu.dynamic_rotate %297 by %c88_i32_104 dim 0 : vector<128x128xf32>, i32 -> vector<128x128xf32>
    %c24_i32_105 = arith.constant 24 : i32
    %300 = tpu.dynamic_rotate %297 by %c24_i32_105 dim 0 : vector<128x128xf32>, i32 -> vector<128x128xf32>
    %c88_i32_106 = arith.constant 88 : i32
    %301 = tpu.dynamic_rotate %5 by %c88_i32_106 dim 0 : vector<128x1xi32>, i32 -> vector<128x1xi32>
    %302 = arith.cmpi eq, %301, %5 : vector<128x1xi32>
    %303 = vector.shape_cast %302 : vector<128x1xi1> to vector<128x1xi1>
    %304 = vector.broadcast %303 : vector<128x1xi1> to vector<128x128xi1>
    %305 = arith.select %304, %299, %300 : vector<128x128xi1>, vector<128x128xf32>
    %306 = vector.broadcast %4 : vector<128x1xi32> to vector<128x128xi32>
    %307 = vector.broadcast %298 : vector<1x128xi32> to vector<128x128xi32>
    %308 = arith.cmpi eq, %306, %307 : vector<128x128xi32>
    %cst_107 = arith.constant 0.000000e+00 : f32
    %309 = vector.broadcast %cst_107 : f32 to vector<128x128xf32>
    %310 = arith.select %308, %305, %309 : vector<128x128xi1>, vector<128x128xf32>
    %c96_i32_108 = arith.constant 96 : i32
    %311 = tpu.dynamic_rotate %230 by %c96_i32_108 dim 1 : vector<128x128xf32>, i32 -> vector<128x128xf32>
    %c96_i32_109 = arith.constant 96 : i32
    %312 = tpu.dynamic_rotate %3 by %c96_i32_109 dim 1 : vector<1x128xi32>, i32 -> vector<1x128xi32>
    %c80_i32_110 = arith.constant 80 : i32
    %313 = tpu.dynamic_rotate %311 by %c80_i32_110 dim 0 : vector<128x128xf32>, i32 -> vector<128x128xf32>
    %c16_i32_111 = arith.constant 16 : i32
    %314 = tpu.dynamic_rotate %311 by %c16_i32_111 dim 0 : vector<128x128xf32>, i32 -> vector<128x128xf32>
    %c80_i32_112 = arith.constant 80 : i32
    %315 = tpu.dynamic_rotate %5 by %c80_i32_112 dim 0 : vector<128x1xi32>, i32 -> vector<128x1xi32>
    %316 = arith.cmpi eq, %315, %5 : vector<128x1xi32>
    %317 = vector.shape_cast %316 : vector<128x1xi1> to vector<128x1xi1>
    %318 = vector.broadcast %317 : vector<128x1xi1> to vector<128x128xi1>
    %319 = arith.select %318, %313, %314 : vector<128x128xi1>, vector<128x128xf32>
    %320 = vector.broadcast %4 : vector<128x1xi32> to vector<128x128xi32>
    %321 = vector.broadcast %312 : vector<1x128xi32> to vector<128x128xi32>
    %322 = arith.cmpi eq, %320, %321 : vector<128x128xi32>
    %cst_113 = arith.constant 0.000000e+00 : f32
    %323 = vector.broadcast %cst_113 : f32 to vector<128x128xf32>
    %324 = arith.select %322, %319, %323 : vector<128x128xi1>, vector<128x128xf32>
    %c112_i32_114 = arith.constant 112 : i32
    %325 = tpu.dynamic_rotate %230 by %c112_i32_114 dim 1 : vector<128x128xf32>, i32 -> vector<128x128xf32>
    %c112_i32_115 = arith.constant 112 : i32
    %326 = tpu.dynamic_rotate %3 by %c112_i32_115 dim 1 : vector<1x128xi32>, i32 -> vector<1x128xi32>
    %c72_i32_116 = arith.constant 72 : i32
    %327 = tpu.dynamic_rotate %325 by %c72_i32_116 dim 0 : vector<128x128xf32>, i32 -> vector<128x128xf32>
    %c8_i32_117 = arith.constant 8 : i32
    %328 = tpu.dynamic_rotate %325 by %c8_i32_117 dim 0 : vector<128x128xf32>, i32 -> vector<128x128xf32>
    %c72_i32_118 = arith.constant 72 : i32
    %329 = tpu.dynamic_rotate %5 by %c72_i32_118 dim 0 : vector<128x1xi32>, i32 -> vector<128x1xi32>
    %330 = arith.cmpi eq, %329, %5 : vector<128x1xi32>
    %331 = vector.shape_cast %330 : vector<128x1xi1> to vector<128x1xi1>
    %332 = vector.broadcast %331 : vector<128x1xi1> to vector<128x128xi1>
    %333 = arith.select %332, %327, %328 : vector<128x128xi1>, vector<128x128xf32>
    %334 = vector.broadcast %4 : vector<128x1xi32> to vector<128x128xi32>
    %335 = vector.broadcast %326 : vector<1x128xi32> to vector<128x128xi32>
    %336 = arith.cmpi eq, %334, %335 : vector<128x128xi32>
    %cst_119 = arith.constant 0.000000e+00 : f32
    %337 = vector.broadcast %cst_119 : f32 to vector<128x128xf32>
    %338 = arith.select %336, %333, %337 : vector<128x128xi1>, vector<128x128xf32>
    %339 = arith.addf %240, %254 : vector<128x128xf32>
    %340 = arith.addf %268, %282 : vector<128x128xf32>
    %341 = arith.addf %296, %310 : vector<128x128xf32>
    %342 = arith.addf %324, %338 : vector<128x128xf32>
    %343 = arith.addf %339, %340 : vector<128x128xf32>
    %344 = arith.addf %341, %342 : vector<128x128xf32>
    %345 = arith.addf %343, %344 : vector<128x128xf32>
    %346 = vector.broadcast %6 : vector<128x1xi32> to vector<128x128xi32>
    %347 = vector.broadcast %3 : vector<1x128xi32> to vector<128x128xi32>
    %348 = arith.cmpi eq, %346, %347 : vector<128x128xi32>
    %cst_120 = arith.constant 0.000000e+00 : f32
    %349 = vector.broadcast %cst_120 : f32 to vector<128x128xf32>
    %350 = arith.select %348, %233, %349 : vector<128x128xi1>, vector<128x128xf32>
    %c16_i32_121 = arith.constant 16 : i32
    %351 = tpu.dynamic_rotate %233 by %c16_i32_121 dim 1 : vector<128x128xf32>, i32 -> vector<128x128xf32>
    %c16_i32_122 = arith.constant 16 : i32
    %352 = tpu.dynamic_rotate %3 by %c16_i32_122 dim 1 : vector<1x128xi32>, i32 -> vector<1x128xi32>
    %c127_i32_123 = arith.constant 127 : i32
    %353 = tpu.dynamic_rotate %351 by %c127_i32_123 dim 0 : vector<128x128xf32>, i32 -> vector<128x128xf32>
    %c7_i32_124 = arith.constant 7 : i32
    %354 = tpu.dynamic_rotate %351 by %c7_i32_124 dim 0 : vector<128x128xf32>, i32 -> vector<128x128xf32>
    %c127_i32_125 = arith.constant 127 : i32
    %355 = tpu.dynamic_rotate %7 by %c127_i32_125 dim 0 : vector<128x1xi32>, i32 -> vector<128x1xi32>
    %356 = arith.cmpi eq, %355, %7 : vector<128x1xi32>
    %357 = vector.shape_cast %356 : vector<128x1xi1> to vector<128x1xi1>
    %358 = vector.broadcast %357 : vector<128x1xi1> to vector<128x128xi1>
    %359 = arith.select %358, %353, %354 : vector<128x128xi1>, vector<128x128xf32>
    %360 = vector.broadcast %6 : vector<128x1xi32> to vector<128x128xi32>
    %361 = vector.broadcast %352 : vector<1x128xi32> to vector<128x128xi32>
    %362 = arith.cmpi eq, %360, %361 : vector<128x128xi32>
    %cst_126 = arith.constant 0.000000e+00 : f32
    %363 = vector.broadcast %cst_126 : f32 to vector<128x128xf32>
    %364 = arith.select %362, %359, %363 : vector<128x128xi1>, vector<128x128xf32>
    %c32_i32_127 = arith.constant 32 : i32
    %365 = tpu.dynamic_rotate %233 by %c32_i32_127 dim 1 : vector<128x128xf32>, i32 -> vector<128x128xf32>
    %c32_i32_128 = arith.constant 32 : i32
    %366 = tpu.dynamic_rotate %3 by %c32_i32_128 dim 1 : vector<1x128xi32>, i32 -> vector<1x128xi32>
    %c126_i32_129 = arith.constant 126 : i32
    %367 = tpu.dynamic_rotate %365 by %c126_i32_129 dim 0 : vector<128x128xf32>, i32 -> vector<128x128xf32>
    %c6_i32_130 = arith.constant 6 : i32
    %368 = tpu.dynamic_rotate %365 by %c6_i32_130 dim 0 : vector<128x128xf32>, i32 -> vector<128x128xf32>
    %c126_i32_131 = arith.constant 126 : i32
    %369 = tpu.dynamic_rotate %7 by %c126_i32_131 dim 0 : vector<128x1xi32>, i32 -> vector<128x1xi32>
    %370 = arith.cmpi eq, %369, %7 : vector<128x1xi32>
    %371 = vector.shape_cast %370 : vector<128x1xi1> to vector<128x1xi1>
    %372 = vector.broadcast %371 : vector<128x1xi1> to vector<128x128xi1>
    %373 = arith.select %372, %367, %368 : vector<128x128xi1>, vector<128x128xf32>
    %374 = vector.broadcast %6 : vector<128x1xi32> to vector<128x128xi32>
    %375 = vector.broadcast %366 : vector<1x128xi32> to vector<128x128xi32>
    %376 = arith.cmpi eq, %374, %375 : vector<128x128xi32>
    %cst_132 = arith.constant 0.000000e+00 : f32
    %377 = vector.broadcast %cst_132 : f32 to vector<128x128xf32>
    %378 = arith.select %376, %373, %377 : vector<128x128xi1>, vector<128x128xf32>
    %c48_i32_133 = arith.constant 48 : i32
    %379 = tpu.dynamic_rotate %233 by %c48_i32_133 dim 1 : vector<128x128xf32>, i32 -> vector<128x128xf32>
    %c48_i32_134 = arith.constant 48 : i32
    %380 = tpu.dynamic_rotate %3 by %c48_i32_134 dim 1 : vector<1x128xi32>, i32 -> vector<1x128xi32>
    %c125_i32_135 = arith.constant 125 : i32
    %381 = tpu.dynamic_rotate %379 by %c125_i32_135 dim 0 : vector<128x128xf32>, i32 -> vector<128x128xf32>
    %c5_i32_136 = arith.constant 5 : i32
    %382 = tpu.dynamic_rotate %379 by %c5_i32_136 dim 0 : vector<128x128xf32>, i32 -> vector<128x128xf32>
    %c125_i32_137 = arith.constant 125 : i32
    %383 = tpu.dynamic_rotate %7 by %c125_i32_137 dim 0 : vector<128x1xi32>, i32 -> vector<128x1xi32>
    %384 = arith.cmpi eq, %383, %7 : vector<128x1xi32>
    %385 = vector.shape_cast %384 : vector<128x1xi1> to vector<128x1xi1>
    %386 = vector.broadcast %385 : vector<128x1xi1> to vector<128x128xi1>
    %387 = arith.select %386, %381, %382 : vector<128x128xi1>, vector<128x128xf32>
    %388 = vector.broadcast %6 : vector<128x1xi32> to vector<128x128xi32>
    %389 = vector.broadcast %380 : vector<1x128xi32> to vector<128x128xi32>
    %390 = arith.cmpi eq, %388, %389 : vector<128x128xi32>
    %cst_138 = arith.constant 0.000000e+00 : f32
    %391 = vector.broadcast %cst_138 : f32 to vector<128x128xf32>
    %392 = arith.select %390, %387, %391 : vector<128x128xi1>, vector<128x128xf32>
    %c64_i32_139 = arith.constant 64 : i32
    %393 = tpu.dynamic_rotate %233 by %c64_i32_139 dim 1 : vector<128x128xf32>, i32 -> vector<128x128xf32>
    %c64_i32_140 = arith.constant 64 : i32
    %394 = tpu.dynamic_rotate %3 by %c64_i32_140 dim 1 : vector<1x128xi32>, i32 -> vector<1x128xi32>
    %c124_i32_141 = arith.constant 124 : i32
    %395 = tpu.dynamic_rotate %393 by %c124_i32_141 dim 0 : vector<128x128xf32>, i32 -> vector<128x128xf32>
    %c4_i32_142 = arith.constant 4 : i32
    %396 = tpu.dynamic_rotate %393 by %c4_i32_142 dim 0 : vector<128x128xf32>, i32 -> vector<128x128xf32>
    %c124_i32_143 = arith.constant 124 : i32
    %397 = tpu.dynamic_rotate %7 by %c124_i32_143 dim 0 : vector<128x1xi32>, i32 -> vector<128x1xi32>
    %398 = arith.cmpi eq, %397, %7 : vector<128x1xi32>
    %399 = vector.shape_cast %398 : vector<128x1xi1> to vector<128x1xi1>
    %400 = vector.broadcast %399 : vector<128x1xi1> to vector<128x128xi1>
    %401 = arith.select %400, %395, %396 : vector<128x128xi1>, vector<128x128xf32>
    %402 = vector.broadcast %6 : vector<128x1xi32> to vector<128x128xi32>
    %403 = vector.broadcast %394 : vector<1x128xi32> to vector<128x128xi32>
    %404 = arith.cmpi eq, %402, %403 : vector<128x128xi32>
    %cst_144 = arith.constant 0.000000e+00 : f32
    %405 = vector.broadcast %cst_144 : f32 to vector<128x128xf32>
    %406 = arith.select %404, %401, %405 : vector<128x128xi1>, vector<128x128xf32>
    %c80_i32_145 = arith.constant 80 : i32
    %407 = tpu.dynamic_rotate %233 by %c80_i32_145 dim 1 : vector<128x128xf32>, i32 -> vector<128x128xf32>
    %c80_i32_146 = arith.constant 80 : i32
    %408 = tpu.dynamic_rotate %3 by %c80_i32_146 dim 1 : vector<1x128xi32>, i32 -> vector<1x128xi32>
    %c123_i32_147 = arith.constant 123 : i32
    %409 = tpu.dynamic_rotate %407 by %c123_i32_147 dim 0 : vector<128x128xf32>, i32 -> vector<128x128xf32>
    %c3_i32_148 = arith.constant 3 : i32
    %410 = tpu.dynamic_rotate %407 by %c3_i32_148 dim 0 : vector<128x128xf32>, i32 -> vector<128x128xf32>
    %c123_i32_149 = arith.constant 123 : i32
    %411 = tpu.dynamic_rotate %7 by %c123_i32_149 dim 0 : vector<128x1xi32>, i32 -> vector<128x1xi32>
    %412 = arith.cmpi eq, %411, %7 : vector<128x1xi32>
    %413 = vector.shape_cast %412 : vector<128x1xi1> to vector<128x1xi1>
    %414 = vector.broadcast %413 : vector<128x1xi1> to vector<128x128xi1>
    %415 = arith.select %414, %409, %410 : vector<128x128xi1>, vector<128x128xf32>
    %416 = vector.broadcast %6 : vector<128x1xi32> to vector<128x128xi32>
    %417 = vector.broadcast %408 : vector<1x128xi32> to vector<128x128xi32>
    %418 = arith.cmpi eq, %416, %417 : vector<128x128xi32>
    %cst_150 = arith.constant 0.000000e+00 : f32
    %419 = vector.broadcast %cst_150 : f32 to vector<128x128xf32>
    %420 = arith.select %418, %415, %419 : vector<128x128xi1>, vector<128x128xf32>
    %c96_i32_151 = arith.constant 96 : i32
    %421 = tpu.dynamic_rotate %233 by %c96_i32_151 dim 1 : vector<128x128xf32>, i32 -> vector<128x128xf32>
    %c96_i32_152 = arith.constant 96 : i32
    %422 = tpu.dynamic_rotate %3 by %c96_i32_152 dim 1 : vector<1x128xi32>, i32 -> vector<1x128xi32>
    %c122_i32_153 = arith.constant 122 : i32
    %423 = tpu.dynamic_rotate %421 by %c122_i32_153 dim 0 : vector<128x128xf32>, i32 -> vector<128x128xf32>
    %c2_i32_154 = arith.constant 2 : i32
    %424 = tpu.dynamic_rotate %421 by %c2_i32_154 dim 0 : vector<128x128xf32>, i32 -> vector<128x128xf32>
    %c122_i32_155 = arith.constant 122 : i32
    %425 = tpu.dynamic_rotate %7 by %c122_i32_155 dim 0 : vector<128x1xi32>, i32 -> vector<128x1xi32>
    %426 = arith.cmpi eq, %425, %7 : vector<128x1xi32>
    %427 = vector.shape_cast %426 : vector<128x1xi1> to vector<128x1xi1>
    %428 = vector.broadcast %427 : vector<128x1xi1> to vector<128x128xi1>
    %429 = arith.select %428, %423, %424 : vector<128x128xi1>, vector<128x128xf32>
    %430 = vector.broadcast %6 : vector<128x1xi32> to vector<128x128xi32>
    %431 = vector.broadcast %422 : vector<1x128xi32> to vector<128x128xi32>
    %432 = arith.cmpi eq, %430, %431 : vector<128x128xi32>
    %cst_156 = arith.constant 0.000000e+00 : f32
    %433 = vector.broadcast %cst_156 : f32 to vector<128x128xf32>
    %434 = arith.select %432, %429, %433 : vector<128x128xi1>, vector<128x128xf32>
    %c112_i32_157 = arith.constant 112 : i32
    %435 = tpu.dynamic_rotate %233 by %c112_i32_157 dim 1 : vector<128x128xf32>, i32 -> vector<128x128xf32>
    %c112_i32_158 = arith.constant 112 : i32
    %436 = tpu.dynamic_rotate %3 by %c112_i32_158 dim 1 : vector<1x128xi32>, i32 -> vector<1x128xi32>
    %c121_i32_159 = arith.constant 121 : i32
    %437 = tpu.dynamic_rotate %435 by %c121_i32_159 dim 0 : vector<128x128xf32>, i32 -> vector<128x128xf32>
    %c1_i32_160 = arith.constant 1 : i32
    %438 = tpu.dynamic_rotate %435 by %c1_i32_160 dim 0 : vector<128x128xf32>, i32 -> vector<128x128xf32>
    %c121_i32_161 = arith.constant 121 : i32
    %439 = tpu.dynamic_rotate %7 by %c121_i32_161 dim 0 : vector<128x1xi32>, i32 -> vector<128x1xi32>
    %440 = arith.cmpi eq, %439, %7 : vector<128x1xi32>
    %441 = vector.shape_cast %440 : vector<128x1xi1> to vector<128x1xi1>
    %442 = vector.broadcast %441 : vector<128x1xi1> to vector<128x128xi1>
    %443 = arith.select %442, %437, %438 : vector<128x128xi1>, vector<128x128xf32>
    %444 = vector.broadcast %6 : vector<128x1xi32> to vector<128x128xi32>
    %445 = vector.broadcast %436 : vector<1x128xi32> to vector<128x128xi32>
    %446 = arith.cmpi eq, %444, %445 : vector<128x128xi32>
    %cst_162 = arith.constant 0.000000e+00 : f32
    %447 = vector.broadcast %cst_162 : f32 to vector<128x128xf32>
    %448 = arith.select %446, %443, %447 : vector<128x128xi1>, vector<128x128xf32>
    %449 = arith.addf %350, %364 : vector<128x128xf32>
    %450 = arith.addf %378, %392 : vector<128x128xf32>
    %451 = arith.addf %406, %420 : vector<128x128xf32>
    %452 = arith.addf %434, %448 : vector<128x128xf32>
    %453 = arith.addf %449, %450 : vector<128x128xf32>
    %454 = arith.addf %451, %452 : vector<128x128xf32>
    %455 = arith.addf %453, %454 : vector<128x128xf32>
    %456 = vector.extract_strided_slice %345 {offsets = [0, 0], sizes = [64, 128], strides = [1, 1]} : vector<128x128xf32> to vector<64x128xf32>
    %457 = vector.extract_strided_slice %455 {offsets = [0, 0], sizes = [64, 128], strides = [1, 1]} : vector<128x128xf32> to vector<64x128xf32>
    %458 = arith.addf %456, %457 : vector<64x128xf32>
    %459 = vector.extract_strided_slice %235 {offsets = [0, 0], sizes = [64, 128], strides = [1, 1]} : vector<128x128xf32> to vector<64x128xf32>
    %460 = arith.addf %458, %459 : vector<64x128xf32>
    %cst_163 = arith.constant dense<0.000000e+00> : vector<128xf32>
    %461 = vector.multi_reduction <add>, %460, %cst_163 [0] : vector<64x128xf32> to vector<128xf32>
    %462 = vector.shape_cast %461 : vector<128xf32> to vector<1x128xf32>
    %cst_164 = arith.constant 6.400000e+01 : f32
    %463 = vector.broadcast %cst_164 : f32 to vector<1x128xf32>
    %464 = arith.divf %462, %463 : vector<1x128xf32>
    %465 = vector.extract_strided_slice %345 {offsets = [64, 0], sizes = [64, 128], strides = [1, 1]} : vector<128x128xf32> to vector<64x128xf32>
    %466 = vector.extract_strided_slice %455 {offsets = [64, 0], sizes = [64, 128], strides = [1, 1]} : vector<128x128xf32> to vector<64x128xf32>
    %467 = arith.addf %465, %466 : vector<64x128xf32>
    %468 = vector.extract_strided_slice %235 {offsets = [64, 0], sizes = [64, 128], strides = [1, 1]} : vector<128x128xf32> to vector<64x128xf32>
    %469 = arith.addf %467, %468 : vector<64x128xf32>
    %cst_165 = arith.constant dense<0.000000e+00> : vector<128xf32>
    %470 = vector.multi_reduction <add>, %469, %cst_165 [0] : vector<64x128xf32> to vector<128xf32>
    %471 = vector.shape_cast %470 : vector<128xf32> to vector<1x128xf32>
    %cst_166 = arith.constant 6.400000e+01 : f32
    %472 = vector.broadcast %cst_166 : f32 to vector<1x128xf32>
    %473 = arith.divf %471, %472 : vector<1x128xf32>
    %474 = tpu.concatenate %464, %473 in 0 : vector<1x128xf32>, vector<1x128xf32> -> vector<2x128xf32>
    %475 = arith.truncf %474 : vector<2x128xf32> to vector<2x128xbf16>
    %c0_167 = arith.constant 0 : index
    %c0_168 = arith.constant 0 : index
    %476 = vector.load %arg10[%c0_167, %c0_168] : memref<128x32xbf16, #tpu.memory_space<vmem>>, vector<128x32xbf16>
    %cst_169 = arith.constant dense<0.000000e+00> : vector<2x32xf32>
    %477 = tpu.matmul %475, %476, %cst_169 {dimension_numbers = #tpu.dot_dimension_numbers<[1], [0], [0], [1], [0, 0, 1, 1], [], []>} : vector<2x128xbf16>, vector<128x32xbf16>, vector<2x32xf32> -> vector<2x32xf32>
    %c0_170 = arith.constant 0 : index
    %c0_171 = arith.constant 0 : index
    %478 = vector.load %arg11[%c0_170, %c0_171] : memref<1x32xf32, #tpu.memory_space<vmem>>, vector<1x32xf32>
    %479 = vector.broadcast %478 : vector<1x32xf32> to vector<2x32xf32>
    %480 = arith.addf %477, %479 : vector<2x32xf32>
    %cst_172 = arith.constant 0.000000e+00 : f32
    %481 = vector.broadcast %cst_172 : f32 to vector<2x32xf32>
    %482 = arith.maximumf %480, %481 : vector<2x32xf32>
    %483 = arith.truncf %482 : vector<2x32xf32> to vector<2x32xbf16>
    %c0_173 = arith.constant 0 : index
    %c0_174 = arith.constant 0 : index
    %484 = vector.load %arg12[%c0_173, %c0_174] : memref<32x384xbf16, #tpu.memory_space<vmem>>, vector<32x384xbf16>
    %cst_175 = arith.constant dense<0.000000e+00> : vector<2x384xf32>
    %485 = tpu.matmul %483, %484, %cst_175 {dimension_numbers = #tpu.dot_dimension_numbers<[1], [0], [0], [1], [0, 0, 1, 1], [], []>} : vector<2x32xbf16>, vector<32x384xbf16>, vector<2x384xf32> -> vector<2x384xf32>
    %c0_176 = arith.constant 0 : index
    %c0_177 = arith.constant 0 : index
    %486 = vector.load %arg13[%c0_176, %c0_177] : memref<1x384xf32, #tpu.memory_space<vmem>>, vector<1x384xf32>
    %487 = vector.broadcast %486 : vector<1x384xf32> to vector<2x384xf32>
    %488 = arith.addf %485, %487 : vector<2x384xf32>
    %489 = vector.extract_strided_slice %488 {offsets = [0, 0], sizes = [2, 128], strides = [1, 1]} : vector<2x384xf32> to vector<2x128xf32>
    %490 = vector.extract_strided_slice %488 {offsets = [0, 128], sizes = [2, 128], strides = [1, 1]} : vector<2x384xf32> to vector<2x128xf32>
    %491 = vector.extract_strided_slice %488 {offsets = [0, 256], sizes = [2, 128], strides = [1, 1]} : vector<2x384xf32> to vector<2x128xf32>
    %492 = arith.maximumf %489, %490 : vector<2x128xf32>
    %493 = arith.maximumf %492, %491 : vector<2x128xf32>
    %494 = arith.subf %489, %493 : vector<2x128xf32>
    %495 = math.exp %494 : vector<2x128xf32>
    %496 = arith.subf %490, %493 : vector<2x128xf32>
    %497 = math.exp %496 : vector<2x128xf32>
    %498 = arith.subf %491, %493 : vector<2x128xf32>
    %499 = math.exp %498 : vector<2x128xf32>
    %500 = arith.addf %495, %497 : vector<2x128xf32>
    %501 = arith.addf %500, %499 : vector<2x128xf32>
    %502 = tpu.reciprocal %501 {approx = true} : vector<2x128xf32> -> vector<2x128xf32>
    %503 = arith.mulf %495, %502 : vector<2x128xf32>
    %504 = arith.mulf %497, %502 : vector<2x128xf32>
    %505 = arith.mulf %499, %502 : vector<2x128xf32>
    %506 = vector.extract_strided_slice %345 {offsets = [0, 0], sizes = [64, 128], strides = [1, 1]} : vector<128x128xf32> to vector<64x128xf32>
    %507 = vector.extract_strided_slice %503 {offsets = [0, 0], sizes = [1, 128], strides = [1, 1]} : vector<2x128xf32> to vector<1x128xf32>
    %508 = vector.broadcast %507 : vector<1x128xf32> to vector<64x128xf32>
    %509 = arith.mulf %506, %508 : vector<64x128xf32>
    %510 = vector.extract_strided_slice %455 {offsets = [0, 0], sizes = [64, 128], strides = [1, 1]} : vector<128x128xf32> to vector<64x128xf32>
    %511 = vector.extract_strided_slice %504 {offsets = [0, 0], sizes = [1, 128], strides = [1, 1]} : vector<2x128xf32> to vector<1x128xf32>
    %512 = vector.broadcast %511 : vector<1x128xf32> to vector<64x128xf32>
    %513 = arith.mulf %510, %512 : vector<64x128xf32>
    %514 = arith.addf %509, %513 : vector<64x128xf32>
    %515 = vector.extract_strided_slice %235 {offsets = [0, 0], sizes = [64, 128], strides = [1, 1]} : vector<128x128xf32> to vector<64x128xf32>
    %516 = vector.extract_strided_slice %505 {offsets = [0, 0], sizes = [1, 128], strides = [1, 1]} : vector<2x128xf32> to vector<1x128xf32>
    %517 = vector.broadcast %516 : vector<1x128xf32> to vector<64x128xf32>
    %518 = arith.mulf %515, %517 : vector<64x128xf32>
    %519 = arith.addf %514, %518 : vector<64x128xf32>
    %520 = vector.extract_strided_slice %345 {offsets = [64, 0], sizes = [64, 128], strides = [1, 1]} : vector<128x128xf32> to vector<64x128xf32>
    %521 = vector.extract_strided_slice %503 {offsets = [1, 0], sizes = [1, 128], strides = [1, 1]} : vector<2x128xf32> to vector<1x128xf32>
    %522 = vector.broadcast %521 : vector<1x128xf32> to vector<64x128xf32>
    %523 = arith.mulf %520, %522 : vector<64x128xf32>
    %524 = vector.extract_strided_slice %455 {offsets = [64, 0], sizes = [64, 128], strides = [1, 1]} : vector<128x128xf32> to vector<64x128xf32>
    %525 = vector.extract_strided_slice %504 {offsets = [1, 0], sizes = [1, 128], strides = [1, 1]} : vector<2x128xf32> to vector<1x128xf32>
    %526 = vector.broadcast %525 : vector<1x128xf32> to vector<64x128xf32>
    %527 = arith.mulf %524, %526 : vector<64x128xf32>
    %528 = arith.addf %523, %527 : vector<64x128xf32>
    %529 = vector.extract_strided_slice %235 {offsets = [64, 0], sizes = [64, 128], strides = [1, 1]} : vector<128x128xf32> to vector<64x128xf32>
    %530 = vector.extract_strided_slice %505 {offsets = [1, 0], sizes = [1, 128], strides = [1, 1]} : vector<2x128xf32> to vector<1x128xf32>
    %531 = vector.broadcast %530 : vector<1x128xf32> to vector<64x128xf32>
    %532 = arith.mulf %529, %531 : vector<64x128xf32>
    %533 = arith.addf %528, %532 : vector<64x128xf32>
    %534 = tpu.concatenate %519, %533 in 0 : vector<64x128xf32>, vector<64x128xf32> -> vector<128x128xf32>
    %535 = arith.truncf %534 : vector<128x128xf32> to vector<128x128xbf16>
    %c0_178 = arith.constant 0 : index
    %c0_179 = arith.constant 0 : index
    %536 = vector.load %arg14[%c0_178, %c0_179] : memref<128x128xbf16, #tpu.memory_space<vmem>>, vector<128x128xbf16>
    %cst_180 = arith.constant dense<0.000000e+00> : vector<128x128xf32>
    %537 = tpu.matmul %535, %536, %cst_180 {dimension_numbers = #tpu.dot_dimension_numbers<[1], [0], [0], [1], [0, 0, 1, 1], [], []>} : vector<128x128xbf16>, vector<128x128xbf16>, vector<128x128xf32> -> vector<128x128xf32>
    %c0_181 = arith.constant 0 : index
    %c0_182 = arith.constant 0 : index
    %538 = vector.load %arg15[%c0_181, %c0_182] : memref<1x128xf32, #tpu.memory_space<vmem>>, vector<1x128xf32>
    %539 = vector.broadcast %538 : vector<1x128xf32> to vector<128x128xf32>
    %540 = arith.addf %537, %539 : vector<128x128xf32>
    %541 = vector.shape_cast %540 : vector<128x128xf32> to vector<2x64x128xf32>
    %542 = arith.truncf %541 : vector<2x64x128xf32> to vector<2x64x128xbf16>
    %c0_183 = arith.constant 0 : index
    %c0_184 = arith.constant 0 : index
    %c0_185 = arith.constant 0 : index
    %543 = vector.load %arg16[%c0_183, %c0_184, %c0_185] : memref<2x64x128xbf16, #tpu.memory_space<vmem>>, vector<2x64x128xbf16>
    tpu.vector_store %arg16[%c0_183, %c0_184, %c0_185], %542 {strides = array<i32>} : memref<2x64x128xbf16, #tpu.memory_space<vmem>>, vector<2x64x128xbf16>,
    return
  }
  func.func @transform_0(%arg0: i32) -> (i32, i32, i32) {
    %c0_i32 = arith.constant 0 : i32
    %c0_i32_0 = arith.constant 0 : i32
    %c0_i32_1 = arith.constant 0 : i32
    return %arg0, %c0_i32, %c0_i32_0 : i32, i32, i32
  }
  func.func @transform_1(%arg0: i32) -> (i32, i32) {
    %c0_i32 = arith.constant 0 : i32
    %c0_i32_0 = arith.constant 0 : i32
    %c0_i32_1 = arith.constant 0 : i32
    return %c0_i32, %c0_i32_0 : i32, i32
  }
  func.func @transform_2(%arg0: i32) -> (i32, i32) {
    %c0_i32 = arith.constant 0 : i32
    %c0_i32_0 = arith.constant 0 : i32
    %c0_i32_1 = arith.constant 0 : i32
    return %c0_i32, %c0_i32_0 : i32, i32
  }
  func.func @transform_3(%arg0: i32) -> (i32, i32) {
    %c0_i32 = arith.constant 0 : i32
    %c0_i32_0 = arith.constant 0 : i32
    %c0_i32_1 = arith.constant 0 : i32
    return %c0_i32, %c0_i32_0 : i32, i32
  }
  func.func @transform_4(%arg0: i32) -> (i32, i32) {
    %c0_i32 = arith.constant 0 : i32
    %c0_i32_0 = arith.constant 0 : i32
    %c0_i32_1 = arith.constant 0 : i32
    return %c0_i32, %c0_i32_0 : i32, i32
  }
  func.func @transform_5(%arg0: i32) -> (i32, i32) {
    %c0_i32 = arith.constant 0 : i32
    %c0_i32_0 = arith.constant 0 : i32
    %c0_i32_1 = arith.constant 0 : i32
    return %c0_i32, %c0_i32_0 : i32, i32
  }
  func.func @transform_6(%arg0: i32) -> (i32, i32) {
    %c0_i32 = arith.constant 0 : i32
    %c0_i32_0 = arith.constant 0 : i32
    %c0_i32_1 = arith.constant 0 : i32
    return %c0_i32, %c0_i32_0 : i32, i32
  }
  func.func @transform_7(%arg0: i32) -> (i32, i32) {
    %c0_i32 = arith.constant 0 : i32
    %c0_i32_0 = arith.constant 0 : i32
    %c0_i32_1 = arith.constant 0 : i32
    return %c0_i32, %c0_i32_0 : i32, i32
  }
  func.func @transform_8(%arg0: i32) -> (i32, i32) {
    %c0_i32 = arith.constant 0 : i32
    %c0_i32_0 = arith.constant 0 : i32
    %c0_i32_1 = arith.constant 0 : i32
    return %c0_i32, %c0_i32_0 : i32, i32
  }
  func.func @transform_9(%arg0: i32) -> (i32, i32) {
    %c0_i32 = arith.constant 0 : i32
    %c0_i32_0 = arith.constant 0 : i32
    %c0_i32_1 = arith.constant 0 : i32
    return %c0_i32, %c0_i32_0 : i32, i32
  }
  func.func @transform_10(%arg0: i32) -> (i32, i32) {
    %c0_i32 = arith.constant 0 : i32
    %c0_i32_0 = arith.constant 0 : i32
    %c0_i32_1 = arith.constant 0 : i32
    return %c0_i32, %c0_i32_0 : i32, i32
  }
  func.func @transform_11(%arg0: i32) -> (i32, i32) {
    %c0_i32 = arith.constant 0 : i32
    %c0_i32_0 = arith.constant 0 : i32
    %c0_i32_1 = arith.constant 0 : i32
    return %c0_i32, %c0_i32_0 : i32, i32
  }
  func.func @transform_12(%arg0: i32) -> (i32, i32) {
    %c0_i32 = arith.constant 0 : i32
    %c0_i32_0 = arith.constant 0 : i32
    %c0_i32_1 = arith.constant 0 : i32
    return %c0_i32, %c0_i32_0 : i32, i32
  }
  func.func @transform_13(%arg0: i32) -> (i32, i32) {
    %c0_i32 = arith.constant 0 : i32
    %c0_i32_0 = arith.constant 0 : i32
    %c0_i32_1 = arith.constant 0 : i32
    return %c0_i32, %c0_i32_0 : i32, i32
  }
  func.func @transform_14(%arg0: i32) -> (i32, i32) {
    %c0_i32 = arith.constant 0 : i32
    %c0_i32_0 = arith.constant 0 : i32
    %c0_i32_1 = arith.constant 0 : i32
    return %c0_i32, %c0_i32_0 : i32, i32
  }
  func.func @transform_15(%arg0: i32) -> (i32, i32, i32) {
    %c0_i32 = arith.constant 0 : i32
    %c0_i32_0 = arith.constant 0 : i32
    %c0_i32_1 = arith.constant 0 : i32
    return %arg0, %c0_i32, %c0_i32_0 : i32, i32, i32
  }
}

</mosaic_0001>

<llo_original>
// kernel: tpu_custom_call.1
$region0: #{tpu_custom_call.1}
  #allocation0 [shape = 'u32[]', space=smem, size = 0x4, offset = 0x4, fixed_abs, tag = 'smem constant byte address 0x4 - core index']
  #allocation1 [shape = 'u32[144,128]{1,0:T(1,128)}', space=vmem, size = 0x12000, scoped, tag = 'internal scratch']
  %s0 = inlined_call_operand.vmem [shape: bf16[2,64,128], index: 0, kind: input, shape index: {}]
  %s1 = inlined_call_operand.vmem [shape: s32[1,128], index: 1, kind: input, shape index: {}]
  %s2 = inlined_call_operand.vmem [shape: s32[128,1], index: 2, kind: input, shape index: {}]
  %s3 = inlined_call_operand.vmem [shape: s32[128,1], index: 3, kind: input, shape index: {}]
  %s4 = inlined_call_operand.vmem [shape: s32[128,1], index: 4, kind: input, shape index: {}]
  %s5 = inlined_call_operand.vmem [shape: s32[128,1], index: 5, kind: input, shape index: {}]
  %s6 = inlined_call_operand.vmem [shape: bf16[128,128], index: 6, kind: input, shape index: {}]
  %s7 = inlined_call_operand.vmem [shape: bf16[128,128], index: 7, kind: input, shape index: {}]
  %s8 = inlined_call_operand.vmem [shape: bf16[128,128], index: 8, kind: input, shape index: {}]
  %s9 = inlined_call_operand.vmem [shape: bf16[128,32], index: 9, kind: input, shape index: {}]
  %s10 = inlined_call_operand.vmem [shape: f32[1,32], index: 10, kind: input, shape index: {}]
  %s11 = inlined_call_operand.vmem [shape: bf16[32,384], index: 11, kind: input, shape index: {}]
  %s12 = inlined_call_operand.vmem [shape: f32[1,384], index: 12, kind: input, shape index: {}]
  %s13 = inlined_call_operand.vmem [shape: bf16[128,128], index: 13, kind: input, shape index: {}]
  %s14 = inlined_call_operand.vmem [shape: f32[1,128], index: 14, kind: input, shape index: {}]
  %s15 = inlined_call_operand.hbm [shape: bf16[2,64,128], index: 15, kind: output, shape index: {}]
  %s16 = sld [smem:[#allocation0]]
  $region70: #{tpu_custom_call.1} parent=0
    _
  %s18 = ssub.s32 1, %s16
  %s19 = scalar_select 0, %s18, %s16
  $region1: #{tpu_custom_call.1} parent=0
    #allocation2 [shape = 'u8[32768]{0}', space=vmem, size = 0x8000, scoped, tag = 'output window, operand 0, single buffered']
    #allocation3 [shape = 's32[1]{0}', space=sflag, size = 0x4, scoped, tag = 'scoped memory for tpu_custom_call.1']
    %20 = vsyncpa [#allocation3], 0
    // Predicated region
    $region2: #{tpu_custom_call.1} parent=1 // pred_check
      _
    $region3: #{tpu_custom_call.1} parent=1 // pred_check_branch
      %22 = sbr.rel (0) target = $region5
    $region4: #{tpu_custom_call.1} parent=1 // pred_region
      _
    $region5: #{tpu_custom_call.1} parent=1 // pred_fallthru
      _
    // Predicated region
    $region6: #{tpu_custom_call.1} parent=1 // pred_check
      _
    $region7: #{tpu_custom_call.1} parent=1 // pred_check_branch
      %24 = sbr.rel (0) target = $region9
    $region8: #{tpu_custom_call.1} parent=1 // pred_region
      _
    $region9: #{tpu_custom_call.1} parent=1 // pred_fallthru
      _
    // Predicated region
    $region10: #{tpu_custom_call.1} parent=1 // pred_check
      _
    $region11: #{tpu_custom_call.1} parent=1 // pred_check_branch
      %26 = sbr.rel (0) target = $region13
    $region12: #{tpu_custom_call.1} parent=1 // pred_region
      _
    $region13: #{tpu_custom_call.1} parent=1 // pred_fallthru
      _
    // Predicated region
    $region14: #{tpu_custom_call.1} parent=1 // pred_check
      _
    $region15: #{tpu_custom_call.1} parent=1 // pred_check_branch
      %28 = sbr.rel (0) target = $region17
    $region16: #{tpu_custom_call.1} parent=1 // pred_region
      _
    $region17: #{tpu_custom_call.1} parent=1 // pred_fallthru
      _
    // Predicated region
    $region18: #{tpu_custom_call.1} parent=1 // pred_check
      _
    $region19: #{tpu_custom_call.1} parent=1 // pred_check_branch
      %30 = sbr.rel (0) target = $region21
    $region20: #{tpu_custom_call.1} parent=1 // pred_region
      _
    $region21: #{tpu_custom_call.1} parent=1 // pred_fallthru
      _
    // Predicated region
    $region22: #{tpu_custom_call.1} parent=1 // pred_check
      _
    $region23: #{tpu_custom_call.1} parent=1 // pred_check_branch
      %32 = sbr.rel (0) target = $region25
    $region24: #{tpu_custom_call.1} parent=1 // pred_region
      _
    $region25: #{tpu_custom_call.1} parent=1 // pred_fallthru
      _
    // Predicated region
    $region26: #{tpu_custom_call.1} parent=1 // pred_check
      _
    $region27: #{tpu_custom_call.1} parent=1 // pred_check_branch
      %34 = sbr.rel (0) target = $region29
    $region28: #{tpu_custom_call.1} parent=1 // pred_region
      _
    $region29: #{tpu_custom_call.1} parent=1 // pred_fallthru
      _
    // Predicated region
    $region30: #{tpu_custom_call.1} parent=1 // pred_check
      _
    $region31: #{tpu_custom_call.1} parent=1 // pred_check_branch
      %36 = sbr.rel (0) target = $region33
    $region32: #{tpu_custom_call.1} parent=1 // pred_region
      _
    $region33: #{tpu_custom_call.1} parent=1 // pred_fallthru
      _
    // Predicated region
    $region34: #{tpu_custom_call.1} parent=1 // pred_check
      _
    $region35: #{tpu_custom_call.1} parent=1 // pred_check_branch
      %38 = sbr.rel (0) target = $region37
    $region36: #{tpu_custom_call.1} parent=1 // pred_region
      _
    $region37: #{tpu_custom_call.1} parent=1 // pred_fallthru
      _
    // Predicated region
    $region38: #{tpu_custom_call.1} parent=1 // pred_check
      _
    $region39: #{tpu_custom_call.1} parent=1 // pred_check_branch
      %40 = sbr.rel (0) target = $region41
    $region40: #{tpu_custom_call.1} parent=1 // pred_region
      _
    $region41: #{tpu_custom_call.1} parent=1 // pred_fallthru
      _
    // Predicated region
    $region42: #{tpu_custom_call.1} parent=1 // pred_check
      _
    $region43: #{tpu_custom_call.1} parent=1 // pred_check_branch
      %42 = sbr.rel (0) target = $region45
    $region44: #{tpu_custom_call.1} parent=1 // pred_region
      _
    $region45: #{tpu_custom_call.1} parent=1 // pred_fallthru
      _
    // Predicated region
    $region46: #{tpu_custom_call.1} parent=1 // pred_check
      _
    $region47: #{tpu_custom_call.1} parent=1 // pred_check_branch
      %44 = sbr.rel (0) target = $region49
    $region48: #{tpu_custom_call.1} parent=1 // pred_region
      _
    $region49: #{tpu_custom_call.1} parent=1 // pred_fallthru
      _
    // Predicated region
    $region50: #{tpu_custom_call.1} parent=1 // pred_check
      _
    $region51: #{tpu_custom_call.1} parent=1 // pred_check_branch
      %46 = sbr.rel (0) target = $region53
    $region52: #{tpu_custom_call.1} parent=1 // pred_region
      _
    $region53: #{tpu_custom_call.1} parent=1 // pred_fallthru
      _
    // Predicated region
    $region54: #{tpu_custom_call.1} parent=1 // pred_check
      _
    $region55: #{tpu_custom_call.1} parent=1 // pred_check_branch
      %48 = sbr.rel (0) target = $region57
    $region56: #{tpu_custom_call.1} parent=1 // pred_region
      _
    $region57: #{tpu_custom_call.1} parent=1 // pred_fallthru
      _
    // Predicated region
    $region58: #{tpu_custom_call.1} parent=1 // pred_check
      _
    $region59: #{tpu_custom_call.1} parent=1 // pred_check_branch
      %50 = sbr.rel (0) target = $region61
    $region60: #{tpu_custom_call.1} parent=1 // pred_region
      _
    $region61: #{tpu_custom_call.1} parent=1 // pred_fallthru
      _
    %v52 = vld [vmem:[%s0] sm:$0xf]
    %v53 = vld [vmem:[%s0 + $0x4] sm:$0xf]
    %v54 = vld [vmem:[%s0 + $0x8] sm:$0xf]
    %v55 = vld [vmem:[%s0 + $0xc] sm:$0xf]
    %v56 = vld [vmem:[%s0 + $0x10] sm:$0xf]
    %v57 = vld [vmem:[%s0 + $0x14] sm:$0xf]
    %v58 = vld [vmem:[%s0 + $0x18] sm:$0xf]
    %v59 = vld [vmem:[%s0 + $0x1c] sm:$0xf]
    %v60 = vld [vmem:[%s0 + $0x20] sm:$0xf]
    %v61 = vld [vmem:[%s0 + $0x24] sm:$0xf]
    %v62 = vld [vmem:[%s0 + $0x28] sm:$0xf]
    %v63 = vld [vmem:[%s0 + $0x2c] sm:$0xf]
    %v64 = vld [vmem:[%s0 + $0x30] sm:$0xf]
    %v65 = vld [vmem:[%s0 + $0x34] sm:$0xf]
    %v66 = vld [vmem:[%s0 + $0x38] sm:$0xf]
    %v67 = vld [vmem:[%s0 + $0x3c] sm:$0xf]
    %v68 = vunpack.c.l.bf16 %v52
    %v69 = vunpack.c.l.bf16 %v53
    %v70 = vunpack.c.l.bf16 %v54
    %v71 = vunpack.c.l.bf16 %v55
    %v72 = vunpack.c.l.bf16 %v56
    %v73 = vunpack.c.l.bf16 %v57
    %v74 = vunpack.c.l.bf16 %v58
    %v75 = vunpack.c.l.bf16 %v59
    %v76 = vunpack.c.l.bf16 %v60
    %v77 = vunpack.c.l.bf16 %v61
    %v78 = vunpack.c.l.bf16 %v62
    %v79 = vunpack.c.l.bf16 %v63
    %v80 = vunpack.c.l.bf16 %v64
    %v81 = vunpack.c.l.bf16 %v65
    %v82 = vunpack.c.l.bf16 %v66
    %v83 = vunpack.c.l.bf16 %v67
    %v84 = vld [vmem:[%s1] sm:$0x1]
    %v85 = vld [vmem:[%s2] sm:$0xff]
    %v86 = vld [vmem:[%s2 + $0x8] sm:$0xff]
    %v87 = vld [vmem:[%s2 + $0x10] sm:$0xff]
    %v88 = vld [vmem:[%s2 + $0x18] sm:$0xff]
    %v89 = vld [vmem:[%s2 + $0x20] sm:$0xff]
    %v90 = vld [vmem:[%s2 + $0x28] sm:$0xff]
    %v91 = vld [vmem:[%s2 + $0x30] sm:$0xff]
    %v92 = vld [vmem:[%s2 + $0x38] sm:$0xff]
    %v93 = vld [vmem:[%s2 + $0x40] sm:$0xff]
    %v94 = vld [vmem:[%s2 + $0x48] sm:$0xff]
    %v95 = vld [vmem:[%s2 + $0x50] sm:$0xff]
    %v96 = vld [vmem:[%s2 + $0x58] sm:$0xff]
    %v97 = vld [vmem:[%s2 + $0x60] sm:$0xff]
    %v98 = vld [vmem:[%s2 + $0x68] sm:$0xff]
    %v99 = vld [vmem:[%s2 + $0x70] sm:$0xff]
    %v100 = vld [vmem:[%s2 + $0x78] sm:$0xff]
    %v101 = vld [vmem:[%s3] sm:$0xff]
    %v102 = vld [vmem:[%s3 + $0x8] sm:$0xff]
    %v103 = vld [vmem:[%s3 + $0x10] sm:$0xff]
    %v104 = vld [vmem:[%s3 + $0x18] sm:$0xff]
    %v105 = vld [vmem:[%s3 + $0x20] sm:$0xff]
    %v106 = vld [vmem:[%s3 + $0x28] sm:$0xff]
    %v107 = vld [vmem:[%s3 + $0x30] sm:$0xff]
    %v108 = vld [vmem:[%s3 + $0x38] sm:$0xff]
    %v109 = vld [vmem:[%s3 + $0x40] sm:$0xff]
    %v110 = vld [vmem:[%s3 + $0x48] sm:$0xff]
    %v111 = vld [vmem:[%s3 + $0x50] sm:$0xff]
    %v112 = vld [vmem:[%s3 + $0x58] sm:$0xff]
    %v113 = vld [vmem:[%s3 + $0x60] sm:$0xff]
    %v114 = vld [vmem:[%s3 + $0x68] sm:$0xff]
    %v115 = vld [vmem:[%s3 + $0x70] sm:$0xff]
    %v116 = vld [vmem:[%s3 + $0x78] sm:$0xff]
    %v117 = vld [vmem:[%s4] sm:$0xff]
    %v118 = vld [vmem:[%s4 + $0x8] sm:$0xff]
    %v119 = vld [vmem:[%s4 + $0x10] sm:$0xff]
    %v120 = vld [vmem:[%s4 + $0x18] sm:$0xff]
    %v121 = vld [vmem:[%s4 + $0x20] sm:$0xff]
    %v122 = vld [vmem:[%s4 + $0x28] sm:$0xff]
    %v123 = vld [vmem:[%s4 + $0x30] sm:$0xff]
    %v124 = vld [vmem:[%s4 + $0x38] sm:$0xff]
    %v125 = vld [vmem:[%s4 + $0x40] sm:$0xff]
    %v126 = vld [vmem:[%s4 + $0x48] sm:$0xff]
    %v127 = vld [vmem:[%s4 + $0x50] sm:$0xff]
    %v128 = vld [vmem:[%s4 + $0x58] sm:$0xff]
    %v129 = vld [vmem:[%s4 + $0x60] sm:$0xff]
    %v130 = vld [vmem:[%s4 + $0x68] sm:$0xff]
    %v131 = vld [vmem:[%s4 + $0x70] sm:$0xff]
    %v132 = vld [vmem:[%s4 + $0x78] sm:$0xff]
    %v133 = vld [vmem:[%s5] sm:$0xff]
    %v134 = vld [vmem:[%s5 + $0x8] sm:$0xff]
    %v135 = vld [vmem:[%s5 + $0x10] sm:$0xff]
    %v136 = vld [vmem:[%s5 + $0x18] sm:$0xff]
    %v137 = vld [vmem:[%s5 + $0x20] sm:$0xff]
    %v138 = vld [vmem:[%s5 + $0x28] sm:$0xff]
    %v139 = vld [vmem:[%s5 + $0x30] sm:$0xff]
    %v140 = vld [vmem:[%s5 + $0x38] sm:$0xff]
    %v141 = vld [vmem:[%s5 + $0x40] sm:$0xff]
    %v142 = vld [vmem:[%s5 + $0x48] sm:$0xff]
    %v143 = vld [vmem:[%s5 + $0x50] sm:$0xff]
    %v144 = vld [vmem:[%s5 + $0x58] sm:$0xff]
    %v145 = vld [vmem:[%s5 + $0x60] sm:$0xff]
    %v146 = vld [vmem:[%s5 + $0x68] sm:$0xff]
    %v147 = vld [vmem:[%s5 + $0x70] sm:$0xff]
    %v148 = vld [vmem:[%s5 + $0x78] sm:$0xff]
    %149 = vset.pattern.permute.xlu0 0
    %150 = vperm.xlu0 %149, %v85
    %v151 = vpop.permute.xlu0 %150
    %152 = vset.pattern.permute.xlu0 0
    %153 = vperm.xlu0 %152, %v86
    %v154 = vpop.permute.xlu0 %153
    %155 = vset.pattern.permute.xlu0 0
    %156 = vperm.xlu0 %155, %v87
    %v157 = vpop.permute.xlu0 %156
    %158 = vset.pattern.permute.xlu0 0
    %159 = vperm.xlu0 %158, %v88
    %v160 = vpop.permute.xlu0 %159
    %161 = vset.pattern.permute.xlu0 0
    %162 = vperm.xlu0 %161, %v89
    %v163 = vpop.permute.xlu0 %162
    %164 = vset.pattern.permute.xlu0 0
    %165 = vperm.xlu0 %164, %v90
    %v166 = vpop.permute.xlu0 %165
    %167 = vset.pattern.permute.xlu0 0
    %168 = vperm.xlu0 %167, %v91
    %v169 = vpop.permute.xlu0 %168
    %170 = vset.pattern.permute.xlu0 0
    %171 = vperm.xlu0 %170, %v92
    %v172 = vpop.permute.xlu0 %171
    %173 = vset.pattern.permute.xlu0 0
    %174 = vperm.xlu0 %173, %v93
    %v175 = vpop.permute.xlu0 %174
    %176 = vset.pattern.permute.xlu0 0
    %177 = vperm.xlu0 %176, %v94
    %v178 = vpop.permute.xlu0 %177
    %179 = vset.pattern.permute.xlu0 0
    %180 = vperm.xlu0 %179, %v95
    %v181 = vpop.permute.xlu0 %180
    %182 = vset.pattern.permute.xlu0 0
    %183 = vperm.xlu0 %182, %v96
    %v184 = vpop.permute.xlu0 %183
    %185 = vset.pattern.permute.xlu0 0
    %186 = vperm.xlu0 %185, %v97
    %v187 = vpop.permute.xlu0 %186
    %188 = vset.pattern.permute.xlu0 0
    %189 = vperm.xlu0 %188, %v98
    %v190 = vpop.permute.xlu0 %189
    %191 = vset.pattern.permute.xlu0 0
    %192 = vperm.xlu0 %191, %v99
    %v193 = vpop.permute.xlu0 %192
    %194 = vset.pattern.permute.xlu0 0
    %195 = vperm.xlu0 %194, %v100
    %v196 = vpop.permute.xlu0 %195
    %v197 = vlaneseq
    %v198 = vshrl.u32 %v197, 7
    %v199 = vsub.s32 0, %v198
    %v200 = vrot.slane %v84, %v199
    %vm201 = vcmp.eq.s32.totalorder %v151, %v200
    %vm202 = vcmp.eq.s32.totalorder %v154, %v200
    %vm203 = vcmp.eq.s32.totalorder %v157, %v200
    %vm204 = vcmp.eq.s32.totalorder %v160, %v200
    %vm205 = vcmp.eq.s32.totalorder %v163, %v200
    %vm206 = vcmp.eq.s32.totalorder %v166, %v200
    %vm207 = vcmp.eq.s32.totalorder %v169, %v200
    %vm208 = vcmp.eq.s32.totalorder %v172, %v200
    %vm209 = vcmp.eq.s32.totalorder %v175, %v200
    %vm210 = vcmp.eq.s32.totalorder %v178, %v200
    %vm211 = vcmp.eq.s32.totalorder %v181, %v200
    %vm212 = vcmp.eq.s32.totalorder %v184, %v200
    %vm213 = vcmp.eq.s32.totalorder %v187, %v200
    %vm214 = vcmp.eq.s32.totalorder %v190, %v200
    %vm215 = vcmp.eq.s32.totalorder %v193, %v200
    %vm216 = vcmp.eq.s32.totalorder %v196, %v200
    %v217 = vsel %vm201, %v68, 0.0
    %v218 = vsel %vm202, %v69, 0.0
    %v219 = vsel %vm203, %v70, 0.0
    %v220 = vsel %vm204, %v71, 0.0
    %v221 = vsel %vm205, %v72, 0.0
    %v222 = vsel %vm206, %v73, 0.0
    %v223 = vsel %vm207, %v74, 0.0
    %v224 = vsel %vm208, %v75, 0.0
    %v225 = vsel %vm209, %v76, 0.0
    %v226 = vsel %vm210, %v77, 0.0
    %v227 = vsel %vm211, %v78, 0.0
    %v228 = vsel %vm212, %v79, 0.0
    %v229 = vsel %vm213, %v80, 0.0
    %v230 = vsel %vm214, %v81, 0.0
    %v231 = vsel %vm215, %v82, 0.0
    %v232 = vsel %vm216, %v83, 0.0
    %233 = vrot.lane.b32.xlu0 %v68, 16
    %v234 = vpop.permute.xlu0 %233
    %235 = vrot.lane.b32.xlu0 %v69, 16
    %v236 = vpop.permute.xlu0 %235
    %237 = vrot.lane.b32.xlu0 %v70, 16
    %v238 = vpop.permute.xlu0 %237
    %239 = vrot.lane.b32.xlu0 %v71, 16
    %v240 = vpop.permute.xlu0 %239
    %241 = vrot.lane.b32.xlu0 %v72, 16
    %v242 = vpop.permute.xlu0 %241
    %243 = vrot.lane.b32.xlu0 %v73, 16
    %v244 = vpop.permute.xlu0 %243
    %245 = vrot.lane.b32.xlu0 %v74, 16
    %v246 = vpop.permute.xlu0 %245
    %247 = vrot.lane.b32.xlu0 %v75, 16
    %v248 = vpop.permute.xlu0 %247
    %249 = vrot.lane.b32.xlu0 %v76, 16
    %v250 = vpop.permute.xlu0 %249
    %251 = vrot.lane.b32.xlu0 %v77, 16
    %v252 = vpop.permute.xlu0 %251
    %253 = vrot.lane.b32.xlu0 %v78, 16
    %v254 = vpop.permute.xlu0 %253
    %255 = vrot.lane.b32.xlu0 %v79, 16
    %v256 = vpop.permute.xlu0 %255
    %257 = vrot.lane.b32.xlu0 %v80, 16
    %v258 = vpop.permute.xlu0 %257
    %259 = vrot.lane.b32.xlu0 %v81, 16
    %v260 = vpop.permute.xlu0 %259
    %261 = vrot.lane.b32.xlu0 %v82, 16
    %v262 = vpop.permute.xlu0 %261
    %263 = vrot.lane.b32.xlu0 %v83, 16
    %v264 = vpop.permute.xlu0 %263
    %265 = vrot.lane.b32.xlu0 %v84, 16
    %v266 = vpop.permute.xlu0 %265
    %vm267 = vcmp.eq.s32.totalorder %v102, %v101
    %vm268 = vcmp.eq.s32.totalorder %v103, %v102
    %vm269 = vcmp.eq.s32.totalorder %v104, %v103
    %vm270 = vcmp.eq.s32.totalorder %v105, %v104
    %vm271 = vcmp.eq.s32.totalorder %v106, %v105
    %vm272 = vcmp.eq.s32.totalorder %v107, %v106
    %vm273 = vcmp.eq.s32.totalorder %v108, %v107
    %vm274 = vcmp.eq.s32.totalorder %v109, %v108
    %vm275 = vcmp.eq.s32.totalorder %v110, %v109
    %vm276 = vcmp.eq.s32.totalorder %v111, %v110
    %vm277 = vcmp.eq.s32.totalorder %v112, %v111
    %vm278 = vcmp.eq.s32.totalorder %v113, %v112
    %vm279 = vcmp.eq.s32.totalorder %v114, %v113
    %vm280 = vcmp.eq.s32.totalorder %v115, %v114
    %vm281 = vcmp.eq.s32.totalorder %v116, %v115
    %vm282 = vcmp.eq.s32.totalorder %v101, %v116
    %v283 = vsel %vm267, 1, 0
    %v284 = vsel %vm268, 1, 0
    %v285 = vsel %vm269, 1, 0
    %v286 = vsel %vm270, 1, 0
    %v287 = vsel %vm271, 1, 0
    %v288 = vsel %vm272, 1, 0
    %v289 = vsel %vm273, 1, 0
    %v290 = vsel %vm274, 1, 0
    %v291 = vsel %vm275, 1, 0
    %v292 = vsel %vm276, 1, 0
    %v293 = vsel %vm277, 1, 0
    %v294 = vsel %vm278, 1, 0
    %v295 = vsel %vm279, 1, 0
    %v296 = vsel %vm280, 1, 0
    %v297 = vsel %vm281, 1, 0
    %v298 = vsel %vm282, 1, 0
    %299 = vset.pattern.permute.xlu0 0
    %300 = vperm.xlu0 %299, %v283
    %v301 = vpop.permute.xlu0 %300
    %302 = vset.pattern.permute.xlu0 0
    %303 = vperm.xlu0 %302, %v284
    %v304 = vpop.permute.xlu0 %303
    %305 = vset.pattern.permute.xlu0 0
    %306 = vperm.xlu0 %305, %v285
    %v307 = vpop.permute.xlu0 %306
    %308 = vset.pattern.permute.xlu0 0
    %309 = vperm.xlu0 %308, %v286
    %v310 = vpop.permute.xlu0 %309
    %311 = vset.pattern.permute.xlu0 0
    %312 = vperm.xlu0 %311, %v287
    %v313 = vpop.permute.xlu0 %312
    %314 = vset.pattern.permute.xlu0 0
    %315 = vperm.xlu0 %314, %v288
    %v316 = vpop.permute.xlu0 %315
    %317 = vset.pattern.permute.xlu0 0
    %318 = vperm.xlu0 %317, %v289
    %v319 = vpop.permute.xlu0 %318
    %320 = vset.pattern.permute.xlu0 0
    %321 = vperm.xlu0 %320, %v290
    %v322 = vpop.permute.xlu0 %321
    %323 = vset.pattern.permute.xlu0 0
    %324 = vperm.xlu0 %323, %v291
    %v325 = vpop.permute.xlu0 %324
    %326 = vset.pattern.permute.xlu0 0
    %327 = vperm.xlu0 %326, %v292
    %v328 = vpop.permute.xlu0 %327
    %329 = vset.pattern.permute.xlu0 0
    %330 = vperm.xlu0 %329, %v293
    %v331 = vpop.permute.xlu0 %330
    %332 = vset.pattern.permute.xlu0 0
    %333 = vperm.xlu0 %332, %v294
    %v334 = vpop.permute.xlu0 %333
    %335 = vset.pattern.permute.xlu0 0
    %336 = vperm.xlu0 %335, %v295
    %v337 = vpop.permute.xlu0 %336
    %338 = vset.pattern.permute.xlu0 0
    %339 = vperm.xlu0 %338, %v296
    %v340 = vpop.permute.xlu0 %339
    %341 = vset.pattern.permute.xlu0 0
    %342 = vperm.xlu0 %341, %v297
    %v343 = vpop.permute.xlu0 %342
    %344 = vset.pattern.permute.xlu0 0
    %345 = vperm.xlu0 %344, %v298
    %v346 = vpop.permute.xlu0 %345
    %vm347 = vcmp.eq.s32.totalorder %v301, 1
    %vm348 = vcmp.eq.s32.totalorder %v304, 1
    %vm349 = vcmp.eq.s32.totalorder %v307, 1
    %vm350 = vcmp.eq.s32.totalorder %v310, 1
    %vm351 = vcmp.eq.s32.totalorder %v313, 1
    %vm352 = vcmp.eq.s32.totalorder %v316, 1
    %vm353 = vcmp.eq.s32.totalorder %v319, 1
    %vm354 = vcmp.eq.s32.totalorder %v322, 1
    %vm355 = vcmp.eq.s32.totalorder %v325, 1
    %vm356 = vcmp.eq.s32.totalorder %v328, 1
    %vm357 = vcmp.eq.s32.totalorder %v331, 1
    %vm358 = vcmp.eq.s32.totalorder %v334, 1
    %vm359 = vcmp.eq.s32.totalorder %v337, 1
    %vm360 = vcmp.eq.s32.totalorder %v340, 1
    %vm361 = vcmp.eq.s32.totalorder %v343, 1
    %vm362 = vcmp.eq.s32.totalorder %v346, 1
    %v363 = vsel %vm347, %v236, %v252
    %v364 = vsel %vm348, %v238, %v254
    %v365 = vsel %vm349, %v240, %v256
    %v366 = vsel %vm350, %v242, %v258
    %v367 = vsel %vm351, %v244, %v260
    %v368 = vsel %vm352, %v246, %v262
    %v369 = vsel %vm353, %v248, %v264
    %v370 = vsel %vm354, %v250, %v234
    %v371 = vsel %vm355, %v252, %v236
    %v372 = vsel %vm356, %v254, %v238
    %v373 = vsel %vm357, %v256, %v240
    %v374 = vsel %vm358, %v258, %v242
    %v375 = vsel %vm359, %v260, %v244
    %v376 = vsel %vm360, %v262, %v246
    %v377 = vsel %vm361, %v264, %v248
    %v378 = vsel %vm362, %v234, %v250
    %v379 = vlaneseq
    %v380 = vshrl.u32 %v379, 7
    %v381 = vsub.s32 0, %v380
    %v382 = vrot.slane %v266, %v381
    %vm383 = vcmp.eq.s32.totalorder %v151, %v382
    %vm384 = vcmp.eq.s32.totalorder %v154, %v382
    %vm385 = vcmp.eq.s32.totalorder %v157, %v382
    %vm386 = vcmp.eq.s32.totalorder %v160, %v382
    %vm387 = vcmp.eq.s32.totalorder %v163, %v382
    %vm388 = vcmp.eq.s32.totalorder %v166, %v382
    %vm389 = vcmp.eq.s32.totalorder %v169, %v382
    %vm390 = vcmp.eq.s32.totalorder %v172, %v382
    %vm391 = vcmp.eq.s32.totalorder %v175, %v382
    %vm392 = vcmp.eq.s32.totalorder %v178, %v382
    %vm393 = vcmp.eq.s32.totalorder %v181, %v382
    %vm394 = vcmp.eq.s32.totalorder %v184, %v382
    %vm395 = vcmp.eq.s32.totalorder %v187, %v382
    %vm396 = vcmp.eq.s32.totalorder %v190, %v382
    %vm397 = vcmp.eq.s32.totalorder %v193, %v382
    %vm398 = vcmp.eq.s32.totalorder %v196, %v382
    %v399 = vsel %vm383, %v363, 0.0
    %v400 = vsel %vm384, %v364, 0.0
    %v401 = vsel %vm385, %v365, 0.0
    %v402 = vsel %vm386, %v366, 0.0
    %v403 = vsel %vm387, %v367, 0.0
    %v404 = vsel %vm388, %v368, 0.0
    %v405 = vsel %vm389, %v369, 0.0
    %v406 = vsel %vm390, %v370, 0.0
    %v407 = vsel %vm391, %v371, 0.0
    %v408 = vsel %vm392, %v372, 0.0
    %v409 = vsel %vm393, %v373, 0.0
    %v410 = vsel %vm394, %v374, 0.0
    %v411 = vsel %vm395, %v375, 0.0
    %v412 = vsel %vm396, %v376, 0.0
    %v413 = vsel %vm397, %v377, 0.0
    %v414 = vsel %vm398, %v378, 0.0
    %415 = vrot.lane.b32.xlu0 %v68, 32
    %v416 = vpop.permute.xlu0 %415
    %417 = vrot.lane.b32.xlu0 %v69, 32
    %v418 = vpop.permute.xlu0 %417
    %419 = vrot.lane.b32.xlu0 %v70, 32
    %v420 = vpop.permute.xlu0 %419
    %421 = vrot.lane.b32.xlu0 %v71, 32
    %v422 = vpop.permute.xlu0 %421
    %423 = vrot.lane.b32.xlu0 %v72, 32
    %v424 = vpop.permute.xlu0 %423
    %425 = vrot.lane.b32.xlu0 %v73, 32
    %v426 = vpop.permute.xlu0 %425
    %427 = vrot.lane.b32.xlu0 %v74, 32
    %v428 = vpop.permute.xlu0 %427
    %429 = vrot.lane.b32.xlu0 %v75, 32
    %v430 = vpop.permute.xlu0 %429
    %431 = vrot.lane.b32.xlu0 %v76, 32
    %v432 = vpop.permute.xlu0 %431
    %433 = vrot.lane.b32.xlu0 %v77, 32
    %v434 = vpop.permute.xlu0 %433
    %435 = vrot.lane.b32.xlu0 %v78, 32
    %v436 = vpop.permute.xlu0 %435
    %437 = vrot.lane.b32.xlu0 %v79, 32
    %v438 = vpop.permute.xlu0 %437
    %439 = vrot.lane.b32.xlu0 %v80, 32
    %v440 = vpop.permute.xlu0 %439
    %441 = vrot.lane.b32.xlu0 %v81, 32
    %v442 = vpop.permute.xlu0 %441
    %443 = vrot.lane.b32.xlu0 %v82, 32
    %v444 = vpop.permute.xlu0 %443
    %445 = vrot.lane.b32.xlu0 %v83, 32
    %v446 = vpop.permute.xlu0 %445
    %447 = vrot.lane.b32.xlu0 %v84, 32
    %v448 = vpop.permute.xlu0 %447
    %vm449 = vcmp.eq.s32.totalorder %v103, %v101
    %vm450 = vcmp.eq.s32.totalorder %v104, %v102
    %vm451 = vcmp.eq.s32.totalorder %v105, %v103
    %vm452 = vcmp.eq.s32.totalorder %v106, %v104
    %vm453 = vcmp.eq.s32.totalorder %v107, %v105
    %vm454 = vcmp.eq.s32.totalorder %v108, %v106
    %vm455 = vcmp.eq.s32.totalorder %v109, %v107
    %vm456 = vcmp.eq.s32.totalorder %v110, %v108
    %vm457 = vcmp.eq.s32.totalorder %v111, %v109
    %vm458 = vcmp.eq.s32.totalorder %v112, %v110
    %vm459 = vcmp.eq.s32.totalorder %v113, %v111
    %vm460 = vcmp.eq.s32.totalorder %v114, %v112
    %vm461 = vcmp.eq.s32.totalorder %v115, %v113
    %vm462 = vcmp.eq.s32.totalorder %v116, %v114
    %vm463 = vcmp.eq.s32.totalorder %v101, %v115
    %vm464 = vcmp.eq.s32.totalorder %v102, %v116
    %v465 = vsel %vm449, 1, 0
    %v466 = vsel %vm450, 1, 0
    %v467 = vsel %vm451, 1, 0
    %v468 = vsel %vm452, 1, 0
    %v469 = vsel %vm453, 1, 0
    %v470 = vsel %vm454, 1, 0
    %v471 = vsel %vm455, 1, 0
    %v472 = vsel %vm456, 1, 0
    %v473 = vsel %vm457, 1, 0
    %v474 = vsel %vm458, 1, 0
    %v475 = vsel %vm459, 1, 0
    %v476 = vsel %vm460, 1, 0
    %v477 = vsel %vm461, 1, 0
    %v478 = vsel %vm462, 1, 0
    %v479 = vsel %vm463, 1, 0
    %v480 = vsel %vm464, 1, 0
    %481 = vset.pattern.permute.xlu0 0
    %482 = vperm.xlu0 %481, %v465
    %v483 = vpop.permute.xlu0 %482
    %484 = vset.pattern.permute.xlu0 0
    %485 = vperm.xlu0 %484, %v466
    %v486 = vpop.permute.xlu0 %485
    %487 = vset.pattern.permute.xlu0 0
    %488 = vperm.xlu0 %487, %v467
    %v489 = vpop.permute.xlu0 %488
    %490 = vset.pattern.permute.xlu0 0
    %491 = vperm.xlu0 %490, %v468
    %v492 = vpop.permute.xlu0 %491
    %493 = vset.pattern.permute.xlu0 0
    %494 = vperm.xlu0 %493, %v469
    %v495 = vpop.permute.xlu0 %494
    %496 = vset.pattern.permute.xlu0 0
    %497 = vperm.xlu0 %496, %v470
    %v498 = vpop.permute.xlu0 %497
    %499 = vset.pattern.permute.xlu0 0
    %500 = vperm.xlu0 %499, %v471
    %v501 = vpop.permute.xlu0 %500
    %502 = vset.pattern.permute.xlu0 0
    %503 = vperm.xlu0 %502, %v472
    %v504 = vpop.permute.xlu0 %503
    %505 = vset.pattern.permute.xlu0 0
    %506 = vperm.xlu0 %505, %v473
    %v507 = vpop.permute.xlu0 %506
    %508 = vset.pattern.permute.xlu0 0
    %509 = vperm.xlu0 %508, %v474
    %v510 = vpop.permute.xlu0 %509
    %511 = vset.pattern.permute.xlu0 0
    %512 = vperm.xlu0 %511, %v475
    %v513 = vpop.permute.xlu0 %512
    %514 = vset.pattern.permute.xlu0 0
    %515 = vperm.xlu0 %514, %v476
    %v516 = vpop.permute.xlu0 %515
    %517 = vset.pattern.permute.xlu0 0
    %518 = vperm.xlu0 %517, %v477
    %v519 = vpop.permute.xlu0 %518
    %520 = vset.pattern.permute.xlu0 0
    %521 = vperm.xlu0 %520, %v478
    %v522 = vpop.permute.xlu0 %521
    %523 = vset.pattern.permute.xlu0 0
    %524 = vperm.xlu0 %523, %v479
    %v525 = vpop.permute.xlu0 %524
    %526 = vset.pattern.permute.xlu0 0
    %527 = vperm.xlu0 %526, %v480
    %v528 = vpop.permute.xlu0 %527
    %vm529 = vcmp.eq.s32.totalorder %v483, 1
    %vm530 = vcmp.eq.s32.totalorder %v486, 1
    %vm531 = vcmp.eq.s32.totalorder %v489, 1
    %vm532 = vcmp.eq.s32.totalorder %v492, 1
    %vm533 = vcmp.eq.s32.totalorder %v495, 1
    %vm534 = vcmp.eq.s32.totalorder %v498, 1
    %vm535 = vcmp.eq.s32.totalorder %v501, 1
    %vm536 = vcmp.eq.s32.totalorder %v504, 1
    %vm537 = vcmp.eq.s32.totalorder %v507, 1
    %vm538 = vcmp.eq.s32.totalorder %v510, 1
    %vm539 = vcmp.eq.s32.totalorder %v513, 1
    %vm540 = vcmp.eq.s32.totalorder %v516, 1
    %vm541 = vcmp.eq.s32.totalorder %v519, 1
    %vm542 = vcmp.eq.s32.totalorder %v522, 1
    %vm543 = vcmp.eq.s32.totalorder %v525, 1
    %vm544 = vcmp.eq.s32.totalorder %v528, 1
    %v545 = vsel %vm529, %v420, %v436
    %v546 = vsel %vm530, %v422, %v438
    %v547 = vsel %vm531, %v424, %v440
    %v548 = vsel %vm532, %v426, %v442
    %v549 = vsel %vm533, %v428, %v444
    %v550 = vsel %vm534, %v430, %v446
    %v551 = vsel %vm535, %v432, %v416
    %v552 = vsel %vm536, %v434, %v418
    %v553 = vsel %vm537, %v436, %v420
    %v554 = vsel %vm538, %v438, %v422
    %v555 = vsel %vm539, %v440, %v424
    %v556 = vsel %vm540, %v442, %v426
    %v557 = vsel %vm541, %v444, %v428
    %v558 = vsel %vm542, %v446, %v430
    %v559 = vsel %vm543, %v416, %v432
    %v560 = vsel %vm544, %v418, %v434
    %v561 = vlaneseq
    %v562 = vshrl.u32 %v561, 7
    %v563 = vsub.s32 0, %v562
    %v564 = vrot.slane %v448, %v563
    %vm565 = vcmp.eq.s32.totalorder %v151, %v564
    %vm566 = vcmp.eq.s32.totalorder %v154, %v564
    %vm567 = vcmp.eq.s32.totalorder %v157, %v564
    %vm568 = vcmp.eq.s32.totalorder %v160, %v564
    %vm569 = vcmp.eq.s32.totalorder %v163, %v564
    %vm570 = vcmp.eq.s32.totalorder %v166, %v564
    %vm571 = vcmp.eq.s32.totalorder %v169, %v564
    %vm572 = vcmp.eq.s32.totalorder %v172, %v564
    %vm573 = vcmp.eq.s32.totalorder %v175, %v564
    %vm574 = vcmp.eq.s32.totalorder %v178, %v564
    %vm575 = vcmp.eq.s32.totalorder %v181, %v564
    %vm576 = vcmp.eq.s32.totalorder %v184, %v564
    %vm577 = vcmp.eq.s32.totalorder %v187, %v564
    %vm578 = vcmp.eq.s32.totalorder %v190, %v564
    %vm579 = vcmp.eq.s32.totalorder %v193, %v564
    %vm580 = vcmp.eq.s32.totalorder %v196, %v564
    %v581 = vsel %vm565, %v545, 0.0
    %v582 = vsel %vm566, %v546, 0.0
    %v583 = vsel %vm567, %v547, 0.0
    %v584 = vsel %vm568, %v548, 0.0
    %v585 = vsel %vm569, %v549, 0.0
    %v586 = vsel %vm570, %v550, 0.0
    %v587 = vsel %vm571, %v551, 0.0
    %v588 = vsel %vm572, %v552, 0.0
    %v589 = vsel %vm573, %v553, 0.0
    %v590 = vsel %vm574, %v554, 0.0
    %v591 = vsel %vm575, %v555, 0.0
    %v592 = vsel %vm576, %v556, 0.0
    %v593 = vsel %vm577, %v557, 0.0
    %v594 = vsel %vm578, %v558, 0.0
    %v595 = vsel %vm579, %v559, 0.0
    %v596 = vsel %vm580, %v560, 0.0
    %597 = vrot.lane.b32.xlu0 %v68, 48
    %v598 = vpop.permute.xlu0 %597
    %599 = vrot.lane.b32.xlu0 %v69, 48
    %v600 = vpop.permute.xlu0 %599
    %601 = vrot.lane.b32.xlu0 %v70, 48
    %v602 = vpop.permute.xlu0 %601
    %603 = vrot.lane.b32.xlu0 %v71, 48
    %v604 = vpop.permute.xlu0 %603
    %605 = vrot.lane.b32.xlu0 %v72, 48
    %v606 = vpop.permute.xlu0 %605
    %607 = vrot.lane.b32.xlu0 %v73, 48
    %v608 = vpop.permute.xlu0 %607
    %609 = vrot.lane.b32.xlu0 %v74, 48
    %v610 = vpop.permute.xlu0 %609
    %611 = vrot.lane.b32.xlu0 %v75, 48
    %v612 = vpop.permute.xlu0 %611
    %613 = vrot.lane.b32.xlu0 %v76, 48
    %v614 = vpop.permute.xlu0 %613
    %615 = vrot.lane.b32.xlu0 %v77, 48
    %v616 = vpop.permute.xlu0 %615
    %617 = vrot.lane.b32.xlu0 %v78, 48
    %v618 = vpop.permute.xlu0 %617
    %619 = vrot.lane.b32.xlu0 %v79, 48
    %v620 = vpop.permute.xlu0 %619
    %621 = vrot.lane.b32.xlu0 %v80, 48
    %v622 = vpop.permute.xlu0 %621
    %623 = vrot.lane.b32.xlu0 %v81, 48
    %v624 = vpop.permute.xlu0 %623
    %625 = vrot.lane.b32.xlu0 %v82, 48
    %v626 = vpop.permute.xlu0 %625
    %627 = vrot.lane.b32.xlu0 %v83, 48
    %v628 = vpop.permute.xlu0 %627
    %629 = vrot.lane.b32.xlu0 %v84, 48
    %v630 = vpop.permute.xlu0 %629
    %vm631 = vcmp.eq.s32.totalorder %v104, %v101
    %vm632 = vcmp.eq.s32.totalorder %v105, %v102
    %vm633 = vcmp.eq.s32.totalorder %v106, %v103
    %vm634 = vcmp.eq.s32.totalorder %v107, %v104
    %vm635 = vcmp.eq.s32.totalorder %v108, %v105
    %vm636 = vcmp.eq.s32.totalorder %v109, %v106
    %vm637 = vcmp.eq.s32.totalorder %v110, %v107
    %vm638 = vcmp.eq.s32.totalorder %v111, %v108
    %vm639 = vcmp.eq.s32.totalorder %v112, %v109
    %vm640 = vcmp.eq.s32.totalorder %v113, %v110
    %vm641 = vcmp.eq.s32.totalorder %v114, %v111
    %vm642 = vcmp.eq.s32.totalorder %v115, %v112
    %vm643 = vcmp.eq.s32.totalorder %v116, %v113
    %vm644 = vcmp.eq.s32.totalorder %v101, %v114
    %vm645 = vcmp.eq.s32.totalorder %v102, %v115
    %vm646 = vcmp.eq.s32.totalorder %v103, %v116
    %v647 = vsel %vm631, 1, 0
    %v648 = vsel %vm632, 1, 0
    %v649 = vsel %vm633, 1, 0
    %v650 = vsel %vm634, 1, 0
    %v651 = vsel %vm635, 1, 0
    %v652 = vsel %vm636, 1, 0
    %v653 = vsel %vm637, 1, 0
    %v654 = vsel %vm638, 1, 0
    %v655 = vsel %vm639, 1, 0
    %v656 = vsel %vm640, 1, 0
    %v657 = vsel %vm641, 1, 0
    %v658 = vsel %vm642, 1, 0
    %v659 = vsel %vm643, 1, 0
    %v660 = vsel %vm644, 1, 0
    %v661 = vsel %vm645, 1, 0
    %v662 = vsel %vm646, 1, 0
    %663 = vset.pattern.permute.xlu0 0
    %664 = vperm.xlu0 %663, %v647
    %v665 = vpop.permute.xlu0 %664
    %666 = vset.pattern.permute.xlu0 0
    %667 = vperm.xlu0 %666, %v648
    %v668 = vpop.permute.xlu0 %667
    %669 = vset.pattern.permute.xlu0 0
    %670 = vperm.xlu0 %669, %v649
    %v671 = vpop.permute.xlu0 %670
    %672 = vset.pattern.permute.xlu0 0
    %673 = vperm.xlu0 %672, %v650
    %v674 = vpop.permute.xlu0 %673
    %675 = vset.pattern.permute.xlu0 0
    %676 = vperm.xlu0 %675, %v651
    %v677 = vpop.permute.xlu0 %676
    %678 = vset.pattern.permute.xlu0 0
    %679 = vperm.xlu0 %678, %v652
    %v680 = vpop.permute.xlu0 %679
    %681 = vset.pattern.permute.xlu0 0
    %682 = vperm.xlu0 %681, %v653
    %v683 = vpop.permute.xlu0 %682
    %684 = vset.pattern.permute.xlu0 0
    %685 = vperm.xlu0 %684, %v654
    %v686 = vpop.permute.xlu0 %685
    %687 = vset.pattern.permute.xlu0 0
    %688 = vperm.xlu0 %687, %v655
    %v689 = vpop.permute.xlu0 %688
    %690 = vset.pattern.permute.xlu0 0
    %691 = vperm.xlu0 %690, %v656
    %v692 = vpop.permute.xlu0 %691
    %693 = vset.pattern.permute.xlu0 0
    %694 = vperm.xlu0 %693, %v657
    %v695 = vpop.permute.xlu0 %694
    %696 = vset.pattern.permute.xlu0 0
    %697 = vperm.xlu0 %696, %v658
    %v698 = vpop.permute.xlu0 %697
    %699 = vset.pattern.permute.xlu0 0
    %700 = vperm.xlu0 %699, %v659
    %v701 = vpop.permute.xlu0 %700
    %702 = vset.pattern.permute.xlu0 0
    %703 = vperm.xlu0 %702, %v660
    %v704 = vpop.permute.xlu0 %703
    %705 = vset.pattern.permute.xlu0 0
    %706 = vperm.xlu0 %705, %v661
    %v707 = vpop.permute.xlu0 %706
    %708 = vset.pattern.permute.xlu0 0
    %709 = vperm.xlu0 %708, %v662
    %v710 = vpop.permute.xlu0 %709
    %vm711 = vcmp.eq.s32.totalorder %v665, 1
    %vm712 = vcmp.eq.s32.totalorder %v668, 1
    %vm713 = vcmp.eq.s32.totalorder %v671, 1
    %vm714 = vcmp.eq.s32.totalorder %v674, 1
    %vm715 = vcmp.eq.s32.totalorder %v677, 1
    %vm716 = vcmp.eq.s32.totalorder %v680, 1
    %vm717 = vcmp.eq.s32.totalorder %v683, 1
    %vm718 = vcmp.eq.s32.totalorder %v686, 1
    %vm719 = vcmp.eq.s32.totalorder %v689, 1
    %vm720 = vcmp.eq.s32.totalorder %v692, 1
    %vm721 = vcmp.eq.s32.totalorder %v695, 1
    %vm722 = vcmp.eq.s32.totalorder %v698, 1
    %vm723 = vcmp.eq.s32.totalorder %v701, 1
    %vm724 = vcmp.eq.s32.totalorder %v704, 1
    %vm725 = vcmp.eq.s32.totalorder %v707, 1
    %vm726 = vcmp.eq.s32.totalorder %v710, 1
    %v727 = vsel %vm711, %v604, %v620
    %v728 = vsel %vm712, %v606, %v622
    %v729 = vsel %vm713, %v608, %v624
    %v730 = vsel %vm714, %v610, %v626
    %v731 = vsel %vm715, %v612, %v628
    %v732 = vsel %vm716, %v614, %v598
    %v733 = vsel %vm717, %v616, %v600
    %v734 = vsel %vm718, %v618, %v602
    %v735 = vsel %vm719, %v620, %v604
    %v736 = vsel %vm720, %v622, %v606
    %v737 = vsel %vm721, %v624, %v608
    %v738 = vsel %vm722, %v626, %v610
    %v739 = vsel %vm723, %v628, %v612
    %v740 = vsel %vm724, %v598, %v614
    %v741 = vsel %vm725, %v600, %v616
    %v742 = vsel %vm726, %v602, %v618
    %v743 = vlaneseq
    %v744 = vshrl.u32 %v743, 7
    %v745 = vsub.s32 0, %v744
    %v746 = vrot.slane %v630, %v745
    %vm747 = vcmp.eq.s32.totalorder %v151, %v746
    %vm748 = vcmp.eq.s32.totalorder %v154, %v746
    %vm749 = vcmp.eq.s32.totalorder %v157, %v746
    %vm750 = vcmp.eq.s32.totalorder %v160, %v746
    %vm751 = vcmp.eq.s32.totalorder %v163, %v746
    %vm752 = vcmp.eq.s32.totalorder %v166, %v746
    %vm753 = vcmp.eq.s32.totalorder %v169, %v746
    %vm754 = vcmp.eq.s32.totalorder %v172, %v746
    %vm755 = vcmp.eq.s32.totalorder %v175, %v746
    %vm756 = vcmp.eq.s32.totalorder %v178, %v746
    %vm757 = vcmp.eq.s32.totalorder %v181, %v746
    %vm758 = vcmp.eq.s32.totalorder %v184, %v746
    %vm759 = vcmp.eq.s32.totalorder %v187, %v746
    %vm760 = vcmp.eq.s32.totalorder %v190, %v746
    %vm761 = vcmp.eq.s32.totalorder %v193, %v746
    %vm762 = vcmp.eq.s32.totalorder %v196, %v746
    %v763 = vsel %vm747, %v727, 0.0
    %v764 = vsel %vm748, %v728, 0.0
    %v765 = vsel %vm749, %v729, 0.0
    %v766 = vsel %vm750, %v730, 0.0
    %v767 = vsel %vm751, %v731, 0.0
    %v768 = vsel %vm752, %v732, 0.0
    %v769 = vsel %vm753, %v733, 0.0
    %v770 = vsel %vm754, %v734, 0.0
    %v771 = vsel %vm755, %v735, 0.0
    %v772 = vsel %vm756, %v736, 0.0
    %v773 = vsel %vm757, %v737, 0.0
    %v774 = vsel %vm758, %v738, 0.0
    %v775 = vsel %vm759, %v739, 0.0
    %v776 = vsel %vm760, %v740, 0.0
    %v777 = vsel %vm761, %v741, 0.0
    %v778 = vsel %vm762, %v742, 0.0
    %779 = vrot.lane.b32.xlu0 %v68, 64
    %v780 = vpop.permute.xlu0 %779
    %781 = vrot.lane.b32.xlu0 %v69, 64
    %v782 = vpop.permute.xlu0 %781
    %783 = vrot.lane.b32.xlu0 %v70, 64
    %v784 = vpop.permute.xlu0 %783
    %785 = vrot.lane.b32.xlu0 %v71, 64
    %v786 = vpop.permute.xlu0 %785
    %787 = vrot.lane.b32.xlu0 %v72, 64
    %v788 = vpop.permute.xlu0 %787
    %789 = vrot.lane.b32.xlu0 %v73, 64
    %v790 = vpop.permute.xlu0 %789
    %791 = vrot.lane.b32.xlu0 %v74, 64
    %v792 = vpop.permute.xlu0 %791
    %793 = vrot.lane.b32.xlu0 %v75, 64
    %v794 = vpop.permute.xlu0 %793
    %795 = vrot.lane.b32.xlu0 %v76, 64
    %v796 = vpop.permute.xlu0 %795
    %797 = vrot.lane.b32.xlu0 %v77, 64
    %v798 = vpop.permute.xlu0 %797
    %799 = vrot.lane.b32.xlu0 %v78, 64
    %v800 = vpop.permute.xlu0 %799
    %801 = vrot.lane.b32.xlu0 %v79, 64
    %v802 = vpop.permute.xlu0 %801
    %803 = vrot.lane.b32.xlu0 %v80, 64
    %v804 = vpop.permute.xlu0 %803
    %805 = vrot.lane.b32.xlu0 %v81, 64
    %v806 = vpop.permute.xlu0 %805
    %807 = vrot.lane.b32.xlu0 %v82, 64
    %v808 = vpop.permute.xlu0 %807
    %809 = vrot.lane.b32.xlu0 %v83, 64
    %v810 = vpop.permute.xlu0 %809
    %811 = vrot.lane.b32.xlu0 %v84, 64
    %v812 = vpop.permute.xlu0 %811
    %vm813 = vcmp.eq.s32.totalorder %v105, %v101
    %vm814 = vcmp.eq.s32.totalorder %v106, %v102
    %vm815 = vcmp.eq.s32.totalorder %v107, %v103
    %vm816 = vcmp.eq.s32.totalorder %v108, %v104
    %vm817 = vcmp.eq.s32.totalorder %v109, %v105
    %vm818 = vcmp.eq.s32.totalorder %v110, %v106
    %vm819 = vcmp.eq.s32.totalorder %v111, %v107
    %vm820 = vcmp.eq.s32.totalorder %v112, %v108
    %vm821 = vcmp.eq.s32.totalorder %v113, %v109
    %vm822 = vcmp.eq.s32.totalorder %v114, %v110
    %vm823 = vcmp.eq.s32.totalorder %v115, %v111
    %vm824 = vcmp.eq.s32.totalorder %v116, %v112
    %vm825 = vcmp.eq.s32.totalorder %v101, %v113
    %vm826 = vcmp.eq.s32.totalorder %v102, %v114
    %vm827 = vcmp.eq.s32.totalorder %v103, %v115
    %vm828 = vcmp.eq.s32.totalorder %v104, %v116
    %v829 = vsel %vm813, 1, 0
    %v830 = vsel %vm814, 1, 0
    %v831 = vsel %vm815, 1, 0
    %v832 = vsel %vm816, 1, 0
    %v833 = vsel %vm817, 1, 0
    %v834 = vsel %vm818, 1, 0
    %v835 = vsel %vm819, 1, 0
    %v836 = vsel %vm820, 1, 0
    %v837 = vsel %vm821, 1, 0
    %v838 = vsel %vm822, 1, 0
    %v839 = vsel %vm823, 1, 0
    %v840 = vsel %vm824, 1, 0
    %v841 = vsel %vm825, 1, 0
    %v842 = vsel %vm826, 1, 0
    %v843 = vsel %vm827, 1, 0
    %v844 = vsel %vm828, 1, 0
    %845 = vset.pattern.permute.xlu0 0
    %846 = vperm.xlu0 %845, %v829
    %v847 = vpop.permute.xlu0 %846
    %848 = vset.pattern.permute.xlu0 0
    %849 = vperm.xlu0 %848, %v830
    %v850 = vpop.permute.xlu0 %849
    %851 = vset.pattern.permute.xlu0 0
    %852 = vperm.xlu0 %851, %v831
    %v853 = vpop.permute.xlu0 %852
    %854 = vset.pattern.permute.xlu0 0
    %855 = vperm.xlu0 %854, %v832
    %v856 = vpop.permute.xlu0 %855
    %857 = vset.pattern.permute.xlu0 0
    %858 = vperm.xlu0 %857, %v833
    %v859 = vpop.permute.xlu0 %858
    %860 = vset.pattern.permute.xlu0 0
    %861 = vperm.xlu0 %860, %v834
    %v862 = vpop.permute.xlu0 %861
    %863 = vset.pattern.permute.xlu0 0
    %864 = vperm.xlu0 %863, %v835
    %v865 = vpop.permute.xlu0 %864
    %866 = vset.pattern.permute.xlu0 0
    %867 = vperm.xlu0 %866, %v836
    %v868 = vpop.permute.xlu0 %867
    %869 = vset.pattern.permute.xlu0 0
    %870 = vperm.xlu0 %869, %v837
    %v871 = vpop.permute.xlu0 %870
    %872 = vset.pattern.permute.xlu0 0
    %873 = vperm.xlu0 %872, %v838
    %v874 = vpop.permute.xlu0 %873
    %875 = vset.pattern.permute.xlu0 0
    %876 = vperm.xlu0 %875, %v839
    %v877 = vpop.permute.xlu0 %876
    %878 = vset.pattern.permute.xlu0 0
    %879 = vperm.xlu0 %878, %v840
    %v880 = vpop.permute.xlu0 %879
    %881 = vset.pattern.permute.xlu0 0
    %882 = vperm.xlu0 %881, %v841
    %v883 = vpop.permute.xlu0 %882
    %884 = vset.pattern.permute.xlu0 0
    %885 = vperm.xlu0 %884, %v842
    %v886 = vpop.permute.xlu0 %885
    %887 = vset.pattern.permute.xlu0 0
    %888 = vperm.xlu0 %887, %v843
    %v889 = vpop.permute.xlu0 %888
    %890 = vset.pattern.permute.xlu0 0
    %891 = vperm.xlu0 %890, %v844
    %v892 = vpop.permute.xlu0 %891
    %vm893 = vcmp.eq.s32.totalorder %v847, 1
    %vm894 = vcmp.eq.s32.totalorder %v850, 1
    %vm895 = vcmp.eq.s32.totalorder %v853, 1
    %vm896 = vcmp.eq.s32.totalorder %v856, 1
    %vm897 = vcmp.eq.s32.totalorder %v859, 1
    %vm898 = vcmp.eq.s32.totalorder %v862, 1
    %vm899 = vcmp.eq.s32.totalorder %v865, 1
    %vm900 = vcmp.eq.s32.totalorder %v868, 1
    %vm901 = vcmp.eq.s32.totalorder %v871, 1
    %vm902 = vcmp.eq.s32.totalorder %v874, 1
    %vm903 = vcmp.eq.s32.totalorder %v877, 1
    %vm904 = vcmp.eq.s32.totalorder %v880, 1
    %vm905 = vcmp.eq.s32.totalorder %v883, 1
    %vm906 = vcmp.eq.s32.totalorder %v886, 1
    %vm907 = vcmp.eq.s32.totalorder %v889, 1
    %vm908 = vcmp.eq.s32.totalorder %v892, 1
    %v909 = vsel %vm893, %v788, %v804
    %v910 = vsel %vm894, %v790, %v806
    %v911 = vsel %vm895, %v792, %v808
    %v912 = vsel %vm896, %v794, %v810
    %v913 = vsel %vm897, %v796, %v780
    %v914 = vsel %vm898, %v798, %v782
    %v915 = vsel %vm899, %v800, %v784
    %v916 = vsel %vm900, %v802, %v786
    %v917 = vsel %vm901, %v804, %v788
    %v918 = vsel %vm902, %v806, %v790
    %v919 = vsel %vm903, %v808, %v792
    %v920 = vsel %vm904, %v810, %v794
    %v921 = vsel %vm905, %v780, %v796
    %v922 = vsel %vm906, %v782, %v798
    %v923 = vsel %vm907, %v784, %v800
    %v924 = vsel %vm908, %v786, %v802
    %v925 = vlaneseq
    %v926 = vshrl.u32 %v925, 7
    %v927 = vsub.s32 0, %v926
    %v928 = vrot.slane %v812, %v927
    %vm929 = vcmp.eq.s32.totalorder %v151, %v928
    %vm930 = vcmp.eq.s32.totalorder %v154, %v928
    %vm931 = vcmp.eq.s32.totalorder %v157, %v928
    %vm932 = vcmp.eq.s32.totalorder %v160, %v928
    %vm933 = vcmp.eq.s32.totalorder %v163, %v928
    %vm934 = vcmp.eq.s32.totalorder %v166, %v928
    %vm935 = vcmp.eq.s32.totalorder %v169, %v928
    %vm936 = vcmp.eq.s32.totalorder %v172, %v928
    %vm937 = vcmp.eq.s32.totalorder %v175, %v928
    %vm938 = vcmp.eq.s32.totalorder %v178, %v928
    %vm939 = vcmp.eq.s32.totalorder %v181, %v928
    %vm940 = vcmp.eq.s32.totalorder %v184, %v928
    %vm941 = vcmp.eq.s32.totalorder %v187, %v928
    %vm942 = vcmp.eq.s32.totalorder %v190, %v928
    %vm943 = vcmp.eq.s32.totalorder %v193, %v928
    %vm944 = vcmp.eq.s32.totalorder %v196, %v928
    %v945 = vsel %vm929, %v909, 0.0
    %v946 = vsel %vm930, %v910, 0.0
    %v947 = vsel %vm931, %v911, 0.0
    %v948 = vsel %vm932, %v912, 0.0
    %v949 = vsel %vm933, %v913, 0.0
    %v950 = vsel %vm934, %v914, 0.0
    %v951 = vsel %vm935, %v915, 0.0
    %v952 = vsel %vm936, %v916, 0.0
    %v953 = vsel %vm937, %v917, 0.0
    %v954 = vsel %vm938, %v918, 0.0
    %v955 = vsel %vm939, %v919, 0.0
    %v956 = vsel %vm940, %v920, 0.0
    %v957 = vsel %vm941, %v921, 0.0
    %v958 = vsel %vm942, %v922, 0.0
    %v959 = vsel %vm943, %v923, 0.0
    %v960 = vsel %vm944, %v924, 0.0
    %961 = vrot.lane.b32.xlu0 %v68, 80
    %v962 = vpop.permute.xlu0 %961
    %963 = vrot.lane.b32.xlu0 %v69, 80
    %v964 = vpop.permute.xlu0 %963
    %965 = vrot.lane.b32.xlu0 %v70, 80
    %v966 = vpop.permute.xlu0 %965
    %967 = vrot.lane.b32.xlu0 %v71, 80
    %v968 = vpop.permute.xlu0 %967
    %969 = vrot.lane.b32.xlu0 %v72, 80
    %v970 = vpop.permute.xlu0 %969
    %971 = vrot.lane.b32.xlu0 %v73, 80
    %v972 = vpop.permute.xlu0 %971
    %973 = vrot.lane.b32.xlu0 %v74, 80
    %v974 = vpop.permute.xlu0 %973
    %975 = vrot.lane.b32.xlu0 %v75, 80
    %v976 = vpop.permute.xlu0 %975
    %977 = vrot.lane.b32.xlu0 %v76, 80
    %v978 = vpop.permute.xlu0 %977
    %979 = vrot.lane.b32.xlu0 %v77, 80
    %v980 = vpop.permute.xlu0 %979
    %981 = vrot.lane.b32.xlu0 %v78, 80
    %v982 = vpop.permute.xlu0 %981
    %983 = vrot.lane.b32.xlu0 %v79, 80
    %v984 = vpop.permute.xlu0 %983
    %985 = vrot.lane.b32.xlu0 %v80, 80
    %v986 = vpop.permute.xlu0 %985
    %987 = vrot.lane.b32.xlu0 %v81, 80
    %v988 = vpop.permute.xlu0 %987
    %989 = vrot.lane.b32.xlu0 %v82, 80
    %v990 = vpop.permute.xlu0 %989
    %991 = vrot.lane.b32.xlu0 %v83, 80
    %v992 = vpop.permute.xlu0 %991
    %993 = vrot.lane.b32.xlu0 %v84, 80
    %v994 = vpop.permute.xlu0 %993
    %vm995 = vcmp.eq.s32.totalorder %v106, %v101
    %vm996 = vcmp.eq.s32.totalorder %v107, %v102
    %vm997 = vcmp.eq.s32.totalorder %v108, %v103
    %vm998 = vcmp.eq.s32.totalorder %v109, %v104
    %vm999 = vcmp.eq.s32.totalorder %v110, %v105
    %vm1000 = vcmp.eq.s32.totalorder %v111, %v106
    %vm1001 = vcmp.eq.s32.totalorder %v112, %v107
    %vm1002 = vcmp.eq.s32.totalorder %v113, %v108
    %vm1003 = vcmp.eq.s32.totalorder %v114, %v109
    %vm1004 = vcmp.eq.s32.totalorder %v115, %v110
    %vm1005 = vcmp.eq.s32.totalorder %v116, %v111
    %vm1006 = vcmp.eq.s32.totalorder %v101, %v112
    %vm1007 = vcmp.eq.s32.totalorder %v102, %v113
    %vm1008 = vcmp.eq.s32.totalorder %v103, %v114
    %vm1009 = vcmp.eq.s32.totalorder %v104, %v115
    %vm1010 = vcmp.eq.s32.totalorder %v105, %v116
    %v1011 = vsel %vm995, 1, 0
    %v1012 = vsel %vm996, 1, 0
    %v1013 = vsel %vm997, 1, 0
    %v1014 = vsel %vm998, 1, 0
    %v1015 = vsel %vm999, 1, 0
    %v1016 = vsel %vm1000, 1, 0
    %v1017 = vsel %vm1001, 1, 0
    %v1018 = vsel %vm1002, 1, 0
    %v1019 = vsel %vm1003, 1, 0
    %v1020 = vsel %vm1004, 1, 0
    %v1021 = vsel %vm1005, 1, 0
    %v1022 = vsel %vm1006, 1, 0
    %v1023 = vsel %vm1007, 1, 0
    %v1024 = vsel %vm1008, 1, 0
    %v1025 = vsel %vm1009, 1, 0
    %v1026 = vsel %vm1010, 1, 0
    %1027 = vset.pattern.permute.xlu0 0
    %1028 = vperm.xlu0 %1027, %v1011
    %v1029 = vpop.permute.xlu0 %1028
    %1030 = vset.pattern.permute.xlu0 0
    %1031 = vperm.xlu0 %1030, %v1012
    %v1032 = vpop.permute.xlu0 %1031
    %1033 = vset.pattern.permute.xlu0 0
    %1034 = vperm.xlu0 %1033, %v1013
    %v1035 = vpop.permute.xlu0 %1034
    %1036 = vset.pattern.permute.xlu0 0
    %1037 = vperm.xlu0 %1036, %v1014
    %v1038 = vpop.permute.xlu0 %1037
    %1039 = vset.pattern.permute.xlu0 0
    %1040 = vperm.xlu0 %1039, %v1015
    %v1041 = vpop.permute.xlu0 %1040
    %1042 = vset.pattern.permute.xlu0 0
    %1043 = vperm.xlu0 %1042, %v1016
    %v1044 = vpop.permute.xlu0 %1043
    %1045 = vset.pattern.permute.xlu0 0
    %1046 = vperm.xlu0 %1045, %v1017
    %v1047 = vpop.permute.xlu0 %1046
    %1048 = vset.pattern.permute.xlu0 0
    %1049 = vperm.xlu0 %1048, %v1018
    %v1050 = vpop.permute.xlu0 %1049
    %1051 = vset.pattern.permute.xlu0 0
    %1052 = vperm.xlu0 %1051, %v1019
    %v1053 = vpop.permute.xlu0 %1052
    %1054 = vset.pattern.permute.xlu0 0
    %1055 = vperm.xlu0 %1054, %v1020
    %v1056 = vpop.permute.xlu0 %1055
    %1057 = vset.pattern.permute.xlu0 0
    %1058 = vperm.xlu0 %1057, %v1021
    %v1059 = vpop.permute.xlu0 %1058
    %1060 = vset.pattern.permute.xlu0 0
    %1061 = vperm.xlu0 %1060, %v1022
    %v1062 = vpop.permute.xlu0 %1061
    %1063 = vset.pattern.permute.xlu0 0
    %1064 = vperm.xlu0 %1063, %v1023
    %v1065 = vpop.permute.xlu0 %1064
    %1066 = vset.pattern.permute.xlu0 0
    %1067 = vperm.xlu0 %1066, %v1024
    %v1068 = vpop.permute.xlu0 %1067
    %1069 = vset.pattern.permute.xlu0 0
    %1070 = vperm.xlu0 %1069, %v1025
    %v1071 = vpop.permute.xlu0 %1070
    %1072 = vset.pattern.permute.xlu0 0
    %1073 = vperm.xlu0 %1072, %v1026
    %v1074 = vpop.permute.xlu0 %1073
    %vm1075 = vcmp.eq.s32.totalorder %v1029, 1
    %vm1076 = vcmp.eq.s32.totalorder %v1032, 1
    %vm1077 = vcmp.eq.s32.totalorder %v1035, 1
    %vm1078 = vcmp.eq.s32.totalorder %v1038, 1
    %vm1079 = vcmp.eq.s32.totalorder %v1041, 1
    %vm1080 = vcmp.eq.s32.totalorder %v1044, 1
    %vm1081 = vcmp.eq.s32.totalorder %v1047, 1
    %vm1082 = vcmp.eq.s32.totalorder %v1050, 1
    %vm1083 = vcmp.eq.s32.totalorder %v1053, 1
    %vm1084 = vcmp.eq.s32.totalorder %v1056, 1
    %vm1085 = vcmp.eq.s32.totalorder %v1059, 1
    %vm1086 = vcmp.eq.s32.totalorder %v1062, 1
    %vm1087 = vcmp.eq.s32.totalorder %v1065, 1
    %vm1088 = vcmp.eq.s32.totalorder %v1068, 1
    %vm1089 = vcmp.eq.s32.totalorder %v1071, 1
    %vm1090 = vcmp.eq.s32.totalorder %v1074, 1
    %v1091 = vsel %vm1075, %v972, %v988
    %v1092 = vsel %vm1076, %v974, %v990
    %v1093 = vsel %vm1077, %v976, %v992
    %v1094 = vsel %vm1078, %v978, %v962
    %v1095 = vsel %vm1079, %v980, %v964
    %v1096 = vsel %vm1080, %v982, %v966
    %v1097 = vsel %vm1081, %v984, %v968
    %v1098 = vsel %vm1082, %v986, %v970
    %v1099 = vsel %vm1083, %v988, %v972
    %v1100 = vsel %vm1084, %v990, %v974
    %v1101 = vsel %vm1085, %v992, %v976
    %v1102 = vsel %vm1086, %v962, %v978
    %v1103 = vsel %vm1087, %v964, %v980
    %v1104 = vsel %vm1088, %v966, %v982
    %v1105 = vsel %vm1089, %v968, %v984
    %v1106 = vsel %vm1090, %v970, %v986
    %v1107 = vlaneseq
    %v1108 = vshrl.u32 %v1107, 7
    %v1109 = vsub.s32 0, %v1108
    %v1110 = vrot.slane %v994, %v1109
    %vm1111 = vcmp.eq.s32.totalorder %v151, %v1110
    %vm1112 = vcmp.eq.s32.totalorder %v154, %v1110
    %vm1113 = vcmp.eq.s32.totalorder %v157, %v1110
    %vm1114 = vcmp.eq.s32.totalorder %v160, %v1110
    %vm1115 = vcmp.eq.s32.totalorder %v163, %v1110
    %vm1116 = vcmp.eq.s32.totalorder %v166, %v1110
    %vm1117 = vcmp.eq.s32.totalorder %v169, %v1110
    %vm1118 = vcmp.eq.s32.totalorder %v172, %v1110
    %vm1119 = vcmp.eq.s32.totalorder %v175, %v1110
    %vm1120 = vcmp.eq.s32.totalorder %v178, %v1110
    %vm1121 = vcmp.eq.s32.totalorder %v181, %v1110
    %vm1122 = vcmp.eq.s32.totalorder %v184, %v1110
    %vm1123 = vcmp.eq.s32.totalorder %v187, %v1110
    %vm1124 = vcmp.eq.s32.totalorder %v190, %v1110
    %vm1125 = vcmp.eq.s32.totalorder %v193, %v1110
    %vm1126 = vcmp.eq.s32.totalorder %v196, %v1110
    %v1127 = vsel %vm1111, %v1091, 0.0
    %v1128 = vsel %vm1112, %v1092, 0.0
    %v1129 = vsel %vm1113, %v1093, 0.0
    %v1130 = vsel %vm1114, %v1094, 0.0
    %v1131 = vsel %vm1115, %v1095, 0.0
    %v1132 = vsel %vm1116, %v1096, 0.0
    %v1133 = vsel %vm1117, %v1097, 0.0
    %v1134 = vsel %vm1118, %v1098, 0.0
    %v1135 = vsel %vm1119, %v1099, 0.0
    %v1136 = vsel %vm1120, %v1100, 0.0
    %v1137 = vsel %vm1121, %v1101, 0.0
    %v1138 = vsel %vm1122, %v1102, 0.0
    %v1139 = vsel %vm1123, %v1103, 0.0
    %v1140 = vsel %vm1124, %v1104, 0.0
    %v1141 = vsel %vm1125, %v1105, 0.0
    %v1142 = vsel %vm1126, %v1106, 0.0
    %1143 = vrot.lane.b32.xlu0 %v68, 96
    %v1144 = vpop.permute.xlu0 %1143
    %1145 = vrot.lane.b32.xlu0 %v69, 96
    %v1146 = vpop.permute.xlu0 %1145
    %1147 = vrot.lane.b32.xlu0 %v70, 96
    %v1148 = vpop.permute.xlu0 %1147
    %1149 = vrot.lane.b32.xlu0 %v71, 96
    %v1150 = vpop.permute.xlu0 %1149
    %1151 = vrot.lane.b32.xlu0 %v72, 96
    %v1152 = vpop.permute.xlu0 %1151
    %1153 = vrot.lane.b32.xlu0 %v73, 96
    %v1154 = vpop.permute.xlu0 %1153
    %1155 = vrot.lane.b32.xlu0 %v74, 96
    %v1156 = vpop.permute.xlu0 %1155
    %1157 = vrot.lane.b32.xlu0 %v75, 96
    %v1158 = vpop.permute.xlu0 %1157
    %1159 = vrot.lane.b32.xlu0 %v76, 96
    %v1160 = vpop.permute.xlu0 %1159
    %1161 = vrot.lane.b32.xlu0 %v77, 96
    %v1162 = vpop.permute.xlu0 %1161
    %1163 = vrot.lane.b32.xlu0 %v78, 96
    %v1164 = vpop.permute.xlu0 %1163
    %1165 = vrot.lane.b32.xlu0 %v79, 96
    %v1166 = vpop.permute.xlu0 %1165
    %1167 = vrot.lane.b32.xlu0 %v80, 96
    %v1168 = vpop.permute.xlu0 %1167
    %1169 = vrot.lane.b32.xlu0 %v81, 96
    %v1170 = vpop.permute.xlu0 %1169
    %1171 = vrot.lane.b32.xlu0 %v82, 96
    %v1172 = vpop.permute.xlu0 %1171
    %1173 = vrot.lane.b32.xlu0 %v83, 96
    %v1174 = vpop.permute.xlu0 %1173
    %1175 = vrot.lane.b32.xlu0 %v84, 96
    %v1176 = vpop.permute.xlu0 %1175
    %vm1177 = vcmp.eq.s32.totalorder %v107, %v101
    %vm1178 = vcmp.eq.s32.totalorder %v108, %v102
    %vm1179 = vcmp.eq.s32.totalorder %v109, %v103
    %vm1180 = vcmp.eq.s32.totalorder %v110, %v104
    %vm1181 = vcmp.eq.s32.totalorder %v111, %v105
    %vm1182 = vcmp.eq.s32.totalorder %v112, %v106
    %vm1183 = vcmp.eq.s32.totalorder %v113, %v107
    %vm1184 = vcmp.eq.s32.totalorder %v114, %v108
    %vm1185 = vcmp.eq.s32.totalorder %v115, %v109
    %vm1186 = vcmp.eq.s32.totalorder %v116, %v110
    %vm1187 = vcmp.eq.s32.totalorder %v101, %v111
    %vm1188 = vcmp.eq.s32.totalorder %v102, %v112
    %vm1189 = vcmp.eq.s32.totalorder %v103, %v113
    %vm1190 = vcmp.eq.s32.totalorder %v104, %v114
    %vm1191 = vcmp.eq.s32.totalorder %v105, %v115
    %vm1192 = vcmp.eq.s32.totalorder %v106, %v116
    %v1193 = vsel %vm1177, 1, 0
    %v1194 = vsel %vm1178, 1, 0
    %v1195 = vsel %vm1179, 1, 0
    %v1196 = vsel %vm1180, 1, 0
    %v1197 = vsel %vm1181, 1, 0
    %v1198 = vsel %vm1182, 1, 0
    %v1199 = vsel %vm1183, 1, 0
    %v1200 = vsel %vm1184, 1, 0
    %v1201 = vsel %vm1185, 1, 0
    %v1202 = vsel %vm1186, 1, 0
    %v1203 = vsel %vm1187, 1, 0
    %v1204 = vsel %vm1188, 1, 0
    %v1205 = vsel %vm1189, 1, 0
    %v1206 = vsel %vm1190, 1, 0
    %v1207 = vsel %vm1191, 1, 0
    %v1208 = vsel %vm1192, 1, 0
    %1209 = vset.pattern.permute.xlu0 0
    %1210 = vperm.xlu0 %1209, %v1193
    %v1211 = vpop.permute.xlu0 %1210
    %1212 = vset.pattern.permute.xlu0 0
    %1213 = vperm.xlu0 %1212, %v1194
    %v1214 = vpop.permute.xlu0 %1213
    %1215 = vset.pattern.permute.xlu0 0
    %1216 = vperm.xlu0 %1215, %v1195
    %v1217 = vpop.permute.xlu0 %1216
    %1218 = vset.pattern.permute.xlu0 0
    %1219 = vperm.xlu0 %1218, %v1196
    %v1220 = vpop.permute.xlu0 %1219
    %1221 = vset.pattern.permute.xlu0 0
    %1222 = vperm.xlu0 %1221, %v1197
    %v1223 = vpop.permute.xlu0 %1222
    %1224 = vset.pattern.permute.xlu0 0
    %1225 = vperm.xlu0 %1224, %v1198
    %v1226 = vpop.permute.xlu0 %1225
    %1227 = vset.pattern.permute.xlu0 0
    %1228 = vperm.xlu0 %1227, %v1199
    %v1229 = vpop.permute.xlu0 %1228
    %1230 = vset.pattern.permute.xlu0 0
    %1231 = vperm.xlu0 %1230, %v1200
    %v1232 = vpop.permute.xlu0 %1231
    %1233 = vset.pattern.permute.xlu0 0
    %1234 = vperm.xlu0 %1233, %v1201
    %v1235 = vpop.permute.xlu0 %1234
    %1236 = vset.pattern.permute.xlu0 0
    %1237 = vperm.xlu0 %1236, %v1202
    %v1238 = vpop.permute.xlu0 %1237
    %1239 = vset.pattern.permute.xlu0 0
    %1240 = vperm.xlu0 %1239, %v1203
    %v1241 = vpop.permute.xlu0 %1240
    %1242 = vset.pattern.permute.xlu0 0
    %1243 = vperm.xlu0 %1242, %v1204
    %v1244 = vpop.permute.xlu0 %1243
    %1245 = vset.pattern.permute.xlu0 0
    %1246 = vperm.xlu0 %1245, %v1205
    %v1247 = vpop.permute.xlu0 %1246
    %1248 = vset.pattern.permute.xlu0 0
    %1249 = vperm.xlu0 %1248, %v1206
    %v1250 = vpop.permute.xlu0 %1249
    %1251 = vset.pattern.permute.xlu0 0
    %1252 = vperm.xlu0 %1251, %v1207
    %v1253 = vpop.permute.xlu0 %1252
    %1254 = vset.pattern.permute.xlu0 0
    %1255 = vperm.xlu0 %1254, %v1208
    %v1256 = vpop.permute.xlu0 %1255
    %vm1257 = vcmp.eq.s32.totalorder %v1211, 1
    %vm1258 = vcmp.eq.s32.totalorder %v1214, 1
    %vm1259 = vcmp.eq.s32.totalorder %v1217, 1
    %vm1260 = vcmp.eq.s32.totalorder %v1220, 1
    %vm1261 = vcmp.eq.s32.totalorder %v1223, 1
    %vm1262 = vcmp.eq.s32.totalorder %v1226, 1
    %vm1263 = vcmp.eq.s32.totalorder %v1229, 1
    %vm1264 = vcmp.eq.s32.totalorder %v1232, 1
    %vm1265 = vcmp.eq.s32.totalorder %v1235, 1
    %vm1266 = vcmp.eq.s32.totalorder %v1238, 1
    %vm1267 = vcmp.eq.s32.totalorder %v1241, 1
    %vm1268 = vcmp.eq.s32.totalorder %v1244, 1
    %vm1269 = vcmp.eq.s32.totalorder %v1247, 1
    %vm1270 = vcmp.eq.s32.totalorder %v1250, 1
    %vm1271 = vcmp.eq.s32.totalorder %v1253, 1
    %vm1272 = vcmp.eq.s32.totalorder %v1256, 1
    %v1273 = vsel %vm1257, %v1156, %v1172
    %v1274 = vsel %vm1258, %v1158, %v1174
    %v1275 = vsel %vm1259, %v1160, %v1144
    %v1276 = vsel %vm1260, %v1162, %v1146
    %v1277 = vsel %vm1261, %v1164, %v1148
    %v1278 = vsel %vm1262, %v1166, %v1150
    %v1279 = vsel %vm1263, %v1168, %v1152
    %v1280 = vsel %vm1264, %v1170, %v1154
    %v1281 = vsel %vm1265, %v1172, %v1156
    %v1282 = vsel %vm1266, %v1174, %v1158
    %v1283 = vsel %vm1267, %v1144, %v1160
    %v1284 = vsel %vm1268, %v1146, %v1162
    %v1285 = vsel %vm1269, %v1148, %v1164
    %v1286 = vsel %vm1270, %v1150, %v1166
    %v1287 = vsel %vm1271, %v1152, %v1168
    %v1288 = vsel %vm1272, %v1154, %v1170
    %v1289 = vlaneseq
    %v1290 = vshrl.u32 %v1289, 7
    %v1291 = vsub.s32 0, %v1290
    %v1292 = vrot.slane %v1176, %v1291
    %vm1293 = vcmp.eq.s32.totalorder %v151, %v1292
    %vm1294 = vcmp.eq.s32.totalorder %v154, %v1292
    %vm1295 = vcmp.eq.s32.totalorder %v157, %v1292
    %vm1296 = vcmp.eq.s32.totalorder %v160, %v1292
    %vm1297 = vcmp.eq.s32.totalorder %v163, %v1292
    %vm1298 = vcmp.eq.s32.totalorder %v166, %v1292
    %vm1299 = vcmp.eq.s32.totalorder %v169, %v1292
    %vm1300 = vcmp.eq.s32.totalorder %v172, %v1292
    %vm1301 = vcmp.eq.s32.totalorder %v175, %v1292
    %vm1302 = vcmp.eq.s32.totalorder %v178, %v1292
    %vm1303 = vcmp.eq.s32.totalorder %v181, %v1292
    %vm1304 = vcmp.eq.s32.totalorder %v184, %v1292
    %vm1305 = vcmp.eq.s32.totalorder %v187, %v1292
    %vm1306 = vcmp.eq.s32.totalorder %v190, %v1292
    %vm1307 = vcmp.eq.s32.totalorder %v193, %v1292
    %vm1308 = vcmp.eq.s32.totalorder %v196, %v1292
    %v1309 = vsel %vm1293, %v1273, 0.0
    %v1310 = vsel %vm1294, %v1274, 0.0
    %v1311 = vsel %vm1295, %v1275, 0.0
    %v1312 = vsel %vm1296, %v1276, 0.0
    %v1313 = vsel %vm1297, %v1277, 0.0
    %v1314 = vsel %vm1298, %v1278, 0.0
    %v1315 = vsel %vm1299, %v1279, 0.0
    %v1316 = vsel %vm1300, %v1280, 0.0
    %v1317 = vsel %vm1301, %v1281, 0.0
    %v1318 = vsel %vm1302, %v1282, 0.0
    %v1319 = vsel %vm1303, %v1283, 0.0
    %v1320 = vsel %vm1304, %v1284, 0.0
    %v1321 = vsel %vm1305, %v1285, 0.0
    %v1322 = vsel %vm1306, %v1286, 0.0
    %v1323 = vsel %vm1307, %v1287, 0.0
    %v1324 = vsel %vm1308, %v1288, 0.0
    %1325 = vrot.lane.b32.xlu0 %v68, 112
    %v1326 = vpop.permute.xlu0 %1325
    %1327 = vrot.lane.b32.xlu0 %v69, 112
    %v1328 = vpop.permute.xlu0 %1327
    %1329 = vrot.lane.b32.xlu0 %v70, 112
    %v1330 = vpop.permute.xlu0 %1329
    %1331 = vrot.lane.b32.xlu0 %v71, 112
    %v1332 = vpop.permute.xlu0 %1331
    %1333 = vrot.lane.b32.xlu0 %v72, 112
    %v1334 = vpop.permute.xlu0 %1333
    %1335 = vrot.lane.b32.xlu0 %v73, 112
    %v1336 = vpop.permute.xlu0 %1335
    %1337 = vrot.lane.b32.xlu0 %v74, 112
    %v1338 = vpop.permute.xlu0 %1337
    %1339 = vrot.lane.b32.xlu0 %v75, 112
    %v1340 = vpop.permute.xlu0 %1339
    %1341 = vrot.lane.b32.xlu0 %v76, 112
    %v1342 = vpop.permute.xlu0 %1341
    %1343 = vrot.lane.b32.xlu0 %v77, 112
    %v1344 = vpop.permute.xlu0 %1343
    %1345 = vrot.lane.b32.xlu0 %v78, 112
    %v1346 = vpop.permute.xlu0 %1345
    %1347 = vrot.lane.b32.xlu0 %v79, 112
    %v1348 = vpop.permute.xlu0 %1347
    %1349 = vrot.lane.b32.xlu0 %v80, 112
    %v1350 = vpop.permute.xlu0 %1349
    %1351 = vrot.lane.b32.xlu0 %v81, 112
    %v1352 = vpop.permute.xlu0 %1351
    %1353 = vrot.lane.b32.xlu0 %v82, 112
    %v1354 = vpop.permute.xlu0 %1353
    %1355 = vrot.lane.b32.xlu0 %v83, 112
    %v1356 = vpop.permute.xlu0 %1355
    %1357 = vrot.lane.b32.xlu0 %v84, 112
    %v1358 = vpop.permute.xlu0 %1357
    %vm1359 = vcmp.eq.s32.totalorder %v108, %v101
    %vm1360 = vcmp.eq.s32.totalorder %v109, %v102
    %vm1361 = vcmp.eq.s32.totalorder %v110, %v103
    %vm1362 = vcmp.eq.s32.totalorder %v111, %v104
    %vm1363 = vcmp.eq.s32.totalorder %v112, %v105
    %vm1364 = vcmp.eq.s32.totalorder %v113, %v106
    %vm1365 = vcmp.eq.s32.totalorder %v114, %v107
    %vm1366 = vcmp.eq.s32.totalorder %v115, %v108
    %vm1367 = vcmp.eq.s32.totalorder %v116, %v109
    %vm1368 = vcmp.eq.s32.totalorder %v101, %v110
    %vm1369 = vcmp.eq.s32.totalorder %v102, %v111
    %vm1370 = vcmp.eq.s32.totalorder %v103, %v112
    %vm1371 = vcmp.eq.s32.totalorder %v104, %v113
    %vm1372 = vcmp.eq.s32.totalorder %v105, %v114
    %vm1373 = vcmp.eq.s32.totalorder %v106, %v115
    %vm1374 = vcmp.eq.s32.totalorder %v107, %v116
    %v1375 = vsel %vm1359, 1, 0
    %v1376 = vsel %vm1360, 1, 0
    %v1377 = vsel %vm1361, 1, 0
    %v1378 = vsel %vm1362, 1, 0
    %v1379 = vsel %vm1363, 1, 0
    %v1380 = vsel %vm1364, 1, 0
    %v1381 = vsel %vm1365, 1, 0
    %v1382 = vsel %vm1366, 1, 0
    %v1383 = vsel %vm1367, 1, 0
    %v1384 = vsel %vm1368, 1, 0
    %v1385 = vsel %vm1369, 1, 0
    %v1386 = vsel %vm1370, 1, 0
    %v1387 = vsel %vm1371, 1, 0
    %v1388 = vsel %vm1372, 1, 0
    %v1389 = vsel %vm1373, 1, 0
    %v1390 = vsel %vm1374, 1, 0
    %1391 = vset.pattern.permute.xlu0 0
    %1392 = vperm.xlu0 %1391, %v1375
    %v1393 = vpop.permute.xlu0 %1392
    %1394 = vset.pattern.permute.xlu0 0
    %1395 = vperm.xlu0 %1394, %v1376
    %v1396 = vpop.permute.xlu0 %1395
    %1397 = vset.pattern.permute.xlu0 0
    %1398 = vperm.xlu0 %1397, %v1377
    %v1399 = vpop.permute.xlu0 %1398
    %1400 = vset.pattern.permute.xlu0 0
    %1401 = vperm.xlu0 %1400, %v1378
    %v1402 = vpop.permute.xlu0 %1401
    %1403 = vset.pattern.permute.xlu0 0
    %1404 = vperm.xlu0 %1403, %v1379
    %v1405 = vpop.permute.xlu0 %1404
    %1406 = vset.pattern.permute.xlu0 0
    %1407 = vperm.xlu0 %1406, %v1380
    %v1408 = vpop.permute.xlu0 %1407
    %1409 = vset.pattern.permute.xlu0 0
    %1410 = vperm.xlu0 %1409, %v1381
    %v1411 = vpop.permute.xlu0 %1410
    %1412 = vset.pattern.permute.xlu0 0
    %1413 = vperm.xlu0 %1412, %v1382
    %v1414 = vpop.permute.xlu0 %1413
    %1415 = vset.pattern.permute.xlu0 0
    %1416 = vperm.xlu0 %1415, %v1383
    %v1417 = vpop.permute.xlu0 %1416
    %1418 = vset.pattern.permute.xlu0 0
    %1419 = vperm.xlu0 %1418, %v1384
    %v1420 = vpop.permute.xlu0 %1419
    %1421 = vset.pattern.permute.xlu0 0
    %1422 = vperm.xlu0 %1421, %v1385
    %v1423 = vpop.permute.xlu0 %1422
    %1424 = vset.pattern.permute.xlu0 0
    %1425 = vperm.xlu0 %1424, %v1386
    %v1426 = vpop.permute.xlu0 %1425
    %1427 = vset.pattern.permute.xlu0 0
    %1428 = vperm.xlu0 %1427, %v1387
    %v1429 = vpop.permute.xlu0 %1428
    %1430 = vset.pattern.permute.xlu0 0
    %1431 = vperm.xlu0 %1430, %v1388
    %v1432 = vpop.permute.xlu0 %1431
    %1433 = vset.pattern.permute.xlu0 0
    %1434 = vperm.xlu0 %1433, %v1389
    %v1435 = vpop.permute.xlu0 %1434
    %1436 = vset.pattern.permute.xlu0 0
    %1437 = vperm.xlu0 %1436, %v1390
    %v1438 = vpop.permute.xlu0 %1437
    %vm1439 = vcmp.eq.s32.totalorder %v1393, 1
    %vm1440 = vcmp.eq.s32.totalorder %v1396, 1
    %vm1441 = vcmp.eq.s32.totalorder %v1399, 1
    %vm1442 = vcmp.eq.s32.totalorder %v1402, 1
    %vm1443 = vcmp.eq.s32.totalorder %v1405, 1
    %vm1444 = vcmp.eq.s32.totalorder %v1408, 1
    %vm1445 = vcmp.eq.s32.totalorder %v1411, 1
    %vm1446 = vcmp.eq.s32.totalorder %v1414, 1
    %vm1447 = vcmp.eq.s32.totalorder %v1417, 1
    %vm1448 = vcmp.eq.s32.totalorder %v1420, 1
    %vm1449 = vcmp.eq.s32.totalorder %v1423, 1
    %vm1450 = vcmp.eq.s32.totalorder %v1426, 1
    %vm1451 = vcmp.eq.s32.totalorder %v1429, 1
    %vm1452 = vcmp.eq.s32.totalorder %v1432, 1
    %vm1453 = vcmp.eq.s32.totalorder %v1435, 1
    %vm1454 = vcmp.eq.s32.totalorder %v1438, 1
    %v1455 = vsel %vm1439, %v1340, %v1356
    %v1456 = vsel %vm1440, %v1342, %v1326
    %v1457 = vsel %vm1441, %v1344, %v1328
    %v1458 = vsel %vm1442, %v1346, %v1330
    %v1459 = vsel %vm1443, %v1348, %v1332
    %v1460 = vsel %vm1444, %v1350, %v1334
    %v1461 = vsel %vm1445, %v1352, %v1336
    %v1462 = vsel %vm1446, %v1354, %v1338
    %v1463 = vsel %vm1447, %v1356, %v1340
    %v1464 = vsel %vm1448, %v1326, %v1342
    %v1465 = vsel %vm1449, %v1328, %v1344
    %v1466 = vsel %vm1450, %v1330, %v1346
    %v1467 = vsel %vm1451, %v1332, %v1348
    %v1468 = vsel %vm1452, %v1334, %v1350
    %v1469 = vsel %vm1453, %v1336, %v1352
    %v1470 = vsel %vm1454, %v1338, %v1354
    %v1471 = vlaneseq
    %v1472 = vshrl.u32 %v1471, 7
    %v1473 = vsub.s32 0, %v1472
    %v1474 = vrot.slane %v1358, %v1473
    %vm1475 = vcmp.eq.s32.totalorder %v151, %v1474
    %vm1476 = vcmp.eq.s32.totalorder %v154, %v1474
    %vm1477 = vcmp.eq.s32.totalorder %v157, %v1474
    %vm1478 = vcmp.eq.s32.totalorder %v160, %v1474
    %vm1479 = vcmp.eq.s32.totalorder %v163, %v1474
    %vm1480 = vcmp.eq.s32.totalorder %v166, %v1474
    %vm1481 = vcmp.eq.s32.totalorder %v169, %v1474
    %vm1482 = vcmp.eq.s32.totalorder %v172, %v1474
    %vm1483 = vcmp.eq.s32.totalorder %v175, %v1474
    %vm1484 = vcmp.eq.s32.totalorder %v178, %v1474
    %vm1485 = vcmp.eq.s32.totalorder %v181, %v1474
    %vm1486 = vcmp.eq.s32.totalorder %v184, %v1474
    %vm1487 = vcmp.eq.s32.totalorder %v187, %v1474
    %vm1488 = vcmp.eq.s32.totalorder %v190, %v1474
    %vm1489 = vcmp.eq.s32.totalorder %v193, %v1474
    %vm1490 = vcmp.eq.s32.totalorder %v196, %v1474
    %v1491 = vsel %vm1475, %v1455, 0.0
    %v1492 = vsel %vm1476, %v1456, 0.0
    %v1493 = vsel %vm1477, %v1457, 0.0
    %v1494 = vsel %vm1478, %v1458, 0.0
    %v1495 = vsel %vm1479, %v1459, 0.0
    %v1496 = vsel %vm1480, %v1460, 0.0
    %v1497 = vsel %vm1481, %v1461, 0.0
    %v1498 = vsel %vm1482, %v1462, 0.0
    %v1499 = vsel %vm1483, %v1463, 0.0
    %v1500 = vsel %vm1484, %v1464, 0.0
    %v1501 = vsel %vm1485, %v1465, 0.0
    %v1502 = vsel %vm1486, %v1466, 0.0
    %v1503 = vsel %vm1487, %v1467, 0.0
    %v1504 = vsel %vm1488, %v1468, 0.0
    %v1505 = vsel %vm1489, %v1469, 0.0
    %v1506 = vsel %vm1490, %v1470, 0.0
    %v1507 = vadd.f32 %v217, %v399
    %v1508 = vadd.f32 %v218, %v400
    %v1509 = vadd.f32 %v219, %v401
    %v1510 = vadd.f32 %v220, %v402
    %v1511 = vadd.f32 %v221, %v403
    %v1512 = vadd.f32 %v222, %v404
    %v1513 = vadd.f32 %v223, %v405
    %v1514 = vadd.f32 %v224, %v406
    %v1515 = vadd.f32 %v225, %v407
    %v1516 = vadd.f32 %v226, %v408
    %v1517 = vadd.f32 %v227, %v409
    %v1518 = vadd.f32 %v228, %v410
    %v1519 = vadd.f32 %v229, %v411
    %v1520 = vadd.f32 %v230, %v412
    %v1521 = vadd.f32 %v231, %v413
    %v1522 = vadd.f32 %v232, %v414
    %v1523 = vadd.f32 %v581, %v763
    %v1524 = vadd.f32 %v582, %v764
    %v1525 = vadd.f32 %v583, %v765
    %v1526 = vadd.f32 %v584, %v766
    %v1527 = vadd.f32 %v585, %v767
    %v1528 = vadd.f32 %v586, %v768
    %v1529 = vadd.f32 %v587, %v769
    %v1530 = vadd.f32 %v588, %v770
    %v1531 = vadd.f32 %v589, %v771
    %v1532 = vadd.f32 %v590, %v772
    %v1533 = vadd.f32 %v591, %v773
    %v1534 = vadd.f32 %v592, %v774
    %v1535 = vadd.f32 %v593, %v775
    %v1536 = vadd.f32 %v594, %v776
    %v1537 = vadd.f32 %v595, %v777
    %v1538 = vadd.f32 %v596, %v778
    %v1539 = vadd.f32 %v945, %v1127
    %v1540 = vadd.f32 %v946, %v1128
    %v1541 = vadd.f32 %v947, %v1129
    %v1542 = vadd.f32 %v948, %v1130
    %v1543 = vadd.f32 %v949, %v1131
    %v1544 = vadd.f32 %v950, %v1132
    %v1545 = vadd.f32 %v951, %v1133
    %v1546 = vadd.f32 %v952, %v1134
    %v1547 = vadd.f32 %v953, %v1135
    %v1548 = vadd.f32 %v954, %v1136
    %v1549 = vadd.f32 %v955, %v1137
    %v1550 = vadd.f32 %v956, %v1138
    %v1551 = vadd.f32 %v957, %v1139
    %v1552 = vadd.f32 %v958, %v1140
    %v1553 = vadd.f32 %v959, %v1141
    %v1554 = vadd.f32 %v960, %v1142
    %v1555 = vadd.f32 %v1309, %v1491
    %v1556 = vadd.f32 %v1310, %v1492
    %v1557 = vadd.f32 %v1311, %v1493
    %v1558 = vadd.f32 %v1312, %v1494
    %v1559 = vadd.f32 %v1313, %v1495
    %v1560 = vadd.f32 %v1314, %v1496
    %v1561 = vadd.f32 %v1315, %v1497
    %v1562 = vadd.f32 %v1316, %v1498
    %v1563 = vadd.f32 %v1317, %v1499
    %v1564 = vadd.f32 %v1318, %v1500
    %v1565 = vadd.f32 %v1319, %v1501
    %v1566 = vadd.f32 %v1320, %v1502
    %v1567 = vadd.f32 %v1321, %v1503
    %v1568 = vadd.f32 %v1322, %v1504
    %v1569 = vadd.f32 %v1323, %v1505
    %v1570 = vadd.f32 %v1324, %v1506
    %v1571 = vadd.f32 %v1507, %v1523
    %v1572 = vadd.f32 %v1508, %v1524
    %v1573 = vadd.f32 %v1509, %v1525
    %v1574 = vadd.f32 %v1510, %v1526
    %v1575 = vadd.f32 %v1511, %v1527
    %v1576 = vadd.f32 %v1512, %v1528
    %v1577 = vadd.f32 %v1513, %v1529
    %v1578 = vadd.f32 %v1514, %v1530
    %v1579 = vadd.f32 %v1515, %v1531
    %v1580 = vadd.f32 %v1516, %v1532
    %v1581 = vadd.f32 %v1517, %v1533
    %v1582 = vadd.f32 %v1518, %v1534
    %v1583 = vadd.f32 %v1519, %v1535
    %v1584 = vadd.f32 %v1520, %v1536
    %v1585 = vadd.f32 %v1521, %v1537
    %v1586 = vadd.f32 %v1522, %v1538
    %v1587 = vadd.f32 %v1539, %v1555
    %v1588 = vadd.f32 %v1540, %v1556
    %v1589 = vadd.f32 %v1541, %v1557
    %v1590 = vadd.f32 %v1542, %v1558
    %v1591 = vadd.f32 %v1543, %v1559
    %v1592 = vadd.f32 %v1544, %v1560
    %v1593 = vadd.f32 %v1545, %v1561
    %v1594 = vadd.f32 %v1546, %v1562
    %v1595 = vadd.f32 %v1547, %v1563
    %v1596 = vadd.f32 %v1548, %v1564
    %v1597 = vadd.f32 %v1549, %v1565
    %v1598 = vadd.f32 %v1550, %v1566
    %v1599 = vadd.f32 %v1551, %v1567
    %v1600 = vadd.f32 %v1552, %v1568
    %v1601 = vadd.f32 %v1553, %v1569
    %v1602 = vadd.f32 %v1554, %v1570
    %v1603 = vadd.f32 %v1571, %v1587
    %v1604 = vadd.f32 %v1572, %v1588
    %v1605 = vadd.f32 %v1573, %v1589
    %v1606 = vadd.f32 %v1574, %v1590
    %v1607 = vadd.f32 %v1575, %v1591
    %v1608 = vadd.f32 %v1576, %v1592
    %v1609 = vadd.f32 %v1577, %v1593
    %v1610 = vadd.f32 %v1578, %v1594
    %v1611 = vadd.f32 %v1579, %v1595
    %v1612 = vadd.f32 %v1580, %v1596
    %v1613 = vadd.f32 %v1581, %v1597
    %v1614 = vadd.f32 %v1582, %v1598
    %v1615 = vadd.f32 %v1583, %v1599
    %v1616 = vadd.f32 %v1584, %v1600
    %v1617 = vadd.f32 %v1585, %v1601
    %v1618 = vadd.f32 %v1586, %v1602
    %1619 = vset.pattern.permute.xlu0 0
    %1620 = vperm.xlu0 %1619, %v117
    %v1621 = vpop.permute.xlu0 %1620
    %1622 = vset.pattern.permute.xlu0 0
    %1623 = vperm.xlu0 %1622, %v118
    %v1624 = vpop.permute.xlu0 %1623
    %1625 = vset.pattern.permute.xlu0 0
    %1626 = vperm.xlu0 %1625, %v119
    %v1627 = vpop.permute.xlu0 %1626
    %1628 = vset.pattern.permute.xlu0 0
    %1629 = vperm.xlu0 %1628, %v120
    %v1630 = vpop.permute.xlu0 %1629
    %1631 = vset.pattern.permute.xlu0 0
    %1632 = vperm.xlu0 %1631, %v121
    %v1633 = vpop.permute.xlu0 %1632
    %1634 = vset.pattern.permute.xlu0 0
    %1635 = vperm.xlu0 %1634, %v122
    %v1636 = vpop.permute.xlu0 %1635
    %1637 = vset.pattern.permute.xlu0 0
    %1638 = vperm.xlu0 %1637, %v123
    %v1639 = vpop.permute.xlu0 %1638
    %1640 = vset.pattern.permute.xlu0 0
    %1641 = vperm.xlu0 %1640, %v124
    %v1642 = vpop.permute.xlu0 %1641
    %1643 = vset.pattern.permute.xlu0 0
    %1644 = vperm.xlu0 %1643, %v125
    %v1645 = vpop.permute.xlu0 %1644
    %1646 = vset.pattern.permute.xlu0 0
    %1647 = vperm.xlu0 %1646, %v126
    %v1648 = vpop.permute.xlu0 %1647
    %1649 = vset.pattern.permute.xlu0 0
    %1650 = vperm.xlu0 %1649, %v127
    %v1651 = vpop.permute.xlu0 %1650
    %1652 = vset.pattern.permute.xlu0 0
    %1653 = vperm.xlu0 %1652, %v128
    %v1654 = vpop.permute.xlu0 %1653
    %1655 = vset.pattern.permute.xlu0 0
    %1656 = vperm.xlu0 %1655, %v129
    %v1657 = vpop.permute.xlu0 %1656
    %1658 = vset.pattern.permute.xlu0 0
    %1659 = vperm.xlu0 %1658, %v130
    %v1660 = vpop.permute.xlu0 %1659
    %1661 = vset.pattern.permute.xlu0 0
    %1662 = vperm.xlu0 %1661, %v131
    %v1663 = vpop.permute.xlu0 %1662
    %1664 = vset.pattern.permute.xlu0 0
    %1665 = vperm.xlu0 %1664, %v132
    %v1666 = vpop.permute.xlu0 %1665
    %vm1667 = vcmp.eq.s32.totalorder %v1621, %v200
    %vm1668 = vcmp.eq.s32.totalorder %v1624, %v200
    %vm1669 = vcmp.eq.s32.totalorder %v1627, %v200
    %vm1670 = vcmp.eq.s32.totalorder %v1630, %v200
    %vm1671 = vcmp.eq.s32.totalorder %v1633, %v200
    %vm1672 = vcmp.eq.s32.totalorder %v1636, %v200
    %vm1673 = vcmp.eq.s32.totalorder %v1639, %v200
    %vm1674 = vcmp.eq.s32.totalorder %v1642, %v200
    %vm1675 = vcmp.eq.s32.totalorder %v1645, %v200
    %vm1676 = vcmp.eq.s32.totalorder %v1648, %v200
    %vm1677 = vcmp.eq.s32.totalorder %v1651, %v200
    %vm1678 = vcmp.eq.s32.totalorder %v1654, %v200
    %vm1679 = vcmp.eq.s32.totalorder %v1657, %v200
    %vm1680 = vcmp.eq.s32.totalorder %v1660, %v200
    %vm1681 = vcmp.eq.s32.totalorder %v1663, %v200
    %vm1682 = vcmp.eq.s32.totalorder %v1666, %v200
    %v1683 = vsel %vm1667, %v68, 0.0
    %v1684 = vsel %vm1668, %v69, 0.0
    %v1685 = vsel %vm1669, %v70, 0.0
    %v1686 = vsel %vm1670, %v71, 0.0
    %v1687 = vsel %vm1671, %v72, 0.0
    %v1688 = vsel %vm1672, %v73, 0.0
    %v1689 = vsel %vm1673, %v74, 0.0
    %v1690 = vsel %vm1674, %v75, 0.0
    %v1691 = vsel %vm1675, %v76, 0.0
    %v1692 = vsel %vm1676, %v77, 0.0
    %v1693 = vsel %vm1677, %v78, 0.0
    %v1694 = vsel %vm1678, %v79, 0.0
    %v1695 = vsel %vm1679, %v80, 0.0
    %v1696 = vsel %vm1680, %v81, 0.0
    %v1697 = vsel %vm1681, %v82, 0.0
    %v1698 = vsel %vm1682, %v83, 0.0
    %v1699 = vrot.slane %v234, 1
    %v1700 = vrot.slane %v236, 1
    %v1701 = vrot.slane %v238, 1
    %v1702 = vrot.slane %v240, 1
    %v1703 = vrot.slane %v242, 1
    %v1704 = vrot.slane %v244, 1
    %v1705 = vrot.slane %v246, 1
    %v1706 = vrot.slane %v248, 1
    %v1707 = vrot.slane %v250, 1
    %v1708 = vrot.slane %v252, 1
    %v1709 = vrot.slane %v254, 1
    %v1710 = vrot.slane %v256, 1
    %v1711 = vrot.slane %v258, 1
    %v1712 = vrot.slane %v260, 1
    %v1713 = vrot.slane %v262, 1
    %v1714 = vrot.slane %v264, 1
    %v1715 = vlaneseq
    %v1716 = vshrl.u32 %v1715, 7
    %vm1717 = vcmp.lt.s32.totalorder %v1716, 7
    %v1718 = vsel %vm1717, %v1713, %v1714
    %v1719 = vsel %vm1717, %v1712, %v1713
    %v1720 = vsel %vm1717, %v1711, %v1712
    %v1721 = vsel %vm1717, %v1710, %v1711
    %v1722 = vsel %vm1717, %v1709, %v1710
    %v1723 = vsel %vm1717, %v1708, %v1709
    %v1724 = vsel %vm1717, %v1707, %v1708
    %v1725 = vsel %vm1717, %v1706, %v1707
    %v1726 = vsel %vm1717, %v1705, %v1706
    %v1727 = vsel %vm1717, %v1704, %v1705
    %v1728 = vsel %vm1717, %v1703, %v1704
    %v1729 = vsel %vm1717, %v1702, %v1703
    %v1730 = vsel %vm1717, %v1701, %v1702
    %v1731 = vsel %vm1717, %v1700, %v1701
    %v1732 = vsel %vm1717, %v1699, %v1700
    %v1733 = vsel %vm1717, %v1714, %v1699
    %v1734 = vrot.slane %v133, 1
    %v1735 = vrot.slane %v134, 1
    %v1736 = vrot.slane %v135, 1
    %v1737 = vrot.slane %v136, 1
    %v1738 = vrot.slane %v137, 1
    %v1739 = vrot.slane %v138, 1
    %v1740 = vrot.slane %v139, 1
    %v1741 = vrot.slane %v140, 1
    %v1742 = vrot.slane %v141, 1
    %v1743 = vrot.slane %v142, 1
    %v1744 = vrot.slane %v143, 1
    %v1745 = vrot.slane %v144, 1
    %v1746 = vrot.slane %v145, 1
    %v1747 = vrot.slane %v146, 1
    %v1748 = vrot.slane %v147, 1
    %v1749 = vrot.slane %v148, 1
    %v1750 = vsel %vm1717, %v1748, %v1749
    %v1751 = vsel %vm1717, %v1747, %v1748
    %v1752 = vsel %vm1717, %v1746, %v1747
    %v1753 = vsel %vm1717, %v1745, %v1746
    %v1754 = vsel %vm1717, %v1744, %v1745
    %v1755 = vsel %vm1717, %v1743, %v1744
    %v1756 = vsel %vm1717, %v1742, %v1743
    %v1757 = vsel %vm1717, %v1741, %v1742
    %v1758 = vsel %vm1717, %v1740, %v1741
    %v1759 = vsel %vm1717, %v1739, %v1740
    %v1760 = vsel %vm1717, %v1738, %v1739
    %v1761 = vsel %vm1717, %v1737, %v1738
    %v1762 = vsel %vm1717, %v1736, %v1737
    %v1763 = vsel %vm1717, %v1735, %v1736
    %v1764 = vsel %vm1717, %v1734, %v1735
    %v1765 = vsel %vm1717, %v1749, %v1734
    %vm1766 = vcmp.eq.s32.totalorder %v1764, %v133
    %vm1767 = vcmp.eq.s32.totalorder %v1763, %v134
    %vm1768 = vcmp.eq.s32.totalorder %v1762, %v135
    %vm1769 = vcmp.eq.s32.totalorder %v1761, %v136
    %vm1770 = vcmp.eq.s32.totalorder %v1760, %v137
    %vm1771 = vcmp.eq.s32.totalorder %v1759, %v138
    %vm1772 = vcmp.eq.s32.totalorder %v1758, %v139
    %vm1773 = vcmp.eq.s32.totalorder %v1757, %v140
    %vm1774 = vcmp.eq.s32.totalorder %v1756, %v141
    %vm1775 = vcmp.eq.s32.totalorder %v1755, %v142
    %vm1776 = vcmp.eq.s32.totalorder %v1754, %v143
    %vm1777 = vcmp.eq.s32.totalorder %v1753, %v144
    %vm1778 = vcmp.eq.s32.totalorder %v1752, %v145
    %vm1779 = vcmp.eq.s32.totalorder %v1751, %v146
    %vm1780 = vcmp.eq.s32.totalorder %v1750, %v147
    %vm1781 = vcmp.eq.s32.totalorder %v1765, %v148
    %v1782 = vsel %vm1766, 1, 0
    %v1783 = vsel %vm1767, 1, 0
    %v1784 = vsel %vm1768, 1, 0
    %v1785 = vsel %vm1769, 1, 0
    %v1786 = vsel %vm1770, 1, 0
    %v1787 = vsel %vm1771, 1, 0
    %v1788 = vsel %vm1772, 1, 0
    %v1789 = vsel %vm1773, 1, 0
    %v1790 = vsel %vm1774, 1, 0
    %v1791 = vsel %vm1775, 1, 0
    %v1792 = vsel %vm1776, 1, 0
    %v1793 = vsel %vm1777, 1, 0
    %v1794 = vsel %vm1778, 1, 0
    %v1795 = vsel %vm1779, 1, 0
    %v1796 = vsel %vm1780, 1, 0
    %v1797 = vsel %vm1781, 1, 0
    %1798 = vset.pattern.permute.xlu0 0
    %1799 = vperm.xlu0 %1798, %v1782
    %v1800 = vpop.permute.xlu0 %1799
    %1801 = vset.pattern.permute.xlu0 0
    %1802 = vperm.xlu0 %1801, %v1783
    %v1803 = vpop.permute.xlu0 %1802
    %1804 = vset.pattern.permute.xlu0 0
    %1805 = vperm.xlu0 %1804, %v1784
    %v1806 = vpop.permute.xlu0 %1805
    %1807 = vset.pattern.permute.xlu0 0
    %1808 = vperm.xlu0 %1807, %v1785
    %v1809 = vpop.permute.xlu0 %1808
    %1810 = vset.pattern.permute.xlu0 0
    %1811 = vperm.xlu0 %1810, %v1786
    %v1812 = vpop.permute.xlu0 %1811
    %1813 = vset.pattern.permute.xlu0 0
    %1814 = vperm.xlu0 %1813, %v1787
    %v1815 = vpop.permute.xlu0 %1814
    %1816 = vset.pattern.permute.xlu0 0
    %1817 = vperm.xlu0 %1816, %v1788
    %v1818 = vpop.permute.xlu0 %1817
    %1819 = vset.pattern.permute.xlu0 0
    %1820 = vperm.xlu0 %1819, %v1789
    %v1821 = vpop.permute.xlu0 %1820
    %1822 = vset.pattern.permute.xlu0 0
    %1823 = vperm.xlu0 %1822, %v1790
    %v1824 = vpop.permute.xlu0 %1823
    %1825 = vset.pattern.permute.xlu0 0
    %1826 = vperm.xlu0 %1825, %v1791
    %v1827 = vpop.permute.xlu0 %1826
    %1828 = vset.pattern.permute.xlu0 0
    %1829 = vperm.xlu0 %1828, %v1792
    %v1830 = vpop.permute.xlu0 %1829
    %1831 = vset.pattern.permute.xlu0 0
    %1832 = vperm.xlu0 %1831, %v1793
    %v1833 = vpop.permute.xlu0 %1832
    %1834 = vset.pattern.permute.xlu0 0
    %1835 = vperm.xlu0 %1834, %v1794
    %v1836 = vpop.permute.xlu0 %1835
    %1837 = vset.pattern.permute.xlu0 0
    %1838 = vperm.xlu0 %1837, %v1795
    %v1839 = vpop.permute.xlu0 %1838
    %1840 = vset.pattern.permute.xlu0 0
    %1841 = vperm.xlu0 %1840, %v1796
    %v1842 = vpop.permute.xlu0 %1841
    %1843 = vset.pattern.permute.xlu0 0
    %1844 = vperm.xlu0 %1843, %v1797
    %v1845 = vpop.permute.xlu0 %1844
    %vm1846 = vcmp.eq.s32.totalorder %v1800, 1
    %vm1847 = vcmp.eq.s32.totalorder %v1803, 1
    %vm1848 = vcmp.eq.s32.totalorder %v1806, 1
    %vm1849 = vcmp.eq.s32.totalorder %v1809, 1
    %vm1850 = vcmp.eq.s32.totalorder %v1812, 1
    %vm1851 = vcmp.eq.s32.totalorder %v1815, 1
    %vm1852 = vcmp.eq.s32.totalorder %v1818, 1
    %vm1853 = vcmp.eq.s32.totalorder %v1821, 1
    %vm1854 = vcmp.eq.s32.totalorder %v1824, 1
    %vm1855 = vcmp.eq.s32.totalorder %v1827, 1
    %vm1856 = vcmp.eq.s32.totalorder %v1830, 1
    %vm1857 = vcmp.eq.s32.totalorder %v1833, 1
    %vm1858 = vcmp.eq.s32.totalorder %v1836, 1
    %vm1859 = vcmp.eq.s32.totalorder %v1839, 1
    %vm1860 = vcmp.eq.s32.totalorder %v1842, 1
    %vm1861 = vcmp.eq.s32.totalorder %v1845, 1
    %v1862 = vsel %vm1846, %v1732, %v1733
    %v1863 = vsel %vm1847, %v1731, %v1732
    %v1864 = vsel %vm1848, %v1730, %v1731
    %v1865 = vsel %vm1849, %v1729, %v1730
    %v1866 = vsel %vm1850, %v1728, %v1729
    %v1867 = vsel %vm1851, %v1727, %v1728
    %v1868 = vsel %vm1852, %v1726, %v1727
    %v1869 = vsel %vm1853, %v1725, %v1726
    %v1870 = vsel %vm1854, %v1724, %v1725
    %v1871 = vsel %vm1855, %v1723, %v1724
    %v1872 = vsel %vm1856, %v1722, %v1723
    %v1873 = vsel %vm1857, %v1721, %v1722
    %v1874 = vsel %vm1858, %v1720, %v1721
    %v1875 = vsel %vm1859, %v1719, %v1720
    %v1876 = vsel %vm1860, %v1718, %v1719
    %v1877 = vsel %vm1861, %v1733, %v1718
    %vm1878 = vcmp.eq.s32.totalorder %v1621, %v382
    %vm1879 = vcmp.eq.s32.totalorder %v1624, %v382
    %vm1880 = vcmp.eq.s32.totalorder %v1627, %v382
    %vm1881 = vcmp.eq.s32.totalorder %v1630, %v382
    %vm1882 = vcmp.eq.s32.totalorder %v1633, %v382
    %vm1883 = vcmp.eq.s32.totalorder %v1636, %v382
    %vm1884 = vcmp.eq.s32.totalorder %v1639, %v382
    %vm1885 = vcmp.eq.s32.totalorder %v1642, %v382
    %vm1886 = vcmp.eq.s32.totalorder %v1645, %v382
    %vm1887 = vcmp.eq.s32.totalorder %v1648, %v382
    %vm1888 = vcmp.eq.s32.totalorder %v1651, %v382
    %vm1889 = vcmp.eq.s32.totalorder %v1654, %v382
    %vm1890 = vcmp.eq.s32.totalorder %v1657, %v382
    %vm1891 = vcmp.eq.s32.totalorder %v1660, %v382
    %vm1892 = vcmp.eq.s32.totalorder %v1663, %v382
    %vm1893 = vcmp.eq.s32.totalorder %v1666, %v382
    %v1894 = vsel %vm1878, %v1862, 0.0
    %v1895 = vsel %vm1879, %v1863, 0.0
    %v1896 = vsel %vm1880, %v1864, 0.0
    %v1897 = vsel %vm1881, %v1865, 0.0
    %v1898 = vsel %vm1882, %v1866, 0.0
    %v1899 = vsel %vm1883, %v1867, 0.0
    %v1900 = vsel %vm1884, %v1868, 0.0
    %v1901 = vsel %vm1885, %v1869, 0.0
    %v1902 = vsel %vm1886, %v1870, 0.0
    %v1903 = vsel %vm1887, %v1871, 0.0
    %v1904 = vsel %vm1888, %v1872, 0.0
    %v1905 = vsel %vm1889, %v1873, 0.0
    %v1906 = vsel %vm1890, %v1874, 0.0
    %v1907 = vsel %vm1891, %v1875, 0.0
    %v1908 = vsel %vm1892, %v1876, 0.0
    %v1909 = vsel %vm1893, %v1877, 0.0
    %v1910 = vrot.slane %v416, 2
    %v1911 = vrot.slane %v418, 2
    %v1912 = vrot.slane %v420, 2
    %v1913 = vrot.slane %v422, 2
    %v1914 = vrot.slane %v424, 2
    %v1915 = vrot.slane %v426, 2
    %v1916 = vrot.slane %v428, 2
    %v1917 = vrot.slane %v430, 2
    %v1918 = vrot.slane %v432, 2
    %v1919 = vrot.slane %v434, 2
    %v1920 = vrot.slane %v436, 2
    %v1921 = vrot.slane %v438, 2
    %v1922 = vrot.slane %v440, 2
    %v1923 = vrot.slane %v442, 2
    %v1924 = vrot.slane %v444, 2
    %v1925 = vrot.slane %v446, 2
    %vm1926 = vcmp.lt.s32.totalorder %v1716, 6
    %v1927 = vsel %vm1926, %v1924, %v1925
    %v1928 = vsel %vm1926, %v1923, %v1924
    %v1929 = vsel %vm1926, %v1922, %v1923
    %v1930 = vsel %vm1926, %v1921, %v1922
    %v1931 = vsel %vm1926, %v1920, %v1921
    %v1932 = vsel %vm1926, %v1919, %v1920
    %v1933 = vsel %vm1926, %v1918, %v1919
    %v1934 = vsel %vm1926, %v1917, %v1918
    %v1935 = vsel %vm1926, %v1916, %v1917
    %v1936 = vsel %vm1926, %v1915, %v1916
    %v1937 = vsel %vm1926, %v1914, %v1915
    %v1938 = vsel %vm1926, %v1913, %v1914
    %v1939 = vsel %vm1926, %v1912, %v1913
    %v1940 = vsel %vm1926, %v1911, %v1912
    %v1941 = vsel %vm1926, %v1910, %v1911
    %v1942 = vsel %vm1926, %v1925, %v1910
    %v1943 = vrot.slane %v133, 2
    %v1944 = vrot.slane %v134, 2
    %v1945 = vrot.slane %v135, 2
    %v1946 = vrot.slane %v136, 2
    %v1947 = vrot.slane %v137, 2
    %v1948 = vrot.slane %v138, 2
    %v1949 = vrot.slane %v139, 2
    %v1950 = vrot.slane %v140, 2
    %v1951 = vrot.slane %v141, 2
    %v1952 = vrot.slane %v142, 2
    %v1953 = vrot.slane %v143, 2
    %v1954 = vrot.slane %v144, 2
    %v1955 = vrot.slane %v145, 2
    %v1956 = vrot.slane %v146, 2
    %v1957 = vrot.slane %v147, 2
    %v1958 = vrot.slane %v148, 2
    %v1959 = vsel %vm1926, %v1957, %v1958
    %v1960 = vsel %vm1926, %v1956, %v1957
    %v1961 = vsel %vm1926, %v1955, %v1956
    %v1962 = vsel %vm1926, %v1954, %v1955
    %v1963 = vsel %vm1926, %v1953, %v1954
    %v1964 = vsel %vm1926, %v1952, %v1953
    %v1965 = vsel %vm1926, %v1951, %v1952
    %v1966 = vsel %vm1926, %v1950, %v1951
    %v1967 = vsel %vm1926, %v1949, %v1950
    %v1968 = vsel %vm1926, %v1948, %v1949
    %v1969 = vsel %vm1926, %v1947, %v1948
    %v1970 = vsel %vm1926, %v1946, %v1947
    %v1971 = vsel %vm1926, %v1945, %v1946
    %v1972 = vsel %vm1926, %v1944, %v1945
    %v1973 = vsel %vm1926, %v1943, %v1944
    %v1974 = vsel %vm1926, %v1958, %v1943
    %vm1975 = vcmp.eq.s32.totalorder %v1973, %v133
    %vm1976 = vcmp.eq.s32.totalorder %v1972, %v134
    %vm1977 = vcmp.eq.s32.totalorder %v1971, %v135
    %vm1978 = vcmp.eq.s32.totalorder %v1970, %v136
    %vm1979 = vcmp.eq.s32.totalorder %v1969, %v137
    %vm1980 = vcmp.eq.s32.totalorder %v1968, %v138
    %vm1981 = vcmp.eq.s32.totalorder %v1967, %v139
    %vm1982 = vcmp.eq.s32.totalorder %v1966, %v140
    %vm1983 = vcmp.eq.s32.totalorder %v1965, %v141
    %vm1984 = vcmp.eq.s32.totalorder %v1964, %v142
    %vm1985 = vcmp.eq.s32.totalorder %v1963, %v143
    %vm1986 = vcmp.eq.s32.totalorder %v1962, %v144
    %vm1987 = vcmp.eq.s32.totalorder %v1961, %v145
    %vm1988 = vcmp.eq.s32.totalorder %v1960, %v146
    %vm1989 = vcmp.eq.s32.totalorder %v1959, %v147
    %vm1990 = vcmp.eq.s32.totalorder %v1974, %v148
    %v1991 = vsel %vm1975, 1, 0
    %v1992 = vsel %vm1976, 1, 0
    %v1993 = vsel %vm1977, 1, 0
    %v1994 = vsel %vm1978, 1, 0
    %v1995 = vsel %vm1979, 1, 0
    %v1996 = vsel %vm1980, 1, 0
    %v1997 = vsel %vm1981, 1, 0
    %v1998 = vsel %vm1982, 1, 0
    %v1999 = vsel %vm1983, 1, 0
    %v2000 = vsel %vm1984, 1, 0
    %v2001 = vsel %vm1985, 1, 0
    %v2002 = vsel %vm1986, 1, 0
    %v2003 = vsel %vm1987, 1, 0
    %v2004 = vsel %vm1988, 1, 0
    %v2005 = vsel %vm1989, 1, 0
    %v2006 = vsel %vm1990, 1, 0
    %2007 = vset.pattern.permute.xlu0 0
    %2008 = vperm.xlu0 %2007, %v1991
    %v2009 = vpop.permute.xlu0 %2008
    %2010 = vset.pattern.permute.xlu0 0
    %2011 = vperm.xlu0 %2010, %v1992
    %v2012 = vpop.permute.xlu0 %2011
    %2013 = vset.pattern.permute.xlu0 0
    %2014 = vperm.xlu0 %2013, %v1993
    %v2015 = vpop.permute.xlu0 %2014
    %2016 = vset.pattern.permute.xlu0 0
    %2017 = vperm.xlu0 %2016, %v1994
    %v2018 = vpop.permute.xlu0 %2017
    %2019 = vset.pattern.permute.xlu0 0
    %2020 = vperm.xlu0 %2019, %v1995
    %v2021 = vpop.permute.xlu0 %2020
    %2022 = vset.pattern.permute.xlu0 0
    %2023 = vperm.xlu0 %2022, %v1996
    %v2024 = vpop.permute.xlu0 %2023
    %2025 = vset.pattern.permute.xlu0 0
    %2026 = vperm.xlu0 %2025, %v1997
    %v2027 = vpop.permute.xlu0 %2026
    %2028 = vset.pattern.permute.xlu0 0
    %2029 = vperm.xlu0 %2028, %v1998
    %v2030 = vpop.permute.xlu0 %2029
    %2031 = vset.pattern.permute.xlu0 0
    %2032 = vperm.xlu0 %2031, %v1999
    %v2033 = vpop.permute.xlu0 %2032
    %2034 = vset.pattern.permute.xlu0 0
    %2035 = vperm.xlu0 %2034, %v2000
    %v2036 = vpop.permute.xlu0 %2035
    %2037 = vset.pattern.permute.xlu0 0
    %2038 = vperm.xlu0 %2037, %v2001
    %v2039 = vpop.permute.xlu0 %2038
    %2040 = vset.pattern.permute.xlu0 0
    %2041 = vperm.xlu0 %2040, %v2002
    %v2042 = vpop.permute.xlu0 %2041
    %2043 = vset.pattern.permute.xlu0 0
    %2044 = vperm.xlu0 %2043, %v2003
    %v2045 = vpop.permute.xlu0 %2044
    %2046 = vset.pattern.permute.xlu0 0
    %2047 = vperm.xlu0 %2046, %v2004
    %v2048 = vpop.permute.xlu0 %2047
    %2049 = vset.pattern.permute.xlu0 0
    %2050 = vperm.xlu0 %2049, %v2005
    %v2051 = vpop.permute.xlu0 %2050
    %2052 = vset.pattern.permute.xlu0 0
    %2053 = vperm.xlu0 %2052, %v2006
    %v2054 = vpop.permute.xlu0 %2053
    %vm2055 = vcmp.eq.s32.totalorder %v2009, 1
    %vm2056 = vcmp.eq.s32.totalorder %v2012, 1
    %vm2057 = vcmp.eq.s32.totalorder %v2015, 1
    %vm2058 = vcmp.eq.s32.totalorder %v2018, 1
    %vm2059 = vcmp.eq.s32.totalorder %v2021, 1
    %vm2060 = vcmp.eq.s32.totalorder %v2024, 1
    %vm2061 = vcmp.eq.s32.totalorder %v2027, 1
    %vm2062 = vcmp.eq.s32.totalorder %v2030, 1
    %vm2063 = vcmp.eq.s32.totalorder %v2033, 1
    %vm2064 = vcmp.eq.s32.totalorder %v2036, 1
    %vm2065 = vcmp.eq.s32.totalorder %v2039, 1
    %vm2066 = vcmp.eq.s32.totalorder %v2042, 1
    %vm2067 = vcmp.eq.s32.totalorder %v2045, 1
    %vm2068 = vcmp.eq.s32.totalorder %v2048, 1
    %vm2069 = vcmp.eq.s32.totalorder %v2051, 1
    %vm2070 = vcmp.eq.s32.totalorder %v2054, 1
    %v2071 = vsel %vm2055, %v1941, %v1942
    %v2072 = vsel %vm2056, %v1940, %v1941
    %v2073 = vsel %vm2057, %v1939, %v1940
    %v2074 = vsel %vm2058, %v1938, %v1939
    %v2075 = vsel %vm2059, %v1937, %v1938
    %v2076 = vsel %vm2060, %v1936, %v1937
    %v2077 = vsel %vm2061, %v1935, %v1936
    %v2078 = vsel %vm2062, %v1934, %v1935
    %v2079 = vsel %vm2063, %v1933, %v1934
    %v2080 = vsel %vm2064, %v1932, %v1933
    %v2081 = vsel %vm2065, %v1931, %v1932
    %v2082 = vsel %vm2066, %v1930, %v1931
    %v2083 = vsel %vm2067, %v1929, %v1930
    %v2084 = vsel %vm2068, %v1928, %v1929
    %v2085 = vsel %vm2069, %v1927, %v1928
    %v2086 = vsel %vm2070, %v1942, %v1927
    %vm2087 = vcmp.eq.s32.totalorder %v1621, %v564
    %vm2088 = vcmp.eq.s32.totalorder %v1624, %v564
    %vm2089 = vcmp.eq.s32.totalorder %v1627, %v564
    %vm2090 = vcmp.eq.s32.totalorder %v1630, %v564
    %vm2091 = vcmp.eq.s32.totalorder %v1633, %v564
    %vm2092 = vcmp.eq.s32.totalorder %v1636, %v564
    %vm2093 = vcmp.eq.s32.totalorder %v1639, %v564
    %vm2094 = vcmp.eq.s32.totalorder %v1642, %v564
    %vm2095 = vcmp.eq.s32.totalorder %v1645, %v564
    %vm2096 = vcmp.eq.s32.totalorder %v1648, %v564
    %vm2097 = vcmp.eq.s32.totalorder %v1651, %v564
    %vm2098 = vcmp.eq.s32.totalorder %v1654, %v564
    %vm2099 = vcmp.eq.s32.totalorder %v1657, %v564
    %vm2100 = vcmp.eq.s32.totalorder %v1660, %v564
    %vm2101 = vcmp.eq.s32.totalorder %v1663, %v564
    %vm2102 = vcmp.eq.s32.totalorder %v1666, %v564
    %v2103 = vsel %vm2087, %v2071, 0.0
    %v2104 = vsel %vm2088, %v2072, 0.0
    %v2105 = vsel %vm2089, %v2073, 0.0
    %v2106 = vsel %vm2090, %v2074, 0.0
    %v2107 = vsel %vm2091, %v2075, 0.0
    %v2108 = vsel %vm2092, %v2076, 0.0
    %v2109 = vsel %vm2093, %v2077, 0.0
    %v2110 = vsel %vm2094, %v2078, 0.0
    %v2111 = vsel %vm2095, %v2079, 0.0
    %v2112 = vsel %vm2096, %v2080, 0.0
    %v2113 = vsel %vm2097, %v2081, 0.0
    %v2114 = vsel %vm2098, %v2082, 0.0
    %v2115 = vsel %vm2099, %v2083, 0.0
    %v2116 = vsel %vm2100, %v2084, 0.0
    %v2117 = vsel %vm2101, %v2085, 0.0
    %v2118 = vsel %vm2102, %v2086, 0.0
    %v2119 = vrot.slane %v598, 3
    %v2120 = vrot.slane %v600, 3
    %v2121 = vrot.slane %v602, 3
    %v2122 = vrot.slane %v604, 3
    %v2123 = vrot.slane %v606, 3
    %v2124 = vrot.slane %v608, 3
    %v2125 = vrot.slane %v610, 3
    %v2126 = vrot.slane %v612, 3
    %v2127 = vrot.slane %v614, 3
    %v2128 = vrot.slane %v616, 3
    %v2129 = vrot.slane %v618, 3
    %v2130 = vrot.slane %v620, 3
    %v2131 = vrot.slane %v622, 3
    %v2132 = vrot.slane %v624, 3
    %v2133 = vrot.slane %v626, 3
    %v2134 = vrot.slane %v628, 3
    %vm2135 = vcmp.lt.s32.totalorder %v1716, 5
    %v2136 = vsel %vm2135, %v2133, %v2134
    %v2137 = vsel %vm2135, %v2132, %v2133
    %v2138 = vsel %vm2135, %v2131, %v2132
    %v2139 = vsel %vm2135, %v2130, %v2131
    %v2140 = vsel %vm2135, %v2129, %v2130
    %v2141 = vsel %vm2135, %v2128, %v2129
    %v2142 = vsel %vm2135, %v2127, %v2128
    %v2143 = vsel %vm2135, %v2126, %v2127
    %v2144 = vsel %vm2135, %v2125, %v2126
    %v2145 = vsel %vm2135, %v2124, %v2125
    %v2146 = vsel %vm2135, %v2123, %v2124
    %v2147 = vsel %vm2135, %v2122, %v2123
    %v2148 = vsel %vm2135, %v2121, %v2122
    %v2149 = vsel %vm2135, %v2120, %v2121
    %v2150 = vsel %vm2135, %v2119, %v2120
    %v2151 = vsel %vm2135, %v2134, %v2119
    %v2152 = vrot.slane %v133, 3
    %v2153 = vrot.slane %v134, 3
    %v2154 = vrot.slane %v135, 3
    %v2155 = vrot.slane %v136, 3
    %v2156 = vrot.slane %v137, 3
    %v2157 = vrot.slane %v138, 3
    %v2158 = vrot.slane %v139, 3
    %v2159 = vrot.slane %v140, 3
    %v2160 = vrot.slane %v141, 3
    %v2161 = vrot.slane %v142, 3
    %v2162 = vrot.slane %v143, 3
    %v2163 = vrot.slane %v144, 3
    %v2164 = vrot.slane %v145, 3
    %v2165 = vrot.slane %v146, 3
    %v2166 = vrot.slane %v147, 3
    %v2167 = vrot.slane %v148, 3
    %v2168 = vsel %vm2135, %v2166, %v2167
    %v2169 = vsel %vm2135, %v2165, %v2166
    %v2170 = vsel %vm2135, %v2164, %v2165
    %v2171 = vsel %vm2135, %v2163, %v2164
    %v2172 = vsel %vm2135, %v2162, %v2163
    %v2173 = vsel %vm2135, %v2161, %v2162
    %v2174 = vsel %vm2135, %v2160, %v2161
    %v2175 = vsel %vm2135, %v2159, %v2160
    %v2176 = vsel %vm2135, %v2158, %v2159
    %v2177 = vsel %vm2135, %v2157, %v2158
    %v2178 = vsel %vm2135, %v2156, %v2157
    %v2179 = vsel %vm2135, %v2155, %v2156
    %v2180 = vsel %vm2135, %v2154, %v2155
    %v2181 = vsel %vm2135, %v2153, %v2154
    %v2182 = vsel %vm2135, %v2152, %v2153
    %v2183 = vsel %vm2135, %v2167, %v2152
    %vm2184 = vcmp.eq.s32.totalorder %v2182, %v133
    %vm2185 = vcmp.eq.s32.totalorder %v2181, %v134
    %vm2186 = vcmp.eq.s32.totalorder %v2180, %v135
    %vm2187 = vcmp.eq.s32.totalorder %v2179, %v136
    %vm2188 = vcmp.eq.s32.totalorder %v2178, %v137
    %vm2189 = vcmp.eq.s32.totalorder %v2177, %v138
    %vm2190 = vcmp.eq.s32.totalorder %v2176, %v139
    %vm2191 = vcmp.eq.s32.totalorder %v2175, %v140
    %vm2192 = vcmp.eq.s32.totalorder %v2174, %v141
    %vm2193 = vcmp.eq.s32.totalorder %v2173, %v142
    %vm2194 = vcmp.eq.s32.totalorder %v2172, %v143
    %vm2195 = vcmp.eq.s32.totalorder %v2171, %v144
    %vm2196 = vcmp.eq.s32.totalorder %v2170, %v145
    %vm2197 = vcmp.eq.s32.totalorder %v2169, %v146
    %vm2198 = vcmp.eq.s32.totalorder %v2168, %v147
    %vm2199 = vcmp.eq.s32.totalorder %v2183, %v148
    %v2200 = vsel %vm2184, 1, 0
    %v2201 = vsel %vm2185, 1, 0
    %v2202 = vsel %vm2186, 1, 0
    %v2203 = vsel %vm2187, 1, 0
    %v2204 = vsel %vm2188, 1, 0
    %v2205 = vsel %vm2189, 1, 0
    %v2206 = vsel %vm2190, 1, 0
    %v2207 = vsel %vm2191, 1, 0
    %v2208 = vsel %vm2192, 1, 0
    %v2209 = vsel %vm2193, 1, 0
    %v2210 = vsel %vm2194, 1, 0
    %v2211 = vsel %vm2195, 1, 0
    %v2212 = vsel %vm2196, 1, 0
    %v2213 = vsel %vm2197, 1, 0
    %v2214 = vsel %vm2198, 1, 0
    %v2215 = vsel %vm2199, 1, 0
    %2216 = vset.pattern.permute.xlu0 0
    %2217 = vperm.xlu0 %2216, %v2200
    %v2218 = vpop.permute.xlu0 %2217
    %2219 = vset.pattern.permute.xlu0 0
    %2220 = vperm.xlu0 %2219, %v2201
    %v2221 = vpop.permute.xlu0 %2220
    %2222 = vset.pattern.permute.xlu0 0
    %2223 = vperm.xlu0 %2222, %v2202
    %v2224 = vpop.permute.xlu0 %2223
    %2225 = vset.pattern.permute.xlu0 0
    %2226 = vperm.xlu0 %2225, %v2203
    %v2227 = vpop.permute.xlu0 %2226
    %2228 = vset.pattern.permute.xlu0 0
    %2229 = vperm.xlu0 %2228, %v2204
    %v2230 = vpop.permute.xlu0 %2229
    %2231 = vset.pattern.permute.xlu0 0
    %2232 = vperm.xlu0 %2231, %v2205
    %v2233 = vpop.permute.xlu0 %2232
    %2234 = vset.pattern.permute.xlu0 0
    %2235 = vperm.xlu0 %2234, %v2206
    %v2236 = vpop.permute.xlu0 %2235
    %2237 = vset.pattern.permute.xlu0 0
    %2238 = vperm.xlu0 %2237, %v2207
    %v2239 = vpop.permute.xlu0 %2238
    %2240 = vset.pattern.permute.xlu0 0
    %2241 = vperm.xlu0 %2240, %v2208
    %v2242 = vpop.permute.xlu0 %2241
    %2243 = vset.pattern.permute.xlu0 0
    %2244 = vperm.xlu0 %2243, %v2209
    %v2245 = vpop.permute.xlu0 %2244
    %2246 = vset.pattern.permute.xlu0 0
    %2247 = vperm.xlu0 %2246, %v2210
    %v2248 = vpop.permute.xlu0 %2247
    %2249 = vset.pattern.permute.xlu0 0
    %2250 = vperm.xlu0 %2249, %v2211
    %v2251 = vpop.permute.xlu0 %2250
    %2252 = vset.pattern.permute.xlu0 0
    %2253 = vperm.xlu0 %2252, %v2212
    %v2254 = vpop.permute.xlu0 %2253
    %2255 = vset.pattern.permute.xlu0 0
    %2256 = vperm.xlu0 %2255, %v2213
    %v2257 = vpop.permute.xlu0 %2256
    %2258 = vset.pattern.permute.xlu0 0
    %2259 = vperm.xlu0 %2258, %v2214
    %v2260 = vpop.permute.xlu0 %2259
    %2261 = vset.pattern.permute.xlu0 0
    %2262 = vperm.xlu0 %2261, %v2215
    %v2263 = vpop.permute.xlu0 %2262
    %vm2264 = vcmp.eq.s32.totalorder %v2218, 1
    %vm2265 = vcmp.eq.s32.totalorder %v2221, 1
    %vm2266 = vcmp.eq.s32.totalorder %v2224, 1
    %vm2267 = vcmp.eq.s32.totalorder %v2227, 1
    %vm2268 = vcmp.eq.s32.totalorder %v2230, 1
    %vm2269 = vcmp.eq.s32.totalorder %v2233, 1
    %vm2270 = vcmp.eq.s32.totalorder %v2236, 1
    %vm2271 = vcmp.eq.s32.totalorder %v2239, 1
    %vm2272 = vcmp.eq.s32.totalorder %v2242, 1
    %vm2273 = vcmp.eq.s32.totalorder %v2245, 1
    %vm2274 = vcmp.eq.s32.totalorder %v2248, 1
    %vm2275 = vcmp.eq.s32.totalorder %v2251, 1
    %vm2276 = vcmp.eq.s32.totalorder %v2254, 1
    %vm2277 = vcmp.eq.s32.totalorder %v2257, 1
    %vm2278 = vcmp.eq.s32.totalorder %v2260, 1
    %vm2279 = vcmp.eq.s32.totalorder %v2263, 1
    %v2280 = vsel %vm2264, %v2150, %v2151
    %v2281 = vsel %vm2265, %v2149, %v2150
    %v2282 = vsel %vm2266, %v2148, %v2149
    %v2283 = vsel %vm2267, %v2147, %v2148
    %v2284 = vsel %vm2268, %v2146, %v2147
    %v2285 = vsel %vm2269, %v2145, %v2146
    %v2286 = vsel %vm2270, %v2144, %v2145
    %v2287 = vsel %vm2271, %v2143, %v2144
    %v2288 = vsel %vm2272, %v2142, %v2143
    %v2289 = vsel %vm2273, %v2141, %v2142
    %v2290 = vsel %vm2274, %v2140, %v2141
    %v2291 = vsel %vm2275, %v2139, %v2140
    %v2292 = vsel %vm2276, %v2138, %v2139
    %v2293 = vsel %vm2277, %v2137, %v2138
    %v2294 = vsel %vm2278, %v2136, %v2137
    %v2295 = vsel %vm2279, %v2151, %v2136
    %vm2296 = vcmp.eq.s32.totalorder %v1621, %v746
    %vm2297 = vcmp.eq.s32.totalorder %v1624, %v746
    %vm2298 = vcmp.eq.s32.totalorder %v1627, %v746
    %vm2299 = vcmp.eq.s32.totalorder %v1630, %v746
    %vm2300 = vcmp.eq.s32.totalorder %v1633, %v746
    %vm2301 = vcmp.eq.s32.totalorder %v1636, %v746
    %vm2302 = vcmp.eq.s32.totalorder %v1639, %v746
    %vm2303 = vcmp.eq.s32.totalorder %v1642, %v746
    %vm2304 = vcmp.eq.s32.totalorder %v1645, %v746
    %vm2305 = vcmp.eq.s32.totalorder %v1648, %v746
    %vm2306 = vcmp.eq.s32.totalorder %v1651, %v746
    %vm2307 = vcmp.eq.s32.totalorder %v1654, %v746
    %vm2308 = vcmp.eq.s32.totalorder %v1657, %v746
    %vm2309 = vcmp.eq.s32.totalorder %v1660, %v746
    %vm2310 = vcmp.eq.s32.totalorder %v1663, %v746
    %vm2311 = vcmp.eq.s32.totalorder %v1666, %v746
    %v2312 = vsel %vm2296, %v2280, 0.0
    %v2313 = vsel %vm2297, %v2281, 0.0
    %v2314 = vsel %vm2298, %v2282, 0.0
    %v2315 = vsel %vm2299, %v2283, 0.0
    %v2316 = vsel %vm2300, %v2284, 0.0
    %v2317 = vsel %vm2301, %v2285, 0.0
    %v2318 = vsel %vm2302, %v2286, 0.0
    %v2319 = vsel %vm2303, %v2287, 0.0
    %v2320 = vsel %vm2304, %v2288, 0.0
    %v2321 = vsel %vm2305, %v2289, 0.0
    %v2322 = vsel %vm2306, %v2290, 0.0
    %v2323 = vsel %vm2307, %v2291, 0.0
    %v2324 = vsel %vm2308, %v2292, 0.0
    %v2325 = vsel %vm2309, %v2293, 0.0
    %v2326 = vsel %vm2310, %v2294, 0.0
    %v2327 = vsel %vm2311, %v2295, 0.0
    %v2328 = vrot.slane %v780, 4
    %v2329 = vrot.slane %v782, 4
    %v2330 = vrot.slane %v784, 4
    %v2331 = vrot.slane %v786, 4
    %v2332 = vrot.slane %v788, 4
    %v2333 = vrot.slane %v790, 4
    %v2334 = vrot.slane %v792, 4
    %v2335 = vrot.slane %v794, 4
    %v2336 = vrot.slane %v796, 4
    %v2337 = vrot.slane %v798, 4
    %v2338 = vrot.slane %v800, 4
    %v2339 = vrot.slane %v802, 4
    %v2340 = vrot.slane %v804, 4
    %v2341 = vrot.slane %v806, 4
    %v2342 = vrot.slane %v808, 4
    %v2343 = vrot.slane %v810, 4
    %vm2344 = vcmp.lt.s32.totalorder %v1716, 4
    %v2345 = vsel %vm2344, %v2342, %v2343
    %v2346 = vsel %vm2344, %v2341, %v2342
    %v2347 = vsel %vm2344, %v2340, %v2341
    %v2348 = vsel %vm2344, %v2339, %v2340
    %v2349 = vsel %vm2344, %v2338, %v2339
    %v2350 = vsel %vm2344, %v2337, %v2338
    %v2351 = vsel %vm2344, %v2336, %v2337
    %v2352 = vsel %vm2344, %v2335, %v2336
    %v2353 = vsel %vm2344, %v2334, %v2335
    %v2354 = vsel %vm2344, %v2333, %v2334
    %v2355 = vsel %vm2344, %v2332, %v2333
    %v2356 = vsel %vm2344, %v2331, %v2332
    %v2357 = vsel %vm2344, %v2330, %v2331
    %v2358 = vsel %vm2344, %v2329, %v2330
    %v2359 = vsel %vm2344, %v2328, %v2329
    %v2360 = vsel %vm2344, %v2343, %v2328
    %v2361 = vrot.slane %v133, 4
    %v2362 = vrot.slane %v134, 4
    %v2363 = vrot.slane %v135, 4
    %v2364 = vrot.slane %v136, 4
    %v2365 = vrot.slane %v137, 4
    %v2366 = vrot.slane %v138, 4
    %v2367 = vrot.slane %v139, 4
    %v2368 = vrot.slane %v140, 4
    %v2369 = vrot.slane %v141, 4
    %v2370 = vrot.slane %v142, 4
    %v2371 = vrot.slane %v143, 4
    %v2372 = vrot.slane %v144, 4
    %v2373 = vrot.slane %v145, 4
    %v2374 = vrot.slane %v146, 4
    %v2375 = vrot.slane %v147, 4
    %v2376 = vrot.slane %v148, 4
    %v2377 = vsel %vm2344, %v2375, %v2376
    %v2378 = vsel %vm2344, %v2374, %v2375
    %v2379 = vsel %vm2344, %v2373, %v2374
    %v2380 = vsel %vm2344, %v2372, %v2373
    %v2381 = vsel %vm2344, %v2371, %v2372
    %v2382 = vsel %vm2344, %v2370, %v2371
    %v2383 = vsel %vm2344, %v2369, %v2370
    %v2384 = vsel %vm2344, %v2368, %v2369
    %v2385 = vsel %vm2344, %v2367, %v2368
    %v2386 = vsel %vm2344, %v2366, %v2367
    %v2387 = vsel %vm2344, %v2365, %v2366
    %v2388 = vsel %vm2344, %v2364, %v2365
    %v2389 = vsel %vm2344, %v2363, %v2364
    %v2390 = vsel %vm2344, %v2362, %v2363
    %v2391 = vsel %vm2344, %v2361, %v2362
    %v2392 = vsel %vm2344, %v2376, %v2361
    %vm2393 = vcmp.eq.s32.totalorder %v2391, %v133
    %vm2394 = vcmp.eq.s32.totalorder %v2390, %v134
    %vm2395 = vcmp.eq.s32.totalorder %v2389, %v135
    %vm2396 = vcmp.eq.s32.totalorder %v2388, %v136
    %vm2397 = vcmp.eq.s32.totalorder %v2387, %v137
    %vm2398 = vcmp.eq.s32.totalorder %v2386, %v138
    %vm2399 = vcmp.eq.s32.totalorder %v2385, %v139
    %vm2400 = vcmp.eq.s32.totalorder %v2384, %v140
    %vm2401 = vcmp.eq.s32.totalorder %v2383, %v141
    %vm2402 = vcmp.eq.s32.totalorder %v2382, %v142
    %vm2403 = vcmp.eq.s32.totalorder %v2381, %v143
    %vm2404 = vcmp.eq.s32.totalorder %v2380, %v144
    %vm2405 = vcmp.eq.s32.totalorder %v2379, %v145
    %vm2406 = vcmp.eq.s32.totalorder %v2378, %v146
    %vm2407 = vcmp.eq.s32.totalorder %v2377, %v147
    %vm2408 = vcmp.eq.s32.totalorder %v2392, %v148
    %v2409 = vsel %vm2393, 1, 0
    %v2410 = vsel %vm2394, 1, 0
    %v2411 = vsel %vm2395, 1, 0
    %v2412 = vsel %vm2396, 1, 0
    %v2413 = vsel %vm2397, 1, 0
    %v2414 = vsel %vm2398, 1, 0
    %v2415 = vsel %vm2399, 1, 0
    %v2416 = vsel %vm2400, 1, 0
    %v2417 = vsel %vm2401, 1, 0
    %v2418 = vsel %vm2402, 1, 0
    %v2419 = vsel %vm2403, 1, 0
    %v2420 = vsel %vm2404, 1, 0
    %v2421 = vsel %vm2405, 1, 0
    %v2422 = vsel %vm2406, 1, 0
    %v2423 = vsel %vm2407, 1, 0
    %v2424 = vsel %vm2408, 1, 0
    %2425 = vset.pattern.permute.xlu0 0
    %2426 = vperm.xlu0 %2425, %v2409
    %v2427 = vpop.permute.xlu0 %2426
    %2428 = vset.pattern.permute.xlu0 0
    %2429 = vperm.xlu0 %2428, %v2410
    %v2430 = vpop.permute.xlu0 %2429
    %2431 = vset.pattern.permute.xlu0 0
    %2432 = vperm.xlu0 %2431, %v2411
    %v2433 = vpop.permute.xlu0 %2432
    %2434 = vset.pattern.permute.xlu0 0
    %2435 = vperm.xlu0 %2434, %v2412
    %v2436 = vpop.permute.xlu0 %2435
    %2437 = vset.pattern.permute.xlu0 0
    %2438 = vperm.xlu0 %2437, %v2413
    %v2439 = vpop.permute.xlu0 %2438
    %2440 = vset.pattern.permute.xlu0 0
    %2441 = vperm.xlu0 %2440, %v2414
    %v2442 = vpop.permute.xlu0 %2441
    %2443 = vset.pattern.permute.xlu0 0
    %2444 = vperm.xlu0 %2443, %v2415
    %v2445 = vpop.permute.xlu0 %2444
    %2446 = vset.pattern.permute.xlu0 0
    %2447 = vperm.xlu0 %2446, %v2416
    %v2448 = vpop.permute.xlu0 %2447
    %2449 = vset.pattern.permute.xlu0 0
    %2450 = vperm.xlu0 %2449, %v2417
    %v2451 = vpop.permute.xlu0 %2450
    %2452 = vset.pattern.permute.xlu0 0
    %2453 = vperm.xlu0 %2452, %v2418
    %v2454 = vpop.permute.xlu0 %2453
    %2455 = vset.pattern.permute.xlu0 0
    %2456 = vperm.xlu0 %2455, %v2419
    %v2457 = vpop.permute.xlu0 %2456
    %2458 = vset.pattern.permute.xlu0 0
    %2459 = vperm.xlu0 %2458, %v2420
    %v2460 = vpop.permute.xlu0 %2459
    %2461 = vset.pattern.permute.xlu0 0
    %2462 = vperm.xlu0 %2461, %v2421
    %v2463 = vpop.permute.xlu0 %2462
    %2464 = vset.pattern.permute.xlu0 0
    %2465 = vperm.xlu0 %2464, %v2422
    %v2466 = vpop.permute.xlu0 %2465
    %2467 = vset.pattern.permute.xlu0 0
    %2468 = vperm.xlu0 %2467, %v2423
    %v2469 = vpop.permute.xlu0 %2468
    %2470 = vset.pattern.permute.xlu0 0
    %2471 = vperm.xlu0 %2470, %v2424
    %v2472 = vpop.permute.xlu0 %2471
    %vm2473 = vcmp.eq.s32.totalorder %v2427, 1
    %vm2474 = vcmp.eq.s32.totalorder %v2430, 1
    %vm2475 = vcmp.eq.s32.totalorder %v2433, 1
    %vm2476 = vcmp.eq.s32.totalorder %v2436, 1
    %vm2477 = vcmp.eq.s32.totalorder %v2439, 1
    %vm2478 = vcmp.eq.s32.totalorder %v2442, 1
    %vm2479 = vcmp.eq.s32.totalorder %v2445, 1
    %vm2480 = vcmp.eq.s32.totalorder %v2448, 1
    %vm2481 = vcmp.eq.s32.totalorder %v2451, 1
    %vm2482 = vcmp.eq.s32.totalorder %v2454, 1
    %vm2483 = vcmp.eq.s32.totalorder %v2457, 1
    %vm2484 = vcmp.eq.s32.totalorder %v2460, 1
    %vm2485 = vcmp.eq.s32.totalorder %v2463, 1
    %vm2486 = vcmp.eq.s32.totalorder %v2466, 1
    %vm2487 = vcmp.eq.s32.totalorder %v2469, 1
    %vm2488 = vcmp.eq.s32.totalorder %v2472, 1
    %v2489 = vsel %vm2473, %v2359, %v2360
    %v2490 = vsel %vm2474, %v2358, %v2359
    %v2491 = vsel %vm2475, %v2357, %v2358
    %v2492 = vsel %vm2476, %v2356, %v2357
    %v2493 = vsel %vm2477, %v2355, %v2356
    %v2494 = vsel %vm2478, %v2354, %v2355
    %v2495 = vsel %vm2479, %v2353, %v2354
    %v2496 = vsel %vm2480, %v2352, %v2353
    %v2497 = vsel %vm2481, %v2351, %v2352
    %v2498 = vsel %vm2482, %v2350, %v2351
    %v2499 = vsel %vm2483, %v2349, %v2350
    %v2500 = vsel %vm2484, %v2348, %v2349
    %v2501 = vsel %vm2485, %v2347, %v2348
    %v2502 = vsel %vm2486, %v2346, %v2347
    %v2503 = vsel %vm2487, %v2345, %v2346
    %v2504 = vsel %vm2488, %v2360, %v2345
    %vm2505 = vcmp.eq.s32.totalorder %v1621, %v928
    %vm2506 = vcmp.eq.s32.totalorder %v1624, %v928
    %vm2507 = vcmp.eq.s32.totalorder %v1627, %v928
    %vm2508 = vcmp.eq.s32.totalorder %v1630, %v928
    %vm2509 = vcmp.eq.s32.totalorder %v1633, %v928
    %vm2510 = vcmp.eq.s32.totalorder %v1636, %v928
    %vm2511 = vcmp.eq.s32.totalorder %v1639, %v928
    %vm2512 = vcmp.eq.s32.totalorder %v1642, %v928
    %vm2513 = vcmp.eq.s32.totalorder %v1645, %v928
    %vm2514 = vcmp.eq.s32.totalorder %v1648, %v928
    %vm2515 = vcmp.eq.s32.totalorder %v1651, %v928
    %vm2516 = vcmp.eq.s32.totalorder %v1654, %v928
    %vm2517 = vcmp.eq.s32.totalorder %v1657, %v928
    %vm2518 = vcmp.eq.s32.totalorder %v1660, %v928
    %vm2519 = vcmp.eq.s32.totalorder %v1663, %v928
    %vm2520 = vcmp.eq.s32.totalorder %v1666, %v928
    %v2521 = vsel %vm2505, %v2489, 0.0
    %v2522 = vsel %vm2506, %v2490, 0.0
    %v2523 = vsel %vm2507, %v2491, 0.0
    %v2524 = vsel %vm2508, %v2492, 0.0
    %v2525 = vsel %vm2509, %v2493, 0.0
    %v2526 = vsel %vm2510, %v2494, 0.0
    %v2527 = vsel %vm2511, %v2495, 0.0
    %v2528 = vsel %vm2512, %v2496, 0.0
    %v2529 = vsel %vm2513, %v2497, 0.0
    %v2530 = vsel %vm2514, %v2498, 0.0
    %v2531 = vsel %vm2515, %v2499, 0.0
    %v2532 = vsel %vm2516, %v2500, 0.0
    %v2533 = vsel %vm2517, %v2501, 0.0
    %v2534 = vsel %vm2518, %v2502, 0.0
    %v2535 = vsel %vm2519, %v2503, 0.0
    %v2536 = vsel %vm2520, %v2504, 0.0
    %v2537 = vrot.slane %v962, 5
    %v2538 = vrot.slane %v964, 5
    %v2539 = vrot.slane %v966, 5
    %v2540 = vrot.slane %v968, 5
    %v2541 = vrot.slane %v970, 5
    %v2542 = vrot.slane %v972, 5
    %v2543 = vrot.slane %v974, 5
    %v2544 = vrot.slane %v976, 5
    %v2545 = vrot.slane %v978, 5
    %v2546 = vrot.slane %v980, 5
    %v2547 = vrot.slane %v982, 5
    %v2548 = vrot.slane %v984, 5
    %v2549 = vrot.slane %v986, 5
    %v2550 = vrot.slane %v988, 5
    %v2551 = vrot.slane %v990, 5
    %v2552 = vrot.slane %v992, 5
    %vm2553 = vcmp.lt.s32.totalorder %v1716, 3
    %v2554 = vsel %vm2553, %v2551, %v2552
    %v2555 = vsel %vm2553, %v2550, %v2551
    %v2556 = vsel %vm2553, %v2549, %v2550
    %v2557 = vsel %vm2553, %v2548, %v2549
    %v2558 = vsel %vm2553, %v2547, %v2548
    %v2559 = vsel %vm2553, %v2546, %v2547
    %v2560 = vsel %vm2553, %v2545, %v2546
    %v2561 = vsel %vm2553, %v2544, %v2545
    %v2562 = vsel %vm2553, %v2543, %v2544
    %v2563 = vsel %vm2553, %v2542, %v2543
    %v2564 = vsel %vm2553, %v2541, %v2542
    %v2565 = vsel %vm2553, %v2540, %v2541
    %v2566 = vsel %vm2553, %v2539, %v2540
    %v2567 = vsel %vm2553, %v2538, %v2539
    %v2568 = vsel %vm2553, %v2537, %v2538
    %v2569 = vsel %vm2553, %v2552, %v2537
    %v2570 = vrot.slane %v133, 5
    %v2571 = vrot.slane %v134, 5
    %v2572 = vrot.slane %v135, 5
    %v2573 = vrot.slane %v136, 5
    %v2574 = vrot.slane %v137, 5
    %v2575 = vrot.slane %v138, 5
    %v2576 = vrot.slane %v139, 5
    %v2577 = vrot.slane %v140, 5
    %v2578 = vrot.slane %v141, 5
    %v2579 = vrot.slane %v142, 5
    %v2580 = vrot.slane %v143, 5
    %v2581 = vrot.slane %v144, 5
    %v2582 = vrot.slane %v145, 5
    %v2583 = vrot.slane %v146, 5
    %v2584 = vrot.slane %v147, 5
    %v2585 = vrot.slane %v148, 5
    %v2586 = vsel %vm2553, %v2584, %v2585
    %v2587 = vsel %vm2553, %v2583, %v2584
    %v2588 = vsel %vm2553, %v2582, %v2583
    %v2589 = vsel %vm2553, %v2581, %v2582
    %v2590 = vsel %vm2553, %v2580, %v2581
    %v2591 = vsel %vm2553, %v2579, %v2580
    %v2592 = vsel %vm2553, %v2578, %v2579
    %v2593 = vsel %vm2553, %v2577, %v2578
    %v2594 = vsel %vm2553, %v2576, %v2577
    %v2595 = vsel %vm2553, %v2575, %v2576
    %v2596 = vsel %vm2553, %v2574, %v2575
    %v2597 = vsel %vm2553, %v2573, %v2574
    %v2598 = vsel %vm2553, %v2572, %v2573
    %v2599 = vsel %vm2553, %v2571, %v2572
    %v2600 = vsel %vm2553, %v2570, %v2571
    %v2601 = vsel %vm2553, %v2585, %v2570
    %vm2602 = vcmp.eq.s32.totalorder %v2600, %v133
    %vm2603 = vcmp.eq.s32.totalorder %v2599, %v134
    %vm2604 = vcmp.eq.s32.totalorder %v2598, %v135
    %vm2605 = vcmp.eq.s32.totalorder %v2597, %v136
    %vm2606 = vcmp.eq.s32.totalorder %v2596, %v137
    %vm2607 = vcmp.eq.s32.totalorder %v2595, %v138
    %vm2608 = vcmp.eq.s32.totalorder %v2594, %v139
    %vm2609 = vcmp.eq.s32.totalorder %v2593, %v140
    %vm2610 = vcmp.eq.s32.totalorder %v2592, %v141
    %vm2611 = vcmp.eq.s32.totalorder %v2591, %v142
    %vm2612 = vcmp.eq.s32.totalorder %v2590, %v143
    %vm2613 = vcmp.eq.s32.totalorder %v2589, %v144
    %vm2614 = vcmp.eq.s32.totalorder %v2588, %v145
    %vm2615 = vcmp.eq.s32.totalorder %v2587, %v146
    %vm2616 = vcmp.eq.s32.totalorder %v2586, %v147
    %vm2617 = vcmp.eq.s32.totalorder %v2601, %v148
    %v2618 = vsel %vm2602, 1, 0
    %v2619 = vsel %vm2603, 1, 0
    %v2620 = vsel %vm2604, 1, 0
    %v2621 = vsel %vm2605, 1, 0
    %v2622 = vsel %vm2606, 1, 0
    %v2623 = vsel %vm2607, 1, 0
    %v2624 = vsel %vm2608, 1, 0
    %v2625 = vsel %vm2609, 1, 0
    %v2626 = vsel %vm2610, 1, 0
    %v2627 = vsel %vm2611, 1, 0
    %v2628 = vsel %vm2612, 1, 0
    %v2629 = vsel %vm2613, 1, 0
    %v2630 = vsel %vm2614, 1, 0
    %v2631 = vsel %vm2615, 1, 0
    %v2632 = vsel %vm2616, 1, 0
    %v2633 = vsel %vm2617, 1, 0
    %2634 = vset.pattern.permute.xlu0 0
    %2635 = vperm.xlu0 %2634, %v2618
    %v2636 = vpop.permute.xlu0 %2635
    %2637 = vset.pattern.permute.xlu0 0
    %2638 = vperm.xlu0 %2637, %v2619
    %v2639 = vpop.permute.xlu0 %2638
    %2640 = vset.pattern.permute.xlu0 0
    %2641 = vperm.xlu0 %2640, %v2620
    %v2642 = vpop.permute.xlu0 %2641
    %2643 = vset.pattern.permute.xlu0 0
    %2644 = vperm.xlu0 %2643, %v2621
    %v2645 = vpop.permute.xlu0 %2644
    %2646 = vset.pattern.permute.xlu0 0
    %2647 = vperm.xlu0 %2646, %v2622
    %v2648 = vpop.permute.xlu0 %2647
    %2649 = vset.pattern.permute.xlu0 0
    %2650 = vperm.xlu0 %2649, %v2623
    %v2651 = vpop.permute.xlu0 %2650
    %2652 = vset.pattern.permute.xlu0 0
    %2653 = vperm.xlu0 %2652, %v2624
    %v2654 = vpop.permute.xlu0 %2653
    %2655 = vset.pattern.permute.xlu0 0
    %2656 = vperm.xlu0 %2655, %v2625
    %v2657 = vpop.permute.xlu0 %2656
    %2658 = vset.pattern.permute.xlu0 0
    %2659 = vperm.xlu0 %2658, %v2626
    %v2660 = vpop.permute.xlu0 %2659
    %2661 = vset.pattern.permute.xlu0 0
    %2662 = vperm.xlu0 %2661, %v2627
    %v2663 = vpop.permute.xlu0 %2662
    %2664 = vset.pattern.permute.xlu0 0
    %2665 = vperm.xlu0 %2664, %v2628
    %v2666 = vpop.permute.xlu0 %2665
    %2667 = vset.pattern.permute.xlu0 0
    %2668 = vperm.xlu0 %2667, %v2629
    %v2669 = vpop.permute.xlu0 %2668
    %2670 = vset.pattern.permute.xlu0 0
    %2671 = vperm.xlu0 %2670, %v2630
    %v2672 = vpop.permute.xlu0 %2671
    %2673 = vset.pattern.permute.xlu0 0
    %2674 = vperm.xlu0 %2673, %v2631
    %v2675 = vpop.permute.xlu0 %2674
    %2676 = vset.pattern.permute.xlu0 0
    %2677 = vperm.xlu0 %2676, %v2632
    %v2678 = vpop.permute.xlu0 %2677
    %2679 = vset.pattern.permute.xlu0 0
    %2680 = vperm.xlu0 %2679, %v2633
    %v2681 = vpop.permute.xlu0 %2680
    %vm2682 = vcmp.eq.s32.totalorder %v2636, 1
    %vm2683 = vcmp.eq.s32.totalorder %v2639, 1
    %vm2684 = vcmp.eq.s32.totalorder %v2642, 1
    %vm2685 = vcmp.eq.s32.totalorder %v2645, 1
    %vm2686 = vcmp.eq.s32.totalorder %v2648, 1
    %vm2687 = vcmp.eq.s32.totalorder %v2651, 1
    %vm2688 = vcmp.eq.s32.totalorder %v2654, 1
    %vm2689 = vcmp.eq.s32.totalorder %v2657, 1
    %vm2690 = vcmp.eq.s32.totalorder %v2660, 1
    %vm2691 = vcmp.eq.s32.totalorder %v2663, 1
    %vm2692 = vcmp.eq.s32.totalorder %v2666, 1
    %vm2693 = vcmp.eq.s32.totalorder %v2669, 1
    %vm2694 = vcmp.eq.s32.totalorder %v2672, 1
    %vm2695 = vcmp.eq.s32.totalorder %v2675, 1
    %vm2696 = vcmp.eq.s32.totalorder %v2678, 1
    %vm2697 = vcmp.eq.s32.totalorder %v2681, 1
    %v2698 = vsel %vm2682, %v2568, %v2569
    %v2699 = vsel %vm2683, %v2567, %v2568
    %v2700 = vsel %vm2684, %v2566, %v2567
    %v2701 = vsel %vm2685, %v2565, %v2566
    %v2702 = vsel %vm2686, %v2564, %v2565
    %v2703 = vsel %vm2687, %v2563, %v2564
    %v2704 = vsel %vm2688, %v2562, %v2563
    %v2705 = vsel %vm2689, %v2561, %v2562
    %v2706 = vsel %vm2690, %v2560, %v2561
    %v2707 = vsel %vm2691, %v2559, %v2560
    %v2708 = vsel %vm2692, %v2558, %v2559
    %v2709 = vsel %vm2693, %v2557, %v2558
    %v2710 = vsel %vm2694, %v2556, %v2557
    %v2711 = vsel %vm2695, %v2555, %v2556
    %v2712 = vsel %vm2696, %v2554, %v2555
    %v2713 = vsel %vm2697, %v2569, %v2554
    %vm2714 = vcmp.eq.s32.totalorder %v1621, %v1110
    %vm2715 = vcmp.eq.s32.totalorder %v1624, %v1110
    %vm2716 = vcmp.eq.s32.totalorder %v1627, %v1110
    %vm2717 = vcmp.eq.s32.totalorder %v1630, %v1110
    %vm2718 = vcmp.eq.s32.totalorder %v1633, %v1110
    %vm2719 = vcmp.eq.s32.totalorder %v1636, %v1110
    %vm2720 = vcmp.eq.s32.totalorder %v1639, %v1110
    %vm2721 = vcmp.eq.s32.totalorder %v1642, %v1110
    %vm2722 = vcmp.eq.s32.totalorder %v1645, %v1110
    %vm2723 = vcmp.eq.s32.totalorder %v1648, %v1110
    %vm2724 = vcmp.eq.s32.totalorder %v1651, %v1110
    %vm2725 = vcmp.eq.s32.totalorder %v1654, %v1110
    %vm2726 = vcmp.eq.s32.totalorder %v1657, %v1110
    %vm2727 = vcmp.eq.s32.totalorder %v1660, %v1110
    %vm2728 = vcmp.eq.s32.totalorder %v1663, %v1110
    %vm2729 = vcmp.eq.s32.totalorder %v1666, %v1110
    %v2730 = vsel %vm2714, %v2698, 0.0
    %v2731 = vsel %vm2715, %v2699, 0.0
    %v2732 = vsel %vm2716, %v2700, 0.0
    %v2733 = vsel %vm2717, %v2701, 0.0
    %v2734 = vsel %vm2718, %v2702, 0.0
    %v2735 = vsel %vm2719, %v2703, 0.0
    %v2736 = vsel %vm2720, %v2704, 0.0
    %v2737 = vsel %vm2721, %v2705, 0.0
    %v2738 = vsel %vm2722, %v2706, 0.0
    %v2739 = vsel %vm2723, %v2707, 0.0
    %v2740 = vsel %vm2724, %v2708, 0.0
    %v2741 = vsel %vm2725, %v2709, 0.0
    %v2742 = vsel %vm2726, %v2710, 0.0
    %v2743 = vsel %vm2727, %v2711, 0.0
    %v2744 = vsel %vm2728, %v2712, 0.0
    %v2745 = vsel %vm2729, %v2713, 0.0
    %v2746 = vrot.slane %v1144, 6
    %v2747 = vrot.slane %v1146, 6
    %v2748 = vrot.slane %v1148, 6
    %v2749 = vrot.slane %v1150, 6
    %v2750 = vrot.slane %v1152, 6
    %v2751 = vrot.slane %v1154, 6
    %v2752 = vrot.slane %v1156, 6
    %v2753 = vrot.slane %v1158, 6
    %v2754 = vrot.slane %v1160, 6
    %v2755 = vrot.slane %v1162, 6
    %v2756 = vrot.slane %v1164, 6
    %v2757 = vrot.slane %v1166, 6
    %v2758 = vrot.slane %v1168, 6
    %v2759 = vrot.slane %v1170, 6
    %v2760 = vrot.slane %v1172, 6
    %v2761 = vrot.slane %v1174, 6
    %vm2762 = vcmp.lt.s32.totalorder %v1716, 2
    %v2763 = vsel %vm2762, %v2760, %v2761
    %v2764 = vsel %vm2762, %v2759, %v2760
    %v2765 = vsel %vm2762, %v2758, %v2759
    %v2766 = vsel %vm2762, %v2757, %v2758
    %v2767 = vsel %vm2762, %v2756, %v2757
    %v2768 = vsel %vm2762, %v2755, %v2756
    %v2769 = vsel %vm2762, %v2754, %v2755
    %v2770 = vsel %vm2762, %v2753, %v2754
    %v2771 = vsel %vm2762, %v2752, %v2753
    %v2772 = vsel %vm2762, %v2751, %v2752
    %v2773 = vsel %vm2762, %v2750, %v2751
    %v2774 = vsel %vm2762, %v2749, %v2750
    %v2775 = vsel %vm2762, %v2748, %v2749
    %v2776 = vsel %vm2762, %v2747, %v2748
    %v2777 = vsel %vm2762, %v2746, %v2747
    %v2778 = vsel %vm2762, %v2761, %v2746
    %v2779 = vrot.slane %v133, 6
    %v2780 = vrot.slane %v134, 6
    %v2781 = vrot.slane %v135, 6
    %v2782 = vrot.slane %v136, 6
    %v2783 = vrot.slane %v137, 6
    %v2784 = vrot.slane %v138, 6
    %v2785 = vrot.slane %v139, 6
    %v2786 = vrot.slane %v140, 6
    %v2787 = vrot.slane %v141, 6
    %v2788 = vrot.slane %v142, 6
    %v2789 = vrot.slane %v143, 6
    %v2790 = vrot.slane %v144, 6
    %v2791 = vrot.slane %v145, 6
    %v2792 = vrot.slane %v146, 6
    %v2793 = vrot.slane %v147, 6
    %v2794 = vrot.slane %v148, 6
    %v2795 = vsel %vm2762, %v2793, %v2794
    %v2796 = vsel %vm2762, %v2792, %v2793
    %v2797 = vsel %vm2762, %v2791, %v2792
    %v2798 = vsel %vm2762, %v2790, %v2791
    %v2799 = vsel %vm2762, %v2789, %v2790
    %v2800 = vsel %vm2762, %v2788, %v2789
    %v2801 = vsel %vm2762, %v2787, %v2788
    %v2802 = vsel %vm2762, %v2786, %v2787
    %v2803 = vsel %vm2762, %v2785, %v2786
    %v2804 = vsel %vm2762, %v2784, %v2785
    %v2805 = vsel %vm2762, %v2783, %v2784
    %v2806 = vsel %vm2762, %v2782, %v2783
    %v2807 = vsel %vm2762, %v2781, %v2782
    %v2808 = vsel %vm2762, %v2780, %v2781
    %v2809 = vsel %vm2762, %v2779, %v2780
    %v2810 = vsel %vm2762, %v2794, %v2779
    %vm2811 = vcmp.eq.s32.totalorder %v2809, %v133
    %vm2812 = vcmp.eq.s32.totalorder %v2808, %v134
    %vm2813 = vcmp.eq.s32.totalorder %v2807, %v135
    %vm2814 = vcmp.eq.s32.totalorder %v2806, %v136
    %vm2815 = vcmp.eq.s32.totalorder %v2805, %v137
    %vm2816 = vcmp.eq.s32.totalorder %v2804, %v138
    %vm2817 = vcmp.eq.s32.totalorder %v2803, %v139
    %vm2818 = vcmp.eq.s32.totalorder %v2802, %v140
    %vm2819 = vcmp.eq.s32.totalorder %v2801, %v141
    %vm2820 = vcmp.eq.s32.totalorder %v2800, %v142
    %vm2821 = vcmp.eq.s32.totalorder %v2799, %v143
    %vm2822 = vcmp.eq.s32.totalorder %v2798, %v144
    %vm2823 = vcmp.eq.s32.totalorder %v2797, %v145
    %vm2824 = vcmp.eq.s32.totalorder %v2796, %v146
    %vm2825 = vcmp.eq.s32.totalorder %v2795, %v147
    %vm2826 = vcmp.eq.s32.totalorder %v2810, %v148
    %v2827 = vsel %vm2811, 1, 0
    %v2828 = vsel %vm2812, 1, 0
    %v2829 = vsel %vm2813, 1, 0
    %v2830 = vsel %vm2814, 1, 0
    %v2831 = vsel %vm2815, 1, 0
    %v2832 = vsel %vm2816, 1, 0
    %v2833 = vsel %vm2817, 1, 0
    %v2834 = vsel %vm2818, 1, 0
    %v2835 = vsel %vm2819, 1, 0
    %v2836 = vsel %vm2820, 1, 0
    %v2837 = vsel %vm2821, 1, 0
    %v2838 = vsel %vm2822, 1, 0
    %v2839 = vsel %vm2823, 1, 0
    %v2840 = vsel %vm2824, 1, 0
    %v2841 = vsel %vm2825, 1, 0
    %v2842 = vsel %vm2826, 1, 0
    %2843 = vset.pattern.permute.xlu0 0
    %2844 = vperm.xlu0 %2843, %v2827
    %v2845 = vpop.permute.xlu0 %2844
    %2846 = vset.pattern.permute.xlu0 0
    %2847 = vperm.xlu0 %2846, %v2828
    %v2848 = vpop.permute.xlu0 %2847
    %2849 = vset.pattern.permute.xlu0 0
    %2850 = vperm.xlu0 %2849, %v2829
    %v2851 = vpop.permute.xlu0 %2850
    %2852 = vset.pattern.permute.xlu0 0
    %2853 = vperm.xlu0 %2852, %v2830
    %v2854 = vpop.permute.xlu0 %2853
    %2855 = vset.pattern.permute.xlu0 0
    %2856 = vperm.xlu0 %2855, %v2831
    %v2857 = vpop.permute.xlu0 %2856
    %2858 = vset.pattern.permute.xlu0 0
    %2859 = vperm.xlu0 %2858, %v2832
    %v2860 = vpop.permute.xlu0 %2859
    %2861 = vset.pattern.permute.xlu0 0
    %2862 = vperm.xlu0 %2861, %v2833
    %v2863 = vpop.permute.xlu0 %2862
    %2864 = vset.pattern.permute.xlu0 0
    %2865 = vperm.xlu0 %2864, %v2834
    %v2866 = vpop.permute.xlu0 %2865
    %2867 = vset.pattern.permute.xlu0 0
    %2868 = vperm.xlu0 %2867, %v2835
    %v2869 = vpop.permute.xlu0 %2868
    %2870 = vset.pattern.permute.xlu0 0
    %2871 = vperm.xlu0 %2870, %v2836
    %v2872 = vpop.permute.xlu0 %2871
    %2873 = vset.pattern.permute.xlu0 0
    %2874 = vperm.xlu0 %2873, %v2837
    %v2875 = vpop.permute.xlu0 %2874
    %2876 = vset.pattern.permute.xlu0 0
    %2877 = vperm.xlu0 %2876, %v2838
    %v2878 = vpop.permute.xlu0 %2877
    %2879 = vset.pattern.permute.xlu0 0
    %2880 = vperm.xlu0 %2879, %v2839
    %v2881 = vpop.permute.xlu0 %2880
    %2882 = vset.pattern.permute.xlu0 0
    %2883 = vperm.xlu0 %2882, %v2840
    %v2884 = vpop.permute.xlu0 %2883
    %2885 = vset.pattern.permute.xlu0 0
    %2886 = vperm.xlu0 %2885, %v2841
    %v2887 = vpop.permute.xlu0 %2886
    %2888 = vset.pattern.permute.xlu0 0
    %2889 = vperm.xlu0 %2888, %v2842
    %v2890 = vpop.permute.xlu0 %2889
    %vm2891 = vcmp.eq.s32.totalorder %v2845, 1
    %vm2892 = vcmp.eq.s32.totalorder %v2848, 1
    %vm2893 = vcmp.eq.s32.totalorder %v2851, 1
    %vm2894 = vcmp.eq.s32.totalorder %v2854, 1
    %vm2895 = vcmp.eq.s32.totalorder %v2857, 1
    %vm2896 = vcmp.eq.s32.totalorder %v2860, 1
    %vm2897 = vcmp.eq.s32.totalorder %v2863, 1
    %vm2898 = vcmp.eq.s32.totalorder %v2866, 1
    %vm2899 = vcmp.eq.s32.totalorder %v2869, 1
    %vm2900 = vcmp.eq.s32.totalorder %v2872, 1
    %vm2901 = vcmp.eq.s32.totalorder %v2875, 1
    %vm2902 = vcmp.eq.s32.totalorder %v2878, 1
    %vm2903 = vcmp.eq.s32.totalorder %v2881, 1
    %vm2904 = vcmp.eq.s32.totalorder %v2884, 1
    %vm2905 = vcmp.eq.s32.totalorder %v2887, 1
    %vm2906 = vcmp.eq.s32.totalorder %v2890, 1
    %v2907 = vsel %vm2891, %v2777, %v2778
    %v2908 = vsel %vm2892, %v2776, %v2777
    %v2909 = vsel %vm2893, %v2775, %v2776
    %v2910 = vsel %vm2894, %v2774, %v2775
    %v2911 = vsel %vm2895, %v2773, %v2774
    %v2912 = vsel %vm2896, %v2772, %v2773
    %v2913 = vsel %vm2897, %v2771, %v2772
    %v2914 = vsel %vm2898, %v2770, %v2771
    %v2915 = vsel %vm2899, %v2769, %v2770
    %v2916 = vsel %vm2900, %v2768, %v2769
    %v2917 = vsel %vm2901, %v2767, %v2768
    %v2918 = vsel %vm2902, %v2766, %v2767
    %v2919 = vsel %vm2903, %v2765, %v2766
    %v2920 = vsel %vm2904, %v2764, %v2765
    %v2921 = vsel %vm2905, %v2763, %v2764
    %v2922 = vsel %vm2906, %v2778, %v2763
    %vm2923 = vcmp.eq.s32.totalorder %v1621, %v1292
    %vm2924 = vcmp.eq.s32.totalorder %v1624, %v1292
    %vm2925 = vcmp.eq.s32.totalorder %v1627, %v1292
    %vm2926 = vcmp.eq.s32.totalorder %v1630, %v1292
    %vm2927 = vcmp.eq.s32.totalorder %v1633, %v1292
    %vm2928 = vcmp.eq.s32.totalorder %v1636, %v1292
    %vm2929 = vcmp.eq.s32.totalorder %v1639, %v1292
    %vm2930 = vcmp.eq.s32.totalorder %v1642, %v1292
    %vm2931 = vcmp.eq.s32.totalorder %v1645, %v1292
    %vm2932 = vcmp.eq.s32.totalorder %v1648, %v1292
    %vm2933 = vcmp.eq.s32.totalorder %v1651, %v1292
    %vm2934 = vcmp.eq.s32.totalorder %v1654, %v1292
    %vm2935 = vcmp.eq.s32.totalorder %v1657, %v1292
    %vm2936 = vcmp.eq.s32.totalorder %v1660, %v1292
    %vm2937 = vcmp.eq.s32.totalorder %v1663, %v1292
    %vm2938 = vcmp.eq.s32.totalorder %v1666, %v1292
    %v2939 = vsel %vm2923, %v2907, 0.0
    %v2940 = vsel %vm2924, %v2908, 0.0
    %v2941 = vsel %vm2925, %v2909, 0.0
    %v2942 = vsel %vm2926, %v2910, 0.0
    %v2943 = vsel %vm2927, %v2911, 0.0
    %v2944 = vsel %vm2928, %v2912, 0.0
    %v2945 = vsel %vm2929, %v2913, 0.0
    %v2946 = vsel %vm2930, %v2914, 0.0
    %v2947 = vsel %vm2931, %v2915, 0.0
    %v2948 = vsel %vm2932, %v2916, 0.0
    %v2949 = vsel %vm2933, %v2917, 0.0
    %v2950 = vsel %vm2934, %v2918, 0.0
    %v2951 = vsel %vm2935, %v2919, 0.0
    %v2952 = vsel %vm2936, %v2920, 0.0
    %v2953 = vsel %vm2937, %v2921, 0.0
    %v2954 = vsel %vm2938, %v2922, 0.0
    %v2955 = vrot.slane %v1326, 7
    %v2956 = vrot.slane %v1328, 7
    %v2957 = vrot.slane %v1330, 7
    %v2958 = vrot.slane %v1332, 7
    %v2959 = vrot.slane %v1334, 7
    %v2960 = vrot.slane %v1336, 7
    %v2961 = vrot.slane %v1338, 7
    %v2962 = vrot.slane %v1340, 7
    %v2963 = vrot.slane %v1342, 7
    %v2964 = vrot.slane %v1344, 7
    %v2965 = vrot.slane %v1346, 7
    %v2966 = vrot.slane %v1348, 7
    %v2967 = vrot.slane %v1350, 7
    %v2968 = vrot.slane %v1352, 7
    %v2969 = vrot.slane %v1354, 7
    %v2970 = vrot.slane %v1356, 7
    %vm2971 = vcmp.lt.s32.totalorder %v1716, 1
    %v2972 = vsel %vm2971, %v2969, %v2970
    %v2973 = vsel %vm2971, %v2968, %v2969
    %v2974 = vsel %vm2971, %v2967, %v2968
    %v2975 = vsel %vm2971, %v2966, %v2967
    %v2976 = vsel %vm2971, %v2965, %v2966
    %v2977 = vsel %vm2971, %v2964, %v2965
    %v2978 = vsel %vm2971, %v2963, %v2964
    %v2979 = vsel %vm2971, %v2962, %v2963
    %v2980 = vsel %vm2971, %v2961, %v2962
    %v2981 = vsel %vm2971, %v2960, %v2961
    %v2982 = vsel %vm2971, %v2959, %v2960
    %v2983 = vsel %vm2971, %v2958, %v2959
    %v2984 = vsel %vm2971, %v2957, %v2958
    %v2985 = vsel %vm2971, %v2956, %v2957
    %v2986 = vsel %vm2971, %v2955, %v2956
    %v2987 = vsel %vm2971, %v2970, %v2955
    %v2988 = vrot.slane %v133, 7
    %v2989 = vrot.slane %v134, 7
    %v2990 = vrot.slane %v135, 7
    %v2991 = vrot.slane %v136, 7
    %v2992 = vrot.slane %v137, 7
    %v2993 = vrot.slane %v138, 7
    %v2994 = vrot.slane %v139, 7
    %v2995 = vrot.slane %v140, 7
    %v2996 = vrot.slane %v141, 7
    %v2997 = vrot.slane %v142, 7
    %v2998 = vrot.slane %v143, 7
    %v2999 = vrot.slane %v144, 7
    %v3000 = vrot.slane %v145, 7
    %v3001 = vrot.slane %v146, 7
    %v3002 = vrot.slane %v147, 7
    %v3003 = vrot.slane %v148, 7
    %v3004 = vsel %vm2971, %v3002, %v3003
    %v3005 = vsel %vm2971, %v3001, %v3002
    %v3006 = vsel %vm2971, %v3000, %v3001
    %v3007 = vsel %vm2971, %v2999, %v3000
    %v3008 = vsel %vm2971, %v2998, %v2999
    %v3009 = vsel %vm2971, %v2997, %v2998
    %v3010 = vsel %vm2971, %v2996, %v2997
    %v3011 = vsel %vm2971, %v2995, %v2996
    %v3012 = vsel %vm2971, %v2994, %v2995
    %v3013 = vsel %vm2971, %v2993, %v2994
    %v3014 = vsel %vm2971, %v2992, %v2993
    %v3015 = vsel %vm2971, %v2991, %v2992
    %v3016 = vsel %vm2971, %v2990, %v2991
    %v3017 = vsel %vm2971, %v2989, %v2990
    %v3018 = vsel %vm2971, %v2988, %v2989
    %v3019 = vsel %vm2971, %v3003, %v2988
    %vm3020 = vcmp.eq.s32.totalorder %v3018, %v133
    %vm3021 = vcmp.eq.s32.totalorder %v3017, %v134
    %vm3022 = vcmp.eq.s32.totalorder %v3016, %v135
    %vm3023 = vcmp.eq.s32.totalorder %v3015, %v136
    %vm3024 = vcmp.eq.s32.totalorder %v3014, %v137
    %vm3025 = vcmp.eq.s32.totalorder %v3013, %v138
    %vm3026 = vcmp.eq.s32.totalorder %v3012, %v139
    %vm3027 = vcmp.eq.s32.totalorder %v3011, %v140
    %vm3028 = vcmp.eq.s32.totalorder %v3010, %v141
    %vm3029 = vcmp.eq.s32.totalorder %v3009, %v142
    %vm3030 = vcmp.eq.s32.totalorder %v3008, %v143
    %vm3031 = vcmp.eq.s32.totalorder %v3007, %v144
    %vm3032 = vcmp.eq.s32.totalorder %v3006, %v145
    %vm3033 = vcmp.eq.s32.totalorder %v3005, %v146
    %vm3034 = vcmp.eq.s32.totalorder %v3004, %v147
    %vm3035 = vcmp.eq.s32.totalorder %v3019, %v148
    %v3036 = vsel %vm3020, 1, 0
    %v3037 = vsel %vm3021, 1, 0
    %v3038 = vsel %vm3022, 1, 0
    %v3039 = vsel %vm3023, 1, 0
    %v3040 = vsel %vm3024, 1, 0
    %v3041 = vsel %vm3025, 1, 0
    %v3042 = vsel %vm3026, 1, 0
    %v3043 = vsel %vm3027, 1, 0
    %v3044 = vsel %vm3028, 1, 0
    %v3045 = vsel %vm3029, 1, 0
    %v3046 = vsel %vm3030, 1, 0
    %v3047 = vsel %vm3031, 1, 0
    %v3048 = vsel %vm3032, 1, 0
    %v3049 = vsel %vm3033, 1, 0
    %v3050 = vsel %vm3034, 1, 0
    %v3051 = vsel %vm3035, 1, 0
    %3052 = vset.pattern.permute.xlu0 0
    %3053 = vperm.xlu0 %3052, %v3036
    %v3054 = vpop.permute.xlu0 %3053
    %3055 = vset.pattern.permute.xlu0 0
    %3056 = vperm.xlu0 %3055, %v3037
    %v3057 = vpop.permute.xlu0 %3056
    %3058 = vset.pattern.permute.xlu0 0
    %3059 = vperm.xlu0 %3058, %v3038
    %v3060 = vpop.permute.xlu0 %3059
    %3061 = vset.pattern.permute.xlu0 0
    %3062 = vperm.xlu0 %3061, %v3039
    %v3063 = vpop.permute.xlu0 %3062
    %3064 = vset.pattern.permute.xlu0 0
    %3065 = vperm.xlu0 %3064, %v3040
    %v3066 = vpop.permute.xlu0 %3065
    %3067 = vset.pattern.permute.xlu0 0
    %3068 = vperm.xlu0 %3067, %v3041
    %v3069 = vpop.permute.xlu0 %3068
    %3070 = vset.pattern.permute.xlu0 0
    %3071 = vperm.xlu0 %3070, %v3042
    %v3072 = vpop.permute.xlu0 %3071
    %3073 = vset.pattern.permute.xlu0 0
    %3074 = vperm.xlu0 %3073, %v3043
    %v3075 = vpop.permute.xlu0 %3074
    %3076 = vset.pattern.permute.xlu0 0
    %3077 = vperm.xlu0 %3076, %v3044
    %v3078 = vpop.permute.xlu0 %3077
    %3079 = vset.pattern.permute.xlu0 0
    %3080 = vperm.xlu0 %3079, %v3045
    %v3081 = vpop.permute.xlu0 %3080
    %3082 = vset.pattern.permute.xlu0 0
    %3083 = vperm.xlu0 %3082, %v3046
    %v3084 = vpop.permute.xlu0 %3083
    %3085 = vset.pattern.permute.xlu0 0
    %3086 = vperm.xlu0 %3085, %v3047
    %v3087 = vpop.permute.xlu0 %3086
    %3088 = vset.pattern.permute.xlu0 0
    %3089 = vperm.xlu0 %3088, %v3048
    %v3090 = vpop.permute.xlu0 %3089
    %3091 = vset.pattern.permute.xlu0 0
    %3092 = vperm.xlu0 %3091, %v3049
    %v3093 = vpop.permute.xlu0 %3092
    %3094 = vset.pattern.permute.xlu0 0
    %3095 = vperm.xlu0 %3094, %v3050
    %v3096 = vpop.permute.xlu0 %3095
    %3097 = vset.pattern.permute.xlu0 0
    %3098 = vperm.xlu0 %3097, %v3051
    %v3099 = vpop.permute.xlu0 %3098
    %vm3100 = vcmp.eq.s32.totalorder %v3054, 1
    %vm3101 = vcmp.eq.s32.totalorder %v3057, 1
    %vm3102 = vcmp.eq.s32.totalorder %v3060, 1
    %vm3103 = vcmp.eq.s32.totalorder %v3063, 1
    %vm3104 = vcmp.eq.s32.totalorder %v3066, 1
    %vm3105 = vcmp.eq.s32.totalorder %v3069, 1
    %vm3106 = vcmp.eq.s32.totalorder %v3072, 1
    %vm3107 = vcmp.eq.s32.totalorder %v3075, 1
    %vm3108 = vcmp.eq.s32.totalorder %v3078, 1
    %vm3109 = vcmp.eq.s32.totalorder %v3081, 1
    %vm3110 = vcmp.eq.s32.totalorder %v3084, 1
    %vm3111 = vcmp.eq.s32.totalorder %v3087, 1
    %vm3112 = vcmp.eq.s32.totalorder %v3090, 1
    %vm3113 = vcmp.eq.s32.totalorder %v3093, 1
    %vm3114 = vcmp.eq.s32.totalorder %v3096, 1
    %vm3115 = vcmp.eq.s32.totalorder %v3099, 1
    %v3116 = vsel %vm3100, %v2986, %v2987
    %v3117 = vsel %vm3101, %v2985, %v2986
    %v3118 = vsel %vm3102, %v2984, %v2985
    %v3119 = vsel %vm3103, %v2983, %v2984
    %v3120 = vsel %vm3104, %v2982, %v2983
    %v3121 = vsel %vm3105, %v2981, %v2982
    %v3122 = vsel %vm3106, %v2980, %v2981
    %v3123 = vsel %vm3107, %v2979, %v2980
    %v3124 = vsel %vm3108, %v2978, %v2979
    %v3125 = vsel %vm3109, %v2977, %v2978
    %v3126 = vsel %vm3110, %v2976, %v2977
    %v3127 = vsel %vm3111, %v2975, %v2976
    %v3128 = vsel %vm3112, %v2974, %v2975
    %v3129 = vsel %vm3113, %v2973, %v2974
    %v3130 = vsel %vm3114, %v2972, %v2973
    %v3131 = vsel %vm3115, %v2987, %v2972
    %vm3132 = vcmp.eq.s32.totalorder %v1621, %v1474
    %vm3133 = vcmp.eq.s32.totalorder %v1624, %v1474
    %vm3134 = vcmp.eq.s32.totalorder %v1627, %v1474
    %vm3135 = vcmp.eq.s32.totalorder %v1630, %v1474
    %vm3136 = vcmp.eq.s32.totalorder %v1633, %v1474
    %vm3137 = vcmp.eq.s32.totalorder %v1636, %v1474
    %vm3138 = vcmp.eq.s32.totalorder %v1639, %v1474
    %vm3139 = vcmp.eq.s32.totalorder %v1642, %v1474
    %vm3140 = vcmp.eq.s32.totalorder %v1645, %v1474
    %vm3141 = vcmp.eq.s32.totalorder %v1648, %v1474
    %vm3142 = vcmp.eq.s32.totalorder %v1651, %v1474
    %vm3143 = vcmp.eq.s32.totalorder %v1654, %v1474
    %vm3144 = vcmp.eq.s32.totalorder %v1657, %v1474
    %vm3145 = vcmp.eq.s32.totalorder %v1660, %v1474
    %vm3146 = vcmp.eq.s32.totalorder %v1663, %v1474
    %vm3147 = vcmp.eq.s32.totalorder %v1666, %v1474
    %v3148 = vsel %vm3132, %v3116, 0.0
    %v3149 = vsel %vm3133, %v3117, 0.0
    %v3150 = vsel %vm3134, %v3118, 0.0
    %v3151 = vsel %vm3135, %v3119, 0.0
    %v3152 = vsel %vm3136, %v3120, 0.0
    %v3153 = vsel %vm3137, %v3121, 0.0
    %v3154 = vsel %vm3138, %v3122, 0.0
    %v3155 = vsel %vm3139, %v3123, 0.0
    %v3156 = vsel %vm3140, %v3124, 0.0
    %v3157 = vsel %vm3141, %v3125, 0.0
    %v3158 = vsel %vm3142, %v3126, 0.0
    %v3159 = vsel %vm3143, %v3127, 0.0
    %v3160 = vsel %vm3144, %v3128, 0.0
    %v3161 = vsel %vm3145, %v3129, 0.0
    %v3162 = vsel %vm3146, %v3130, 0.0
    %v3163 = vsel %vm3147, %v3131, 0.0
    %v3164 = vadd.f32 %v1683, %v1894
    %v3165 = vadd.f32 %v1684, %v1895
    %v3166 = vadd.f32 %v1685, %v1896
    %v3167 = vadd.f32 %v1686, %v1897
    %v3168 = vadd.f32 %v1687, %v1898
    %v3169 = vadd.f32 %v1688, %v1899
    %v3170 = vadd.f32 %v1689, %v1900
    %v3171 = vadd.f32 %v1690, %v1901
    %v3172 = vadd.f32 %v1691, %v1902
    %v3173 = vadd.f32 %v1692, %v1903
    %v3174 = vadd.f32 %v1693, %v1904
    %v3175 = vadd.f32 %v1694, %v1905
    %v3176 = vadd.f32 %v1695, %v1906
    %v3177 = vadd.f32 %v1696, %v1907
    %v3178 = vadd.f32 %v1697, %v1908
    %v3179 = vadd.f32 %v1698, %v1909
    %v3180 = vadd.f32 %v2103, %v2312
    %v3181 = vadd.f32 %v2104, %v2313
    %v3182 = vadd.f32 %v2105, %v2314
    %v3183 = vadd.f32 %v2106, %v2315
    %v3184 = vadd.f32 %v2107, %v2316
    %v3185 = vadd.f32 %v2108, %v2317
    %v3186 = vadd.f32 %v2109, %v2318
    %v3187 = vadd.f32 %v2110, %v2319
    %v3188 = vadd.f32 %v2111, %v2320
    %v3189 = vadd.f32 %v2112, %v2321
    %v3190 = vadd.f32 %v2113, %v2322
    %v3191 = vadd.f32 %v2114, %v2323
    %v3192 = vadd.f32 %v2115, %v2324
    %v3193 = vadd.f32 %v2116, %v2325
    %v3194 = vadd.f32 %v2117, %v2326
    %v3195 = vadd.f32 %v2118, %v2327
    %v3196 = vadd.f32 %v2521, %v2730
    %v3197 = vadd.f32 %v2522, %v2731
    %v3198 = vadd.f32 %v2523, %v2732
    %v3199 = vadd.f32 %v2524, %v2733
    %v3200 = vadd.f32 %v2525, %v2734
    %v3201 = vadd.f32 %v2526, %v2735
    %v3202 = vadd.f32 %v2527, %v2736
    %v3203 = vadd.f32 %v2528, %v2737
    %v3204 = vadd.f32 %v2529, %v2738
    %v3205 = vadd.f32 %v2530, %v2739
    %v3206 = vadd.f32 %v2531, %v2740
    %v3207 = vadd.f32 %v2532, %v2741
    %v3208 = vadd.f32 %v2533, %v2742
    %v3209 = vadd.f32 %v2534, %v2743
    %v3210 = vadd.f32 %v2535, %v2744
    %v3211 = vadd.f32 %v2536, %v2745
    %v3212 = vadd.f32 %v2939, %v3148
    %v3213 = vadd.f32 %v2940, %v3149
    %v3214 = vadd.f32 %v2941, %v3150
    %v3215 = vadd.f32 %v2942, %v3151
    %v3216 = vadd.f32 %v2943, %v3152
    %v3217 = vadd.f32 %v2944, %v3153
    %v3218 = vadd.f32 %v2945, %v3154
    %v3219 = vadd.f32 %v2946, %v3155
    %v3220 = vadd.f32 %v2947, %v3156
    %v3221 = vadd.f32 %v2948, %v3157
    %v3222 = vadd.f32 %v2949, %v3158
    %v3223 = vadd.f32 %v2950, %v3159
    %v3224 = vadd.f32 %v2951, %v3160
    %v3225 = vadd.f32 %v2952, %v3161
    %v3226 = vadd.f32 %v2953, %v3162
    %v3227 = vadd.f32 %v2954, %v3163
    %v3228 = vadd.f32 %v3164, %v3180
    %v3229 = vadd.f32 %v3165, %v3181
    %v3230 = vadd.f32 %v3166, %v3182
    %v3231 = vadd.f32 %v3167, %v3183
    %v3232 = vadd.f32 %v3168, %v3184
    %v3233 = vadd.f32 %v3169, %v3185
    %v3234 = vadd.f32 %v3170, %v3186
    %v3235 = vadd.f32 %v3171, %v3187
    %v3236 = vadd.f32 %v3172, %v3188
    %v3237 = vadd.f32 %v3173, %v3189
    %v3238 = vadd.f32 %v3174, %v3190
    %v3239 = vadd.f32 %v3175, %v3191
    %v3240 = vadd.f32 %v3176, %v3192
    %v3241 = vadd.f32 %v3177, %v3193
    %v3242 = vadd.f32 %v3178, %v3194
    %v3243 = vadd.f32 %v3179, %v3195
    %v3244 = vadd.f32 %v3196, %v3212
    %v3245 = vadd.f32 %v3197, %v3213
    %v3246 = vadd.f32 %v3198, %v3214
    %v3247 = vadd.f32 %v3199, %v3215
    %v3248 = vadd.f32 %v3200, %v3216
    %v3249 = vadd.f32 %v3201, %v3217
    %v3250 = vadd.f32 %v3202, %v3218
    %v3251 = vadd.f32 %v3203, %v3219
    %v3252 = vadd.f32 %v3204, %v3220
    %v3253 = vadd.f32 %v3205, %v3221
    %v3254 = vadd.f32 %v3206, %v3222
    %v3255 = vadd.f32 %v3207, %v3223
    %v3256 = vadd.f32 %v3208, %v3224
    %v3257 = vadd.f32 %v3209, %v3225
    %v3258 = vadd.f32 %v3210, %v3226
    %v3259 = vadd.f32 %v3211, %v3227
    %v3260 = vadd.f32 %v3228, %v3244
    %v3261 = vadd.f32 %v3229, %v3245
    %v3262 = vadd.f32 %v3230, %v3246
    %v3263 = vadd.f32 %v3231, %v3247
    %v3264 = vadd.f32 %v3232, %v3248
    %v3265 = vadd.f32 %v3233, %v3249
    %v3266 = vadd.f32 %v3234, %v3250
    %v3267 = vadd.f32 %v3235, %v3251
    %v3268 = vadd.f32 %v3236, %v3252
    %v3269 = vadd.f32 %v3237, %v3253
    %v3270 = vadd.f32 %v3238, %v3254
    %v3271 = vadd.f32 %v3239, %v3255
    %v3272 = vadd.f32 %v3240, %v3256
    %v3273 = vadd.f32 %v3241, %v3257
    %v3274 = vadd.f32 %v3242, %v3258
    %v3275 = vadd.f32 %v3243, %v3259
    %v3276 = vpack.c.bf16 %v1604, %v1603
    %v3277 = vpack.c.bf16 %v1606, %v1605
    %v3278 = vpack.c.bf16 %v1608, %v1607
    %v3279 = vpack.c.bf16 %v1610, %v1609
    %v3280 = vpack.c.bf16 %v1612, %v1611
    %v3281 = vpack.c.bf16 %v1614, %v1613
    %v3282 = vpack.c.bf16 %v1616, %v1615
    %v3283 = vpack.c.bf16 %v1618, %v1617
    %v3284 = vld [vmem:[%s6] sm:$0xf]
    %v3285 = vld [vmem:[%s6 + $0x4] sm:$0xf]
    %v3286 = vld [vmem:[%s6 + $0x8] sm:$0xf]
    %v3287 = vld [vmem:[%s6 + $0xc] sm:$0xf]
    %v3288 = vld [vmem:[%s6 + $0x10] sm:$0xf]
    %v3289 = vld [vmem:[%s6 + $0x14] sm:$0xf]
    %v3290 = vld [vmem:[%s6 + $0x18] sm:$0xf]
    %v3291 = vld [vmem:[%s6 + $0x1c] sm:$0xf]
    %v3292 = vld [vmem:[%s6 + $0x20] sm:$0xf]
    %v3293 = vld [vmem:[%s6 + $0x24] sm:$0xf]
    %v3294 = vld [vmem:[%s6 + $0x28] sm:$0xf]
    %v3295 = vld [vmem:[%s6 + $0x2c] sm:$0xf]
    %v3296 = vld [vmem:[%s6 + $0x30] sm:$0xf]
    %v3297 = vld [vmem:[%s6 + $0x34] sm:$0xf]
    %v3298 = vld [vmem:[%s6 + $0x38] sm:$0xf]
    %v3299 = vld [vmem:[%s6 + $0x3c] sm:$0xf]
    %v3316 = vunpack.c.l.b16 %v3284
    %v3317 = vunpack.c.l.b16 %v3285
    %v3318 = vunpack.c.l.b16 %v3286
    %v3319 = vunpack.c.l.b16 %v3287
    %v3320 = vunpack.c.l.b16 %v3288
    %v3321 = vunpack.c.l.b16 %v3289
    %v3322 = vunpack.c.l.b16 %v3290
    %v3323 = vunpack.c.l.b16 %v3291
    %v3324 = vunpack.c.l.b16 %v3292
    %v3325 = vunpack.c.l.b16 %v3293
    %v3326 = vunpack.c.l.b16 %v3294
    %v3327 = vunpack.c.l.b16 %v3295
    %v3328 = vunpack.c.l.b16 %v3296
    %v3329 = vunpack.c.l.b16 %v3297
    %v3330 = vunpack.c.l.b16 %v3298
    %v3331 = vunpack.c.l.b16 %v3299
    %v3332 = vpack.c.b16 %v3317, %v3316
    %v3333 = vpack.c.b16 %v3319, %v3318
    %v3334 = vpack.c.b16 %v3321, %v3320
    %v3335 = vpack.c.b16 %v3323, %v3322
    %v3336 = vpack.c.b16 %v3325, %v3324
    %v3337 = vpack.c.b16 %v3327, %v3326
    %v3338 = vpack.c.b16 %v3329, %v3328
    %v3339 = vpack.c.b16 %v3331, %v3330
    %3348 = vmatprep.subr.bf16.mxu0 0
    %3349 = vmatpush1.bf16.msra.mxu0 %v3332
    %3350 = vmatprep.subr.bf16.mxu0 0
    %3351 = vmatpush1.bf16.msra.mxu0 %v3333
    %3352 = vmatprep.subr.bf16.mxu0 0
    %3353 = vmatpush1.bf16.msra.mxu0 %v3334
    %3354 = vmatprep.subr.bf16.mxu0 0
    %3355 = vmatpush1.bf16.msra.mxu0 %v3335
    %3356 = vmatprep.subr.bf16.mxu0 0
    %3357 = vmatpush1.bf16.msra.mxu0 %v3336
    %3358 = vmatprep.subr.bf16.mxu0 0
    %3359 = vmatpush1.bf16.msra.mxu0 %v3337
    %3360 = vmatprep.subr.bf16.mxu0 0
    %3361 = vmatpush1.bf16.msra.mxu0 %v3338
    %3362 = vmatprep.subr.bf16.mxu0 0
    %3363 = vmatpush1.bf16.msra.mxu0 %v3339
    %3364 = vmatprep.subr.bf16.mxu0 0
    %3365 = vmatpush1.bf16.msra.mxu0 0
    %3366 = vmatprep.subr.bf16.mxu0 0
    %3367 = vmatpush1.bf16.msra.mxu0 0
    %3368 = vmatprep.subr.bf16.mxu0 0
    %3369 = vmatpush1.bf16.msra.mxu0 0
    %3370 = vmatprep.subr.bf16.mxu0 0
    %3371 = vmatpush1.bf16.msra.mxu0 0
    %3372 = vmatprep.subr.bf16.mxu0 0
    %3373 = vmatpush1.bf16.msra.mxu0 0
    %3374 = vmatprep.subr.bf16.mxu0 0
    %3375 = vmatpush1.bf16.msra.mxu0 0
    %3376 = vmatprep.subr.bf16.mxu0 0
    %3377 = vmatpush1.bf16.msra.mxu0 0
    %3378 = vmatprep.subr.bf16.mxu0 0
    %3379 = vmatpush1.bf16.msra.mxu0 0
    %3380 = vmatprep.mubr.bf16.mxu0 0
    %3381 = vmatmul.mubr.bf16.gmra.mrb[0].mxu0 %v3276
    %v3382 = vpop.f32.mrb[0].mxu0
    %v3383 = vadd.f32 0.0, %v3382
    %v3384 = vpop.f32.mrb[0].mxu0
    %v3385 = vpop.f32.mrb[0].mxu0
    %v3386 = vadd.f32 0.0, %v3385
    %v3387 = vpop.f32.mrb[0].mxu0
    %3388 = vmatprep.mubr.bf16.mxu0 0
    %3389 = vmatmul.mubr.bf16.gmra.mrb[0].mxu0 %v3277
    %v3390 = vpop.f32.mrb[0].mxu0
    %v3391 = vadd.f32 0.0, %v3390
    %v3392 = vpop.f32.mrb[0].mxu0
    %v3393 = vpop.f32.mrb[0].mxu0
    %v3394 = vadd.f32 0.0, %v3393
    %v3395 = vpop.f32.mrb[0].mxu0
    %3396 = vmatprep.mubr.bf16.mxu0 0
    %3397 = vmatmul.mubr.bf16.gmra.mrb[0].mxu0 %v3278
    %v3398 = vpop.f32.mrb[0].mxu0
    %v3399 = vadd.f32 0.0, %v3398
    %v3400 = vpop.f32.mrb[0].mxu0
    %v3401 = vpop.f32.mrb[0].mxu0
    %v3402 = vadd.f32 0.0, %v3401
    %v3403 = vpop.f32.mrb[0].mxu0
    %3404 = vmatprep.mubr.bf16.mxu0 0
    %3405 = vmatmul.mubr.bf16.gmra.mrb[0].mxu0 %v3279
    %v3406 = vpop.f32.mrb[0].mxu0
    %v3407 = vadd.f32 0.0, %v3406
    %v3408 = vpop.f32.mrb[0].mxu0
    %v3409 = vpop.f32.mrb[0].mxu0
    %v3410 = vadd.f32 0.0, %v3409
    %v3411 = vpop.f32.mrb[0].mxu0
    %3412 = vmatprep.mubr.bf16.mxu0 0
    %3413 = vmatmul.mubr.bf16.gmra.mrb[0].mxu0 %v3280
    %v3414 = vpop.f32.mrb[0].mxu0
    %v3415 = vadd.f32 0.0, %v3414
    %v3416 = vpop.f32.mrb[0].mxu0
    %v3417 = vpop.f32.mrb[0].mxu0
    %v3418 = vadd.f32 0.0, %v3417
    %v3419 = vpop.f32.mrb[0].mxu0
    %3420 = vmatprep.mubr.bf16.mxu0 0
    %3421 = vmatmul.mubr.bf16.gmra.mrb[0].mxu0 %v3281
    %v3422 = vpop.f32.mrb[0].mxu0
    %v3423 = vadd.f32 0.0, %v3422
    %v3424 = vpop.f32.mrb[0].mxu0
    %v3425 = vpop.f32.mrb[0].mxu0
    %v3426 = vadd.f32 0.0, %v3425
    %v3427 = vpop.f32.mrb[0].mxu0
    %3428 = vmatprep.mubr.bf16.mxu0 0
    %3429 = vmatmul.mubr.bf16.gmra.mrb[0].mxu0 %v3282
    %v3430 = vpop.f32.mrb[0].mxu0
    %v3431 = vadd.f32 0.0, %v3430
    %v3432 = vpop.f32.mrb[0].mxu0
    %v3433 = vpop.f32.mrb[0].mxu0
    %v3434 = vadd.f32 0.0, %v3433
    %v3435 = vpop.f32.mrb[0].mxu0
    %3436 = vmatprep.mubr.bf16.mxu0 0
    %3437 = vmatmul.mubr.bf16.gmra.mrb[0].mxu0 %v3283
    %v3438 = vpop.f32.mrb[0].mxu0
    %v3439 = vadd.f32 0.0, %v3438
    %v3440 = vpop.f32.mrb[0].mxu0
    %v3441 = vpop.f32.mrb[0].mxu0
    %v3442 = vadd.f32 0.0, %v3441
    %v3443 = vpop.f32.mrb[0].mxu0
    %3444 = vdwg.mxu0
    %v3445 = vpack.c.bf16 %v3261, %v3260
    %v3446 = vpack.c.bf16 %v3263, %v3262
    %v3447 = vpack.c.bf16 %v3265, %v3264
    %v3448 = vpack.c.bf16 %v3267, %v3266
    %v3449 = vpack.c.bf16 %v3269, %v3268
    %v3450 = vpack.c.bf16 %v3271, %v3270
    %v3451 = vpack.c.bf16 %v3273, %v3272
    %v3452 = vpack.c.bf16 %v3275, %v3274
    %v3453 = vld [vmem:[%s7] sm:$0xf]
    %v3454 = vld [vmem:[%s7 + $0x4] sm:$0xf]
    %v3455 = vld [vmem:[%s7 + $0x8] sm:$0xf]
    %v3456 = vld [vmem:[%s7 + $0xc] sm:$0xf]
    %v3457 = vld [vmem:[%s7 + $0x10] sm:$0xf]
    %v3458 = vld [vmem:[%s7 + $0x14] sm:$0xf]
    %v3459 = vld [vmem:[%s7 + $0x18] sm:$0xf]
    %v3460 = vld [vmem:[%s7 + $0x1c] sm:$0xf]
    %v3461 = vld [vmem:[%s7 + $0x20] sm:$0xf]
    %v3462 = vld [vmem:[%s7 + $0x24] sm:$0xf]
    %v3463 = vld [vmem:[%s7 + $0x28] sm:$0xf]
    %v3464 = vld [vmem:[%s7 + $0x2c] sm:$0xf]
    %v3465 = vld [vmem:[%s7 + $0x30] sm:$0xf]
    %v3466 = vld [vmem:[%s7 + $0x34] sm:$0xf]
    %v3467 = vld [vmem:[%s7 + $0x38] sm:$0xf]
    %v3468 = vld [vmem:[%s7 + $0x3c] sm:$0xf]
    %v3485 = vunpack.c.l.b16 %v3453
    %v3486 = vunpack.c.l.b16 %v3454
    %v3487 = vunpack.c.l.b16 %v3455
    %v3488 = vunpack.c.l.b16 %v3456
    %v3489 = vunpack.c.l.b16 %v3457
    %v3490 = vunpack.c.l.b16 %v3458
    %v3491 = vunpack.c.l.b16 %v3459
    %v3492 = vunpack.c.l.b16 %v3460
    %v3493 = vunpack.c.l.b16 %v3461
    %v3494 = vunpack.c.l.b16 %v3462
    %v3495 = vunpack.c.l.b16 %v3463
    %v3496 = vunpack.c.l.b16 %v3464
    %v3497 = vunpack.c.l.b16 %v3465
    %v3498 = vunpack.c.l.b16 %v3466
    %v3499 = vunpack.c.l.b16 %v3467
    %v3500 = vunpack.c.l.b16 %v3468
    %v3501 = vpack.c.b16 %v3486, %v3485
    %v3502 = vpack.c.b16 %v3488, %v3487
    %v3503 = vpack.c.b16 %v3490, %v3489
    %v3504 = vpack.c.b16 %v3492, %v3491
    %v3505 = vpack.c.b16 %v3494, %v3493
    %v3506 = vpack.c.b16 %v3496, %v3495
    %v3507 = vpack.c.b16 %v3498, %v3497
    %v3508 = vpack.c.b16 %v3500, %v3499
    %3517 = vmatprep.subr.bf16.mxu0 0
    %3518 = vmatpush1.bf16.msra.mxu0 %v3501
    %3519 = vmatprep.subr.bf16.mxu0 0
    %3520 = vmatpush1.bf16.msra.mxu0 %v3502
    %3521 = vmatprep.subr.bf16.mxu0 0
    %3522 = vmatpush1.bf16.msra.mxu0 %v3503
    %3523 = vmatprep.subr.bf16.mxu0 0
    %3524 = vmatpush1.bf16.msra.mxu0 %v3504
    %3525 = vmatprep.subr.bf16.mxu0 0
    %3526 = vmatpush1.bf16.msra.mxu0 %v3505
    %3527 = vmatprep.subr.bf16.mxu0 0
    %3528 = vmatpush1.bf16.msra.mxu0 %v3506
    %3529 = vmatprep.subr.bf16.mxu0 0
    %3530 = vmatpush1.bf16.msra.mxu0 %v3507
    %3531 = vmatprep.subr.bf16.mxu0 0
    %3532 = vmatpush1.bf16.msra.mxu0 %v3508
    %3533 = vmatprep.subr.bf16.mxu0 0
    %3534 = vmatpush1.bf16.msra.mxu0 0
    %3535 = vmatprep.subr.bf16.mxu0 0
    %3536 = vmatpush1.bf16.msra.mxu0 0
    %3537 = vmatprep.subr.bf16.mxu0 0
    %3538 = vmatpush1.bf16.msra.mxu0 0
    %3539 = vmatprep.subr.bf16.mxu0 0
    %3540 = vmatpush1.bf16.msra.mxu0 0
    %3541 = vmatprep.subr.bf16.mxu0 0
    %3542 = vmatpush1.bf16.msra.mxu0 0
    %3543 = vmatprep.subr.bf16.mxu0 0
    %3544 = vmatpush1.bf16.msra.mxu0 0
    %3545 = vmatprep.subr.bf16.mxu0 0
    %3546 = vmatpush1.bf16.msra.mxu0 0
    %3547 = vmatprep.subr.bf16.mxu0 0
    %3548 = vmatpush1.bf16.msra.mxu0 0
    %3549 = vmatprep.mubr.bf16.mxu0 0
    %3550 = vmatmul.mubr.bf16.gmra.mrb[0].mxu0 %v3445
    %v3551 = vpop.f32.mrb[0].mxu0
    %v3552 = vadd.f32 0.0, %v3551
    %v3553 = vpop.f32.mrb[0].mxu0
    %v3554 = vpop.f32.mrb[0].mxu0
    %v3555 = vadd.f32 0.0, %v3554
    %v3556 = vpop.f32.mrb[0].mxu0
    %3557 = vmatprep.mubr.bf16.mxu0 0
    %3558 = vmatmul.mubr.bf16.gmra.mrb[0].mxu0 %v3446
    %v3559 = vpop.f32.mrb[0].mxu0
    %v3560 = vadd.f32 0.0, %v3559
    %v3561 = vpop.f32.mrb[0].mxu0
    %v3562 = vpop.f32.mrb[0].mxu0
    %v3563 = vadd.f32 0.0, %v3562
    %v3564 = vpop.f32.mrb[0].mxu0
    %3565 = vmatprep.mubr.bf16.mxu0 0
    %3566 = vmatmul.mubr.bf16.gmra.mrb[0].mxu0 %v3447
    %v3567 = vpop.f32.mrb[0].mxu0
    %v3568 = vadd.f32 0.0, %v3567
    %v3569 = vpop.f32.mrb[0].mxu0
    %v3570 = vpop.f32.mrb[0].mxu0
    %v3571 = vadd.f32 0.0, %v3570
    %v3572 = vpop.f32.mrb[0].mxu0
    %3573 = vmatprep.mubr.bf16.mxu0 0
    %3574 = vmatmul.mubr.bf16.gmra.mrb[0].mxu0 %v3448
    %v3575 = vpop.f32.mrb[0].mxu0
    %v3576 = vadd.f32 0.0, %v3575
    %v3577 = vpop.f32.mrb[0].mxu0
    %v3578 = vpop.f32.mrb[0].mxu0
    %v3579 = vadd.f32 0.0, %v3578
    %v3580 = vpop.f32.mrb[0].mxu0
    %3581 = vmatprep.mubr.bf16.mxu0 0
    %3582 = vmatmul.mubr.bf16.gmra.mrb[0].mxu0 %v3449
    %v3583 = vpop.f32.mrb[0].mxu0
    %v3584 = vadd.f32 0.0, %v3583
    %v3585 = vpop.f32.mrb[0].mxu0
    %v3586 = vpop.f32.mrb[0].mxu0
    %v3587 = vadd.f32 0.0, %v3586
    %v3588 = vpop.f32.mrb[0].mxu0
    %3589 = vmatprep.mubr.bf16.mxu0 0
    %3590 = vmatmul.mubr.bf16.gmra.mrb[0].mxu0 %v3450
    %v3591 = vpop.f32.mrb[0].mxu0
    %v3592 = vadd.f32 0.0, %v3591
    %v3593 = vpop.f32.mrb[0].mxu0
    %v3594 = vpop.f32.mrb[0].mxu0
    %v3595 = vadd.f32 0.0, %v3594
    %v3596 = vpop.f32.mrb[0].mxu0
    %3597 = vmatprep.mubr.bf16.mxu0 0
    %3598 = vmatmul.mubr.bf16.gmra.mrb[0].mxu0 %v3451
    %v3599 = vpop.f32.mrb[0].mxu0
    %v3600 = vadd.f32 0.0, %v3599
    %v3601 = vpop.f32.mrb[0].mxu0
    %v3602 = vpop.f32.mrb[0].mxu0
    %v3603 = vadd.f32 0.0, %v3602
    %v3604 = vpop.f32.mrb[0].mxu0
    %3605 = vmatprep.mubr.bf16.mxu0 0
    %3606 = vmatmul.mubr.bf16.gmra.mrb[0].mxu0 %v3452
    %v3607 = vpop.f32.mrb[0].mxu0
    %v3608 = vadd.f32 0.0, %v3607
    %v3609 = vpop.f32.mrb[0].mxu0
    %v3610 = vpop.f32.mrb[0].mxu0
    %v3611 = vadd.f32 0.0, %v3610
    %v3612 = vpop.f32.mrb[0].mxu0
    %3613 = vdwg.mxu0
    %v3614 = vld [vmem:[%s8] sm:$0xf]
    %v3615 = vld [vmem:[%s8 + $0x4] sm:$0xf]
    %v3616 = vld [vmem:[%s8 + $0x8] sm:$0xf]
    %v3617 = vld [vmem:[%s8 + $0xc] sm:$0xf]
    %v3618 = vld [vmem:[%s8 + $0x10] sm:$0xf]
    %v3619 = vld [vmem:[%s8 + $0x14] sm:$0xf]
    %v3620 = vld [vmem:[%s8 + $0x18] sm:$0xf]
    %v3621 = vld [vmem:[%s8 + $0x1c] sm:$0xf]
    %v3622 = vld [vmem:[%s8 + $0x20] sm:$0xf]
    %v3623 = vld [vmem:[%s8 + $0x24] sm:$0xf]
    %v3624 = vld [vmem:[%s8 + $0x28] sm:$0xf]
    %v3625 = vld [vmem:[%s8 + $0x2c] sm:$0xf]
    %v3626 = vld [vmem:[%s8 + $0x30] sm:$0xf]
    %v3627 = vld [vmem:[%s8 + $0x34] sm:$0xf]
    %v3628 = vld [vmem:[%s8 + $0x38] sm:$0xf]
    %v3629 = vld [vmem:[%s8 + $0x3c] sm:$0xf]
    %v3646 = vunpack.c.l.b16 %v52
    %v3647 = vunpack.c.l.b16 %v53
    %v3648 = vunpack.c.l.b16 %v54
    %v3649 = vunpack.c.l.b16 %v55
    %v3650 = vunpack.c.l.b16 %v56
    %v3651 = vunpack.c.l.b16 %v57
    %v3652 = vunpack.c.l.b16 %v58
    %v3653 = vunpack.c.l.b16 %v59
    %v3654 = vunpack.c.l.b16 %v60
    %v3655 = vunpack.c.l.b16 %v61
    %v3656 = vunpack.c.l.b16 %v62
    %v3657 = vunpack.c.l.b16 %v63
    %v3658 = vunpack.c.l.b16 %v64
    %v3659 = vunpack.c.l.b16 %v65
    %v3660 = vunpack.c.l.b16 %v66
    %v3661 = vunpack.c.l.b16 %v67
    %v3662 = vpack.c.b16 %v3647, %v3646
    %v3663 = vpack.c.b16 %v3649, %v3648
    %v3664 = vpack.c.b16 %v3651, %v3650
    %v3665 = vpack.c.b16 %v3653, %v3652
    %v3666 = vpack.c.b16 %v3655, %v3654
    %v3667 = vpack.c.b16 %v3657, %v3656
    %v3668 = vpack.c.b16 %v3659, %v3658
    %v3669 = vpack.c.b16 %v3661, %v3660
    %v3694 = vunpack.c.l.b16 %v3614
    %v3695 = vunpack.c.l.b16 %v3615
    %v3696 = vunpack.c.l.b16 %v3616
    %v3697 = vunpack.c.l.b16 %v3617
    %v3698 = vunpack.c.l.b16 %v3618
    %v3699 = vunpack.c.l.b16 %v3619
    %v3700 = vunpack.c.l.b16 %v3620
    %v3701 = vunpack.c.l.b16 %v3621
    %v3702 = vunpack.c.l.b16 %v3622
    %v3703 = vunpack.c.l.b16 %v3623
    %v3704 = vunpack.c.l.b16 %v3624
    %v3705 = vunpack.c.l.b16 %v3625
    %v3706 = vunpack.c.l.b16 %v3626
    %v3707 = vunpack.c.l.b16 %v3627
    %v3708 = vunpack.c.l.b16 %v3628
    %v3709 = vunpack.c.l.b16 %v3629
    %v3710 = vpack.c.b16 %v3695, %v3694
    %v3711 = vpack.c.b16 %v3697, %v3696
    %v3712 = vpack.c.b16 %v3699, %v3698
    %v3713 = vpack.c.b16 %v3701, %v3700
    %v3714 = vpack.c.b16 %v3703, %v3702
    %v3715 = vpack.c.b16 %v3705, %v3704
    %v3716 = vpack.c.b16 %v3707, %v3706
    %v3717 = vpack.c.b16 %v3709, %v3708
    %3726 = vmatprep.subr.bf16.mxu0 0
    %3727 = vmatpush1.bf16.msra.mxu0 %v3710
    %3728 = vmatprep.subr.bf16.mxu0 0
    %3729 = vmatpush1.bf16.msra.mxu0 %v3711
    %3730 = vmatprep.subr.bf16.mxu0 0
    %3731 = vmatpush1.bf16.msra.mxu0 %v3712
    %3732 = vmatprep.subr.bf16.mxu0 0
    %3733 = vmatpush1.bf16.msra.mxu0 %v3713
    %3734 = vmatprep.subr.bf16.mxu0 0
    %3735 = vmatpush1.bf16.msra.mxu0 %v3714
    %3736 = vmatprep.subr.bf16.mxu0 0
    %3737 = vmatpush1.bf16.msra.mxu0 %v3715
    %3738 = vmatprep.subr.bf16.mxu0 0
    %3739 = vmatpush1.bf16.msra.mxu0 %v3716
    %3740 = vmatprep.subr.bf16.mxu0 0
    %3741 = vmatpush1.bf16.msra.mxu0 %v3717
    %3742 = vmatprep.subr.bf16.mxu0 0
    %3743 = vmatpush1.bf16.msra.mxu0 0
    %3744 = vmatprep.subr.bf16.mxu0 0
    %3745 = vmatpush1.bf16.msra.mxu0 0
    %3746 = vmatprep.subr.bf16.mxu0 0
    %3747 = vmatpush1.bf16.msra.mxu0 0
    %3748 = vmatprep.subr.bf16.mxu0 0
    %3749 = vmatpush1.bf16.msra.mxu0 0
    %3750 = vmatprep.subr.bf16.mxu0 0
    %3751 = vmatpush1.bf16.msra.mxu0 0
    %3752 = vmatprep.subr.bf16.mxu0 0
    %3753 = vmatpush1.bf16.msra.mxu0 0
    %3754 = vmatprep.subr.bf16.mxu0 0
    %3755 = vmatpush1.bf16.msra.mxu0 0
    %3756 = vmatprep.subr.bf16.mxu0 0
    %3757 = vmatpush1.bf16.msra.mxu0 0
    %3758 = vmatprep.mubr.bf16.mxu0 0
    %3759 = vmatmul.mubr.bf16.gmra.mrb[0].mxu0 %v3662
    %v3760 = vpop.f32.mrb[0].mxu0
    %v3761 = vadd.f32 0.0, %v3760
    %v3762 = vpop.f32.mrb[0].mxu0
    %v3763 = vpop.f32.mrb[0].mxu0
    %v3764 = vadd.f32 0.0, %v3763
    %v3765 = vpop.f32.mrb[0].mxu0
    %3766 = vmatprep.mubr.bf16.mxu0 0
    %3767 = vmatmul.mubr.bf16.gmra.mrb[0].mxu0 %v3663
    %v3768 = vpop.f32.mrb[0].mxu0
    %v3769 = vadd.f32 0.0, %v3768
    %v3770 = vpop.f32.mrb[0].mxu0
    %v3771 = vpop.f32.mrb[0].mxu0
    %v3772 = vadd.f32 0.0, %v3771
    %v3773 = vpop.f32.mrb[0].mxu0
    %3774 = vmatprep.mubr.bf16.mxu0 0
    %3775 = vmatmul.mubr.bf16.gmra.mrb[0].mxu0 %v3664
    %v3776 = vpop.f32.mrb[0].mxu0
    %v3777 = vadd.f32 0.0, %v3776
    %v3778 = vpop.f32.mrb[0].mxu0
    %v3779 = vpop.f32.mrb[0].mxu0
    %v3780 = vadd.f32 0.0, %v3779
    %v3781 = vpop.f32.mrb[0].mxu0
    %3782 = vmatprep.mubr.bf16.mxu0 0
    %3783 = vmatmul.mubr.bf16.gmra.mrb[0].mxu0 %v3665
    %v3784 = vpop.f32.mrb[0].mxu0
    %v3785 = vadd.f32 0.0, %v3784
    %v3786 = vpop.f32.mrb[0].mxu0
    %v3787 = vpop.f32.mrb[0].mxu0
    %v3788 = vadd.f32 0.0, %v3787
    %v3789 = vpop.f32.mrb[0].mxu0
    %3790 = vmatprep.mubr.bf16.mxu0 0
    %3791 = vmatmul.mubr.bf16.gmra.mrb[0].mxu0 %v3666
    %v3792 = vpop.f32.mrb[0].mxu0
    %v3793 = vadd.f32 0.0, %v3792
    %v3794 = vpop.f32.mrb[0].mxu0
    %v3795 = vpop.f32.mrb[0].mxu0
    %v3796 = vadd.f32 0.0, %v3795
    %v3797 = vpop.f32.mrb[0].mxu0
    %3798 = vmatprep.mubr.bf16.mxu0 0
    %3799 = vmatmul.mubr.bf16.gmra.mrb[0].mxu0 %v3667
    %v3800 = vpop.f32.mrb[0].mxu0
    %v3801 = vadd.f32 0.0, %v3800
    %v3802 = vpop.f32.mrb[0].mxu0
    %v3803 = vpop.f32.mrb[0].mxu0
    %v3804 = vadd.f32 0.0, %v3803
    %v3805 = vpop.f32.mrb[0].mxu0
    %3806 = vmatprep.mubr.bf16.mxu0 0
    %3807 = vmatmul.mubr.bf16.gmra.mrb[0].mxu0 %v3668
    %v3808 = vpop.f32.mrb[0].mxu0
    %v3809 = vadd.f32 0.0, %v3808
    %v3810 = vpop.f32.mrb[0].mxu0
    %v3811 = vpop.f32.mrb[0].mxu0
    %v3812 = vadd.f32 0.0, %v3811
    %v3813 = vpop.f32.mrb[0].mxu0
    %3814 = vmatprep.mubr.bf16.mxu0 0
    %3815 = vmatmul.mubr.bf16.gmra.mrb[0].mxu0 %v3669
    %v3816 = vpop.f32.mrb[0].mxu0
    %v3817 = vadd.f32 0.0, %v3816
    %v3818 = vpop.f32.mrb[0].mxu0
    %v3819 = vpop.f32.mrb[0].mxu0
    %v3820 = vadd.f32 0.0, %v3819
    %v3821 = vpop.f32.mrb[0].mxu0
    %3822 = vdwg.mxu0
    %v3823 = vsel %vm201, %v3383, 0.0
    %v3824 = vsel %vm202, %v3386, 0.0
    %v3825 = vsel %vm203, %v3391, 0.0
    %v3826 = vsel %vm204, %v3394, 0.0
    %v3827 = vsel %vm205, %v3399, 0.0
    %v3828 = vsel %vm206, %v3402, 0.0
    %v3829 = vsel %vm207, %v3407, 0.0
    %v3830 = vsel %vm208, %v3410, 0.0
    %v3831 = vsel %vm209, %v3415, 0.0
    %v3832 = vsel %vm210, %v3418, 0.0
    %v3833 = vsel %vm211, %v3423, 0.0
    %v3834 = vsel %vm212, %v3426, 0.0
    %v3835 = vsel %vm213, %v3431, 0.0
    %v3836 = vsel %vm214, %v3434, 0.0
    %v3837 = vsel %vm215, %v3439, 0.0
    %v3838 = vsel %vm216, %v3442, 0.0
    %3839 = vrot.lane.b32.xlu0 %v3383, 16
    %v3840 = vpop.permute.xlu0 %3839
    %3841 = vrot.lane.b32.xlu0 %v3386, 16
    %v3842 = vpop.permute.xlu0 %3841
    %3843 = vrot.lane.b32.xlu0 %v3391, 16
    %v3844 = vpop.permute.xlu0 %3843
    %3845 = vrot.lane.b32.xlu0 %v3394, 16
    %v3846 = vpop.permute.xlu0 %3845
    %3847 = vrot.lane.b32.xlu0 %v3399, 16
    %v3848 = vpop.permute.xlu0 %3847
    %3849 = vrot.lane.b32.xlu0 %v3402, 16
    %v3850 = vpop.permute.xlu0 %3849
    %3851 = vrot.lane.b32.xlu0 %v3407, 16
    %v3852 = vpop.permute.xlu0 %3851
    %3853 = vrot.lane.b32.xlu0 %v3410, 16
    %v3854 = vpop.permute.xlu0 %3853
    %3855 = vrot.lane.b32.xlu0 %v3415, 16
    %v3856 = vpop.permute.xlu0 %3855
    %3857 = vrot.lane.b32.xlu0 %v3418, 16
    %v3858 = vpop.permute.xlu0 %3857
    %3859 = vrot.lane.b32.xlu0 %v3423, 16
    %v3860 = vpop.permute.xlu0 %3859
    %3861 = vrot.lane.b32.xlu0 %v3426, 16
    %v3862 = vpop.permute.xlu0 %3861
    %3863 = vrot.lane.b32.xlu0 %v3431, 16
    %v3864 = vpop.permute.xlu0 %3863
    %3865 = vrot.lane.b32.xlu0 %v3434, 16
    %v3866 = vpop.permute.xlu0 %3865
    %3867 = vrot.lane.b32.xlu0 %v3439, 16
    %v3868 = vpop.permute.xlu0 %3867
    %3869 = vrot.lane.b32.xlu0 %v3442, 16
    %v3870 = vpop.permute.xlu0 %3869
    %v3871 = vsel %vm347, %v3842, %v3858
    %v3872 = vsel %vm348, %v3844, %v3860
    %v3873 = vsel %vm349, %v3846, %v3862
    %v3874 = vsel %vm350, %v3848, %v3864
    %v3875 = vsel %vm351, %v3850, %v3866
    %v3876 = vsel %vm352, %v3852, %v3868
    %v3877 = vsel %vm353, %v3854, %v3870
    %v3878 = vsel %vm354, %v3856, %v3840
    %v3879 = vsel %vm355, %v3858, %v3842
    %v3880 = vsel %vm356, %v3860, %v3844
    %v3881 = vsel %vm357, %v3862, %v3846
    %v3882 = vsel %vm358, %v3864, %v3848
    %v3883 = vsel %vm359, %v3866, %v3850
    %v3884 = vsel %vm360, %v3868, %v3852
    %v3885 = vsel %vm361, %v3870, %v3854
    %v3886 = vsel %vm362, %v3840, %v3856
    %v3887 = vsel %vm383, %v3871, 0.0
    %v3888 = vsel %vm384, %v3872, 0.0
    %v3889 = vsel %vm385, %v3873, 0.0
    %v3890 = vsel %vm386, %v3874, 0.0
    %v3891 = vsel %vm387, %v3875, 0.0
    %v3892 = vsel %vm388, %v3876, 0.0
    %v3893 = vsel %vm389, %v3877, 0.0
    %v3894 = vsel %vm390, %v3878, 0.0
    %v3895 = vsel %vm391, %v3879, 0.0
    %v3896 = vsel %vm392, %v3880, 0.0
    %v3897 = vsel %vm393, %v3881, 0.0
    %v3898 = vsel %vm394, %v3882, 0.0
    %v3899 = vsel %vm395, %v3883, 0.0
    %v3900 = vsel %vm396, %v3884, 0.0
    %v3901 = vsel %vm397, %v3885, 0.0
    %v3902 = vsel %vm398, %v3886, 0.0
    %3903 = vrot.lane.b32.xlu0 %v3383, 32
    %v3904 = vpop.permute.xlu0 %3903
    %3905 = vrot.lane.b32.xlu0 %v3386, 32
    %v3906 = vpop.permute.xlu0 %3905
    %3907 = vrot.lane.b32.xlu0 %v3391, 32
    %v3908 = vpop.permute.xlu0 %3907
    %3909 = vrot.lane.b32.xlu0 %v3394, 32
    %v3910 = vpop.permute.xlu0 %3909
    %3911 = vrot.lane.b32.xlu0 %v3399, 32
    %v3912 = vpop.permute.xlu0 %3911
    %3913 = vrot.lane.b32.xlu0 %v3402, 32
    %v3914 = vpop.permute.xlu0 %3913
    %3915 = vrot.lane.b32.xlu0 %v3407, 32
    %v3916 = vpop.permute.xlu0 %3915
    %3917 = vrot.lane.b32.xlu0 %v3410, 32
    %v3918 = vpop.permute.xlu0 %3917
    %3919 = vrot.lane.b32.xlu0 %v3415, 32
    %v3920 = vpop.permute.xlu0 %3919
    %3921 = vrot.lane.b32.xlu0 %v3418, 32
    %v3922 = vpop.permute.xlu0 %3921
    %3923 = vrot.lane.b32.xlu0 %v3423, 32
    %v3924 = vpop.permute.xlu0 %3923
    %3925 = vrot.lane.b32.xlu0 %v3426, 32
    %v3926 = vpop.permute.xlu0 %3925
    %3927 = vrot.lane.b32.xlu0 %v3431, 32
    %v3928 = vpop.permute.xlu0 %3927
    %3929 = vrot.lane.b32.xlu0 %v3434, 32
    %v3930 = vpop.permute.xlu0 %3929
    %3931 = vrot.lane.b32.xlu0 %v3439, 32
    %v3932 = vpop.permute.xlu0 %3931
    %3933 = vrot.lane.b32.xlu0 %v3442, 32
    %v3934 = vpop.permute.xlu0 %3933
    %v3935 = vsel %vm529, %v3908, %v3924
    %v3936 = vsel %vm530, %v3910, %v3926
    %v3937 = vsel %vm531, %v3912, %v3928
    %v3938 = vsel %vm532, %v3914, %v3930
    %v3939 = vsel %vm533, %v3916, %v3932
    %v3940 = vsel %vm534, %v3918, %v3934
    %v3941 = vsel %vm535, %v3920, %v3904
    %v3942 = vsel %vm536, %v3922, %v3906
    %v3943 = vsel %vm537, %v3924, %v3908
    %v3944 = vsel %vm538, %v3926, %v3910
    %v3945 = vsel %vm539, %v3928, %v3912
    %v3946 = vsel %vm540, %v3930, %v3914
    %v3947 = vsel %vm541, %v3932, %v3916
    %v3948 = vsel %vm542, %v3934, %v3918
    %v3949 = vsel %vm543, %v3904, %v3920
    %v3950 = vsel %vm544, %v3906, %v3922
    %v3951 = vsel %vm565, %v3935, 0.0
    %v3952 = vsel %vm566, %v3936, 0.0
    %v3953 = vsel %vm567, %v3937, 0.0
    %v3954 = vsel %vm568, %v3938, 0.0
    %v3955 = vsel %vm569, %v3939, 0.0
    %v3956 = vsel %vm570, %v3940, 0.0
    %v3957 = vsel %vm571, %v3941, 0.0
    %v3958 = vsel %vm572, %v3942, 0.0
    %v3959 = vsel %vm573, %v3943, 0.0
    %v3960 = vsel %vm574, %v3944, 0.0
    %v3961 = vsel %vm575, %v3945, 0.0
    %v3962 = vsel %vm576, %v3946, 0.0
    %v3963 = vsel %vm577, %v3947, 0.0
    %v3964 = vsel %vm578, %v3948, 0.0
    %v3965 = vsel %vm579, %v3949, 0.0
    %v3966 = vsel %vm580, %v3950, 0.0
    %3967 = vrot.lane.b32.xlu0 %v3383, 48
    %v3968 = vpop.permute.xlu0 %3967
    %3969 = vrot.lane.b32.xlu0 %v3386, 48
    %v3970 = vpop.permute.xlu0 %3969
    %3971 = vrot.lane.b32.xlu0 %v3391, 48
    %v3972 = vpop.permute.xlu0 %3971
    %3973 = vrot.lane.b32.xlu0 %v3394, 48
    %v3974 = vpop.permute.xlu0 %3973
    %3975 = vrot.lane.b32.xlu0 %v3399, 48
    %v3976 = vpop.permute.xlu0 %3975
    %3977 = vrot.lane.b32.xlu0 %v3402, 48
    %v3978 = vpop.permute.xlu0 %3977
    %3979 = vrot.lane.b32.xlu0 %v3407, 48
    %v3980 = vpop.permute.xlu0 %3979
    %3981 = vrot.lane.b32.xlu0 %v3410, 48
    %v3982 = vpop.permute.xlu0 %3981
    %3983 = vrot.lane.b32.xlu0 %v3415, 48
    %v3984 = vpop.permute.xlu0 %3983
    %3985 = vrot.lane.b32.xlu0 %v3418, 48
    %v3986 = vpop.permute.xlu0 %3985
    %3987 = vrot.lane.b32.xlu0 %v3423, 48
    %v3988 = vpop.permute.xlu0 %3987
    %3989 = vrot.lane.b32.xlu0 %v3426, 48
    %v3990 = vpop.permute.xlu0 %3989
    %3991 = vrot.lane.b32.xlu0 %v3431, 48
    %v3992 = vpop.permute.xlu0 %3991
    %3993 = vrot.lane.b32.xlu0 %v3434, 48
    %v3994 = vpop.permute.xlu0 %3993
    %3995 = vrot.lane.b32.xlu0 %v3439, 48
    %v3996 = vpop.permute.xlu0 %3995
    %3997 = vrot.lane.b32.xlu0 %v3442, 48
    %v3998 = vpop.permute.xlu0 %3997
    %v3999 = vsel %vm711, %v3974, %v3990
    %v4000 = vsel %vm712, %v3976, %v3992
    %v4001 = vsel %vm713, %v3978, %v3994
    %v4002 = vsel %vm714, %v3980, %v3996
    %v4003 = vsel %vm715, %v3982, %v3998
    %v4004 = vsel %vm716, %v3984, %v3968
    %v4005 = vsel %vm717, %v3986, %v3970
    %v4006 = vsel %vm718, %v3988, %v3972
    %v4007 = vsel %vm719, %v3990, %v3974
    %v4008 = vsel %vm720, %v3992, %v3976
    %v4009 = vsel %vm721, %v3994, %v3978
    %v4010 = vsel %vm722, %v3996, %v3980
    %v4011 = vsel %vm723, %v3998, %v3982
    %v4012 = vsel %vm724, %v3968, %v3984
    %v4013 = vsel %vm725, %v3970, %v3986
    %v4014 = vsel %vm726, %v3972, %v3988
    %v4015 = vsel %vm747, %v3999, 0.0
    %v4016 = vsel %vm748, %v4000, 0.0
    %v4017 = vsel %vm749, %v4001, 0.0
    %v4018 = vsel %vm750, %v4002, 0.0
    %v4019 = vsel %vm751, %v4003, 0.0
    %v4020 = vsel %vm752, %v4004, 0.0
    %v4021 = vsel %vm753, %v4005, 0.0
    %v4022 = vsel %vm754, %v4006, 0.0
    %v4023 = vsel %vm755, %v4007, 0.0
    %v4024 = vsel %vm756, %v4008, 0.0
    %v4025 = vsel %vm757, %v4009, 0.0
    %v4026 = vsel %vm758, %v4010, 0.0
    %v4027 = vsel %vm759, %v4011, 0.0
    %v4028 = vsel %vm760, %v4012, 0.0
    %v4029 = vsel %vm761, %v4013, 0.0
    %v4030 = vsel %vm762, %v4014, 0.0
    %4031 = vrot.lane.b32.xlu0 %v3383, 64
    %v4032 = vpop.permute.xlu0 %4031
    %4033 = vrot.lane.b32.xlu0 %v3386, 64
    %v4034 = vpop.permute.xlu0 %4033
    %4035 = vrot.lane.b32.xlu0 %v3391, 64
    %v4036 = vpop.permute.xlu0 %4035
    %4037 = vrot.lane.b32.xlu0 %v3394, 64
    %v4038 = vpop.permute.xlu0 %4037
    %4039 = vrot.lane.b32.xlu0 %v3399, 64
    %v4040 = vpop.permute.xlu0 %4039
    %4041 = vrot.lane.b32.xlu0 %v3402, 64
    %v4042 = vpop.permute.xlu0 %4041
    %4043 = vrot.lane.b32.xlu0 %v3407, 64
    %v4044 = vpop.permute.xlu0 %4043
    %4045 = vrot.lane.b32.xlu0 %v3410, 64
    %v4046 = vpop.permute.xlu0 %4045
    %4047 = vrot.lane.b32.xlu0 %v3415, 64
    %v4048 = vpop.permute.xlu0 %4047
    %4049 = vrot.lane.b32.xlu0 %v3418, 64
    %v4050 = vpop.permute.xlu0 %4049
    %4051 = vrot.lane.b32.xlu0 %v3423, 64
    %v4052 = vpop.permute.xlu0 %4051
    %4053 = vrot.lane.b32.xlu0 %v3426, 64
    %v4054 = vpop.permute.xlu0 %4053
    %4055 = vrot.lane.b32.xlu0 %v3431, 64
    %v4056 = vpop.permute.xlu0 %4055
    %4057 = vrot.lane.b32.xlu0 %v3434, 64
    %v4058 = vpop.permute.xlu0 %4057
    %4059 = vrot.lane.b32.xlu0 %v3439, 64
    %v4060 = vpop.permute.xlu0 %4059
    %4061 = vrot.lane.b32.xlu0 %v3442, 64
    %v4062 = vpop.permute.xlu0 %4061
    %v4063 = vsel %vm893, %v4040, %v4056
    %v4064 = vsel %vm894, %v4042, %v4058
    %v4065 = vsel %vm895, %v4044, %v4060
    %v4066 = vsel %vm896, %v4046, %v4062
    %v4067 = vsel %vm897, %v4048, %v4032
    %v4068 = vsel %vm898, %v4050, %v4034
    %v4069 = vsel %vm899, %v4052, %v4036
    %v4070 = vsel %vm900, %v4054, %v4038
    %v4071 = vsel %vm901, %v4056, %v4040
    %v4072 = vsel %vm902, %v4058, %v4042
    %v4073 = vsel %vm903, %v4060, %v4044
    %v4074 = vsel %vm904, %v4062, %v4046
    %v4075 = vsel %vm905, %v4032, %v4048
    %v4076 = vsel %vm906, %v4034, %v4050
    %v4077 = vsel %vm907, %v4036, %v4052
    %v4078 = vsel %vm908, %v4038, %v4054
    %v4079 = vsel %vm929, %v4063, 0.0
    %v4080 = vsel %vm930, %v4064, 0.0
    %v4081 = vsel %vm931, %v4065, 0.0
    %v4082 = vsel %vm932, %v4066, 0.0
    %v4083 = vsel %vm933, %v4067, 0.0
    %v4084 = vsel %vm934, %v4068, 0.0
    %v4085 = vsel %vm935, %v4069, 0.0
    %v4086 = vsel %vm936, %v4070, 0.0
    %v4087 = vsel %vm937, %v4071, 0.0
    %v4088 = vsel %vm938, %v4072, 0.0
    %v4089 = vsel %vm939, %v4073, 0.0
    %v4090 = vsel %vm940, %v4074, 0.0
    %v4091 = vsel %vm941, %v4075, 0.0
    %v4092 = vsel %vm942, %v4076, 0.0
    %v4093 = vsel %vm943, %v4077, 0.0
    %v4094 = vsel %vm944, %v4078, 0.0
    %4095 = vrot.lane.b32.xlu0 %v3383, 80
    %v4096 = vpop.permute.xlu0 %4095
    %4097 = vrot.lane.b32.xlu0 %v3386, 80
    %v4098 = vpop.permute.xlu0 %4097
    %4099 = vrot.lane.b32.xlu0 %v3391, 80
    %v4100 = vpop.permute.xlu0 %4099
    %4101 = vrot.lane.b32.xlu0 %v3394, 80
    %v4102 = vpop.permute.xlu0 %4101
    %4103 = vrot.lane.b32.xlu0 %v3399, 80
    %v4104 = vpop.permute.xlu0 %4103
    %4105 = vrot.lane.b32.xlu0 %v3402, 80
    %v4106 = vpop.permute.xlu0 %4105
    %4107 = vrot.lane.b32.xlu0 %v3407, 80
    %v4108 = vpop.permute.xlu0 %4107
    %4109 = vrot.lane.b32.xlu0 %v3410, 80
    %v4110 = vpop.permute.xlu0 %4109
    %4111 = vrot.lane.b32.xlu0 %v3415, 80
    %v4112 = vpop.permute.xlu0 %4111
    %4113 = vrot.lane.b32.xlu0 %v3418, 80
    %v4114 = vpop.permute.xlu0 %4113
    %4115 = vrot.lane.b32.xlu0 %v3423, 80
    %v4116 = vpop.permute.xlu0 %4115
    %4117 = vrot.lane.b32.xlu0 %v3426, 80
    %v4118 = vpop.permute.xlu0 %4117
    %4119 = vrot.lane.b32.xlu0 %v3431, 80
    %v4120 = vpop.permute.xlu0 %4119
    %4121 = vrot.lane.b32.xlu0 %v3434, 80
    %v4122 = vpop.permute.xlu0 %4121
    %4123 = vrot.lane.b32.xlu0 %v3439, 80
    %v4124 = vpop.permute.xlu0 %4123
    %4125 = vrot.lane.b32.xlu0 %v3442, 80
    %v4126 = vpop.permute.xlu0 %4125
    %v4127 = vsel %vm1075, %v4106, %v4122
    %v4128 = vsel %vm1076, %v4108, %v4124
    %v4129 = vsel %vm1077, %v4110, %v4126
    %v4130 = vsel %vm1078, %v4112, %v4096
    %v4131 = vsel %vm1079, %v4114, %v4098
    %v4132 = vsel %vm1080, %v4116, %v4100
    %v4133 = vsel %vm1081, %v4118, %v4102
    %v4134 = vsel %vm1082, %v4120, %v4104
    %v4135 = vsel %vm1083, %v4122, %v4106
    %v4136 = vsel %vm1084, %v4124, %v4108
    %v4137 = vsel %vm1085, %v4126, %v4110
    %v4138 = vsel %vm1086, %v4096, %v4112
    %v4139 = vsel %vm1087, %v4098, %v4114
    %v4140 = vsel %vm1088, %v4100, %v4116
    %v4141 = vsel %vm1089, %v4102, %v4118
    %v4142 = vsel %vm1090, %v4104, %v4120
    %v4143 = vsel %vm1111, %v4127, 0.0
    %v4144 = vsel %vm1112, %v4128, 0.0
    %v4145 = vsel %vm1113, %v4129, 0.0
    %v4146 = vsel %vm1114, %v4130, 0.0
    %v4147 = vsel %vm1115, %v4131, 0.0
    %v4148 = vsel %vm1116, %v4132, 0.0
    %v4149 = vsel %vm1117, %v4133, 0.0
    %v4150 = vsel %vm1118, %v4134, 0.0
    %v4151 = vsel %vm1119, %v4135, 0.0
    %v4152 = vsel %vm1120, %v4136, 0.0
    %v4153 = vsel %vm1121, %v4137, 0.0
    %v4154 = vsel %vm1122, %v4138, 0.0
    %v4155 = vsel %vm1123, %v4139, 0.0
    %v4156 = vsel %vm1124, %v4140, 0.0
    %v4157 = vsel %vm1125, %v4141, 0.0
    %v4158 = vsel %vm1126, %v4142, 0.0
    %4159 = vrot.lane.b32.xlu0 %v3383, 96
    %v4160 = vpop.permute.xlu0 %4159
    %4161 = vrot.lane.b32.xlu0 %v3386, 96
    %v4162 = vpop.permute.xlu0 %4161
    %4163 = vrot.lane.b32.xlu0 %v3391, 96
    %v4164 = vpop.permute.xlu0 %4163
    %4165 = vrot.lane.b32.xlu0 %v3394, 96
    %v4166 = vpop.permute.xlu0 %4165
    %4167 = vrot.lane.b32.xlu0 %v3399, 96
    %v4168 = vpop.permute.xlu0 %4167
    %4169 = vrot.lane.b32.xlu0 %v3402, 96
    %v4170 = vpop.permute.xlu0 %4169
    %4171 = vrot.lane.b32.xlu0 %v3407, 96
    %v4172 = vpop.permute.xlu0 %4171
    %4173 = vrot.lane.b32.xlu0 %v3410, 96
    %v4174 = vpop.permute.xlu0 %4173
    %4175 = vrot.lane.b32.xlu0 %v3415, 96
    %v4176 = vpop.permute.xlu0 %4175
    %4177 = vrot.lane.b32.xlu0 %v3418, 96
    %v4178 = vpop.permute.xlu0 %4177
    %4179 = vrot.lane.b32.xlu0 %v3423, 96
    %v4180 = vpop.permute.xlu0 %4179
    %4181 = vrot.lane.b32.xlu0 %v3426, 96
    %v4182 = vpop.permute.xlu0 %4181
    %4183 = vrot.lane.b32.xlu0 %v3431, 96
    %v4184 = vpop.permute.xlu0 %4183
    %4185 = vrot.lane.b32.xlu0 %v3434, 96
    %v4186 = vpop.permute.xlu0 %4185
    %4187 = vrot.lane.b32.xlu0 %v3439, 96
    %v4188 = vpop.permute.xlu0 %4187
    %4189 = vrot.lane.b32.xlu0 %v3442, 96
    %v4190 = vpop.permute.xlu0 %4189
    %v4191 = vsel %vm1257, %v4172, %v4188
    %v4192 = vsel %vm1258, %v4174, %v4190
    %v4193 = vsel %vm1259, %v4176, %v4160
    %v4194 = vsel %vm1260, %v4178, %v4162
    %v4195 = vsel %vm1261, %v4180, %v4164
    %v4196 = vsel %vm1262, %v4182, %v4166
    %v4197 = vsel %vm1263, %v4184, %v4168
    %v4198 = vsel %vm1264, %v4186, %v4170
    %v4199 = vsel %vm1265, %v4188, %v4172
    %v4200 = vsel %vm1266, %v4190, %v4174
    %v4201 = vsel %vm1267, %v4160, %v4176
    %v4202 = vsel %vm1268, %v4162, %v4178
    %v4203 = vsel %vm1269, %v4164, %v4180
    %v4204 = vsel %vm1270, %v4166, %v4182
    %v4205 = vsel %vm1271, %v4168, %v4184
    %v4206 = vsel %vm1272, %v4170, %v4186
    %v4207 = vsel %vm1293, %v4191, 0.0
    %v4208 = vsel %vm1294, %v4192, 0.0
    %v4209 = vsel %vm1295, %v4193, 0.0
    %v4210 = vsel %vm1296, %v4194, 0.0
    %v4211 = vsel %vm1297, %v4195, 0.0
    %v4212 = vsel %vm1298, %v4196, 0.0
    %v4213 = vsel %vm1299, %v4197, 0.0
    %v4214 = vsel %vm1300, %v4198, 0.0
    %v4215 = vsel %vm1301, %v4199, 0.0
    %v4216 = vsel %vm1302, %v4200, 0.0
    %v4217 = vsel %vm1303, %v4201, 0.0
    %v4218 = vsel %vm1304, %v4202, 0.0
    %v4219 = vsel %vm1305, %v4203, 0.0
    %v4220 = vsel %vm1306, %v4204, 0.0
    %v4221 = vsel %vm1307, %v4205, 0.0
    %v4222 = vsel %vm1308, %v4206, 0.0
    %4223 = vrot.lane.b32.xlu0 %v3383, 112
    %v4224 = vpop.permute.xlu0 %4223
    %4225 = vrot.lane.b32.xlu0 %v3386, 112
    %v4226 = vpop.permute.xlu0 %4225
    %4227 = vrot.lane.b32.xlu0 %v3391, 112
    %v4228 = vpop.permute.xlu0 %4227
    %4229 = vrot.lane.b32.xlu0 %v3394, 112
    %v4230 = vpop.permute.xlu0 %4229
    %4231 = vrot.lane.b32.xlu0 %v3399, 112
    %v4232 = vpop.permute.xlu0 %4231
    %4233 = vrot.lane.b32.xlu0 %v3402, 112
    %v4234 = vpop.permute.xlu0 %4233
    %4235 = vrot.lane.b32.xlu0 %v3407, 112
    %v4236 = vpop.permute.xlu0 %4235
    %4237 = vrot.lane.b32.xlu0 %v3410, 112
    %v4238 = vpop.permute.xlu0 %4237
    %4239 = vrot.lane.b32.xlu0 %v3415, 112
    %v4240 = vpop.permute.xlu0 %4239
    %4241 = vrot.lane.b32.xlu0 %v3418, 112
    %v4242 = vpop.permute.xlu0 %4241
    %4243 = vrot.lane.b32.xlu0 %v3423, 112
    %v4244 = vpop.permute.xlu0 %4243
    %4245 = vrot.lane.b32.xlu0 %v3426, 112
    %v4246 = vpop.permute.xlu0 %4245
    %4247 = vrot.lane.b32.xlu0 %v3431, 112
    %v4248 = vpop.permute.xlu0 %4247
    %4249 = vrot.lane.b32.xlu0 %v3434, 112
    %v4250 = vpop.permute.xlu0 %4249
    %4251 = vrot.lane.b32.xlu0 %v3439, 112
    %v4252 = vpop.permute.xlu0 %4251
    %4253 = vrot.lane.b32.xlu0 %v3442, 112
    %v4254 = vpop.permute.xlu0 %4253
    %v4255 = vsel %vm1439, %v4238, %v4254
    %v4256 = vsel %vm1440, %v4240, %v4224
    %v4257 = vsel %vm1441, %v4242, %v4226
    %v4258 = vsel %vm1442, %v4244, %v4228
    %v4259 = vsel %vm1443, %v4246, %v4230
    %v4260 = vsel %vm1444, %v4248, %v4232
    %v4261 = vsel %vm1445, %v4250, %v4234
    %v4262 = vsel %vm1446, %v4252, %v4236
    %v4263 = vsel %vm1447, %v4254, %v4238
    %v4264 = vsel %vm1448, %v4224, %v4240
    %v4265 = vsel %vm1449, %v4226, %v4242
    %v4266 = vsel %vm1450, %v4228, %v4244
    %v4267 = vsel %vm1451, %v4230, %v4246
    %v4268 = vsel %vm1452, %v4232, %v4248
    %v4269 = vsel %vm1453, %v4234, %v4250
    %v4270 = vsel %vm1454, %v4236, %v4252
    %v4271 = vsel %vm1475, %v4255, 0.0
    %v4272 = vsel %vm1476, %v4256, 0.0
    %v4273 = vsel %vm1477, %v4257, 0.0
    %v4274 = vsel %vm1478, %v4258, 0.0
    %v4275 = vsel %vm1479, %v4259, 0.0
    %v4276 = vsel %vm1480, %v4260, 0.0
    %v4277 = vsel %vm1481, %v4261, 0.0
    %v4278 = vsel %vm1482, %v4262, 0.0
    %v4279 = vsel %vm1483, %v4263, 0.0
    %v4280 = vsel %vm1484, %v4264, 0.0
    %v4281 = vsel %vm1485, %v4265, 0.0
    %v4282 = vsel %vm1486, %v4266, 0.0
    %v4283 = vsel %vm1487, %v4267, 0.0
    %v4284 = vsel %vm1488, %v4268, 0.0
    %v4285 = vsel %vm1489, %v4269, 0.0
    %v4286 = vsel %vm1490, %v4270, 0.0
    %v4287 = vadd.f32 %v3823, %v3887
    %v4288 = vadd.f32 %v3824, %v3888
    %v4289 = vadd.f32 %v3825, %v3889
    %v4290 = vadd.f32 %v3826, %v3890
    %v4291 = vadd.f32 %v3827, %v3891
    %v4292 = vadd.f32 %v3828, %v3892
    %v4293 = vadd.f32 %v3829, %v3893
    %v4294 = vadd.f32 %v3830, %v3894
    %v4295 = vadd.f32 %v3831, %v3895
    %v4296 = vadd.f32 %v3832, %v3896
    %v4297 = vadd.f32 %v3833, %v3897
    %v4298 = vadd.f32 %v3834, %v3898
    %v4299 = vadd.f32 %v3835, %v3899
    %v4300 = vadd.f32 %v3836, %v3900
    %v4301 = vadd.f32 %v3837, %v3901
    %v4302 = vadd.f32 %v3838, %v3902
    %v4303 = vadd.f32 %v3951, %v4015
    %v4304 = vadd.f32 %v3952, %v4016
    %v4305 = vadd.f32 %v3953, %v4017
    %v4306 = vadd.f32 %v3954, %v4018
    %v4307 = vadd.f32 %v3955, %v4019
    %v4308 = vadd.f32 %v3956, %v4020
    %v4309 = vadd.f32 %v3957, %v4021
    %v4310 = vadd.f32 %v3958, %v4022
    %v4311 = vadd.f32 %v3959, %v4023
    %v4312 = vadd.f32 %v3960, %v4024
    %v4313 = vadd.f32 %v3961, %v4025
    %v4314 = vadd.f32 %v3962, %v4026
    %v4315 = vadd.f32 %v3963, %v4027
    %v4316 = vadd.f32 %v3964, %v4028
    %v4317 = vadd.f32 %v3965, %v4029
    %v4318 = vadd.f32 %v3966, %v4030
    %v4319 = vadd.f32 %v4079, %v4143
    %v4320 = vadd.f32 %v4080, %v4144
    %v4321 = vadd.f32 %v4081, %v4145
    %v4322 = vadd.f32 %v4082, %v4146
    %v4323 = vadd.f32 %v4083, %v4147
    %v4324 = vadd.f32 %v4084, %v4148
    %v4325 = vadd.f32 %v4085, %v4149
    %v4326 = vadd.f32 %v4086, %v4150
    %v4327 = vadd.f32 %v4087, %v4151
    %v4328 = vadd.f32 %v4088, %v4152
    %v4329 = vadd.f32 %v4089, %v4153
    %v4330 = vadd.f32 %v4090, %v4154
    %v4331 = vadd.f32 %v4091, %v4155
    %v4332 = vadd.f32 %v4092, %v4156
    %v4333 = vadd.f32 %v4093, %v4157
    %v4334 = vadd.f32 %v4094, %v4158
    %v4335 = vadd.f32 %v4207, %v4271
    %v4336 = vadd.f32 %v4208, %v4272
    %v4337 = vadd.f32 %v4209, %v4273
    %v4338 = vadd.f32 %v4210, %v4274
    %v4339 = vadd.f32 %v4211, %v4275
    %v4340 = vadd.f32 %v4212, %v4276
    %v4341 = vadd.f32 %v4213, %v4277
    %v4342 = vadd.f32 %v4214, %v4278
    %v4343 = vadd.f32 %v4215, %v4279
    %v4344 = vadd.f32 %v4216, %v4280
    %v4345 = vadd.f32 %v4217, %v4281
    %v4346 = vadd.f32 %v4218, %v4282
    %v4347 = vadd.f32 %v4219, %v4283
    %v4348 = vadd.f32 %v4220, %v4284
    %v4349 = vadd.f32 %v4221, %v4285
    %v4350 = vadd.f32 %v4222, %v4286
    %v4351 = vadd.f32 %v4287, %v4303
    %v4352 = vadd.f32 %v4288, %v4304
    %v4353 = vadd.f32 %v4289, %v4305
    %v4354 = vadd.f32 %v4290, %v4306
    %v4355 = vadd.f32 %v4291, %v4307
    %v4356 = vadd.f32 %v4292, %v4308
    %v4357 = vadd.f32 %v4293, %v4309
    %v4358 = vadd.f32 %v4294, %v4310
    %v4359 = vadd.f32 %v4295, %v4311
    %v4360 = vadd.f32 %v4296, %v4312
    %v4361 = vadd.f32 %v4297, %v4313
    %v4362 = vadd.f32 %v4298, %v4314
    %v4363 = vadd.f32 %v4299, %v4315
    %v4364 = vadd.f32 %v4300, %v4316
    %v4365 = vadd.f32 %v4301, %v4317
    %v4366 = vadd.f32 %v4302, %v4318
    %v4367 = vadd.f32 %v4319, %v4335
    %v4368 = vadd.f32 %v4320, %v4336
    %v4369 = vadd.f32 %v4321, %v4337
    %v4370 = vadd.f32 %v4322, %v4338
    %v4371 = vadd.f32 %v4323, %v4339
    %v4372 = vadd.f32 %v4324, %v4340
    %v4373 = vadd.f32 %v4325, %v4341
    %v4374 = vadd.f32 %v4326, %v4342
    %v4375 = vadd.f32 %v4327, %v4343
    %v4376 = vadd.f32 %v4328, %v4344
    %v4377 = vadd.f32 %v4329, %v4345
    %v4378 = vadd.f32 %v4330, %v4346
    %v4379 = vadd.f32 %v4331, %v4347
    %v4380 = vadd.f32 %v4332, %v4348
    %v4381 = vadd.f32 %v4333, %v4349
    %v4382 = vadd.f32 %v4334, %v4350
    %v4383 = vadd.f32 %v4351, %v4367
    %v4384 = vadd.f32 %v4352, %v4368
    %v4385 = vadd.f32 %v4353, %v4369
    %v4386 = vadd.f32 %v4354, %v4370
    %v4387 = vadd.f32 %v4355, %v4371
    %v4388 = vadd.f32 %v4356, %v4372
    %v4389 = vadd.f32 %v4357, %v4373
    %v4390 = vadd.f32 %v4358, %v4374
    %v4391 = vadd.f32 %v4359, %v4375
    %v4392 = vadd.f32 %v4360, %v4376
    %v4393 = vadd.f32 %v4361, %v4377
    %v4394 = vadd.f32 %v4362, %v4378
    %v4395 = vadd.f32 %v4363, %v4379
    %v4396 = vadd.f32 %v4364, %v4380
    %v4397 = vadd.f32 %v4365, %v4381
    %v4398 = vadd.f32 %v4366, %v4382
    %v4399 = vsel %vm1667, %v3552, 0.0
    %v4400 = vsel %vm1668, %v3555, 0.0
    %v4401 = vsel %vm1669, %v3560, 0.0
    %v4402 = vsel %vm1670, %v3563, 0.0
    %v4403 = vsel %vm1671, %v3568, 0.0
    %v4404 = vsel %vm1672, %v3571, 0.0
    %v4405 = vsel %vm1673, %v3576, 0.0
    %v4406 = vsel %vm1674, %v3579, 0.0
    %v4407 = vsel %vm1675, %v3584, 0.0
    %v4408 = vsel %vm1676, %v3587, 0.0
    %v4409 = vsel %vm1677, %v3592, 0.0
    %v4410 = vsel %vm1678, %v3595, 0.0
    %v4411 = vsel %vm1679, %v3600, 0.0
    %v4412 = vsel %vm1680, %v3603, 0.0
    %v4413 = vsel %vm1681, %v3608, 0.0
    %v4414 = vsel %vm1682, %v3611, 0.0
    %4415 = vrot.lane.b32.xlu0 %v3552, 16
    %v4416 = vpop.permute.xlu0 %4415
    %4417 = vrot.lane.b32.xlu0 %v3555, 16
    %v4418 = vpop.permute.xlu0 %4417
    %4419 = vrot.lane.b32.xlu0 %v3560, 16
    %v4420 = vpop.permute.xlu0 %4419
    %4421 = vrot.lane.b32.xlu0 %v3563, 16
    %v4422 = vpop.permute.xlu0 %4421
    %4423 = vrot.lane.b32.xlu0 %v3568, 16
    %v4424 = vpop.permute.xlu0 %4423
    %4425 = vrot.lane.b32.xlu0 %v3571, 16
    %v4426 = vpop.permute.xlu0 %4425
    %4427 = vrot.lane.b32.xlu0 %v3576, 16
    %v4428 = vpop.permute.xlu0 %4427
    %4429 = vrot.lane.b32.xlu0 %v3579, 16
    %v4430 = vpop.permute.xlu0 %4429
    %4431 = vrot.lane.b32.xlu0 %v3584, 16
    %v4432 = vpop.permute.xlu0 %4431
    %4433 = vrot.lane.b32.xlu0 %v3587, 16
    %v4434 = vpop.permute.xlu0 %4433
    %4435 = vrot.lane.b32.xlu0 %v3592, 16
    %v4436 = vpop.permute.xlu0 %4435
    %4437 = vrot.lane.b32.xlu0 %v3595, 16
    %v4438 = vpop.permute.xlu0 %4437
    %4439 = vrot.lane.b32.xlu0 %v3600, 16
    %v4440 = vpop.permute.xlu0 %4439
    %4441 = vrot.lane.b32.xlu0 %v3603, 16
    %v4442 = vpop.permute.xlu0 %4441
    %4443 = vrot.lane.b32.xlu0 %v3608, 16
    %v4444 = vpop.permute.xlu0 %4443
    %4445 = vrot.lane.b32.xlu0 %v3611, 16
    %v4446 = vpop.permute.xlu0 %4445
    %v4447 = vrot.slane %v4416, 1
    %v4448 = vrot.slane %v4418, 1
    %v4449 = vrot.slane %v4420, 1
    %v4450 = vrot.slane %v4422, 1
    %v4451 = vrot.slane %v4424, 1
    %v4452 = vrot.slane %v4426, 1
    %v4453 = vrot.slane %v4428, 1
    %v4454 = vrot.slane %v4430, 1
    %v4455 = vrot.slane %v4432, 1
    %v4456 = vrot.slane %v4434, 1
    %v4457 = vrot.slane %v4436, 1
    %v4458 = vrot.slane %v4438, 1
    %v4459 = vrot.slane %v4440, 1
    %v4460 = vrot.slane %v4442, 1
    %v4461 = vrot.slane %v4444, 1
    %v4462 = vrot.slane %v4446, 1
    %v4463 = vsel %vm1717, %v4461, %v4462
    %v4464 = vsel %vm1717, %v4460, %v4461
    %v4465 = vsel %vm1717, %v4459, %v4460
    %v4466 = vsel %vm1717, %v4458, %v4459
    %v4467 = vsel %vm1717, %v4457, %v4458
    %v4468 = vsel %vm1717, %v4456, %v4457
    %v4469 = vsel %vm1717, %v4455, %v4456
    %v4470 = vsel %vm1717, %v4454, %v4455
    %v4471 = vsel %vm1717, %v4453, %v4454
    %v4472 = vsel %vm1717, %v4452, %v4453
    %v4473 = vsel %vm1717, %v4451, %v4452
    %v4474 = vsel %vm1717, %v4450, %v4451
    %v4475 = vsel %vm1717, %v4449, %v4450
    %v4476 = vsel %vm1717, %v4448, %v4449
    %v4477 = vsel %vm1717, %v4447, %v4448
    %v4478 = vsel %vm1717, %v4462, %v4447
    %v4479 = vsel %vm1846, %v4477, %v4478
    %v4480 = vsel %vm1847, %v4476, %v4477
    %v4481 = vsel %vm1848, %v4475, %v4476
    %v4482 = vsel %vm1849, %v4474, %v4475
    %v4483 = vsel %vm1850, %v4473, %v4474
    %v4484 = vsel %vm1851, %v4472, %v4473
    %v4485 = vsel %vm1852, %v4471, %v4472
    %v4486 = vsel %vm1853, %v4470, %v4471
    %v4487 = vsel %vm1854, %v4469, %v4470
    %v4488 = vsel %vm1855, %v4468, %v4469
    %v4489 = vsel %vm1856, %v4467, %v4468
    %v4490 = vsel %vm1857, %v4466, %v4467
    %v4491 = vsel %vm1858, %v4465, %v4466
    %v4492 = vsel %vm1859, %v4464, %v4465
    %v4493 = vsel %vm1860, %v4463, %v4464
    %v4494 = vsel %vm1861, %v4478, %v4463
    %v4495 = vsel %vm1878, %v4479, 0.0
    %v4496 = vsel %vm1879, %v4480, 0.0
    %v4497 = vsel %vm1880, %v4481, 0.0
    %v4498 = vsel %vm1881, %v4482, 0.0
    %v4499 = vsel %vm1882, %v4483, 0.0
    %v4500 = vsel %vm1883, %v4484, 0.0
    %v4501 = vsel %vm1884, %v4485, 0.0
    %v4502 = vsel %vm1885, %v4486, 0.0
    %v4503 = vsel %vm1886, %v4487, 0.0
    %v4504 = vsel %vm1887, %v4488, 0.0
    %v4505 = vsel %vm1888, %v4489, 0.0
    %v4506 = vsel %vm1889, %v4490, 0.0
    %v4507 = vsel %vm1890, %v4491, 0.0
    %v4508 = vsel %vm1891, %v4492, 0.0
    %v4509 = vsel %vm1892, %v4493, 0.0
    %v4510 = vsel %vm1893, %v4494, 0.0
    %4511 = vrot.lane.b32.xlu0 %v3552, 32
    %v4512 = vpop.permute.xlu0 %4511
    %4513 = vrot.lane.b32.xlu0 %v3555, 32
    %v4514 = vpop.permute.xlu0 %4513
    %4515 = vrot.lane.b32.xlu0 %v3560, 32
    %v4516 = vpop.permute.xlu0 %4515
    %4517 = vrot.lane.b32.xlu0 %v3563, 32
    %v4518 = vpop.permute.xlu0 %4517
    %4519 = vrot.lane.b32.xlu0 %v3568, 32
    %v4520 = vpop.permute.xlu0 %4519
    %4521 = vrot.lane.b32.xlu0 %v3571, 32
    %v4522 = vpop.permute.xlu0 %4521
    %4523 = vrot.lane.b32.xlu0 %v3576, 32
    %v4524 = vpop.permute.xlu0 %4523
    %4525 = vrot.lane.b32.xlu0 %v3579, 32
    %v4526 = vpop.permute.xlu0 %4525
    %4527 = vrot.lane.b32.xlu0 %v3584, 32
    %v4528 = vpop.permute.xlu0 %4527
    %4529 = vrot.lane.b32.xlu0 %v3587, 32
    %v4530 = vpop.permute.xlu0 %4529
    %4531 = vrot.lane.b32.xlu0 %v3592, 32
    %v4532 = vpop.permute.xlu0 %4531
    %4533 = vrot.lane.b32.xlu0 %v3595, 32
    %v4534 = vpop.permute.xlu0 %4533
    %4535 = vrot.lane.b32.xlu0 %v3600, 32
    %v4536 = vpop.permute.xlu0 %4535
    %4537 = vrot.lane.b32.xlu0 %v3603, 32
    %v4538 = vpop.permute.xlu0 %4537
    %4539 = vrot.lane.b32.xlu0 %v3608, 32
    %v4540 = vpop.permute.xlu0 %4539
    %4541 = vrot.lane.b32.xlu0 %v3611, 32
    %v4542 = vpop.permute.xlu0 %4541
    %v4543 = vrot.slane %v4512, 2
    %v4544 = vrot.slane %v4514, 2
    %v4545 = vrot.slane %v4516, 2
    %v4546 = vrot.slane %v4518, 2
    %v4547 = vrot.slane %v4520, 2
    %v4548 = vrot.slane %v4522, 2
    %v4549 = vrot.slane %v4524, 2
    %v4550 = vrot.slane %v4526, 2
    %v4551 = vrot.slane %v4528, 2
    %v4552 = vrot.slane %v4530, 2
    %v4553 = vrot.slane %v4532, 2
    %v4554 = vrot.slane %v4534, 2
    %v4555 = vrot.slane %v4536, 2
    %v4556 = vrot.slane %v4538, 2
    %v4557 = vrot.slane %v4540, 2
    %v4558 = vrot.slane %v4542, 2
    %v4559 = vsel %vm1926, %v4557, %v4558
    %v4560 = vsel %vm1926, %v4556, %v4557
    %v4561 = vsel %vm1926, %v4555, %v4556
    %v4562 = vsel %vm1926, %v4554, %v4555
    %v4563 = vsel %vm1926, %v4553, %v4554
    %v4564 = vsel %vm1926, %v4552, %v4553
    %v4565 = vsel %vm1926, %v4551, %v4552
    %v4566 = vsel %vm1926, %v4550, %v4551
    %v4567 = vsel %vm1926, %v4549, %v4550
    %v4568 = vsel %vm1926, %v4548, %v4549
    %v4569 = vsel %vm1926, %v4547, %v4548
    %v4570 = vsel %vm1926, %v4546, %v4547
    %v4571 = vsel %vm1926, %v4545, %v4546
    %v4572 = vsel %vm1926, %v4544, %v4545
    %v4573 = vsel %vm1926, %v4543, %v4544
    %v4574 = vsel %vm1926, %v4558, %v4543
    %v4575 = vsel %vm2055, %v4573, %v4574
    %v4576 = vsel %vm2056, %v4572, %v4573
    %v4577 = vsel %vm2057, %v4571, %v4572
    %v4578 = vsel %vm2058, %v4570, %v4571
    %v4579 = vsel %vm2059, %v4569, %v4570
    %v4580 = vsel %vm2060, %v4568, %v4569
    %v4581 = vsel %vm2061, %v4567, %v4568
    %v4582 = vsel %vm2062, %v4566, %v4567
    %v4583 = vsel %vm2063, %v4565, %v4566
    %v4584 = vsel %vm2064, %v4564, %v4565
    %v4585 = vsel %vm2065, %v4563, %v4564
    %v4586 = vsel %vm2066, %v4562, %v4563
    %v4587 = vsel %vm2067, %v4561, %v4562
    %v4588 = vsel %vm2068, %v4560, %v4561
    %v4589 = vsel %vm2069, %v4559, %v4560
    %v4590 = vsel %vm2070, %v4574, %v4559
    %v4591 = vsel %vm2087, %v4575, 0.0
    %v4592 = vsel %vm2088, %v4576, 0.0
    %v4593 = vsel %vm2089, %v4577, 0.0
    %v4594 = vsel %vm2090, %v4578, 0.0
    %v4595 = vsel %vm2091, %v4579, 0.0
    %v4596 = vsel %vm2092, %v4580, 0.0
    %v4597 = vsel %vm2093, %v4581, 0.0
    %v4598 = vsel %vm2094, %v4582, 0.0
    %v4599 = vsel %vm2095, %v4583, 0.0
    %v4600 = vsel %vm2096, %v4584, 0.0
    %v4601 = vsel %vm2097, %v4585, 0.0
    %v4602 = vsel %vm2098, %v4586, 0.0
    %v4603 = vsel %vm2099, %v4587, 0.0
    %v4604 = vsel %vm2100, %v4588, 0.0
    %v4605 = vsel %vm2101, %v4589, 0.0
    %v4606 = vsel %vm2102, %v4590, 0.0
    %4607 = vrot.lane.b32.xlu0 %v3552, 48
    %v4608 = vpop.permute.xlu0 %4607
    %4609 = vrot.lane.b32.xlu0 %v3555, 48
    %v4610 = vpop.permute.xlu0 %4609
    %4611 = vrot.lane.b32.xlu0 %v3560, 48
    %v4612 = vpop.permute.xlu0 %4611
    %4613 = vrot.lane.b32.xlu0 %v3563, 48
    %v4614 = vpop.permute.xlu0 %4613
    %4615 = vrot.lane.b32.xlu0 %v3568, 48
    %v4616 = vpop.permute.xlu0 %4615
    %4617 = vrot.lane.b32.xlu0 %v3571, 48
    %v4618 = vpop.permute.xlu0 %4617
    %4619 = vrot.lane.b32.xlu0 %v3576, 48
    %v4620 = vpop.permute.xlu0 %4619
    %4621 = vrot.lane.b32.xlu0 %v3579, 48
    %v4622 = vpop.permute.xlu0 %4621
    %4623 = vrot.lane.b32.xlu0 %v3584, 48
    %v4624 = vpop.permute.xlu0 %4623
    %4625 = vrot.lane.b32.xlu0 %v3587, 48
    %v4626 = vpop.permute.xlu0 %4625
    %4627 = vrot.lane.b32.xlu0 %v3592, 48
    %v4628 = vpop.permute.xlu0 %4627
    %4629 = vrot.lane.b32.xlu0 %v3595, 48
    %v4630 = vpop.permute.xlu0 %4629
    %4631 = vrot.lane.b32.xlu0 %v3600, 48
    %v4632 = vpop.permute.xlu0 %4631
    %4633 = vrot.lane.b32.xlu0 %v3603, 48
    %v4634 = vpop.permute.xlu0 %4633
    %4635 = vrot.lane.b32.xlu0 %v3608, 48
    %v4636 = vpop.permute.xlu0 %4635
    %4637 = vrot.lane.b32.xlu0 %v3611, 48
    %v4638 = vpop.permute.xlu0 %4637
    %v4639 = vrot.slane %v4608, 3
    %v4640 = vrot.slane %v4610, 3
    %v4641 = vrot.slane %v4612, 3
    %v4642 = vrot.slane %v4614, 3
    %v4643 = vrot.slane %v4616, 3
    %v4644 = vrot.slane %v4618, 3
    %v4645 = vrot.slane %v4620, 3
    %v4646 = vrot.slane %v4622, 3
    %v4647 = vrot.slane %v4624, 3
    %v4648 = vrot.slane %v4626, 3
    %v4649 = vrot.slane %v4628, 3
    %v4650 = vrot.slane %v4630, 3
    %v4651 = vrot.slane %v4632, 3
    %v4652 = vrot.slane %v4634, 3
    %v4653 = vrot.slane %v4636, 3
    %v4654 = vrot.slane %v4638, 3
    %v4655 = vsel %vm2135, %v4653, %v4654
    %v4656 = vsel %vm2135, %v4652, %v4653
    %v4657 = vsel %vm2135, %v4651, %v4652
    %v4658 = vsel %vm2135, %v4650, %v4651
    %v4659 = vsel %vm2135, %v4649, %v4650
    %v4660 = vsel %vm2135, %v4648, %v4649
    %v4661 = vsel %vm2135, %v4647, %v4648
    %v4662 = vsel %vm2135, %v4646, %v4647
    %v4663 = vsel %vm2135, %v4645, %v4646
    %v4664 = vsel %vm2135, %v4644, %v4645
    %v4665 = vsel %vm2135, %v4643, %v4644
    %v4666 = vsel %vm2135, %v4642, %v4643
    %v4667 = vsel %vm2135, %v4641, %v4642
    %v4668 = vsel %vm2135, %v4640, %v4641
    %v4669 = vsel %vm2135, %v4639, %v4640
    %v4670 = vsel %vm2135, %v4654, %v4639
    %v4671 = vsel %vm2264, %v4669, %v4670
    %v4672 = vsel %vm2265, %v4668, %v4669
    %v4673 = vsel %vm2266, %v4667, %v4668
    %v4674 = vsel %vm2267, %v4666, %v4667
    %v4675 = vsel %vm2268, %v4665, %v4666
    %v4676 = vsel %vm2269, %v4664, %v4665
    %v4677 = vsel %vm2270, %v4663, %v4664
    %v4678 = vsel %vm2271, %v4662, %v4663
    %v4679 = vsel %vm2272, %v4661, %v4662
    %v4680 = vsel %vm2273, %v4660, %v4661
    %v4681 = vsel %vm2274, %v4659, %v4660
    %v4682 = vsel %vm2275, %v4658, %v4659
    %v4683 = vsel %vm2276, %v4657, %v4658
    %v4684 = vsel %vm2277, %v4656, %v4657
    %v4685 = vsel %vm2278, %v4655, %v4656
    %v4686 = vsel %vm2279, %v4670, %v4655
    %v4687 = vsel %vm2296, %v4671, 0.0
    %v4688 = vsel %vm2297, %v4672, 0.0
    %v4689 = vsel %vm2298, %v4673, 0.0
    %v4690 = vsel %vm2299, %v4674, 0.0
    %v4691 = vsel %vm2300, %v4675, 0.0
    %v4692 = vsel %vm2301, %v4676, 0.0
    %v4693 = vsel %vm2302, %v4677, 0.0
    %v4694 = vsel %vm2303, %v4678, 0.0
    %v4695 = vsel %vm2304, %v4679, 0.0
    %v4696 = vsel %vm2305, %v4680, 0.0
    %v4697 = vsel %vm2306, %v4681, 0.0
    %v4698 = vsel %vm2307, %v4682, 0.0
    %v4699 = vsel %vm2308, %v4683, 0.0
    %v4700 = vsel %vm2309, %v4684, 0.0
    %v4701 = vsel %vm2310, %v4685, 0.0
    %v4702 = vsel %vm2311, %v4686, 0.0
    %4703 = vrot.lane.b32.xlu0 %v3552, 64
    %v4704 = vpop.permute.xlu0 %4703
    %4705 = vrot.lane.b32.xlu0 %v3555, 64
    %v4706 = vpop.permute.xlu0 %4705
    %4707 = vrot.lane.b32.xlu0 %v3560, 64
    %v4708 = vpop.permute.xlu0 %4707
    %4709 = vrot.lane.b32.xlu0 %v3563, 64
    %v4710 = vpop.permute.xlu0 %4709
    %4711 = vrot.lane.b32.xlu0 %v3568, 64
    %v4712 = vpop.permute.xlu0 %4711
    %4713 = vrot.lane.b32.xlu0 %v3571, 64
    %v4714 = vpop.permute.xlu0 %4713
    %4715 = vrot.lane.b32.xlu0 %v3576, 64
    %v4716 = vpop.permute.xlu0 %4715
    %4717 = vrot.lane.b32.xlu0 %v3579, 64
    %v4718 = vpop.permute.xlu0 %4717
    %4719 = vrot.lane.b32.xlu0 %v3584, 64
    %v4720 = vpop.permute.xlu0 %4719
    %4721 = vrot.lane.b32.xlu0 %v3587, 64
    %v4722 = vpop.permute.xlu0 %4721
    %4723 = vrot.lane.b32.xlu0 %v3592, 64
    %v4724 = vpop.permute.xlu0 %4723
    %4725 = vrot.lane.b32.xlu0 %v3595, 64
    %v4726 = vpop.permute.xlu0 %4725
    %4727 = vrot.lane.b32.xlu0 %v3600, 64
    %v4728 = vpop.permute.xlu0 %4727
    %4729 = vrot.lane.b32.xlu0 %v3603, 64
    %v4730 = vpop.permute.xlu0 %4729
    %4731 = vrot.lane.b32.xlu0 %v3608, 64
    %v4732 = vpop.permute.xlu0 %4731
    %4733 = vrot.lane.b32.xlu0 %v3611, 64
    %v4734 = vpop.permute.xlu0 %4733
    %v4735 = vrot.slane %v4704, 4
    %v4736 = vrot.slane %v4706, 4
    %v4737 = vrot.slane %v4708, 4
    %v4738 = vrot.slane %v4710, 4
    %v4739 = vrot.slane %v4712, 4
    %v4740 = vrot.slane %v4714, 4
    %v4741 = vrot.slane %v4716, 4
    %v4742 = vrot.slane %v4718, 4
    %v4743 = vrot.slane %v4720, 4
    %v4744 = vrot.slane %v4722, 4
    %v4745 = vrot.slane %v4724, 4
    %v4746 = vrot.slane %v4726, 4
    %v4747 = vrot.slane %v4728, 4
    %v4748 = vrot.slane %v4730, 4
    %v4749 = vrot.slane %v4732, 4
    %v4750 = vrot.slane %v4734, 4
    %v4751 = vsel %vm2344, %v4749, %v4750
    %v4752 = vsel %vm2344, %v4748, %v4749
    %v4753 = vsel %vm2344, %v4747, %v4748
    %v4754 = vsel %vm2344, %v4746, %v4747
    %v4755 = vsel %vm2344, %v4745, %v4746
    %v4756 = vsel %vm2344, %v4744, %v4745
    %v4757 = vsel %vm2344, %v4743, %v4744
    %v4758 = vsel %vm2344, %v4742, %v4743
    %v4759 = vsel %vm2344, %v4741, %v4742
    %v4760 = vsel %vm2344, %v4740, %v4741
    %v4761 = vsel %vm2344, %v4739, %v4740
    %v4762 = vsel %vm2344, %v4738, %v4739
    %v4763 = vsel %vm2344, %v4737, %v4738
    %v4764 = vsel %vm2344, %v4736, %v4737
    %v4765 = vsel %vm2344, %v4735, %v4736
    %v4766 = vsel %vm2344, %v4750, %v4735
    %v4767 = vsel %vm2473, %v4765, %v4766
    %v4768 = vsel %vm2474, %v4764, %v4765
    %v4769 = vsel %vm2475, %v4763, %v4764
    %v4770 = vsel %vm2476, %v4762, %v4763
    %v4771 = vsel %vm2477, %v4761, %v4762
    %v4772 = vsel %vm2478, %v4760, %v4761
    %v4773 = vsel %vm2479, %v4759, %v4760
    %v4774 = vsel %vm2480, %v4758, %v4759
    %v4775 = vsel %vm2481, %v4757, %v4758
    %v4776 = vsel %vm2482, %v4756, %v4757
    %v4777 = vsel %vm2483, %v4755, %v4756
    %v4778 = vsel %vm2484, %v4754, %v4755
    %v4779 = vsel %vm2485, %v4753, %v4754
    %v4780 = vsel %vm2486, %v4752, %v4753
    %v4781 = vsel %vm2487, %v4751, %v4752
    %v4782 = vsel %vm2488, %v4766, %v4751
    %v4783 = vsel %vm2505, %v4767, 0.0
    %v4784 = vsel %vm2506, %v4768, 0.0
    %v4785 = vsel %vm2507, %v4769, 0.0
    %v4786 = vsel %vm2508, %v4770, 0.0
    %v4787 = vsel %vm2509, %v4771, 0.0
    %v4788 = vsel %vm2510, %v4772, 0.0
    %v4789 = vsel %vm2511, %v4773, 0.0
    %v4790 = vsel %vm2512, %v4774, 0.0
    %v4791 = vsel %vm2513, %v4775, 0.0
    %v4792 = vsel %vm2514, %v4776, 0.0
    %v4793 = vsel %vm2515, %v4777, 0.0
    %v4794 = vsel %vm2516, %v4778, 0.0
    %v4795 = vsel %vm2517, %v4779, 0.0
    %v4796 = vsel %vm2518, %v4780, 0.0
    %v4797 = vsel %vm2519, %v4781, 0.0
    %v4798 = vsel %vm2520, %v4782, 0.0
    %4799 = vrot.lane.b32.xlu0 %v3552, 80
    %v4800 = vpop.permute.xlu0 %4799
    %4801 = vrot.lane.b32.xlu0 %v3555, 80
    %v4802 = vpop.permute.xlu0 %4801
    %4803 = vrot.lane.b32.xlu0 %v3560, 80
    %v4804 = vpop.permute.xlu0 %4803
    %4805 = vrot.lane.b32.xlu0 %v3563, 80
    %v4806 = vpop.permute.xlu0 %4805
    %4807 = vrot.lane.b32.xlu0 %v3568, 80
    %v4808 = vpop.permute.xlu0 %4807
    %4809 = vrot.lane.b32.xlu0 %v3571, 80
    %v4810 = vpop.permute.xlu0 %4809
    %4811 = vrot.lane.b32.xlu0 %v3576, 80
    %v4812 = vpop.permute.xlu0 %4811
    %4813 = vrot.lane.b32.xlu0 %v3579, 80
    %v4814 = vpop.permute.xlu0 %4813
    %4815 = vrot.lane.b32.xlu0 %v3584, 80
    %v4816 = vpop.permute.xlu0 %4815
    %4817 = vrot.lane.b32.xlu0 %v3587, 80
    %v4818 = vpop.permute.xlu0 %4817
    %4819 = vrot.lane.b32.xlu0 %v3592, 80
    %v4820 = vpop.permute.xlu0 %4819
    %4821 = vrot.lane.b32.xlu0 %v3595, 80
    %v4822 = vpop.permute.xlu0 %4821
    %4823 = vrot.lane.b32.xlu0 %v3600, 80
    %v4824 = vpop.permute.xlu0 %4823
    %4825 = vrot.lane.b32.xlu0 %v3603, 80
    %v4826 = vpop.permute.xlu0 %4825
    %4827 = vrot.lane.b32.xlu0 %v3608, 80
    %v4828 = vpop.permute.xlu0 %4827
    %4829 = vrot.lane.b32.xlu0 %v3611, 80
    %v4830 = vpop.permute.xlu0 %4829
    %v4831 = vrot.slane %v4800, 5
    %v4832 = vrot.slane %v4802, 5
    %v4833 = vrot.slane %v4804, 5
    %v4834 = vrot.slane %v4806, 5
    %v4835 = vrot.slane %v4808, 5
    %v4836 = vrot.slane %v4810, 5
    %v4837 = vrot.slane %v4812, 5
    %v4838 = vrot.slane %v4814, 5
    %v4839 = vrot.slane %v4816, 5
    %v4840 = vrot.slane %v4818, 5
    %v4841 = vrot.slane %v4820, 5
    %v4842 = vrot.slane %v4822, 5
    %v4843 = vrot.slane %v4824, 5
    %v4844 = vrot.slane %v4826, 5
    %v4845 = vrot.slane %v4828, 5
    %v4846 = vrot.slane %v4830, 5
    %v4847 = vsel %vm2553, %v4845, %v4846
    %v4848 = vsel %vm2553, %v4844, %v4845
    %v4849 = vsel %vm2553, %v4843, %v4844
    %v4850 = vsel %vm2553, %v4842, %v4843
    %v4851 = vsel %vm2553, %v4841, %v4842
    %v4852 = vsel %vm2553, %v4840, %v4841
    %v4853 = vsel %vm2553, %v4839, %v4840
    %v4854 = vsel %vm2553, %v4838, %v4839
    %v4855 = vsel %vm2553, %v4837, %v4838
    %v4856 = vsel %vm2553, %v4836, %v4837
    %v4857 = vsel %vm2553, %v4835, %v4836
    %v4858 = vsel %vm2553, %v4834, %v4835
    %v4859 = vsel %vm2553, %v4833, %v4834
    %v4860 = vsel %vm2553, %v4832, %v4833
    %v4861 = vsel %vm2553, %v4831, %v4832
    %v4862 = vsel %vm2553, %v4846, %v4831
    %v4863 = vsel %vm2682, %v4861, %v4862
    %v4864 = vsel %vm2683, %v4860, %v4861
    %v4865 = vsel %vm2684, %v4859, %v4860
    %v4866 = vsel %vm2685, %v4858, %v4859
    %v4867 = vsel %vm2686, %v4857, %v4858
    %v4868 = vsel %vm2687, %v4856, %v4857
    %v4869 = vsel %vm2688, %v4855, %v4856
    %v4870 = vsel %vm2689, %v4854, %v4855
    %v4871 = vsel %vm2690, %v4853, %v4854
    %v4872 = vsel %vm2691, %v4852, %v4853
    %v4873 = vsel %vm2692, %v4851, %v4852
    %v4874 = vsel %vm2693, %v4850, %v4851
    %v4875 = vsel %vm2694, %v4849, %v4850
    %v4876 = vsel %vm2695, %v4848, %v4849
    %v4877 = vsel %vm2696, %v4847, %v4848
    %v4878 = vsel %vm2697, %v4862, %v4847
    %v4879 = vsel %vm2714, %v4863, 0.0
    %v4880 = vsel %vm2715, %v4864, 0.0
    %v4881 = vsel %vm2716, %v4865, 0.0
    %v4882 = vsel %vm2717, %v4866, 0.0
    %v4883 = vsel %vm2718, %v4867, 0.0
    %v4884 = vsel %vm2719, %v4868, 0.0
    %v4885 = vsel %vm2720, %v4869, 0.0
    %v4886 = vsel %vm2721, %v4870, 0.0
    %v4887 = vsel %vm2722, %v4871, 0.0
    %v4888 = vsel %vm2723, %v4872, 0.0
    %v4889 = vsel %vm2724, %v4873, 0.0
    %v4890 = vsel %vm2725, %v4874, 0.0
    %v4891 = vsel %vm2726, %v4875, 0.0
    %v4892 = vsel %vm2727, %v4876, 0.0
    %v4893 = vsel %vm2728, %v4877, 0.0
    %v4894 = vsel %vm2729, %v4878, 0.0
    %4895 = vrot.lane.b32.xlu0 %v3552, 96
    %v4896 = vpop.permute.xlu0 %4895
    %4897 = vrot.lane.b32.xlu0 %v3555, 96
    %v4898 = vpop.permute.xlu0 %4897
    %4899 = vrot.lane.b32.xlu0 %v3560, 96
    %v4900 = vpop.permute.xlu0 %4899
    %4901 = vrot.lane.b32.xlu0 %v3563, 96
    %v4902 = vpop.permute.xlu0 %4901
    %4903 = vrot.lane.b32.xlu0 %v3568, 96
    %v4904 = vpop.permute.xlu0 %4903
    %4905 = vrot.lane.b32.xlu0 %v3571, 96
    %v4906 = vpop.permute.xlu0 %4905
    %4907 = vrot.lane.b32.xlu0 %v3576, 96
    %v4908 = vpop.permute.xlu0 %4907
    %4909 = vrot.lane.b32.xlu0 %v3579, 96
    %v4910 = vpop.permute.xlu0 %4909
    %4911 = vrot.lane.b32.xlu0 %v3584, 96
    %v4912 = vpop.permute.xlu0 %4911
    %4913 = vrot.lane.b32.xlu0 %v3587, 96
    %v4914 = vpop.permute.xlu0 %4913
    %4915 = vrot.lane.b32.xlu0 %v3592, 96
    %v4916 = vpop.permute.xlu0 %4915
    %4917 = vrot.lane.b32.xlu0 %v3595, 96
    %v4918 = vpop.permute.xlu0 %4917
    %4919 = vrot.lane.b32.xlu0 %v3600, 96
    %v4920 = vpop.permute.xlu0 %4919
    %4921 = vrot.lane.b32.xlu0 %v3603, 96
    %v4922 = vpop.permute.xlu0 %4921
    %4923 = vrot.lane.b32.xlu0 %v3608, 96
    %v4924 = vpop.permute.xlu0 %4923
    %4925 = vrot.lane.b32.xlu0 %v3611, 96
    %v4926 = vpop.permute.xlu0 %4925
    %v4927 = vrot.slane %v4896, 6
    %v4928 = vrot.slane %v4898, 6
    %v4929 = vrot.slane %v4900, 6
    %v4930 = vrot.slane %v4902, 6
    %v4931 = vrot.slane %v4904, 6
    %v4932 = vrot.slane %v4906, 6
    %v4933 = vrot.slane %v4908, 6
    %v4934 = vrot.slane %v4910, 6
    %v4935 = vrot.slane %v4912, 6
    %v4936 = vrot.slane %v4914, 6
    %v4937 = vrot.slane %v4916, 6
    %v4938 = vrot.slane %v4918, 6
    %v4939 = vrot.slane %v4920, 6
    %v4940 = vrot.slane %v4922, 6
    %v4941 = vrot.slane %v4924, 6
    %v4942 = vrot.slane %v4926, 6
    %v4943 = vsel %vm2762, %v4941, %v4942
    %v4944 = vsel %vm2762, %v4940, %v4941
    %v4945 = vsel %vm2762, %v4939, %v4940
    %v4946 = vsel %vm2762, %v4938, %v4939
    %v4947 = vsel %vm2762, %v4937, %v4938
    %v4948 = vsel %vm2762, %v4936, %v4937
    %v4949 = vsel %vm2762, %v4935, %v4936
    %v4950 = vsel %vm2762, %v4934, %v4935
    %v4951 = vsel %vm2762, %v4933, %v4934
    %v4952 = vsel %vm2762, %v4932, %v4933
    %v4953 = vsel %vm2762, %v4931, %v4932
    %v4954 = vsel %vm2762, %v4930, %v4931
    %v4955 = vsel %vm2762, %v4929, %v4930
    %v4956 = vsel %vm2762, %v4928, %v4929
    %v4957 = vsel %vm2762, %v4927, %v4928
    %v4958 = vsel %vm2762, %v4942, %v4927
    %v4959 = vsel %vm2891, %v4957, %v4958
    %v4960 = vsel %vm2892, %v4956, %v4957
    %v4961 = vsel %vm2893, %v4955, %v4956
    %v4962 = vsel %vm2894, %v4954, %v4955
    %v4963 = vsel %vm2895, %v4953, %v4954
    %v4964 = vsel %vm2896, %v4952, %v4953
    %v4965 = vsel %vm2897, %v4951, %v4952
    %v4966 = vsel %vm2898, %v4950, %v4951
    %v4967 = vsel %vm2899, %v4949, %v4950
    %v4968 = vsel %vm2900, %v4948, %v4949
    %v4969 = vsel %vm2901, %v4947, %v4948
    %v4970 = vsel %vm2902, %v4946, %v4947
    %v4971 = vsel %vm2903, %v4945, %v4946
    %v4972 = vsel %vm2904, %v4944, %v4945
    %v4973 = vsel %vm2905, %v4943, %v4944
    %v4974 = vsel %vm2906, %v4958, %v4943
    %v4975 = vsel %vm2923, %v4959, 0.0
    %v4976 = vsel %vm2924, %v4960, 0.0
    %v4977 = vsel %vm2925, %v4961, 0.0
    %v4978 = vsel %vm2926, %v4962, 0.0
    %v4979 = vsel %vm2927, %v4963, 0.0
    %v4980 = vsel %vm2928, %v4964, 0.0
    %v4981 = vsel %vm2929, %v4965, 0.0
    %v4982 = vsel %vm2930, %v4966, 0.0
    %v4983 = vsel %vm2931, %v4967, 0.0
    %v4984 = vsel %vm2932, %v4968, 0.0
    %v4985 = vsel %vm2933, %v4969, 0.0
    %v4986 = vsel %vm2934, %v4970, 0.0
    %v4987 = vsel %vm2935, %v4971, 0.0
    %v4988 = vsel %vm2936, %v4972, 0.0
    %v4989 = vsel %vm2937, %v4973, 0.0
    %v4990 = vsel %vm2938, %v4974, 0.0
    %4991 = vrot.lane.b32.xlu0 %v3552, 112
    %v4992 = vpop.permute.xlu0 %4991
    %4993 = vrot.lane.b32.xlu0 %v3555, 112
    %v4994 = vpop.permute.xlu0 %4993
    %4995 = vrot.lane.b32.xlu0 %v3560, 112
    %v4996 = vpop.permute.xlu0 %4995
    %4997 = vrot.lane.b32.xlu0 %v3563, 112
    %v4998 = vpop.permute.xlu0 %4997
    %4999 = vrot.lane.b32.xlu0 %v3568, 112
    %v5000 = vpop.permute.xlu0 %4999
    %5001 = vrot.lane.b32.xlu0 %v3571, 112
    %v5002 = vpop.permute.xlu0 %5001
    %5003 = vrot.lane.b32.xlu0 %v3576, 112
    %v5004 = vpop.permute.xlu0 %5003
    %5005 = vrot.lane.b32.xlu0 %v3579, 112
    %v5006 = vpop.permute.xlu0 %5005
    %5007 = vrot.lane.b32.xlu0 %v3584, 112
    %v5008 = vpop.permute.xlu0 %5007
    %5009 = vrot.lane.b32.xlu0 %v3587, 112
    %v5010 = vpop.permute.xlu0 %5009
    %5011 = vrot.lane.b32.xlu0 %v3592, 112
    %v5012 = vpop.permute.xlu0 %5011
    %5013 = vrot.lane.b32.xlu0 %v3595, 112
    %v5014 = vpop.permute.xlu0 %5013
    %5015 = vrot.lane.b32.xlu0 %v3600, 112
    %v5016 = vpop.permute.xlu0 %5015
    %5017 = vrot.lane.b32.xlu0 %v3603, 112
    %v5018 = vpop.permute.xlu0 %5017
    %5019 = vrot.lane.b32.xlu0 %v3608, 112
    %v5020 = vpop.permute.xlu0 %5019
    %5021 = vrot.lane.b32.xlu0 %v3611, 112
    %v5022 = vpop.permute.xlu0 %5021
    %v5023 = vrot.slane %v4992, 7
    %v5024 = vrot.slane %v4994, 7
    %v5025 = vrot.slane %v4996, 7
    %v5026 = vrot.slane %v4998, 7
    %v5027 = vrot.slane %v5000, 7
    %v5028 = vrot.slane %v5002, 7
    %v5029 = vrot.slane %v5004, 7
    %v5030 = vrot.slane %v5006, 7
    %v5031 = vrot.slane %v5008, 7
    %v5032 = vrot.slane %v5010, 7
    %v5033 = vrot.slane %v5012, 7
    %v5034 = vrot.slane %v5014, 7
    %v5035 = vrot.slane %v5016, 7
    %v5036 = vrot.slane %v5018, 7
    %v5037 = vrot.slane %v5020, 7
    %v5038 = vrot.slane %v5022, 7
    %v5039 = vsel %vm2971, %v5037, %v5038
    %v5040 = vsel %vm2971, %v5036, %v5037
    %v5041 = vsel %vm2971, %v5035, %v5036
    %v5042 = vsel %vm2971, %v5034, %v5035
    %v5043 = vsel %vm2971, %v5033, %v5034
    %v5044 = vsel %vm2971, %v5032, %v5033
    %v5045 = vsel %vm2971, %v5031, %v5032
    %v5046 = vsel %vm2971, %v5030, %v5031
    %v5047 = vsel %vm2971, %v5029, %v5030
    %v5048 = vsel %vm2971, %v5028, %v5029
    %v5049 = vsel %vm2971, %v5027, %v5028
    %v5050 = vsel %vm2971, %v5026, %v5027
    %v5051 = vsel %vm2971, %v5025, %v5026
    %v5052 = vsel %vm2971, %v5024, %v5025
    %v5053 = vsel %vm2971, %v5023, %v5024
    %v5054 = vsel %vm2971, %v5038, %v5023
    %v5055 = vsel %vm3100, %v5053, %v5054
    %v5056 = vsel %vm3101, %v5052, %v5053
    %v5057 = vsel %vm3102, %v5051, %v5052
    %v5058 = vsel %vm3103, %v5050, %v5051
    %v5059 = vsel %vm3104, %v5049, %v5050
    %v5060 = vsel %vm3105, %v5048, %v5049
    %v5061 = vsel %vm3106, %v5047, %v5048
    %v5062 = vsel %vm3107, %v5046, %v5047
    %v5063 = vsel %vm3108, %v5045, %v5046
    %v5064 = vsel %vm3109, %v5044, %v5045
    %v5065 = vsel %vm3110, %v5043, %v5044
    %v5066 = vsel %vm3111, %v5042, %v5043
    %v5067 = vsel %vm3112, %v5041, %v5042
    %v5068 = vsel %vm3113, %v5040, %v5041
    %v5069 = vsel %vm3114, %v5039, %v5040
    %v5070 = vsel %vm3115, %v5054, %v5039
    %v5071 = vsel %vm3132, %v5055, 0.0
    %v5072 = vsel %vm3133, %v5056, 0.0
    %v5073 = vsel %vm3134, %v5057, 0.0
    %v5074 = vsel %vm3135, %v5058, 0.0
    %v5075 = vsel %vm3136, %v5059, 0.0
    %v5076 = vsel %vm3137, %v5060, 0.0
    %v5077 = vsel %vm3138, %v5061, 0.0
    %v5078 = vsel %vm3139, %v5062, 0.0
    %v5079 = vsel %vm3140, %v5063, 0.0
    %v5080 = vsel %vm3141, %v5064, 0.0
    %v5081 = vsel %vm3142, %v5065, 0.0
    %v5082 = vsel %vm3143, %v5066, 0.0
    %v5083 = vsel %vm3144, %v5067, 0.0
    %v5084 = vsel %vm3145, %v5068, 0.0
    %v5085 = vsel %vm3146, %v5069, 0.0
    %v5086 = vsel %vm3147, %v5070, 0.0
    %v5087 = vadd.f32 %v4399, %v4495
    %v5088 = vadd.f32 %v4400, %v4496
    %v5089 = vadd.f32 %v4401, %v4497
    %v5090 = vadd.f32 %v4402, %v4498
    %v5091 = vadd.f32 %v4403, %v4499
    %v5092 = vadd.f32 %v4404, %v4500
    %v5093 = vadd.f32 %v4405, %v4501
    %v5094 = vadd.f32 %v4406, %v4502
    %v5095 = vadd.f32 %v4407, %v4503
    %v5096 = vadd.f32 %v4408, %v4504
    %v5097 = vadd.f32 %v4409, %v4505
    %v5098 = vadd.f32 %v4410, %v4506
    %v5099 = vadd.f32 %v4411, %v4507
    %v5100 = vadd.f32 %v4412, %v4508
    %v5101 = vadd.f32 %v4413, %v4509
    %v5102 = vadd.f32 %v4414, %v4510
    %v5103 = vadd.f32 %v4591, %v4687
    %v5104 = vadd.f32 %v4592, %v4688
    %v5105 = vadd.f32 %v4593, %v4689
    %v5106 = vadd.f32 %v4594, %v4690
    %v5107 = vadd.f32 %v4595, %v4691
    %v5108 = vadd.f32 %v4596, %v4692
    %v5109 = vadd.f32 %v4597, %v4693
    %v5110 = vadd.f32 %v4598, %v4694
    %v5111 = vadd.f32 %v4599, %v4695
    %v5112 = vadd.f32 %v4600, %v4696
    %v5113 = vadd.f32 %v4601, %v4697
    %v5114 = vadd.f32 %v4602, %v4698
    %v5115 = vadd.f32 %v4603, %v4699
    %v5116 = vadd.f32 %v4604, %v4700
    %v5117 = vadd.f32 %v4605, %v4701
    %v5118 = vadd.f32 %v4606, %v4702
    %v5119 = vadd.f32 %v4783, %v4879
    %v5120 = vadd.f32 %v4784, %v4880
    %v5121 = vadd.f32 %v4785, %v4881
    %v5122 = vadd.f32 %v4786, %v4882
    %v5123 = vadd.f32 %v4787, %v4883
    %v5124 = vadd.f32 %v4788, %v4884
    %v5125 = vadd.f32 %v4789, %v4885
    %v5126 = vadd.f32 %v4790, %v4886
    %v5127 = vadd.f32 %v4791, %v4887
    %v5128 = vadd.f32 %v4792, %v4888
    %v5129 = vadd.f32 %v4793, %v4889
    %v5130 = vadd.f32 %v4794, %v4890
    %v5131 = vadd.f32 %v4795, %v4891
    %v5132 = vadd.f32 %v4796, %v4892
    %v5133 = vadd.f32 %v4797, %v4893
    %v5134 = vadd.f32 %v4798, %v4894
    %v5135 = vadd.f32 %v4975, %v5071
    %v5136 = vadd.f32 %v4976, %v5072
    %v5137 = vadd.f32 %v4977, %v5073
    %v5138 = vadd.f32 %v4978, %v5074
    %v5139 = vadd.f32 %v4979, %v5075
    %v5140 = vadd.f32 %v4980, %v5076
    %v5141 = vadd.f32 %v4981, %v5077
    %v5142 = vadd.f32 %v4982, %v5078
    %v5143 = vadd.f32 %v4983, %v5079
    %v5144 = vadd.f32 %v4984, %v5080
    %v5145 = vadd.f32 %v4985, %v5081
    %v5146 = vadd.f32 %v4986, %v5082
    %v5147 = vadd.f32 %v4987, %v5083
    %v5148 = vadd.f32 %v4988, %v5084
    %v5149 = vadd.f32 %v4989, %v5085
    %v5150 = vadd.f32 %v4990, %v5086
    %v5151 = vadd.f32 %v5087, %v5103
    %v5152 = vadd.f32 %v5088, %v5104
    %v5153 = vadd.f32 %v5089, %v5105
    %v5154 = vadd.f32 %v5090, %v5106
    %v5155 = vadd.f32 %v5091, %v5107
    %v5156 = vadd.f32 %v5092, %v5108
    %v5157 = vadd.f32 %v5093, %v5109
    %v5158 = vadd.f32 %v5094, %v5110
    %v5159 = vadd.f32 %v5095, %v5111
    %v5160 = vadd.f32 %v5096, %v5112
    %v5161 = vadd.f32 %v5097, %v5113
    %v5162 = vadd.f32 %v5098, %v5114
    %v5163 = vadd.f32 %v5099, %v5115
    %v5164 = vadd.f32 %v5100, %v5116
    %v5165 = vadd.f32 %v5101, %v5117
    %v5166 = vadd.f32 %v5102, %v5118
    %v5167 = vadd.f32 %v5119, %v5135
    %v5168 = vadd.f32 %v5120, %v5136
    %v5169 = vadd.f32 %v5121, %v5137
    %v5170 = vadd.f32 %v5122, %v5138
    %v5171 = vadd.f32 %v5123, %v5139
    %v5172 = vadd.f32 %v5124, %v5140
    %v5173 = vadd.f32 %v5125, %v5141
    %v5174 = vadd.f32 %v5126, %v5142
    %v5175 = vadd.f32 %v5127, %v5143
    %v5176 = vadd.f32 %v5128, %v5144
    %v5177 = vadd.f32 %v5129, %v5145
    %v5178 = vadd.f32 %v5130, %v5146
    %v5179 = vadd.f32 %v5131, %v5147
    %v5180 = vadd.f32 %v5132, %v5148
    %v5181 = vadd.f32 %v5133, %v5149
    %v5182 = vadd.f32 %v5134, %v5150
    %v5183 = vadd.f32 %v5151, %v5167
    %v5184 = vadd.f32 %v5152, %v5168
    %v5185 = vadd.f32 %v5153, %v5169
    %v5186 = vadd.f32 %v5154, %v5170
    %v5187 = vadd.f32 %v5155, %v5171
    %v5188 = vadd.f32 %v5156, %v5172
    %v5189 = vadd.f32 %v5157, %v5173
    %v5190 = vadd.f32 %v5158, %v5174
    %v5191 = vadd.f32 %v5159, %v5175
    %v5192 = vadd.f32 %v5160, %v5176
    %v5193 = vadd.f32 %v5161, %v5177
    %v5194 = vadd.f32 %v5162, %v5178
    %v5195 = vadd.f32 %v5163, %v5179
    %v5196 = vadd.f32 %v5164, %v5180
    %v5197 = vadd.f32 %v5165, %v5181
    %v5198 = vadd.f32 %v5166, %v5182
    %v5199 = vadd.f32 %v4383, %v5183
    %v5200 = vadd.f32 %v4384, %v5184
    %v5201 = vadd.f32 %v4385, %v5185
    %v5202 = vadd.f32 %v4386, %v5186
    %v5203 = vadd.f32 %v4387, %v5187
    %v5204 = vadd.f32 %v4388, %v5188
    %v5205 = vadd.f32 %v4389, %v5189
    %v5206 = vadd.f32 %v4390, %v5190
    %v5207 = vadd.f32 %v5199, %v3761
    %v5208 = vadd.f32 %v5200, %v3764
    %v5209 = vadd.f32 %v5201, %v3769
    %v5210 = vadd.f32 %v5202, %v3772
    %v5211 = vadd.f32 %v5203, %v3777
    %v5212 = vadd.f32 %v5204, %v3780
    %v5213 = vadd.f32 %v5205, %v3785
    %v5214 = vadd.f32 %v5206, %v3788
    %v5215 = vadd.f32 %v5207, %v5208
    %v5216 = vadd.f32 %v5215, %v5209
    %v5217 = vadd.f32 %v5216, %v5210
    %v5218 = vadd.f32 %v5217, %v5211
    %v5219 = vadd.f32 %v5218, %v5212
    %v5220 = vadd.f32 %v5219, %v5213
    %v5221 = vadd.f32 %v5220, %v5214
    %v5222 = vrot.slane %v5221, 4
    %v5223 = vadd.f32 %v5221, %v5222
    %v5224 = vrot.slane %v5223, 2
    %v5225 = vadd.f32 %v5223, %v5224
    %v5226 = vrot.slane %v5225, 1
    %v5227 = vadd.f32 %v5225, %v5226
    %v5228 = vrcp.pop 64.0
    %v5229 = vmul.f32 %v5227, %v5228
    %v5230 = vadd.f32 %v4391, %v5191
    %v5231 = vadd.f32 %v4392, %v5192
    %v5232 = vadd.f32 %v4393, %v5193
    %v5233 = vadd.f32 %v4394, %v5194
    %v5234 = vadd.f32 %v4395, %v5195
    %v5235 = vadd.f32 %v4396, %v5196
    %v5236 = vadd.f32 %v4397, %v5197
    %v5237 = vadd.f32 %v4398, %v5198
    %v5238 = vadd.f32 %v5230, %v3793
    %v5239 = vadd.f32 %v5231, %v3796
    %v5240 = vadd.f32 %v5232, %v3801
    %v5241 = vadd.f32 %v5233, %v3804
    %v5242 = vadd.f32 %v5234, %v3809
    %v5243 = vadd.f32 %v5235, %v3812
    %v5244 = vadd.f32 %v5236, %v3817
    %v5245 = vadd.f32 %v5237, %v3820
    %v5246 = vadd.f32 %v5238, %v5239
    %v5247 = vadd.f32 %v5246, %v5240
    %v5248 = vadd.f32 %v5247, %v5241
    %v5249 = vadd.f32 %v5248, %v5242
    %v5250 = vadd.f32 %v5249, %v5243
    %v5251 = vadd.f32 %v5250, %v5244
    %v5252 = vadd.f32 %v5251, %v5245
    %v5253 = vrot.slane %v5252, 4
    %v5254 = vadd.f32 %v5252, %v5253
    %v5255 = vrot.slane %v5254, 2
    %v5256 = vadd.f32 %v5254, %v5255
    %v5257 = vrot.slane %v5256, 1
    %v5258 = vadd.f32 %v5256, %v5257
    %v5259 = vmul.f32 %v5258, %v5228
    %vm5260 = vcmask 1040384
    %v5261 = vsel %vm5260, %v5229, %v5259
    %v5262 = vpack.c.bf16 %v5261, %v5261
    %v5263 = vld [vmem:[%s9] sm:$0xf]
    %v5264 = vld [vmem:[%s9 + $0x4] sm:$0xf]
    %v5265 = vld [vmem:[%s9 + $0x8] sm:$0xf]
    %v5266 = vld [vmem:[%s9 + $0xc] sm:$0xf]
    %v5267 = vld [vmem:[%s9 + $0x10] sm:$0xf]
    %v5268 = vld [vmem:[%s9 + $0x14] sm:$0xf]
    %v5269 = vld [vmem:[%s9 + $0x18] sm:$0xf]
    %v5270 = vld [vmem:[%s9 + $0x1c] sm:$0xf]
    %v5271 = vld [vmem:[%s9 + $0x20] sm:$0xf]
    %v5272 = vld [vmem:[%s9 + $0x24] sm:$0xf]
    %v5273 = vld [vmem:[%s9 + $0x28] sm:$0xf]
    %v5274 = vld [vmem:[%s9 + $0x2c] sm:$0xf]
    %v5275 = vld [vmem:[%s9 + $0x30] sm:$0xf]
    %v5276 = vld [vmem:[%s9 + $0x34] sm:$0xf]
    %v5277 = vld [vmem:[%s9 + $0x38] sm:$0xf]
    %v5278 = vld [vmem:[%s9 + $0x3c] sm:$0xf]
    %v5279 = vld [vmem:[%s10] sm:$0x1]
    %v5281 = vlaneseq
    %v5282 = vshrl.u32 %v5281, 7
    %v5283 = vsub.s32 0, %v5282
    %v5284 = vrot.slane %v5279, %v5283
    %v5302 = vunpack.c.l.b16 %v5263
    %v5303 = vunpack.c.l.b16 %v5264
    %v5304 = vunpack.c.l.b16 %v5265
    %v5305 = vunpack.c.l.b16 %v5266
    %v5306 = vunpack.c.l.b16 %v5267
    %v5307 = vunpack.c.l.b16 %v5268
    %v5308 = vunpack.c.l.b16 %v5269
    %v5309 = vunpack.c.l.b16 %v5270
    %v5310 = vunpack.c.l.b16 %v5271
    %v5311 = vunpack.c.l.b16 %v5272
    %v5312 = vunpack.c.l.b16 %v5273
    %v5313 = vunpack.c.l.b16 %v5274
    %v5314 = vunpack.c.l.b16 %v5275
    %v5315 = vunpack.c.l.b16 %v5276
    %v5316 = vunpack.c.l.b16 %v5277
    %v5317 = vunpack.c.l.b16 %v5278
    %v5318 = vpack.c.b16 %v5303, %v5302
    %v5319 = vpack.c.b16 %v5305, %v5304
    %v5320 = vpack.c.b16 %v5307, %v5306
    %v5321 = vpack.c.b16 %v5309, %v5308
    %v5322 = vpack.c.b16 %v5311, %v5310
    %v5323 = vpack.c.b16 %v5313, %v5312
    %v5324 = vpack.c.b16 %v5315, %v5314
    %v5325 = vpack.c.b16 %v5317, %v5316
    %5334 = vmatprep.subr.bf16.mxu0 0
    %5335 = vmatpush1.bf16.msra.mxu0 %v5318
    %5336 = vmatprep.subr.bf16.mxu0 0
    %5337 = vmatpush1.bf16.msra.mxu0 %v5319
    %5338 = vmatprep.subr.bf16.mxu0 0
    %5339 = vmatpush1.bf16.msra.mxu0 %v5320
    %5340 = vmatprep.subr.bf16.mxu0 0
    %5341 = vmatpush1.bf16.msra.mxu0 %v5321
    %5342 = vmatprep.subr.bf16.mxu0 0
    %5343 = vmatpush1.bf16.msra.mxu0 %v5322
    %5344 = vmatprep.subr.bf16.mxu0 0
    %5345 = vmatpush1.bf16.msra.mxu0 %v5323
    %5346 = vmatprep.subr.bf16.mxu0 0
    %5347 = vmatpush1.bf16.msra.mxu0 %v5324
    %5348 = vmatprep.subr.bf16.mxu0 0
    %5349 = vmatpush1.bf16.msra.mxu0 %v5325
    %5350 = vmatprep.subr.bf16.mxu0 0
    %5351 = vmatpush1.bf16.msra.mxu0 0
    %5352 = vmatprep.subr.bf16.mxu0 0
    %5353 = vmatpush1.bf16.msra.mxu0 0
    %5354 = vmatprep.subr.bf16.mxu0 0
    %5355 = vmatpush1.bf16.msra.mxu0 0
    %5356 = vmatprep.subr.bf16.mxu0 0
    %5357 = vmatpush1.bf16.msra.mxu0 0
    %5358 = vmatprep.subr.bf16.mxu0 0
    %5359 = vmatpush1.bf16.msra.mxu0 0
    %5360 = vmatprep.subr.bf16.mxu0 0
    %5361 = vmatpush1.bf16.msra.mxu0 0
    %5362 = vmatprep.subr.bf16.mxu0 0
    %5363 = vmatpush1.bf16.msra.mxu0 0
    %5364 = vmatprep.subr.bf16.mxu0 0
    %5365 = vmatpush1.bf16.msra.mxu0 0
    %5366 = vmatprep.mubr.bf16.mxu0 0
    %5367 = vmatmul.mubr.bf16.gmra.mrb[0].mxu0 %v5262
    %v5368 = vpop.f32.mrb[0].mxu0
    %v5369 = vadd.f32 %v5284, %v5368
    %v5370 = vpop.f32.mrb[0].mxu0
    %v5371 = vpop.f32.mrb[0].mxu0
    %v5372 = vpop.f32.mrb[0].mxu0
    %5373 = vdwg.mxu0
    %v5374 = vmax.f32 %v5369, 0.0
    %v5375 = vpack.c.bf16 %v5374, %v5374
    %v5376 = vld [vmem:[%s11] sm:$0xff]
    %v5377 = vld [vmem:[%s11 + $0x8] sm:$0xf]
    %v5378 = vld [vmem:[%s11 + $0xc] sm:$0xff]
    %v5379 = vld [vmem:[%s11 + $0x14] sm:$0xf]
    %v5380 = vld [vmem:[%s11 + $0x18] sm:$0xff]
    %v5381 = vld [vmem:[%s11 + $0x20] sm:$0xf]
    %v5382 = vld [vmem:[%s11 + $0x24] sm:$0xff]
    %v5383 = vld [vmem:[%s11 + $0x2c] sm:$0xf]
    %v5384 = vld [vmem:[%s12] sm:$0x7]
    %v5386 = vlaneseq
    %v5387 = vshrl.u32 %v5386, 7
    %v5388 = vsub.s32 0, %v5387
    %v5389 = vrot.slane %v5384, %v5388
    %v5390 = vlaneseq
    %v5391 = vshrl.u32 %v5390, 7
    %v5392 = vsub.s32 1, %v5391
    %v5393 = vrot.slane %v5384, %v5392
    %v5394 = vlaneseq
    %v5395 = vshrl.u32 %v5394, 7
    %v5396 = vsub.s32 2, %v5395
    %v5397 = vrot.slane %v5384, %v5396
    %v5409 = vunpack.c.l.b16 %v5376
    %v5410 = vunpack.c.h.b16 %v5376
    %v5411 = vunpack.c.l.b16 %v5377
    %v5412 = vunpack.c.l.b16 %v5378
    %v5413 = vunpack.c.h.b16 %v5378
    %v5414 = vunpack.c.l.b16 %v5379
    %v5415 = vunpack.c.l.b16 %v5380
    %v5416 = vunpack.c.h.b16 %v5380
    %v5417 = vunpack.c.l.b16 %v5381
    %v5418 = vunpack.c.l.b16 %v5382
    %v5419 = vunpack.c.h.b16 %v5382
    %v5420 = vunpack.c.l.b16 %v5383
    %v5421 = vpack.c.b16 %v5412, %v5409
    %v5422 = vpack.c.b16 %v5413, %v5410
    %v5423 = vpack.c.b16 %v5414, %v5411
    %v5424 = vpack.c.b16 %v5418, %v5415
    %v5425 = vpack.c.b16 %v5419, %v5416
    %v5426 = vpack.c.b16 %v5420, %v5417
    %vm5433 = vcmask 261120
    %v5435 = vsel %vm5433, %v5375, 0
    %5437 = vmatprep.subr.bf16.mxu0 %v5422
    %5438 = vmatpush1.bf16.msra.mxu0 %v5421
    %5439 = vmatprep.subr.bf16.mxu0 %v5425
    %5440 = vmatpush1.bf16.msra.mxu0 %v5424
    %5441 = vmatprep.subr.bf16.mxu0 0
    %5442 = vmatpush1.bf16.msra.mxu0 0
    %5443 = vmatprep.subr.bf16.mxu0 0
    %5444 = vmatpush1.bf16.msra.mxu0 0
    %5445 = vmatprep.subr.bf16.mxu0 0
    %5446 = vmatpush1.bf16.msra.mxu0 0
    %5447 = vmatprep.subr.bf16.mxu0 0
    %5448 = vmatpush1.bf16.msra.mxu0 0
    %5449 = vmatprep.subr.bf16.mxu0 0
    %5450 = vmatpush1.bf16.msra.mxu0 0
    %5451 = vmatprep.subr.bf16.mxu0 0
    %5452 = vmatpush1.bf16.msra.mxu0 0
    %5453 = vmatprep.subr.bf16.mxu0 0
    %5454 = vmatpush1.bf16.msra.mxu0 0
    %5455 = vmatprep.subr.bf16.mxu0 0
    %5456 = vmatpush1.bf16.msra.mxu0 0
    %5457 = vmatprep.subr.bf16.mxu0 0
    %5458 = vmatpush1.bf16.msra.mxu0 0
    %5459 = vmatprep.subr.bf16.mxu0 0
    %5460 = vmatpush1.bf16.msra.mxu0 0
    %5461 = vmatprep.subr.bf16.mxu0 0
    %5462 = vmatpush1.bf16.msra.mxu0 0
    %5463 = vmatprep.subr.bf16.mxu0 0
    %5464 = vmatpush1.bf16.msra.mxu0 0
    %5465 = vmatprep.subr.bf16.mxu0 0
    %5466 = vmatpush1.bf16.msra.mxu0 0
    %5467 = vmatprep.subr.bf16.mxu0 0
    %5468 = vmatpush1.bf16.msra.mxu0 0
    %5469 = vmatprep.mubr.bf16.mxu0 0
    %5470 = vmatmul.mubr.bf16.gmra.mrb[0].mxu0 %v5435
    %v5471 = vpop.f32.mrb[0].mxu0
    %v5472 = vadd.f32 %v5389, %v5471
    %v5473 = vpop.f32.mrb[0].mxu0
    %v5474 = vadd.f32 %v5393, %v5473
    %v5475 = vpop.f32.mrb[0].mxu0
    %v5476 = vpop.f32.mrb[0].mxu0
    %5477 = vdwg.mxu0
    %5478 = vmatprep.subr.bf16.mxu0 0
    %5479 = vmatpush1.bf16.msra.mxu0 %v5423
    %5480 = vmatprep.subr.bf16.mxu0 0
    %5481 = vmatpush1.bf16.msra.mxu0 %v5426
    %5482 = vmatprep.subr.bf16.mxu0 0
    %5483 = vmatpush1.bf16.msra.mxu0 0
    %5484 = vmatprep.subr.bf16.mxu0 0
    %5485 = vmatpush1.bf16.msra.mxu0 0
    %5486 = vmatprep.subr.bf16.mxu0 0
    %5487 = vmatpush1.bf16.msra.mxu0 0
    %5488 = vmatprep.subr.bf16.mxu0 0
    %5489 = vmatpush1.bf16.msra.mxu0 0
    %5490 = vmatprep.subr.bf16.mxu0 0
    %5491 = vmatpush1.bf16.msra.mxu0 0
    %5492 = vmatprep.subr.bf16.mxu0 0
    %5493 = vmatpush1.bf16.msra.mxu0 0
    %5494 = vmatprep.subr.bf16.mxu0 0
    %5495 = vmatpush1.bf16.msra.mxu0 0
    %5496 = vmatprep.subr.bf16.mxu0 0
    %5497 = vmatpush1.bf16.msra.mxu0 0
    %5498 = vmatprep.subr.bf16.mxu0 0
    %5499 = vmatpush1.bf16.msra.mxu0 0
    %5500 = vmatprep.subr.bf16.mxu0 0
    %5501 = vmatpush1.bf16.msra.mxu0 0
    %5502 = vmatprep.subr.bf16.mxu0 0
    %5503 = vmatpush1.bf16.msra.mxu0 0
    %5504 = vmatprep.subr.bf16.mxu0 0
    %5505 = vmatpush1.bf16.msra.mxu0 0
    %5506 = vmatprep.subr.bf16.mxu0 0
    %5507 = vmatpush1.bf16.msra.mxu0 0
    %5508 = vmatprep.subr.bf16.mxu0 0
    %5509 = vmatpush1.bf16.msra.mxu0 0
    %5510 = vmatprep.mubr.bf16.mxu0 0
    %5511 = vmatmul.mubr.bf16.gmra.mrb[0].mxu0 %v5435
    %v5512 = vpop.f32.mrb[0].mxu0
    %v5513 = vadd.f32 %v5397, %v5512
    %v5514 = vpop.f32.mrb[0].mxu0
    %v5515 = vpop.f32.mrb[0].mxu0
    %v5516 = vpop.f32.mrb[0].mxu0
    %5517 = vdwg.mxu0
    %v5518 = vmax.f32 %v5472, %v5474
    %v5519 = vmax.f32 %v5518, %v5513
    %v5520 = vsub.f32 %v5472, %v5519
    %v5521 = vmul.f32 %v5520, 1.442695
    %v5522 = vpow.pop %v5521
    %v5523 = vsub.f32 %v5474, %v5519
    %v5524 = vmul.f32 %v5523, 1.442695
    %v5525 = vpow.pop %v5524
    %v5526 = vsub.f32 %v5513, %v5519
    %v5527 = vmul.f32 %v5526, 1.442695
    %v5528 = vpow.pop %v5527
    %v5529 = vadd.f32 %v5522, %v5525
    %v5530 = vadd.f32 %v5529, %v5528
    %v5531 = vrcp.pop %v5530
    %v5532 = vmul.f32 %v5522, %v5531
    %v5533 = vmul.f32 %v5525, %v5531
    %v5534 = vmul.f32 %v5528, %v5531
    %v5535 = vlaneseq
    %v5536 = vshrl.u32 %v5535, 7
    %v5537 = vsub.s32 0, %v5536
    %v5538 = vrot.slane %v5532, %v5537
    %v5539 = vmul.f32 %v4383, %v5538
    %v5540 = vmul.f32 %v4384, %v5538
    %v5541 = vmul.f32 %v4385, %v5538
    %v5542 = vmul.f32 %v4386, %v5538
    %v5543 = vmul.f32 %v4387, %v5538
    %v5544 = vmul.f32 %v4388, %v5538
    %v5545 = vmul.f32 %v4389, %v5538
    %v5546 = vmul.f32 %v4390, %v5538
    %v5547 = vlaneseq
    %v5548 = vshrl.u32 %v5547, 7
    %v5549 = vsub.s32 0, %v5548
    %v5550 = vrot.slane %v5533, %v5549
    %v5551 = vmul.f32 %v5183, %v5550
    %v5552 = vmul.f32 %v5184, %v5550
    %v5553 = vmul.f32 %v5185, %v5550
    %v5554 = vmul.f32 %v5186, %v5550
    %v5555 = vmul.f32 %v5187, %v5550
    %v5556 = vmul.f32 %v5188, %v5550
    %v5557 = vmul.f32 %v5189, %v5550
    %v5558 = vmul.f32 %v5190, %v5550
    %v5559 = vadd.f32 %v5539, %v5551
    %v5560 = vadd.f32 %v5540, %v5552
    %v5561 = vadd.f32 %v5541, %v5553
    %v5562 = vadd.f32 %v5542, %v5554
    %v5563 = vadd.f32 %v5543, %v5555
    %v5564 = vadd.f32 %v5544, %v5556
    %v5565 = vadd.f32 %v5545, %v5557
    %v5566 = vadd.f32 %v5546, %v5558
    %v5567 = vlaneseq
    %v5568 = vshrl.u32 %v5567, 7
    %v5569 = vsub.s32 0, %v5568
    %v5570 = vrot.slane %v5534, %v5569
    %v5571 = vmul.f32 %v3761, %v5570
    %v5572 = vmul.f32 %v3764, %v5570
    %v5573 = vmul.f32 %v3769, %v5570
    %v5574 = vmul.f32 %v3772, %v5570
    %v5575 = vmul.f32 %v3777, %v5570
    %v5576 = vmul.f32 %v3780, %v5570
    %v5577 = vmul.f32 %v3785, %v5570
    %v5578 = vmul.f32 %v3788, %v5570
    %v5579 = vadd.f32 %v5559, %v5571
    %v5580 = vadd.f32 %v5560, %v5572
    %v5581 = vadd.f32 %v5561, %v5573
    %v5582 = vadd.f32 %v5562, %v5574
    %v5583 = vadd.f32 %v5563, %v5575
    %v5584 = vadd.f32 %v5564, %v5576
    %v5585 = vadd.f32 %v5565, %v5577
    %v5586 = vadd.f32 %v5566, %v5578
    %v5587 = vlaneseq
    %v5588 = vshrl.u32 %v5587, 7
    %v5589 = vsub.s32 1, %v5588
    %v5590 = vrot.slane %v5532, %v5589
    %v5591 = vmul.f32 %v4391, %v5590
    %v5592 = vmul.f32 %v4392, %v5590
    %v5593 = vmul.f32 %v4393, %v5590
    %v5594 = vmul.f32 %v4394, %v5590
    %v5595 = vmul.f32 %v4395, %v5590
    %v5596 = vmul.f32 %v4396, %v5590
    %v5597 = vmul.f32 %v4397, %v5590
    %v5598 = vmul.f32 %v4398, %v5590
    %v5599 = vlaneseq
    %v5600 = vshrl.u32 %v5599, 7
    %v5601 = vsub.s32 1, %v5600
    %v5602 = vrot.slane %v5533, %v5601
    %v5603 = vmul.f32 %v5191, %v5602
    %v5604 = vmul.f32 %v5192, %v5602
    %v5605 = vmul.f32 %v5193, %v5602
    %v5606 = vmul.f32 %v5194, %v5602
    %v5607 = vmul.f32 %v5195, %v5602
    %v5608 = vmul.f32 %v5196, %v5602
    %v5609 = vmul.f32 %v5197, %v5602
    %v5610 = vmul.f32 %v5198, %v5602
    %v5611 = vadd.f32 %v5591, %v5603
    %v5612 = vadd.f32 %v5592, %v5604
    %v5613 = vadd.f32 %v5593, %v5605
    %v5614 = vadd.f32 %v5594, %v5606
    %v5615 = vadd.f32 %v5595, %v5607
    %v5616 = vadd.f32 %v5596, %v5608
    %v5617 = vadd.f32 %v5597, %v5609
    %v5618 = vadd.f32 %v5598, %v5610
    %v5619 = vlaneseq
    %v5620 = vshrl.u32 %v5619, 7
    %v5621 = vsub.s32 1, %v5620
    %v5622 = vrot.slane %v5534, %v5621
    %v5623 = vmul.f32 %v3793, %v5622
    %v5624 = vmul.f32 %v3796, %v5622
    %v5625 = vmul.f32 %v3801, %v5622
    %v5626 = vmul.f32 %v3804, %v5622
    %v5627 = vmul.f32 %v3809, %v5622
    %v5628 = vmul.f32 %v3812, %v5622
    %v5629 = vmul.f32 %v3817, %v5622
    %v5630 = vmul.f32 %v3820, %v5622
    %v5631 = vadd.f32 %v5611, %v5623
    %v5632 = vadd.f32 %v5612, %v5624
    %v5633 = vadd.f32 %v5613, %v5625
    %v5634 = vadd.f32 %v5614, %v5626
    %v5635 = vadd.f32 %v5615, %v5627
    %v5636 = vadd.f32 %v5616, %v5628
    %v5637 = vadd.f32 %v5617, %v5629
    %v5638 = vadd.f32 %v5618, %v5630
    %v5639 = vpack.c.bf16 %v5580, %v5579
    %v5640 = vpack.c.bf16 %v5582, %v5581
    %v5641 = vpack.c.bf16 %v5584, %v5583
    %v5642 = vpack.c.bf16 %v5586, %v5585
    %v5643 = vpack.c.bf16 %v5632, %v5631
    %v5644 = vpack.c.bf16 %v5634, %v5633
    %v5645 = vpack.c.bf16 %v5636, %v5635
    %v5646 = vpack.c.bf16 %v5638, %v5637
    %v5647 = vld [vmem:[%s13] sm:$0xf]
    %v5648 = vld [vmem:[%s13 + $0x4] sm:$0xf]
    %v5649 = vld [vmem:[%s13 + $0x8] sm:$0xf]
    %v5650 = vld [vmem:[%s13 + $0xc] sm:$0xf]
    %v5651 = vld [vmem:[%s13 + $0x10] sm:$0xf]
    %v5652 = vld [vmem:[%s13 + $0x14] sm:$0xf]
    %v5653 = vld [vmem:[%s13 + $0x18] sm:$0xf]
    %v5654 = vld [vmem:[%s13 + $0x1c] sm:$0xf]
    %v5655 = vld [vmem:[%s13 + $0x20] sm:$0xf]
    %v5656 = vld [vmem:[%s13 + $0x24] sm:$0xf]
    %v5657 = vld [vmem:[%s13 + $0x28] sm:$0xf]
    %v5658 = vld [vmem:[%s13 + $0x2c] sm:$0xf]
    %v5659 = vld [vmem:[%s13 + $0x30] sm:$0xf]
    %v5660 = vld [vmem:[%s13 + $0x34] sm:$0xf]
    %v5661 = vld [vmem:[%s13 + $0x38] sm:$0xf]
    %v5662 = vld [vmem:[%s13 + $0x3c] sm:$0xf]
    %v5663 = vld [vmem:[%s14] sm:$0x1]
    %v5665 = vlaneseq
    %v5666 = vshrl.u32 %v5665, 7
    %v5667 = vsub.s32 0, %v5666
    %v5668 = vrot.slane %v5663, %v5667
    %v5686 = vunpack.c.l.b16 %v5647
    %v5687 = vunpack.c.l.b16 %v5648
    %v5688 = vunpack.c.l.b16 %v5649
    %v5689 = vunpack.c.l.b16 %v5650
    %v5690 = vunpack.c.l.b16 %v5651
    %v5691 = vunpack.c.l.b16 %v5652
    %v5692 = vunpack.c.l.b16 %v5653
    %v5693 = vunpack.c.l.b16 %v5654
    %v5694 = vunpack.c.l.b16 %v5655
    %v5695 = vunpack.c.l.b16 %v5656
    %v5696 = vunpack.c.l.b16 %v5657
    %v5697 = vunpack.c.l.b16 %v5658
    %v5698 = vunpack.c.l.b16 %v5659
    %v5699 = vunpack.c.l.b16 %v5660
    %v5700 = vunpack.c.l.b16 %v5661
    %v5701 = vunpack.c.l.b16 %v5662
    %v5702 = vpack.c.b16 %v5687, %v5686
    %v5703 = vpack.c.b16 %v5689, %v5688
    %v5704 = vpack.c.b16 %v5691, %v5690
    %v5705 = vpack.c.b16 %v5693, %v5692
    %v5706 = vpack.c.b16 %v5695, %v5694
    %v5707 = vpack.c.b16 %v5697, %v5696
    %v5708 = vpack.c.b16 %v5699, %v5698
    %v5709 = vpack.c.b16 %v5701, %v5700
    %5718 = vmatprep.subr.bf16.mxu0 0
    %5719 = vmatpush1.bf16.msra.mxu0 %v5702
    %5720 = vmatprep.subr.bf16.mxu0 0
    %5721 = vmatpush1.bf16.msra.mxu0 %v5703
    %5722 = vmatprep.subr.bf16.mxu0 0
    %5723 = vmatpush1.bf16.msra.mxu0 %v5704
    %5724 = vmatprep.subr.bf16.mxu0 0
    %5725 = vmatpush1.bf16.msra.mxu0 %v5705
    %5726 = vmatprep.subr.bf16.mxu0 0
    %5727 = vmatpush1.bf16.msra.mxu0 %v5706
    %5728 = vmatprep.subr.bf16.mxu0 0
    %5729 = vmatpush1.bf16.msra.mxu0 %v5707
    %5730 = vmatprep.subr.bf16.mxu0 0
    %5731 = vmatpush1.bf16.msra.mxu0 %v5708
    %5732 = vmatprep.subr.bf16.mxu0 0
    %5733 = vmatpush1.bf16.msra.mxu0 %v5709
    %5734 = vmatprep.subr.bf16.mxu0 0
    %5735 = vmatpush1.bf16.msra.mxu0 0
    %5736 = vmatprep.subr.bf16.mxu0 0
    %5737 = vmatpush1.bf16.msra.mxu0 0
    %5738 = vmatprep.subr.bf16.mxu0 0
    %5739 = vmatpush1.bf16.msra.mxu0 0
    %5740 = vmatprep.subr.bf16.mxu0 0
    %5741 = vmatpush1.bf16.msra.mxu0 0
    %5742 = vmatprep.subr.bf16.mxu0 0
    %5743 = vmatpush1.bf16.msra.mxu0 0
    %5744 = vmatprep.subr.bf16.mxu0 0
    %5745 = vmatpush1.bf16.msra.mxu0 0
    %5746 = vmatprep.subr.bf16.mxu0 0
    %5747 = vmatpush1.bf16.msra.mxu0 0
    %5748 = vmatprep.subr.bf16.mxu0 0
    %5749 = vmatpush1.bf16.msra.mxu0 0
    %5750 = vmatprep.mubr.bf16.mxu0 0
    %5751 = vmatmul.mubr.bf16.gmra.mrb[0].mxu0 %v5639
    %v5752 = vpop.f32.mrb[0].mxu0
    %v5753 = vadd.f32 %v5668, %v5752
    %v5754 = vpop.f32.mrb[0].mxu0
    %v5755 = vpop.f32.mrb[0].mxu0
    %v5756 = vadd.f32 %v5668, %v5755
    %v5757 = vpop.f32.mrb[0].mxu0
    %5758 = vmatprep.mubr.bf16.mxu0 0
    %5759 = vmatmul.mubr.bf16.gmra.mrb[0].mxu0 %v5640
    %v5760 = vpop.f32.mrb[0].mxu0
    %v5761 = vadd.f32 %v5668, %v5760
    %v5762 = vpop.f32.mrb[0].mxu0
    %v5763 = vpop.f32.mrb[0].mxu0
    %v5764 = vadd.f32 %v5668, %v5763
    %v5765 = vpop.f32.mrb[0].mxu0
    %5766 = vmatprep.mubr.bf16.mxu0 0
    %5767 = vmatmul.mubr.bf16.gmra.mrb[0].mxu0 %v5641
    %v5768 = vpop.f32.mrb[0].mxu0
    %v5769 = vadd.f32 %v5668, %v5768
    %v5770 = vpop.f32.mrb[0].mxu0
    %v5771 = vpop.f32.mrb[0].mxu0
    %v5772 = vadd.f32 %v5668, %v5771
    %v5773 = vpop.f32.mrb[0].mxu0
    %5774 = vmatprep.mubr.bf16.mxu0 0
    %5775 = vmatmul.mubr.bf16.gmra.mrb[0].mxu0 %v5642
    %v5776 = vpop.f32.mrb[0].mxu0
    %v5777 = vadd.f32 %v5668, %v5776
    %v5778 = vpop.f32.mrb[0].mxu0
    %v5779 = vpop.f32.mrb[0].mxu0
    %v5780 = vadd.f32 %v5668, %v5779
    %v5781 = vpop.f32.mrb[0].mxu0
    %5782 = vmatprep.mubr.bf16.mxu0 0
    %5783 = vmatmul.mubr.bf16.gmra.mrb[0].mxu0 %v5643
    %v5784 = vpop.f32.mrb[0].mxu0
    %v5785 = vadd.f32 %v5668, %v5784
    %v5786 = vpop.f32.mrb[0].mxu0
    %v5787 = vpop.f32.mrb[0].mxu0
    %v5788 = vadd.f32 %v5668, %v5787
    %v5789 = vpop.f32.mrb[0].mxu0
    %5790 = vmatprep.mubr.bf16.mxu0 0
    %5791 = vmatmul.mubr.bf16.gmra.mrb[0].mxu0 %v5644
    %v5792 = vpop.f32.mrb[0].mxu0
    %v5793 = vadd.f32 %v5668, %v5792
    %v5794 = vpop.f32.mrb[0].mxu0
    %v5795 = vpop.f32.mrb[0].mxu0
    %v5796 = vadd.f32 %v5668, %v5795
    %v5797 = vpop.f32.mrb[0].mxu0
    %5798 = vmatprep.mubr.bf16.mxu0 0
    %5799 = vmatmul.mubr.bf16.gmra.mrb[0].mxu0 %v5645
    %v5800 = vpop.f32.mrb[0].mxu0
    %v5801 = vadd.f32 %v5668, %v5800
    %v5802 = vpop.f32.mrb[0].mxu0
    %v5803 = vpop.f32.mrb[0].mxu0
    %v5804 = vadd.f32 %v5668, %v5803
    %v5805 = vpop.f32.mrb[0].mxu0
    %5806 = vmatprep.mubr.bf16.mxu0 0
    %5807 = vmatmul.mubr.bf16.gmra.mrb[0].mxu0 %v5646
    %v5808 = vpop.f32.mrb[0].mxu0
    %v5809 = vadd.f32 %v5668, %v5808
    %v5810 = vpop.f32.mrb[0].mxu0
    %v5811 = vpop.f32.mrb[0].mxu0
    %v5812 = vadd.f32 %v5668, %v5811
    %v5813 = vpop.f32.mrb[0].mxu0
    %5814 = vdwg.mxu0
    %v5815 = vpack.c.bf16 %v5756, %v5753
    %v5816 = vpack.c.bf16 %v5764, %v5761
    %v5817 = vpack.c.bf16 %v5772, %v5769
    %v5818 = vpack.c.bf16 %v5780, %v5777
    %v5819 = vpack.c.bf16 %v5788, %v5785
    %v5820 = vpack.c.bf16 %v5796, %v5793
    %v5821 = vpack.c.bf16 %v5804, %v5801
    %v5822 = vpack.c.bf16 %v5812, %v5809
    %v5831 = vunpack.c.l.b16 %v5815
    %v5832 = vunpack.c.h.b16 %v5815
    %v5833 = vunpack.c.l.b16 %v5816
    %v5834 = vunpack.c.h.b16 %v5816
    %v5835 = vunpack.c.l.b16 %v5817
    %v5836 = vunpack.c.h.b16 %v5817
    %v5837 = vunpack.c.l.b16 %v5818
    %v5838 = vunpack.c.h.b16 %v5818
    %v5839 = vunpack.c.l.b16 %v5819
    %v5840 = vunpack.c.h.b16 %v5819
    %v5841 = vunpack.c.l.b16 %v5820
    %v5842 = vunpack.c.h.b16 %v5820
    %v5843 = vunpack.c.l.b16 %v5821
    %v5844 = vunpack.c.h.b16 %v5821
    %v5845 = vunpack.c.l.b16 %v5822
    %v5846 = vunpack.c.h.b16 %v5822
    %v5847 = vpack.c.b16 %v5831, %v5831
    %v5848 = vpack.c.b16 %v5832, %v5832
    %v5849 = vpack.c.b16 %v5833, %v5833
    %v5850 = vpack.c.b16 %v5834, %v5834
    %v5851 = vpack.c.b16 %v5835, %v5835
    %v5852 = vpack.c.b16 %v5836, %v5836
    %v5853 = vpack.c.b16 %v5837, %v5837
    %v5854 = vpack.c.b16 %v5838, %v5838
    %v5855 = vpack.c.b16 %v5839, %v5839
    %v5856 = vpack.c.b16 %v5840, %v5840
    %v5857 = vpack.c.b16 %v5841, %v5841
    %v5858 = vpack.c.b16 %v5842, %v5842
    %v5859 = vpack.c.b16 %v5843, %v5843
    %v5860 = vpack.c.b16 %v5844, %v5844
    %v5861 = vpack.c.b16 %v5845, %v5845
    %v5862 = vpack.c.b16 %v5846, %v5846
    %5879 = vst [vmem:[#allocation2] sm:$0xf] %v5847
    %5880 = vst [vmem:[#allocation2 + $0x4] sm:$0xf] %v5848
    %5881 = vst [vmem:[#allocation2 + $0x8] sm:$0xf] %v5849
    %5882 = vst [vmem:[#allocation2 + $0xc] sm:$0xf] %v5850
    %5883 = vst [vmem:[#allocation2 + $0x10] sm:$0xf] %v5851
    %5884 = vst [vmem:[#allocation2 + $0x14] sm:$0xf] %v5852
    %5885 = vst [vmem:[#allocation2 + $0x18] sm:$0xf] %v5853
    %5886 = vst [vmem:[#allocation2 + $0x1c] sm:$0xf] %v5854
    %5887 = vst [vmem:[#allocation2 + $0x20] sm:$0xf] %v5855
    %5888 = vst [vmem:[#allocation2 + $0x24] sm:$0xf] %v5856
    %5889 = vst [vmem:[#allocation2 + $0x28] sm:$0xf] %v5857
    %5890 = vst [vmem:[#allocation2 + $0x2c] sm:$0xf] %v5858
    %5891 = vst [vmem:[#allocation2 + $0x30] sm:$0xf] %v5859
    %5892 = vst [vmem:[#allocation2 + $0x34] sm:$0xf] %v5860
    %5893 = vst [vmem:[#allocation2 + $0x38] sm:$0xf] %v5861
    %5894 = vst [vmem:[#allocation2 + $0x3c] sm:$0xf] %v5862
    // Predicated region
    $region62: #{tpu_custom_call.1} parent=1 // pred_check
      _
    $region63: #{tpu_custom_call.1} parent=1 // pred_check_branch
      %5896 = sbr.rel (0) target = $region65
    $region64: #{tpu_custom_call.1} parent=1 // pred_region
      %s5898 = ssub.s32 1024, 1024
      %5899 = vsyncadd [#allocation3], %s5898
      %s5900 = sshll.u32 [#allocation2], 4
      %s5901 = int_to_ptr.vmem [resolvable:$true] %s5900
      %5906 = dma.vmem_to_hbm [thread:$0]  %s5901, 1024, %s15, [#allocation3], 64, 64, 4
    $region65: #{tpu_custom_call.1} parent=1 // pred_fallthru
      _
    // Predicated region
    $region66: #{tpu_custom_call.1} parent=1 // pred_check
      _
    $region67: #{tpu_custom_call.1} parent=1 // pred_check_branch
      %5908 = sbr.rel (0) target = $region69
    $region68: #{tpu_custom_call.1} parent=1 // pred_region
      %5909 = dma.done [#allocation3], 1024
    $region69: #{tpu_custom_call.1} parent=1 // pred_fallthru
      _
    %5910 = vsyncpa [#allocation3], 1

</llo_original>
